<compile_context>
chip_gen: v5e
topology: v5e:2x2
jax: 0.10.0
libtpu: 0.0.40
codegen_flags: <defaults>
</compile_context>

<pallas_src>
import functools

import jax
import jax.numpy as jnp
from jax import lax
from jax.experimental import pallas as pl
from jax.experimental.pallas import tpu as pltpu

LANES = 128      # vreg lane width (fast axis)
SUBLANES = 8     # f32 sublanes per vreg
CHUNK = 8        # lanes accumulated per select-chain chunk


def _ceil_to(x, m):
    return ((x + m - 1) // m) * m


def _features_linear_kernel(idx_ref, w_ref, b_ref, o_ref, *, num_fields, rows_per_tile):
    """Gather-and-sum for one batch tile, lane-dense output.

    idx_ref : (B_pad * F,) int32  scalar-prefetched flat indices (SMEM)
    w_ref   : (V, 1)       f32    embedding table (VMEM resident)
    b_ref   : (1, 1)       f32    bias
    o_ref   : (rows_per_tile, 128) f32  output tile; element (r, l) is batch
              element (tile*rows_per_tile + r)*128 + l.
    """
    tile = pl.program_id(0)
    base = tile * (rows_per_tile * LANES * num_fields)

    # Hoisted out of all loops (review: no per-element broadcast / bias add).
    lane_iota = lax.broadcasted_iota(jnp.int32, (1, LANES), 1)
    bias_row = jnp.broadcast_to(b_ref[...], (1, LANES))
    zero_row = jnp.zeros((1, LANES), jnp.float32)

    def row_body(r, carry):
        row_base = base + r * (LANES * num_fields)
        chunk_rows = []
        # 128 lanes x F fields, fully unrolled so the scheduler can interleave
        # SMEM index reads, (1,1) table loads and VPU placement.
        for c0 in range(0, LANES, CHUNK):
            acc = zero_row
            for l in range(c0, c0 + CHUNK):
                e = row_base + l * num_fields
                s = w_ref[pl.ds(idx_ref[e], 1), :]            # (1, 1) gathered row
                for f in range(1, num_fields):
                    s = s + w_ref[pl.ds(idx_ref[e + f], 1), :]
                acc = jnp.where(lane_iota == l, s, acc)       # place into lane l
            chunk_rows.append(acc)
        row = functools.reduce(lambda a, b: a + b, chunk_rows)
        # Single full-lane (1, 128) store per 128 batch elements (lane-dense).
        o_ref[pl.ds(r, 1), :] = row + bias_row
        return carry

    lax.fori_loop(0, rows_per_tile, row_body, 0)


def features_linear(x, weight, bias):
    """x: (B, F) integer indices; weight: (V, 1) f32; bias: (1,) f32 -> (B, 1) f32."""
    B, F = x.shape
    V, D = weight.shape
    if D != 1:
        # TODO(synk): generalise the lane-dense layout to output_dim > 1.
        raise NotImplementedError("features_linear Pallas kernel supports output_dim == 1")

    # --- batch padding / tiling (lane-dense: batch -> lanes) -----------------
    if B <= SUBLANES * LANES:
        b_pad = _ceil_to(B, LANES)
        rows_per_tile = b_pad // LANES           # single tile == full array
    else:
        b_pad = _ceil_to(B, SUBLANES * LANES)    # 1024-element tiles
        rows_per_tile = SUBLANES                 # (8, 128) output blocks
    rows_total = b_pad // LANES
    grid = rows_total // rows_per_tile           # >= 2 whenever B > 1024 (v7x)

    idx = x.astype(jnp.int32)
    if b_pad != B:
        idx = jnp.concatenate(
            [idx, jnp.zeros((b_pad - B, F), jnp.int32)], axis=0)  # pad with valid row 0
    idx_flat = idx.reshape(-1)                   # 1-D SMEM layout (tiny padding)

    w = weight.astype(jnp.float32)
    b2 = bias.reshape(1, 1).astype(jnp.float32)

    # --- VMEM accounting with lane/sublane padding + double buffering --------
    w_vmem = _ceil_to(V, SUBLANES) * LANES * 4       # (V,1) is lane-padded to 128
    bias_vmem = SUBLANES * LANES * 4
    out_vmem = rows_per_tile * LANES * 4
    if 2 * w_vmem > (40 << 20):
        # TODO(synk): HBM-resident table + pltpu.make_async_copy gather (or a
        # lane-dense (ceil(V/128), 128) table) for vocabularies this large.
        raise NotImplementedError("embedding table too large for VMEM-resident gather")
    vmem_needed = 2 * (w_vmem + bias_vmem + out_vmem)
    vmem_limit = int(max(vmem_needed + (4 << 20), 16 << 20))

    kernel = functools.partial(
        _features_linear_kernel, num_fields=F, rows_per_tile=rows_per_tile)

    out_lanes = pl.pallas_call(
        kernel,
        out_shape=jax.ShapeDtypeStruct((rows_total, LANES), jnp.float32),
        grid_spec=pltpu.PrefetchScalarGridSpec(
            num_scalar_prefetch=1,                                 # idx_flat -> SMEM
            grid=(grid,),
            in_specs=[
                pl.BlockSpec((V, 1), lambda i, idx_pref: (0, 0)),  # table, VMEM resident
                pl.BlockSpec((1, 1), lambda i, idx_pref: (0, 0)),  # bias
            ],
            out_specs=pl.BlockSpec((rows_per_tile, LANES),
                                   lambda i, idx_pref: (i, 0)),    # lane-dense output
        ),
        compiler_params=pltpu.CompilerParams(
            dimension_semantics=("parallel",),                     # shard tiles on v7x
            vmem_limit_bytes=vmem_limit,
        ),
    )(idx_flat, w, b2)

    return out_lanes.reshape(-1)[:B].reshape(B, 1)


if __name__ == "__main__":
    # Module config consistent with FeaturesLinear(field_dims, output_dim=1).
    field_dims = (10, 6, 9, 7)            # sum = 32 vocab rows
    output_dim = 1
    vocab = sum(field_dims)
    num_fields = len(field_dims)

    key = jax.random.PRNGKey(0)
    k_w, k_x1, k_x2 = jax.random.split(key, 3)

    # nn.Embedding default init ~ N(0, 1); bias init is zeros in the module,
    # use a nonzero value here so the bias path is actually exercised.
    weight = jax.random.normal(k_w, (vocab, output_dim), dtype=jnp.float32)
    bias = jnp.full((output_dim,), 0.25, dtype=jnp.float32)

    fd = jnp.array(field_dims, dtype=jnp.int32)
    offsets = jnp.concatenate([jnp.zeros((1,), jnp.int32), jnp.cumsum(fd)[:-1]])

    def make_x(k, batch):
        per_field = jax.random.randint(k, (batch, num_fields), 0, fd, dtype=jnp.int32)
        return per_field + offsets[None, :]

    ok = True
    # Case 1: small batch (padding path, single tile).
    # Case 2: larger batch (tiled path: grid=2 x 1024-element lane-dense tiles).
    for k, batch in ((k_x1, 32), (k_x2, 2048)):
        x = make_x(k, batch)
        out = jax.block_until_ready(features_linear(x, weight, bias))
        ref = weight[x].sum(axis=1) + bias[None, :]
        ok = ok and out.shape == (batch, output_dim)
        ok = ok and bool(jnp.allclose(out, ref, atol=1e-5, rtol=1e-5))
        assert ok, (batch, out[:4], ref[:4])

    print("KERNEL_OK")
</pallas_src>

<mosaic_0001>
module attributes {stable_mosaic.version = 11 : i64} {
  func.func @_features_linear_kernel(%arg0: i32, %arg1: memref<512xi32, #tpu.memory_space<smem>>, %arg2: memref<32x1xf32, #tpu.memory_space<vmem>>, %arg3: memref<1x1xf32, #tpu.memory_space<vmem>>, %arg4: memref<1x128xf32, #tpu.memory_space<vmem>>) attributes {dimension_semantics = [#tpu.dimension_semantics<parallel>], iteration_bounds = array<i64: 1>, scalar_prefetch = 1 : i64, scratch_operands = 0 : i64, tpu.core_type = #tpu.core_type<tc>, window_params = [{pipeline_mode = #tpu.pipeline_mode<synchronous>, transform_indices = @transform_0, window_bounds = array<i64: 32, 1>}, {pipeline_mode = #tpu.pipeline_mode<synchronous>, transform_indices = @transform_1, window_bounds = array<i64: 1, 1>}, {transform_indices = @transform_2, window_bounds = array<i64: 1, 128>}]} {
    %c512_i32 = arith.constant 512 : i32
    %0 = arith.muli %arg0, %c512_i32 : i32
    %1 = tpu.iota {dimensions = array<i32: 1>} : vector<1x128xi32>
    %c0 = arith.constant 0 : index
    %c0_0 = arith.constant 0 : index
    %2 = vector.load %arg3[%c0, %c0_0] : memref<1x1xf32, #tpu.memory_space<vmem>>, vector<1x1xf32>
    %3 = vector.shape_cast %2 : vector<1x1xf32> to vector<1x1xf32>
    %4 = vector.broadcast %3 : vector<1x1xf32> to vector<1x128xf32>
    %cst = arith.constant 0.000000e+00 : f32
    %5 = vector.broadcast %cst : f32 to vector<1x128xf32>
    %c0_i32 = arith.constant 0 : i32
    %c512_i32_1 = arith.constant 512 : i32
    %6 = arith.muli %c0_i32, %c512_i32_1 : i32
    %7 = arith.addi %0, %6 : i32
    %c0_i32_2 = arith.constant 0 : i32
    %8 = arith.addi %7, %c0_i32_2 : i32
    %9 = arith.index_cast %8 : i32 to index
    %10 = memref.load %arg1[%9] : memref<512xi32, #tpu.memory_space<smem>>
    %11 = arith.index_cast %10 : i32 to index
    %c0_3 = arith.constant 0 : index
    %12 = vector.load %arg2[%11, %c0_3] : memref<32x1xf32, #tpu.memory_space<vmem>>, vector<1x1xf32>
    %c1_i32 = arith.constant 1 : i32
    %13 = arith.addi %8, %c1_i32 : i32
    %14 = arith.index_cast %13 : i32 to index
    %15 = memref.load %arg1[%14] : memref<512xi32, #tpu.memory_space<smem>>
    %16 = arith.index_cast %15 : i32 to index
    %c0_4 = arith.constant 0 : index
    %17 = vector.load %arg2[%16, %c0_4] : memref<32x1xf32, #tpu.memory_space<vmem>>, vector<1x1xf32>
    %18 = arith.addf %12, %17 : vector<1x1xf32>
    %c2_i32 = arith.constant 2 : i32
    %19 = arith.addi %8, %c2_i32 : i32
    %20 = arith.index_cast %19 : i32 to index
    %21 = memref.load %arg1[%20] : memref<512xi32, #tpu.memory_space<smem>>
    %22 = arith.index_cast %21 : i32 to index
    %c0_5 = arith.constant 0 : index
    %23 = vector.load %arg2[%22, %c0_5] : memref<32x1xf32, #tpu.memory_space<vmem>>, vector<1x1xf32>
    %24 = arith.addf %18, %23 : vector<1x1xf32>
    %c3_i32 = arith.constant 3 : i32
    %25 = arith.addi %8, %c3_i32 : i32
    %26 = arith.index_cast %25 : i32 to index
    %27 = memref.load %arg1[%26] : memref<512xi32, #tpu.memory_space<smem>>
    %28 = arith.index_cast %27 : i32 to index
    %c0_6 = arith.constant 0 : index
    %29 = vector.load %arg2[%28, %c0_6] : memref<32x1xf32, #tpu.memory_space<vmem>>, vector<1x1xf32>
    %30 = arith.addf %24, %29 : vector<1x1xf32>
    %c0_i32_7 = arith.constant 0 : i32
    %31 = vector.broadcast %c0_i32_7 : i32 to vector<1x128xi32>
    %32 = arith.cmpi eq, %1, %31 : vector<1x128xi32>
    %33 = vector.shape_cast %30 : vector<1x1xf32> to vector<1x1xf32>
    %34 = vector.broadcast %33 : vector<1x1xf32> to vector<1x128xf32>
    %35 = arith.select %32, %34, %5 : vector<1x128xi1>, vector<1x128xf32>
    %c4_i32 = arith.constant 4 : i32
    %36 = arith.addi %7, %c4_i32 : i32
    %37 = arith.index_cast %36 : i32 to index
    %38 = memref.load %arg1[%37] : memref<512xi32, #tpu.memory_space<smem>>
    %39 = arith.index_cast %38 : i32 to index
    %c0_8 = arith.constant 0 : index
    %40 = vector.load %arg2[%39, %c0_8] : memref<32x1xf32, #tpu.memory_space<vmem>>, vector<1x1xf32>
    %c1_i32_9 = arith.constant 1 : i32
    %41 = arith.addi %36, %c1_i32_9 : i32
    %42 = arith.index_cast %41 : i32 to index
    %43 = memref.load %arg1[%42] : memref<512xi32, #tpu.memory_space<smem>>
    %44 = arith.index_cast %43 : i32 to index
    %c0_10 = arith.constant 0 : index
    %45 = vector.load %arg2[%44, %c0_10] : memref<32x1xf32, #tpu.memory_space<vmem>>, vector<1x1xf32>
    %46 = arith.addf %40, %45 : vector<1x1xf32>
    %c2_i32_11 = arith.constant 2 : i32
    %47 = arith.addi %36, %c2_i32_11 : i32
    %48 = arith.index_cast %47 : i32 to index
    %49 = memref.load %arg1[%48] : memref<512xi32, #tpu.memory_space<smem>>
    %50 = arith.index_cast %49 : i32 to index
    %c0_12 = arith.constant 0 : index
    %51 = vector.load %arg2[%50, %c0_12] : memref<32x1xf32, #tpu.memory_space<vmem>>, vector<1x1xf32>
    %52 = arith.addf %46, %51 : vector<1x1xf32>
    %c3_i32_13 = arith.constant 3 : i32
    %53 = arith.addi %36, %c3_i32_13 : i32
    %54 = arith.index_cast %53 : i32 to index
    %55 = memref.load %arg1[%54] : memref<512xi32, #tpu.memory_space<smem>>
    %56 = arith.index_cast %55 : i32 to index
    %c0_14 = arith.constant 0 : index
    %57 = vector.load %arg2[%56, %c0_14] : memref<32x1xf32, #tpu.memory_space<vmem>>, vector<1x1xf32>
    %58 = arith.addf %52, %57 : vector<1x1xf32>
    %c1_i32_15 = arith.constant 1 : i32
    %59 = vector.broadcast %c1_i32_15 : i32 to vector<1x128xi32>
    %60 = arith.cmpi eq, %1, %59 : vector<1x128xi32>
    %61 = vector.shape_cast %58 : vector<1x1xf32> to vector<1x1xf32>
    %62 = vector.broadcast %61 : vector<1x1xf32> to vector<1x128xf32>
    %63 = arith.select %60, %62, %35 : vector<1x128xi1>, vector<1x128xf32>
    %c8_i32 = arith.constant 8 : i32
    %64 = arith.addi %7, %c8_i32 : i32
    %65 = arith.index_cast %64 : i32 to index
    %66 = memref.load %arg1[%65] : memref<512xi32, #tpu.memory_space<smem>>
    %67 = arith.index_cast %66 : i32 to index
    %c0_16 = arith.constant 0 : index
    %68 = vector.load %arg2[%67, %c0_16] : memref<32x1xf32, #tpu.memory_space<vmem>>, vector<1x1xf32>
    %c1_i32_17 = arith.constant 1 : i32
    %69 = arith.addi %64, %c1_i32_17 : i32
    %70 = arith.index_cast %69 : i32 to index
    %71 = memref.load %arg1[%70] : memref<512xi32, #tpu.memory_space<smem>>
    %72 = arith.index_cast %71 : i32 to index
    %c0_18 = arith.constant 0 : index
    %73 = vector.load %arg2[%72, %c0_18] : memref<32x1xf32, #tpu.memory_space<vmem>>, vector<1x1xf32>
    %74 = arith.addf %68, %73 : vector<1x1xf32>
    %c2_i32_19 = arith.constant 2 : i32
    %75 = arith.addi %64, %c2_i32_19 : i32
    %76 = arith.index_cast %75 : i32 to index
    %77 = memref.load %arg1[%76] : memref<512xi32, #tpu.memory_space<smem>>
    %78 = arith.index_cast %77 : i32 to index
    %c0_20 = arith.constant 0 : index
    %79 = vector.load %arg2[%78, %c0_20] : memref<32x1xf32, #tpu.memory_space<vmem>>, vector<1x1xf32>
    %80 = arith.addf %74, %79 : vector<1x1xf32>
    %c3_i32_21 = arith.constant 3 : i32
    %81 = arith.addi %64, %c3_i32_21 : i32
    %82 = arith.index_cast %81 : i32 to index
    %83 = memref.load %arg1[%82] : memref<512xi32, #tpu.memory_space<smem>>
    %84 = arith.index_cast %83 : i32 to index
    %c0_22 = arith.constant 0 : index
    %85 = vector.load %arg2[%84, %c0_22] : memref<32x1xf32, #tpu.memory_space<vmem>>, vector<1x1xf32>
    %86 = arith.addf %80, %85 : vector<1x1xf32>
    %c2_i32_23 = arith.constant 2 : i32
    %87 = vector.broadcast %c2_i32_23 : i32 to vector<1x128xi32>
    %88 = arith.cmpi eq, %1, %87 : vector<1x128xi32>
    %89 = vector.shape_cast %86 : vector<1x1xf32> to vector<1x1xf32>
    %90 = vector.broadcast %89 : vector<1x1xf32> to vector<1x128xf32>
    %91 = arith.select %88, %90, %63 : vector<1x128xi1>, vector<1x128xf32>
    %c12_i32 = arith.constant 12 : i32
    %92 = arith.addi %7, %c12_i32 : i32
    %93 = arith.index_cast %92 : i32 to index
    %94 = memref.load %arg1[%93] : memref<512xi32, #tpu.memory_space<smem>>
    %95 = arith.index_cast %94 : i32 to index
    %c0_24 = arith.constant 0 : index
    %96 = vector.load %arg2[%95, %c0_24] : memref<32x1xf32, #tpu.memory_space<vmem>>, vector<1x1xf32>
    %c1_i32_25 = arith.constant 1 : i32
    %97 = arith.addi %92, %c1_i32_25 : i32
    %98 = arith.index_cast %97 : i32 to index
    %99 = memref.load %arg1[%98] : memref<512xi32, #tpu.memory_space<smem>>
    %100 = arith.index_cast %99 : i32 to index
    %c0_26 = arith.constant 0 : index
    %101 = vector.load %arg2[%100, %c0_26] : memref<32x1xf32, #tpu.memory_space<vmem>>, vector<1x1xf32>
    %102 = arith.addf %96, %101 : vector<1x1xf32>
    %c2_i32_27 = arith.constant 2 : i32
    %103 = arith.addi %92, %c2_i32_27 : i32
    %104 = arith.index_cast %103 : i32 to index
    %105 = memref.load %arg1[%104] : memref<512xi32, #tpu.memory_space<smem>>
    %106 = arith.index_cast %105 : i32 to index
    %c0_28 = arith.constant 0 : index
    %107 = vector.load %arg2[%106, %c0_28] : memref<32x1xf32, #tpu.memory_space<vmem>>, vector<1x1xf32>
    %108 = arith.addf %102, %107 : vector<1x1xf32>
    %c3_i32_29 = arith.constant 3 : i32
    %109 = arith.addi %92, %c3_i32_29 : i32
    %110 = arith.index_cast %109 : i32 to index
    %111 = memref.load %arg1[%110] : memref<512xi32, #tpu.memory_space<smem>>
    %112 = arith.index_cast %111 : i32 to index
    %c0_30 = arith.constant 0 : index
    %113 = vector.load %arg2[%112, %c0_30] : memref<32x1xf32, #tpu.memory_space<vmem>>, vector<1x1xf32>
    %114 = arith.addf %108, %113 : vector<1x1xf32>
    %c3_i32_31 = arith.constant 3 : i32
    %115 = vector.broadcast %c3_i32_31 : i32 to vector<1x128xi32>
    %116 = arith.cmpi eq, %1, %115 : vector<1x128xi32>
    %117 = vector.shape_cast %114 : vector<1x1xf32> to vector<1x1xf32>
    %118 = vector.broadcast %117 : vector<1x1xf32> to vector<1x128xf32>
    %119 = arith.select %116, %118, %91 : vector<1x128xi1>, vector<1x128xf32>
    %c16_i32 = arith.constant 16 : i32
    %120 = arith.addi %7, %c16_i32 : i32
    %121 = arith.index_cast %120 : i32 to index
    %122 = memref.load %arg1[%121] : memref<512xi32, #tpu.memory_space<smem>>
    %123 = arith.index_cast %122 : i32 to index
    %c0_32 = arith.constant 0 : index
    %124 = vector.load %arg2[%123, %c0_32] : memref<32x1xf32, #tpu.memory_space<vmem>>, vector<1x1xf32>
    %c1_i32_33 = arith.constant 1 : i32
    %125 = arith.addi %120, %c1_i32_33 : i32
    %126 = arith.index_cast %125 : i32 to index
    %127 = memref.load %arg1[%126] : memref<512xi32, #tpu.memory_space<smem>>
    %128 = arith.index_cast %127 : i32 to index
    %c0_34 = arith.constant 0 : index
    %129 = vector.load %arg2[%128, %c0_34] : memref<32x1xf32, #tpu.memory_space<vmem>>, vector<1x1xf32>
    %130 = arith.addf %124, %129 : vector<1x1xf32>
    %c2_i32_35 = arith.constant 2 : i32
    %131 = arith.addi %120, %c2_i32_35 : i32
    %132 = arith.index_cast %131 : i32 to index
    %133 = memref.load %arg1[%132] : memref<512xi32, #tpu.memory_space<smem>>
    %134 = arith.index_cast %133 : i32 to index
    %c0_36 = arith.constant 0 : index
    %135 = vector.load %arg2[%134, %c0_36] : memref<32x1xf32, #tpu.memory_space<vmem>>, vector<1x1xf32>
    %136 = arith.addf %130, %135 : vector<1x1xf32>
    %c3_i32_37 = arith.constant 3 : i32
    %137 = arith.addi %120, %c3_i32_37 : i32
    %138 = arith.index_cast %137 : i32 to index
    %139 = memref.load %arg1[%138] : memref<512xi32, #tpu.memory_space<smem>>
    %140 = arith.index_cast %139 : i32 to index
    %c0_38 = arith.constant 0 : index
    %141 = vector.load %arg2[%140, %c0_38] : memref<32x1xf32, #tpu.memory_space<vmem>>, vector<1x1xf32>
    %142 = arith.addf %136, %141 : vector<1x1xf32>
    %c4_i32_39 = arith.constant 4 : i32
    %143 = vector.broadcast %c4_i32_39 : i32 to vector<1x128xi32>
    %144 = arith.cmpi eq, %1, %143 : vector<1x128xi32>
    %145 = vector.shape_cast %142 : vector<1x1xf32> to vector<1x1xf32>
    %146 = vector.broadcast %145 : vector<1x1xf32> to vector<1x128xf32>
    %147 = arith.select %144, %146, %119 : vector<1x128xi1>, vector<1x128xf32>
    %c20_i32 = arith.constant 20 : i32
    %148 = arith.addi %7, %c20_i32 : i32
    %149 = arith.index_cast %148 : i32 to index
    %150 = memref.load %arg1[%149] : memref<512xi32, #tpu.memory_space<smem>>
    %151 = arith.index_cast %150 : i32 to index
    %c0_40 = arith.constant 0 : index
    %152 = vector.load %arg2[%151, %c0_40] : memref<32x1xf32, #tpu.memory_space<vmem>>, vector<1x1xf32>
    %c1_i32_41 = arith.constant 1 : i32
    %153 = arith.addi %148, %c1_i32_41 : i32
    %154 = arith.index_cast %153 : i32 to index
    %155 = memref.load %arg1[%154] : memref<512xi32, #tpu.memory_space<smem>>
    %156 = arith.index_cast %155 : i32 to index
    %c0_42 = arith.constant 0 : index
    %157 = vector.load %arg2[%156, %c0_42] : memref<32x1xf32, #tpu.memory_space<vmem>>, vector<1x1xf32>
    %158 = arith.addf %152, %157 : vector<1x1xf32>
    %c2_i32_43 = arith.constant 2 : i32
    %159 = arith.addi %148, %c2_i32_43 : i32
    %160 = arith.index_cast %159 : i32 to index
    %161 = memref.load %arg1[%160] : memref<512xi32, #tpu.memory_space<smem>>
    %162 = arith.index_cast %161 : i32 to index
    %c0_44 = arith.constant 0 : index
    %163 = vector.load %arg2[%162, %c0_44] : memref<32x1xf32, #tpu.memory_space<vmem>>, vector<1x1xf32>
    %164 = arith.addf %158, %163 : vector<1x1xf32>
    %c3_i32_45 = arith.constant 3 : i32
    %165 = arith.addi %148, %c3_i32_45 : i32
    %166 = arith.index_cast %165 : i32 to index
    %167 = memref.load %arg1[%166] : memref<512xi32, #tpu.memory_space<smem>>
    %168 = arith.index_cast %167 : i32 to index
    %c0_46 = arith.constant 0 : index
    %169 = vector.load %arg2[%168, %c0_46] : memref<32x1xf32, #tpu.memory_space<vmem>>, vector<1x1xf32>
    %170 = arith.addf %164, %169 : vector<1x1xf32>
    %c5_i32 = arith.constant 5 : i32
    %171 = vector.broadcast %c5_i32 : i32 to vector<1x128xi32>
    %172 = arith.cmpi eq, %1, %171 : vector<1x128xi32>
    %173 = vector.shape_cast %170 : vector<1x1xf32> to vector<1x1xf32>
    %174 = vector.broadcast %173 : vector<1x1xf32> to vector<1x128xf32>
    %175 = arith.select %172, %174, %147 : vector<1x128xi1>, vector<1x128xf32>
    %c24_i32 = arith.constant 24 : i32
    %176 = arith.addi %7, %c24_i32 : i32
    %177 = arith.index_cast %176 : i32 to index
    %178 = memref.load %arg1[%177] : memref<512xi32, #tpu.memory_space<smem>>
    %179 = arith.index_cast %178 : i32 to index
    %c0_47 = arith.constant 0 : index
    %180 = vector.load %arg2[%179, %c0_47] : memref<32x1xf32, #tpu.memory_space<vmem>>, vector<1x1xf32>
    %c1_i32_48 = arith.constant 1 : i32
    %181 = arith.addi %176, %c1_i32_48 : i32
    %182 = arith.index_cast %181 : i32 to index
    %183 = memref.load %arg1[%182] : memref<512xi32, #tpu.memory_space<smem>>
    %184 = arith.index_cast %183 : i32 to index
    %c0_49 = arith.constant 0 : index
    %185 = vector.load %arg2[%184, %c0_49] : memref<32x1xf32, #tpu.memory_space<vmem>>, vector<1x1xf32>
    %186 = arith.addf %180, %185 : vector<1x1xf32>
    %c2_i32_50 = arith.constant 2 : i32
    %187 = arith.addi %176, %c2_i32_50 : i32
    %188 = arith.index_cast %187 : i32 to index
    %189 = memref.load %arg1[%188] : memref<512xi32, #tpu.memory_space<smem>>
    %190 = arith.index_cast %189 : i32 to index
    %c0_51 = arith.constant 0 : index
    %191 = vector.load %arg2[%190, %c0_51] : memref<32x1xf32, #tpu.memory_space<vmem>>, vector<1x1xf32>
    %192 = arith.addf %186, %191 : vector<1x1xf32>
    %c3_i32_52 = arith.constant 3 : i32
    %193 = arith.addi %176, %c3_i32_52 : i32
    %194 = arith.index_cast %193 : i32 to index
    %195 = memref.load %arg1[%194] : memref<512xi32, #tpu.memory_space<smem>>
    %196 = arith.index_cast %195 : i32 to index
    %c0_53 = arith.constant 0 : index
    %197 = vector.load %arg2[%196, %c0_53] : memref<32x1xf32, #tpu.memory_space<vmem>>, vector<1x1xf32>
    %198 = arith.addf %192, %197 : vector<1x1xf32>
    %c6_i32 = arith.constant 6 : i32
    %199 = vector.broadcast %c6_i32 : i32 to vector<1x128xi32>
    %200 = arith.cmpi eq, %1, %199 : vector<1x128xi32>
    %201 = vector.shape_cast %198 : vector<1x1xf32> to vector<1x1xf32>
    %202 = vector.broadcast %201 : vector<1x1xf32> to vector<1x128xf32>
    %203 = arith.select %200, %202, %175 : vector<1x128xi1>, vector<1x128xf32>
    %c28_i32 = arith.constant 28 : i32
    %204 = arith.addi %7, %c28_i32 : i32
    %205 = arith.index_cast %204 : i32 to index
    %206 = memref.load %arg1[%205] : memref<512xi32, #tpu.memory_space<smem>>
    %207 = arith.index_cast %206 : i32 to index
    %c0_54 = arith.constant 0 : index
    %208 = vector.load %arg2[%207, %c0_54] : memref<32x1xf32, #tpu.memory_space<vmem>>, vector<1x1xf32>
    %c1_i32_55 = arith.constant 1 : i32
    %209 = arith.addi %204, %c1_i32_55 : i32
    %210 = arith.index_cast %209 : i32 to index
    %211 = memref.load %arg1[%210] : memref<512xi32, #tpu.memory_space<smem>>
    %212 = arith.index_cast %211 : i32 to index
    %c0_56 = arith.constant 0 : index
    %213 = vector.load %arg2[%212, %c0_56] : memref<32x1xf32, #tpu.memory_space<vmem>>, vector<1x1xf32>
    %214 = arith.addf %208, %213 : vector<1x1xf32>
    %c2_i32_57 = arith.constant 2 : i32
    %215 = arith.addi %204, %c2_i32_57 : i32
    %216 = arith.index_cast %215 : i32 to index
    %217 = memref.load %arg1[%216] : memref<512xi32, #tpu.memory_space<smem>>
    %218 = arith.index_cast %217 : i32 to index
    %c0_58 = arith.constant 0 : index
    %219 = vector.load %arg2[%218, %c0_58] : memref<32x1xf32, #tpu.memory_space<vmem>>, vector<1x1xf32>
    %220 = arith.addf %214, %219 : vector<1x1xf32>
    %c3_i32_59 = arith.constant 3 : i32
    %221 = arith.addi %204, %c3_i32_59 : i32
    %222 = arith.index_cast %221 : i32 to index
    %223 = memref.load %arg1[%222] : memref<512xi32, #tpu.memory_space<smem>>
    %224 = arith.index_cast %223 : i32 to index
    %c0_60 = arith.constant 0 : index
    %225 = vector.load %arg2[%224, %c0_60] : memref<32x1xf32, #tpu.memory_space<vmem>>, vector<1x1xf32>
    %226 = arith.addf %220, %225 : vector<1x1xf32>
    %c7_i32 = arith.constant 7 : i32
    %227 = vector.broadcast %c7_i32 : i32 to vector<1x128xi32>
    %228 = arith.cmpi eq, %1, %227 : vector<1x128xi32>
    %229 = vector.shape_cast %226 : vector<1x1xf32> to vector<1x1xf32>
    %230 = vector.broadcast %229 : vector<1x1xf32> to vector<1x128xf32>
    %231 = arith.select %228, %230, %203 : vector<1x128xi1>, vector<1x128xf32>
    %c32_i32 = arith.constant 32 : i32
    %232 = arith.addi %7, %c32_i32 : i32
    %233 = arith.index_cast %232 : i32 to index
    %234 = memref.load %arg1[%233] : memref<512xi32, #tpu.memory_space<smem>>
    %235 = arith.index_cast %234 : i32 to index
    %c0_61 = arith.constant 0 : index
    %236 = vector.load %arg2[%235, %c0_61] : memref<32x1xf32, #tpu.memory_space<vmem>>, vector<1x1xf32>
    %c1_i32_62 = arith.constant 1 : i32
    %237 = arith.addi %232, %c1_i32_62 : i32
    %238 = arith.index_cast %237 : i32 to index
    %239 = memref.load %arg1[%238] : memref<512xi32, #tpu.memory_space<smem>>
    %240 = arith.index_cast %239 : i32 to index
    %c0_63 = arith.constant 0 : index
    %241 = vector.load %arg2[%240, %c0_63] : memref<32x1xf32, #tpu.memory_space<vmem>>, vector<1x1xf32>
    %242 = arith.addf %236, %241 : vector<1x1xf32>
    %c2_i32_64 = arith.constant 2 : i32
    %243 = arith.addi %232, %c2_i32_64 : i32
    %244 = arith.index_cast %243 : i32 to index
    %245 = memref.load %arg1[%244] : memref<512xi32, #tpu.memory_space<smem>>
    %246 = arith.index_cast %245 : i32 to index
    %c0_65 = arith.constant 0 : index
    %247 = vector.load %arg2[%246, %c0_65] : memref<32x1xf32, #tpu.memory_space<vmem>>, vector<1x1xf32>
    %248 = arith.addf %242, %247 : vector<1x1xf32>
    %c3_i32_66 = arith.constant 3 : i32
    %249 = arith.addi %232, %c3_i32_66 : i32
    %250 = arith.index_cast %249 : i32 to index
    %251 = memref.load %arg1[%250] : memref<512xi32, #tpu.memory_space<smem>>
    %252 = arith.index_cast %251 : i32 to index
    %c0_67 = arith.constant 0 : index
    %253 = vector.load %arg2[%252, %c0_67] : memref<32x1xf32, #tpu.memory_space<vmem>>, vector<1x1xf32>
    %254 = arith.addf %248, %253 : vector<1x1xf32>
    %c8_i32_68 = arith.constant 8 : i32
    %255 = vector.broadcast %c8_i32_68 : i32 to vector<1x128xi32>
    %256 = arith.cmpi eq, %1, %255 : vector<1x128xi32>
    %257 = vector.shape_cast %254 : vector<1x1xf32> to vector<1x1xf32>
    %258 = vector.broadcast %257 : vector<1x1xf32> to vector<1x128xf32>
    %259 = arith.select %256, %258, %5 : vector<1x128xi1>, vector<1x128xf32>
    %c36_i32 = arith.constant 36 : i32
    %260 = arith.addi %7, %c36_i32 : i32
    %261 = arith.index_cast %260 : i32 to index
    %262 = memref.load %arg1[%261] : memref<512xi32, #tpu.memory_space<smem>>
    %263 = arith.index_cast %262 : i32 to index
    %c0_69 = arith.constant 0 : index
    %264 = vector.load %arg2[%263, %c0_69] : memref<32x1xf32, #tpu.memory_space<vmem>>, vector<1x1xf32>
    %c1_i32_70 = arith.constant 1 : i32
    %265 = arith.addi %260, %c1_i32_70 : i32
    %266 = arith.index_cast %265 : i32 to index
    %267 = memref.load %arg1[%266] : memref<512xi32, #tpu.memory_space<smem>>
    %268 = arith.index_cast %267 : i32 to index
    %c0_71 = arith.constant 0 : index
    %269 = vector.load %arg2[%268, %c0_71] : memref<32x1xf32, #tpu.memory_space<vmem>>, vector<1x1xf32>
    %270 = arith.addf %264, %269 : vector<1x1xf32>
    %c2_i32_72 = arith.constant 2 : i32
    %271 = arith.addi %260, %c2_i32_72 : i32
    %272 = arith.index_cast %271 : i32 to index
    %273 = memref.load %arg1[%272] : memref<512xi32, #tpu.memory_space<smem>>
    %274 = arith.index_cast %273 : i32 to index
    %c0_73 = arith.constant 0 : index
    %275 = vector.load %arg2[%274, %c0_73] : memref<32x1xf32, #tpu.memory_space<vmem>>, vector<1x1xf32>
    %276 = arith.addf %270, %275 : vector<1x1xf32>
    %c3_i32_74 = arith.constant 3 : i32
    %277 = arith.addi %260, %c3_i32_74 : i32
    %278 = arith.index_cast %277 : i32 to index
    %279 = memref.load %arg1[%278] : memref<512xi32, #tpu.memory_space<smem>>
    %280 = arith.index_cast %279 : i32 to index
    %c0_75 = arith.constant 0 : index
    %281 = vector.load %arg2[%280, %c0_75] : memref<32x1xf32, #tpu.memory_space<vmem>>, vector<1x1xf32>
    %282 = arith.addf %276, %281 : vector<1x1xf32>
    %c9_i32 = arith.constant 9 : i32
    %283 = vector.broadcast %c9_i32 : i32 to vector<1x128xi32>
    %284 = arith.cmpi eq, %1, %283 : vector<1x128xi32>
    %285 = vector.shape_cast %282 : vector<1x1xf32> to vector<1x1xf32>
    %286 = vector.broadcast %285 : vector<1x1xf32> to vector<1x128xf32>
    %287 = arith.select %284, %286, %259 : vector<1x128xi1>, vector<1x128xf32>
    %c40_i32 = arith.constant 40 : i32
    %288 = arith.addi %7, %c40_i32 : i32
    %289 = arith.index_cast %288 : i32 to index
    %290 = memref.load %arg1[%289] : memref<512xi32, #tpu.memory_space<smem>>
    %291 = arith.index_cast %290 : i32 to index
    %c0_76 = arith.constant 0 : index
    %292 = vector.load %arg2[%291, %c0_76] : memref<32x1xf32, #tpu.memory_space<vmem>>, vector<1x1xf32>
    %c1_i32_77 = arith.constant 1 : i32
    %293 = arith.addi %288, %c1_i32_77 : i32
    %294 = arith.index_cast %293 : i32 to index
    %295 = memref.load %arg1[%294] : memref<512xi32, #tpu.memory_space<smem>>
    %296 = arith.index_cast %295 : i32 to index
    %c0_78 = arith.constant 0 : index
    %297 = vector.load %arg2[%296, %c0_78] : memref<32x1xf32, #tpu.memory_space<vmem>>, vector<1x1xf32>
    %298 = arith.addf %292, %297 : vector<1x1xf32>
    %c2_i32_79 = arith.constant 2 : i32
    %299 = arith.addi %288, %c2_i32_79 : i32
    %300 = arith.index_cast %299 : i32 to index
    %301 = memref.load %arg1[%300] : memref<512xi32, #tpu.memory_space<smem>>
    %302 = arith.index_cast %301 : i32 to index
    %c0_80 = arith.constant 0 : index
    %303 = vector.load %arg2[%302, %c0_80] : memref<32x1xf32, #tpu.memory_space<vmem>>, vector<1x1xf32>
    %304 = arith.addf %298, %303 : vector<1x1xf32>
    %c3_i32_81 = arith.constant 3 : i32
    %305 = arith.addi %288, %c3_i32_81 : i32
    %306 = arith.index_cast %305 : i32 to index
    %307 = memref.load %arg1[%306] : memref<512xi32, #tpu.memory_space<smem>>
    %308 = arith.index_cast %307 : i32 to index
    %c0_82 = arith.constant 0 : index
    %309 = vector.load %arg2[%308, %c0_82] : memref<32x1xf32, #tpu.memory_space<vmem>>, vector<1x1xf32>
    %310 = arith.addf %304, %309 : vector<1x1xf32>
    %c10_i32 = arith.constant 10 : i32
    %311 = vector.broadcast %c10_i32 : i32 to vector<1x128xi32>
    %312 = arith.cmpi eq, %1, %311 : vector<1x128xi32>
    %313 = vector.shape_cast %310 : vector<1x1xf32> to vector<1x1xf32>
    %314 = vector.broadcast %313 : vector<1x1xf32> to vector<1x128xf32>
    %315 = arith.select %312, %314, %287 : vector<1x128xi1>, vector<1x128xf32>
    %c44_i32 = arith.constant 44 : i32
    %316 = arith.addi %7, %c44_i32 : i32
    %317 = arith.index_cast %316 : i32 to index
    %318 = memref.load %arg1[%317] : memref<512xi32, #tpu.memory_space<smem>>
    %319 = arith.index_cast %318 : i32 to index
    %c0_83 = arith.constant 0 : index
    %320 = vector.load %arg2[%319, %c0_83] : memref<32x1xf32, #tpu.memory_space<vmem>>, vector<1x1xf32>
    %c1_i32_84 = arith.constant 1 : i32
    %321 = arith.addi %316, %c1_i32_84 : i32
    %322 = arith.index_cast %321 : i32 to index
    %323 = memref.load %arg1[%322] : memref<512xi32, #tpu.memory_space<smem>>
    %324 = arith.index_cast %323 : i32 to index
    %c0_85 = arith.constant 0 : index
    %325 = vector.load %arg2[%324, %c0_85] : memref<32x1xf32, #tpu.memory_space<vmem>>, vector<1x1xf32>
    %326 = arith.addf %320, %325 : vector<1x1xf32>
    %c2_i32_86 = arith.constant 2 : i32
    %327 = arith.addi %316, %c2_i32_86 : i32
    %328 = arith.index_cast %327 : i32 to index
    %329 = memref.load %arg1[%328] : memref<512xi32, #tpu.memory_space<smem>>
    %330 = arith.index_cast %329 : i32 to index
    %c0_87 = arith.constant 0 : index
    %331 = vector.load %arg2[%330, %c0_87] : memref<32x1xf32, #tpu.memory_space<vmem>>, vector<1x1xf32>
    %332 = arith.addf %326, %331 : vector<1x1xf32>
    %c3_i32_88 = arith.constant 3 : i32
    %333 = arith.addi %316, %c3_i32_88 : i32
    %334 = arith.index_cast %333 : i32 to index
    %335 = memref.load %arg1[%334] : memref<512xi32, #tpu.memory_space<smem>>
    %336 = arith.index_cast %335 : i32 to index
    %c0_89 = arith.constant 0 : index
    %337 = vector.load %arg2[%336, %c0_89] : memref<32x1xf32, #tpu.memory_space<vmem>>, vector<1x1xf32>
    %338 = arith.addf %332, %337 : vector<1x1xf32>
    %c11_i32 = arith.constant 11 : i32
    %339 = vector.broadcast %c11_i32 : i32 to vector<1x128xi32>
    %340 = arith.cmpi eq, %1, %339 : vector<1x128xi32>
    %341 = vector.shape_cast %338 : vector<1x1xf32> to vector<1x1xf32>
    %342 = vector.broadcast %341 : vector<1x1xf32> to vector<1x128xf32>
    %343 = arith.select %340, %342, %315 : vector<1x128xi1>, vector<1x128xf32>
    %c48_i32 = arith.constant 48 : i32
    %344 = arith.addi %7, %c48_i32 : i32
    %345 = arith.index_cast %344 : i32 to index
    %346 = memref.load %arg1[%345] : memref<512xi32, #tpu.memory_space<smem>>
    %347 = arith.index_cast %346 : i32 to index
    %c0_90 = arith.constant 0 : index
    %348 = vector.load %arg2[%347, %c0_90] : memref<32x1xf32, #tpu.memory_space<vmem>>, vector<1x1xf32>
    %c1_i32_91 = arith.constant 1 : i32
    %349 = arith.addi %344, %c1_i32_91 : i32
    %350 = arith.index_cast %349 : i32 to index
    %351 = memref.load %arg1[%350] : memref<512xi32, #tpu.memory_space<smem>>
    %352 = arith.index_cast %351 : i32 to index
    %c0_92 = arith.constant 0 : index
    %353 = vector.load %arg2[%352, %c0_92] : memref<32x1xf32, #tpu.memory_space<vmem>>, vector<1x1xf32>
    %354 = arith.addf %348, %353 : vector<1x1xf32>
    %c2_i32_93 = arith.constant 2 : i32
    %355 = arith.addi %344, %c2_i32_93 : i32
    %356 = arith.index_cast %355 : i32 to index
    %357 = memref.load %arg1[%356] : memref<512xi32, #tpu.memory_space<smem>>
    %358 = arith.index_cast %357 : i32 to index
    %c0_94 = arith.constant 0 : index
    %359 = vector.load %arg2[%358, %c0_94] : memref<32x1xf32, #tpu.memory_space<vmem>>, vector<1x1xf32>
    %360 = arith.addf %354, %359 : vector<1x1xf32>
    %c3_i32_95 = arith.constant 3 : i32
    %361 = arith.addi %344, %c3_i32_95 : i32
    %362 = arith.index_cast %361 : i32 to index
    %363 = memref.load %arg1[%362] : memref<512xi32, #tpu.memory_space<smem>>
    %364 = arith.index_cast %363 : i32 to index
    %c0_96 = arith.constant 0 : index
    %365 = vector.load %arg2[%364, %c0_96] : memref<32x1xf32, #tpu.memory_space<vmem>>, vector<1x1xf32>
    %366 = arith.addf %360, %365 : vector<1x1xf32>
    %c12_i32_97 = arith.constant 12 : i32
    %367 = vector.broadcast %c12_i32_97 : i32 to vector<1x128xi32>
    %368 = arith.cmpi eq, %1, %367 : vector<1x128xi32>
    %369 = vector.shape_cast %366 : vector<1x1xf32> to vector<1x1xf32>
    %370 = vector.broadcast %369 : vector<1x1xf32> to vector<1x128xf32>
    %371 = arith.select %368, %370, %343 : vector<1x128xi1>, vector<1x128xf32>
    %c52_i32 = arith.constant 52 : i32
    %372 = arith.addi %7, %c52_i32 : i32
    %373 = arith.index_cast %372 : i32 to index
    %374 = memref.load %arg1[%373] : memref<512xi32, #tpu.memory_space<smem>>
    %375 = arith.index_cast %374 : i32 to index
    %c0_98 = arith.constant 0 : index
    %376 = vector.load %arg2[%375, %c0_98] : memref<32x1xf32, #tpu.memory_space<vmem>>, vector<1x1xf32>
    %c1_i32_99 = arith.constant 1 : i32
    %377 = arith.addi %372, %c1_i32_99 : i32
    %378 = arith.index_cast %377 : i32 to index
    %379 = memref.load %arg1[%378] : memref<512xi32, #tpu.memory_space<smem>>
    %380 = arith.index_cast %379 : i32 to index
    %c0_100 = arith.constant 0 : index
    %381 = vector.load %arg2[%380, %c0_100] : memref<32x1xf32, #tpu.memory_space<vmem>>, vector<1x1xf32>
    %382 = arith.addf %376, %381 : vector<1x1xf32>
    %c2_i32_101 = arith.constant 2 : i32
    %383 = arith.addi %372, %c2_i32_101 : i32
    %384 = arith.index_cast %383 : i32 to index
    %385 = memref.load %arg1[%384] : memref<512xi32, #tpu.memory_space<smem>>
    %386 = arith.index_cast %385 : i32 to index
    %c0_102 = arith.constant 0 : index
    %387 = vector.load %arg2[%386, %c0_102] : memref<32x1xf32, #tpu.memory_space<vmem>>, vector<1x1xf32>
    %388 = arith.addf %382, %387 : vector<1x1xf32>
    %c3_i32_103 = arith.constant 3 : i32
    %389 = arith.addi %372, %c3_i32_103 : i32
    %390 = arith.index_cast %389 : i32 to index
    %391 = memref.load %arg1[%390] : memref<512xi32, #tpu.memory_space<smem>>
    %392 = arith.index_cast %391 : i32 to index
    %c0_104 = arith.constant 0 : index
    %393 = vector.load %arg2[%392, %c0_104] : memref<32x1xf32, #tpu.memory_space<vmem>>, vector<1x1xf32>
    %394 = arith.addf %388, %393 : vector<1x1xf32>
    %c13_i32 = arith.constant 13 : i32
    %395 = vector.broadcast %c13_i32 : i32 to vector<1x128xi32>
    %396 = arith.cmpi eq, %1, %395 : vector<1x128xi32>
    %397 = vector.shape_cast %394 : vector<1x1xf32> to vector<1x1xf32>
    %398 = vector.broadcast %397 : vector<1x1xf32> to vector<1x128xf32>
    %399 = arith.select %396, %398, %371 : vector<1x128xi1>, vector<1x128xf32>
    %c56_i32 = arith.constant 56 : i32
    %400 = arith.addi %7, %c56_i32 : i32
    %401 = arith.index_cast %400 : i32 to index
    %402 = memref.load %arg1[%401] : memref<512xi32, #tpu.memory_space<smem>>
    %403 = arith.index_cast %402 : i32 to index
    %c0_105 = arith.constant 0 : index
    %404 = vector.load %arg2[%403, %c0_105] : memref<32x1xf32, #tpu.memory_space<vmem>>, vector<1x1xf32>
    %c1_i32_106 = arith.constant 1 : i32
    %405 = arith.addi %400, %c1_i32_106 : i32
    %406 = arith.index_cast %405 : i32 to index
    %407 = memref.load %arg1[%406] : memref<512xi32, #tpu.memory_space<smem>>
    %408 = arith.index_cast %407 : i32 to index
    %c0_107 = arith.constant 0 : index
    %409 = vector.load %arg2[%408, %c0_107] : memref<32x1xf32, #tpu.memory_space<vmem>>, vector<1x1xf32>
    %410 = arith.addf %404, %409 : vector<1x1xf32>
    %c2_i32_108 = arith.constant 2 : i32
    %411 = arith.addi %400, %c2_i32_108 : i32
    %412 = arith.index_cast %411 : i32 to index
    %413 = memref.load %arg1[%412] : memref<512xi32, #tpu.memory_space<smem>>
    %414 = arith.index_cast %413 : i32 to index
    %c0_109 = arith.constant 0 : index
    %415 = vector.load %arg2[%414, %c0_109] : memref<32x1xf32, #tpu.memory_space<vmem>>, vector<1x1xf32>
    %416 = arith.addf %410, %415 : vector<1x1xf32>
    %c3_i32_110 = arith.constant 3 : i32
    %417 = arith.addi %400, %c3_i32_110 : i32
    %418 = arith.index_cast %417 : i32 to index
    %419 = memref.load %arg1[%418] : memref<512xi32, #tpu.memory_space<smem>>
    %420 = arith.index_cast %419 : i32 to index
    %c0_111 = arith.constant 0 : index
    %421 = vector.load %arg2[%420, %c0_111] : memref<32x1xf32, #tpu.memory_space<vmem>>, vector<1x1xf32>
    %422 = arith.addf %416, %421 : vector<1x1xf32>
    %c14_i32 = arith.constant 14 : i32
    %423 = vector.broadcast %c14_i32 : i32 to vector<1x128xi32>
    %424 = arith.cmpi eq, %1, %423 : vector<1x128xi32>
    %425 = vector.shape_cast %422 : vector<1x1xf32> to vector<1x1xf32>
    %426 = vector.broadcast %425 : vector<1x1xf32> to vector<1x128xf32>
    %427 = arith.select %424, %426, %399 : vector<1x128xi1>, vector<1x128xf32>
    %c60_i32 = arith.constant 60 : i32
    %428 = arith.addi %7, %c60_i32 : i32
    %429 = arith.index_cast %428 : i32 to index
    %430 = memref.load %arg1[%429] : memref<512xi32, #tpu.memory_space<smem>>
    %431 = arith.index_cast %430 : i32 to index
    %c0_112 = arith.constant 0 : index
    %432 = vector.load %arg2[%431, %c0_112] : memref<32x1xf32, #tpu.memory_space<vmem>>, vector<1x1xf32>
    %c1_i32_113 = arith.constant 1 : i32
    %433 = arith.addi %428, %c1_i32_113 : i32
    %434 = arith.index_cast %433 : i32 to index
    %435 = memref.load %arg1[%434] : memref<512xi32, #tpu.memory_space<smem>>
    %436 = arith.index_cast %435 : i32 to index
    %c0_114 = arith.constant 0 : index
    %437 = vector.load %arg2[%436, %c0_114] : memref<32x1xf32, #tpu.memory_space<vmem>>, vector<1x1xf32>
    %438 = arith.addf %432, %437 : vector<1x1xf32>
    %c2_i32_115 = arith.constant 2 : i32
    %439 = arith.addi %428, %c2_i32_115 : i32
    %440 = arith.index_cast %439 : i32 to index
    %441 = memref.load %arg1[%440] : memref<512xi32, #tpu.memory_space<smem>>
    %442 = arith.index_cast %441 : i32 to index
    %c0_116 = arith.constant 0 : index
    %443 = vector.load %arg2[%442, %c0_116] : memref<32x1xf32, #tpu.memory_space<vmem>>, vector<1x1xf32>
    %444 = arith.addf %438, %443 : vector<1x1xf32>
    %c3_i32_117 = arith.constant 3 : i32
    %445 = arith.addi %428, %c3_i32_117 : i32
    %446 = arith.index_cast %445 : i32 to index
    %447 = memref.load %arg1[%446] : memref<512xi32, #tpu.memory_space<smem>>
    %448 = arith.index_cast %447 : i32 to index
    %c0_118 = arith.constant 0 : index
    %449 = vector.load %arg2[%448, %c0_118] : memref<32x1xf32, #tpu.memory_space<vmem>>, vector<1x1xf32>
    %450 = arith.addf %444, %449 : vector<1x1xf32>
    %c15_i32 = arith.constant 15 : i32
    %451 = vector.broadcast %c15_i32 : i32 to vector<1x128xi32>
    %452 = arith.cmpi eq, %1, %451 : vector<1x128xi32>
    %453 = vector.shape_cast %450 : vector<1x1xf32> to vector<1x1xf32>
    %454 = vector.broadcast %453 : vector<1x1xf32> to vector<1x128xf32>
    %455 = arith.select %452, %454, %427 : vector<1x128xi1>, vector<1x128xf32>
    %c64_i32 = arith.constant 64 : i32
    %456 = arith.addi %7, %c64_i32 : i32
    %457 = arith.index_cast %456 : i32 to index
    %458 = memref.load %arg1[%457] : memref<512xi32, #tpu.memory_space<smem>>
    %459 = arith.index_cast %458 : i32 to index
    %c0_119 = arith.constant 0 : index
    %460 = vector.load %arg2[%459, %c0_119] : memref<32x1xf32, #tpu.memory_space<vmem>>, vector<1x1xf32>
    %c1_i32_120 = arith.constant 1 : i32
    %461 = arith.addi %456, %c1_i32_120 : i32
    %462 = arith.index_cast %461 : i32 to index
    %463 = memref.load %arg1[%462] : memref<512xi32, #tpu.memory_space<smem>>
    %464 = arith.index_cast %463 : i32 to index
    %c0_121 = arith.constant 0 : index
    %465 = vector.load %arg2[%464, %c0_121] : memref<32x1xf32, #tpu.memory_space<vmem>>, vector<1x1xf32>
    %466 = arith.addf %460, %465 : vector<1x1xf32>
    %c2_i32_122 = arith.constant 2 : i32
    %467 = arith.addi %456, %c2_i32_122 : i32
    %468 = arith.index_cast %467 : i32 to index
    %469 = memref.load %arg1[%468] : memref<512xi32, #tpu.memory_space<smem>>
    %470 = arith.index_cast %469 : i32 to index
    %c0_123 = arith.constant 0 : index
    %471 = vector.load %arg2[%470, %c0_123] : memref<32x1xf32, #tpu.memory_space<vmem>>, vector<1x1xf32>
    %472 = arith.addf %466, %471 : vector<1x1xf32>
    %c3_i32_124 = arith.constant 3 : i32
    %473 = arith.addi %456, %c3_i32_124 : i32
    %474 = arith.index_cast %473 : i32 to index
    %475 = memref.load %arg1[%474] : memref<512xi32, #tpu.memory_space<smem>>
    %476 = arith.index_cast %475 : i32 to index
    %c0_125 = arith.constant 0 : index
    %477 = vector.load %arg2[%476, %c0_125] : memref<32x1xf32, #tpu.memory_space<vmem>>, vector<1x1xf32>
    %478 = arith.addf %472, %477 : vector<1x1xf32>
    %c16_i32_126 = arith.constant 16 : i32
    %479 = vector.broadcast %c16_i32_126 : i32 to vector<1x128xi32>
    %480 = arith.cmpi eq, %1, %479 : vector<1x128xi32>
    %481 = vector.shape_cast %478 : vector<1x1xf32> to vector<1x1xf32>
    %482 = vector.broadcast %481 : vector<1x1xf32> to vector<1x128xf32>
    %483 = arith.select %480, %482, %5 : vector<1x128xi1>, vector<1x128xf32>
    %c68_i32 = arith.constant 68 : i32
    %484 = arith.addi %7, %c68_i32 : i32
    %485 = arith.index_cast %484 : i32 to index
    %486 = memref.load %arg1[%485] : memref<512xi32, #tpu.memory_space<smem>>
    %487 = arith.index_cast %486 : i32 to index
    %c0_127 = arith.constant 0 : index
    %488 = vector.load %arg2[%487, %c0_127] : memref<32x1xf32, #tpu.memory_space<vmem>>, vector<1x1xf32>
    %c1_i32_128 = arith.constant 1 : i32
    %489 = arith.addi %484, %c1_i32_128 : i32
    %490 = arith.index_cast %489 : i32 to index
    %491 = memref.load %arg1[%490] : memref<512xi32, #tpu.memory_space<smem>>
    %492 = arith.index_cast %491 : i32 to index
    %c0_129 = arith.constant 0 : index
    %493 = vector.load %arg2[%492, %c0_129] : memref<32x1xf32, #tpu.memory_space<vmem>>, vector<1x1xf32>
    %494 = arith.addf %488, %493 : vector<1x1xf32>
    %c2_i32_130 = arith.constant 2 : i32
    %495 = arith.addi %484, %c2_i32_130 : i32
    %496 = arith.index_cast %495 : i32 to index
    %497 = memref.load %arg1[%496] : memref<512xi32, #tpu.memory_space<smem>>
    %498 = arith.index_cast %497 : i32 to index
    %c0_131 = arith.constant 0 : index
    %499 = vector.load %arg2[%498, %c0_131] : memref<32x1xf32, #tpu.memory_space<vmem>>, vector<1x1xf32>
    %500 = arith.addf %494, %499 : vector<1x1xf32>
    %c3_i32_132 = arith.constant 3 : i32
    %501 = arith.addi %484, %c3_i32_132 : i32
    %502 = arith.index_cast %501 : i32 to index
    %503 = memref.load %arg1[%502] : memref<512xi32, #tpu.memory_space<smem>>
    %504 = arith.index_cast %503 : i32 to index
    %c0_133 = arith.constant 0 : index
    %505 = vector.load %arg2[%504, %c0_133] : memref<32x1xf32, #tpu.memory_space<vmem>>, vector<1x1xf32>
    %506 = arith.addf %500, %505 : vector<1x1xf32>
    %c17_i32 = arith.constant 17 : i32
    %507 = vector.broadcast %c17_i32 : i32 to vector<1x128xi32>
    %508 = arith.cmpi eq, %1, %507 : vector<1x128xi32>
    %509 = vector.shape_cast %506 : vector<1x1xf32> to vector<1x1xf32>
    %510 = vector.broadcast %509 : vector<1x1xf32> to vector<1x128xf32>
    %511 = arith.select %508, %510, %483 : vector<1x128xi1>, vector<1x128xf32>
    %c72_i32 = arith.constant 72 : i32
    %512 = arith.addi %7, %c72_i32 : i32
    %513 = arith.index_cast %512 : i32 to index
    %514 = memref.load %arg1[%513] : memref<512xi32, #tpu.memory_space<smem>>
    %515 = arith.index_cast %514 : i32 to index
    %c0_134 = arith.constant 0 : index
    %516 = vector.load %arg2[%515, %c0_134] : memref<32x1xf32, #tpu.memory_space<vmem>>, vector<1x1xf32>
    %c1_i32_135 = arith.constant 1 : i32
    %517 = arith.addi %512, %c1_i32_135 : i32
    %518 = arith.index_cast %517 : i32 to index
    %519 = memref.load %arg1[%518] : memref<512xi32, #tpu.memory_space<smem>>
    %520 = arith.index_cast %519 : i32 to index
    %c0_136 = arith.constant 0 : index
    %521 = vector.load %arg2[%520, %c0_136] : memref<32x1xf32, #tpu.memory_space<vmem>>, vector<1x1xf32>
    %522 = arith.addf %516, %521 : vector<1x1xf32>
    %c2_i32_137 = arith.constant 2 : i32
    %523 = arith.addi %512, %c2_i32_137 : i32
    %524 = arith.index_cast %523 : i32 to index
    %525 = memref.load %arg1[%524] : memref<512xi32, #tpu.memory_space<smem>>
    %526 = arith.index_cast %525 : i32 to index
    %c0_138 = arith.constant 0 : index
    %527 = vector.load %arg2[%526, %c0_138] : memref<32x1xf32, #tpu.memory_space<vmem>>, vector<1x1xf32>
    %528 = arith.addf %522, %527 : vector<1x1xf32>
    %c3_i32_139 = arith.constant 3 : i32
    %529 = arith.addi %512, %c3_i32_139 : i32
    %530 = arith.index_cast %529 : i32 to index
    %531 = memref.load %arg1[%530] : memref<512xi32, #tpu.memory_space<smem>>
    %532 = arith.index_cast %531 : i32 to index
    %c0_140 = arith.constant 0 : index
    %533 = vector.load %arg2[%532, %c0_140] : memref<32x1xf32, #tpu.memory_space<vmem>>, vector<1x1xf32>
    %534 = arith.addf %528, %533 : vector<1x1xf32>
    %c18_i32 = arith.constant 18 : i32
    %535 = vector.broadcast %c18_i32 : i32 to vector<1x128xi32>
    %536 = arith.cmpi eq, %1, %535 : vector<1x128xi32>
    %537 = vector.shape_cast %534 : vector<1x1xf32> to vector<1x1xf32>
    %538 = vector.broadcast %537 : vector<1x1xf32> to vector<1x128xf32>
    %539 = arith.select %536, %538, %511 : vector<1x128xi1>, vector<1x128xf32>
    %c76_i32 = arith.constant 76 : i32
    %540 = arith.addi %7, %c76_i32 : i32
    %541 = arith.index_cast %540 : i32 to index
    %542 = memref.load %arg1[%541] : memref<512xi32, #tpu.memory_space<smem>>
    %543 = arith.index_cast %542 : i32 to index
    %c0_141 = arith.constant 0 : index
    %544 = vector.load %arg2[%543, %c0_141] : memref<32x1xf32, #tpu.memory_space<vmem>>, vector<1x1xf32>
    %c1_i32_142 = arith.constant 1 : i32
    %545 = arith.addi %540, %c1_i32_142 : i32
    %546 = arith.index_cast %545 : i32 to index
    %547 = memref.load %arg1[%546] : memref<512xi32, #tpu.memory_space<smem>>
    %548 = arith.index_cast %547 : i32 to index
    %c0_143 = arith.constant 0 : index
    %549 = vector.load %arg2[%548, %c0_143] : memref<32x1xf32, #tpu.memory_space<vmem>>, vector<1x1xf32>
    %550 = arith.addf %544, %549 : vector<1x1xf32>
    %c2_i32_144 = arith.constant 2 : i32
    %551 = arith.addi %540, %c2_i32_144 : i32
    %552 = arith.index_cast %551 : i32 to index
    %553 = memref.load %arg1[%552] : memref<512xi32, #tpu.memory_space<smem>>
    %554 = arith.index_cast %553 : i32 to index
    %c0_145 = arith.constant 0 : index
    %555 = vector.load %arg2[%554, %c0_145] : memref<32x1xf32, #tpu.memory_space<vmem>>, vector<1x1xf32>
    %556 = arith.addf %550, %555 : vector<1x1xf32>
    %c3_i32_146 = arith.constant 3 : i32
    %557 = arith.addi %540, %c3_i32_146 : i32
    %558 = arith.index_cast %557 : i32 to index
    %559 = memref.load %arg1[%558] : memref<512xi32, #tpu.memory_space<smem>>
    %560 = arith.index_cast %559 : i32 to index
    %c0_147 = arith.constant 0 : index
    %561 = vector.load %arg2[%560, %c0_147] : memref<32x1xf32, #tpu.memory_space<vmem>>, vector<1x1xf32>
    %562 = arith.addf %556, %561 : vector<1x1xf32>
    %c19_i32 = arith.constant 19 : i32
    %563 = vector.broadcast %c19_i32 : i32 to vector<1x128xi32>
    %564 = arith.cmpi eq, %1, %563 : vector<1x128xi32>
    %565 = vector.shape_cast %562 : vector<1x1xf32> to vector<1x1xf32>
    %566 = vector.broadcast %565 : vector<1x1xf32> to vector<1x128xf32>
    %567 = arith.select %564, %566, %539 : vector<1x128xi1>, vector<1x128xf32>
    %c80_i32 = arith.constant 80 : i32
    %568 = arith.addi %7, %c80_i32 : i32
    %569 = arith.index_cast %568 : i32 to index
    %570 = memref.load %arg1[%569] : memref<512xi32, #tpu.memory_space<smem>>
    %571 = arith.index_cast %570 : i32 to index
    %c0_148 = arith.constant 0 : index
    %572 = vector.load %arg2[%571, %c0_148] : memref<32x1xf32, #tpu.memory_space<vmem>>, vector<1x1xf32>
    %c1_i32_149 = arith.constant 1 : i32
    %573 = arith.addi %568, %c1_i32_149 : i32
    %574 = arith.index_cast %573 : i32 to index
    %575 = memref.load %arg1[%574] : memref<512xi32, #tpu.memory_space<smem>>
    %576 = arith.index_cast %575 : i32 to index
    %c0_150 = arith.constant 0 : index
    %577 = vector.load %arg2[%576, %c0_150] : memref<32x1xf32, #tpu.memory_space<vmem>>, vector<1x1xf32>
    %578 = arith.addf %572, %577 : vector<1x1xf32>
    %c2_i32_151 = arith.constant 2 : i32
    %579 = arith.addi %568, %c2_i32_151 : i32
    %580 = arith.index_cast %579 : i32 to index
    %581 = memref.load %arg1[%580] : memref<512xi32, #tpu.memory_space<smem>>
    %582 = arith.index_cast %581 : i32 to index
    %c0_152 = arith.constant 0 : index
    %583 = vector.load %arg2[%582, %c0_152] : memref<32x1xf32, #tpu.memory_space<vmem>>, vector<1x1xf32>
    %584 = arith.addf %578, %583 : vector<1x1xf32>
    %c3_i32_153 = arith.constant 3 : i32
    %585 = arith.addi %568, %c3_i32_153 : i32
    %586 = arith.index_cast %585 : i32 to index
    %587 = memref.load %arg1[%586] : memref<512xi32, #tpu.memory_space<smem>>
    %588 = arith.index_cast %587 : i32 to index
    %c0_154 = arith.constant 0 : index
    %589 = vector.load %arg2[%588, %c0_154] : memref<32x1xf32, #tpu.memory_space<vmem>>, vector<1x1xf32>
    %590 = arith.addf %584, %589 : vector<1x1xf32>
    %c20_i32_155 = arith.constant 20 : i32
    %591 = vector.broadcast %c20_i32_155 : i32 to vector<1x128xi32>
    %592 = arith.cmpi eq, %1, %591 : vector<1x128xi32>
    %593 = vector.shape_cast %590 : vector<1x1xf32> to vector<1x1xf32>
    %594 = vector.broadcast %593 : vector<1x1xf32> to vector<1x128xf32>
    %595 = arith.select %592, %594, %567 : vector<1x128xi1>, vector<1x128xf32>
    %c84_i32 = arith.constant 84 : i32
    %596 = arith.addi %7, %c84_i32 : i32
    %597 = arith.index_cast %596 : i32 to index
    %598 = memref.load %arg1[%597] : memref<512xi32, #tpu.memory_space<smem>>
    %599 = arith.index_cast %598 : i32 to index
    %c0_156 = arith.constant 0 : index
    %600 = vector.load %arg2[%599, %c0_156] : memref<32x1xf32, #tpu.memory_space<vmem>>, vector<1x1xf32>
    %c1_i32_157 = arith.constant 1 : i32
    %601 = arith.addi %596, %c1_i32_157 : i32
    %602 = arith.index_cast %601 : i32 to index
    %603 = memref.load %arg1[%602] : memref<512xi32, #tpu.memory_space<smem>>
    %604 = arith.index_cast %603 : i32 to index
    %c0_158 = arith.constant 0 : index
    %605 = vector.load %arg2[%604, %c0_158] : memref<32x1xf32, #tpu.memory_space<vmem>>, vector<1x1xf32>
    %606 = arith.addf %600, %605 : vector<1x1xf32>
    %c2_i32_159 = arith.constant 2 : i32
    %607 = arith.addi %596, %c2_i32_159 : i32
    %608 = arith.index_cast %607 : i32 to index
    %609 = memref.load %arg1[%608] : memref<512xi32, #tpu.memory_space<smem>>
    %610 = arith.index_cast %609 : i32 to index
    %c0_160 = arith.constant 0 : index
    %611 = vector.load %arg2[%610, %c0_160] : memref<32x1xf32, #tpu.memory_space<vmem>>, vector<1x1xf32>
    %612 = arith.addf %606, %611 : vector<1x1xf32>
    %c3_i32_161 = arith.constant 3 : i32
    %613 = arith.addi %596, %c3_i32_161 : i32
    %614 = arith.index_cast %613 : i32 to index
    %615 = memref.load %arg1[%614] : memref<512xi32, #tpu.memory_space<smem>>
    %616 = arith.index_cast %615 : i32 to index
    %c0_162 = arith.constant 0 : index
    %617 = vector.load %arg2[%616, %c0_162] : memref<32x1xf32, #tpu.memory_space<vmem>>, vector<1x1xf32>
    %618 = arith.addf %612, %617 : vector<1x1xf32>
    %c21_i32 = arith.constant 21 : i32
    %619 = vector.broadcast %c21_i32 : i32 to vector<1x128xi32>
    %620 = arith.cmpi eq, %1, %619 : vector<1x128xi32>
    %621 = vector.shape_cast %618 : vector<1x1xf32> to vector<1x1xf32>
    %622 = vector.broadcast %621 : vector<1x1xf32> to vector<1x128xf32>
    %623 = arith.select %620, %622, %595 : vector<1x128xi1>, vector<1x128xf32>
    %c88_i32 = arith.constant 88 : i32
    %624 = arith.addi %7, %c88_i32 : i32
    %625 = arith.index_cast %624 : i32 to index
    %626 = memref.load %arg1[%625] : memref<512xi32, #tpu.memory_space<smem>>
    %627 = arith.index_cast %626 : i32 to index
    %c0_163 = arith.constant 0 : index
    %628 = vector.load %arg2[%627, %c0_163] : memref<32x1xf32, #tpu.memory_space<vmem>>, vector<1x1xf32>
    %c1_i32_164 = arith.constant 1 : i32
    %629 = arith.addi %624, %c1_i32_164 : i32
    %630 = arith.index_cast %629 : i32 to index
    %631 = memref.load %arg1[%630] : memref<512xi32, #tpu.memory_space<smem>>
    %632 = arith.index_cast %631 : i32 to index
    %c0_165 = arith.constant 0 : index
    %633 = vector.load %arg2[%632, %c0_165] : memref<32x1xf32, #tpu.memory_space<vmem>>, vector<1x1xf32>
    %634 = arith.addf %628, %633 : vector<1x1xf32>
    %c2_i32_166 = arith.constant 2 : i32
    %635 = arith.addi %624, %c2_i32_166 : i32
    %636 = arith.index_cast %635 : i32 to index
    %637 = memref.load %arg1[%636] : memref<512xi32, #tpu.memory_space<smem>>
    %638 = arith.index_cast %637 : i32 to index
    %c0_167 = arith.constant 0 : index
    %639 = vector.load %arg2[%638, %c0_167] : memref<32x1xf32, #tpu.memory_space<vmem>>, vector<1x1xf32>
    %640 = arith.addf %634, %639 : vector<1x1xf32>
    %c3_i32_168 = arith.constant 3 : i32
    %641 = arith.addi %624, %c3_i32_168 : i32
    %642 = arith.index_cast %641 : i32 to index
    %643 = memref.load %arg1[%642] : memref<512xi32, #tpu.memory_space<smem>>
    %644 = arith.index_cast %643 : i32 to index
    %c0_169 = arith.constant 0 : index
    %645 = vector.load %arg2[%644, %c0_169] : memref<32x1xf32, #tpu.memory_space<vmem>>, vector<1x1xf32>
    %646 = arith.addf %640, %645 : vector<1x1xf32>
    %c22_i32 = arith.constant 22 : i32
    %647 = vector.broadcast %c22_i32 : i32 to vector<1x128xi32>
    %648 = arith.cmpi eq, %1, %647 : vector<1x128xi32>
    %649 = vector.shape_cast %646 : vector<1x1xf32> to vector<1x1xf32>
    %650 = vector.broadcast %649 : vector<1x1xf32> to vector<1x128xf32>
    %651 = arith.select %648, %650, %623 : vector<1x128xi1>, vector<1x128xf32>
    %c92_i32 = arith.constant 92 : i32
    %652 = arith.addi %7, %c92_i32 : i32
    %653 = arith.index_cast %652 : i32 to index
    %654 = memref.load %arg1[%653] : memref<512xi32, #tpu.memory_space<smem>>
    %655 = arith.index_cast %654 : i32 to index
    %c0_170 = arith.constant 0 : index
    %656 = vector.load %arg2[%655, %c0_170] : memref<32x1xf32, #tpu.memory_space<vmem>>, vector<1x1xf32>
    %c1_i32_171 = arith.constant 1 : i32
    %657 = arith.addi %652, %c1_i32_171 : i32
    %658 = arith.index_cast %657 : i32 to index
    %659 = memref.load %arg1[%658] : memref<512xi32, #tpu.memory_space<smem>>
    %660 = arith.index_cast %659 : i32 to index
    %c0_172 = arith.constant 0 : index
    %661 = vector.load %arg2[%660, %c0_172] : memref<32x1xf32, #tpu.memory_space<vmem>>, vector<1x1xf32>
    %662 = arith.addf %656, %661 : vector<1x1xf32>
    %c2_i32_173 = arith.constant 2 : i32
    %663 = arith.addi %652, %c2_i32_173 : i32
    %664 = arith.index_cast %663 : i32 to index
    %665 = memref.load %arg1[%664] : memref<512xi32, #tpu.memory_space<smem>>
    %666 = arith.index_cast %665 : i32 to index
    %c0_174 = arith.constant 0 : index
    %667 = vector.load %arg2[%666, %c0_174] : memref<32x1xf32, #tpu.memory_space<vmem>>, vector<1x1xf32>
    %668 = arith.addf %662, %667 : vector<1x1xf32>
    %c3_i32_175 = arith.constant 3 : i32
    %669 = arith.addi %652, %c3_i32_175 : i32
    %670 = arith.index_cast %669 : i32 to index
    %671 = memref.load %arg1[%670] : memref<512xi32, #tpu.memory_space<smem>>
    %672 = arith.index_cast %671 : i32 to index
    %c0_176 = arith.constant 0 : index
    %673 = vector.load %arg2[%672, %c0_176] : memref<32x1xf32, #tpu.memory_space<vmem>>, vector<1x1xf32>
    %674 = arith.addf %668, %673 : vector<1x1xf32>
    %c23_i32 = arith.constant 23 : i32
    %675 = vector.broadcast %c23_i32 : i32 to vector<1x128xi32>
    %676 = arith.cmpi eq, %1, %675 : vector<1x128xi32>
    %677 = vector.shape_cast %674 : vector<1x1xf32> to vector<1x1xf32>
    %678 = vector.broadcast %677 : vector<1x1xf32> to vector<1x128xf32>
    %679 = arith.select %676, %678, %651 : vector<1x128xi1>, vector<1x128xf32>
    %c96_i32 = arith.constant 96 : i32
    %680 = arith.addi %7, %c96_i32 : i32
    %681 = arith.index_cast %680 : i32 to index
    %682 = memref.load %arg1[%681] : memref<512xi32, #tpu.memory_space<smem>>
    %683 = arith.index_cast %682 : i32 to index
    %c0_177 = arith.constant 0 : index
    %684 = vector.load %arg2[%683, %c0_177] : memref<32x1xf32, #tpu.memory_space<vmem>>, vector<1x1xf32>
    %c1_i32_178 = arith.constant 1 : i32
    %685 = arith.addi %680, %c1_i32_178 : i32
    %686 = arith.index_cast %685 : i32 to index
    %687 = memref.load %arg1[%686] : memref<512xi32, #tpu.memory_space<smem>>
    %688 = arith.index_cast %687 : i32 to index
    %c0_179 = arith.constant 0 : index
    %689 = vector.load %arg2[%688, %c0_179] : memref<32x1xf32, #tpu.memory_space<vmem>>, vector<1x1xf32>
    %690 = arith.addf %684, %689 : vector<1x1xf32>
    %c2_i32_180 = arith.constant 2 : i32
    %691 = arith.addi %680, %c2_i32_180 : i32
    %692 = arith.index_cast %691 : i32 to index
    %693 = memref.load %arg1[%692] : memref<512xi32, #tpu.memory_space<smem>>
    %694 = arith.index_cast %693 : i32 to index
    %c0_181 = arith.constant 0 : index
    %695 = vector.load %arg2[%694, %c0_181] : memref<32x1xf32, #tpu.memory_space<vmem>>, vector<1x1xf32>
    %696 = arith.addf %690, %695 : vector<1x1xf32>
    %c3_i32_182 = arith.constant 3 : i32
    %697 = arith.addi %680, %c3_i32_182 : i32
    %698 = arith.index_cast %697 : i32 to index
    %699 = memref.load %arg1[%698] : memref<512xi32, #tpu.memory_space<smem>>
    %700 = arith.index_cast %699 : i32 to index
    %c0_183 = arith.constant 0 : index
    %701 = vector.load %arg2[%700, %c0_183] : memref<32x1xf32, #tpu.memory_space<vmem>>, vector<1x1xf32>
    %702 = arith.addf %696, %701 : vector<1x1xf32>
    %c24_i32_184 = arith.constant 24 : i32
    %703 = vector.broadcast %c24_i32_184 : i32 to vector<1x128xi32>
    %704 = arith.cmpi eq, %1, %703 : vector<1x128xi32>
    %705 = vector.shape_cast %702 : vector<1x1xf32> to vector<1x1xf32>
    %706 = vector.broadcast %705 : vector<1x1xf32> to vector<1x128xf32>
    %707 = arith.select %704, %706, %5 : vector<1x128xi1>, vector<1x128xf32>
    %c100_i32 = arith.constant 100 : i32
    %708 = arith.addi %7, %c100_i32 : i32
    %709 = arith.index_cast %708 : i32 to index
    %710 = memref.load %arg1[%709] : memref<512xi32, #tpu.memory_space<smem>>
    %711 = arith.index_cast %710 : i32 to index
    %c0_185 = arith.constant 0 : index
    %712 = vector.load %arg2[%711, %c0_185] : memref<32x1xf32, #tpu.memory_space<vmem>>, vector<1x1xf32>
    %c1_i32_186 = arith.constant 1 : i32
    %713 = arith.addi %708, %c1_i32_186 : i32
    %714 = arith.index_cast %713 : i32 to index
    %715 = memref.load %arg1[%714] : memref<512xi32, #tpu.memory_space<smem>>
    %716 = arith.index_cast %715 : i32 to index
    %c0_187 = arith.constant 0 : index
    %717 = vector.load %arg2[%716, %c0_187] : memref<32x1xf32, #tpu.memory_space<vmem>>, vector<1x1xf32>
    %718 = arith.addf %712, %717 : vector<1x1xf32>
    %c2_i32_188 = arith.constant 2 : i32
    %719 = arith.addi %708, %c2_i32_188 : i32
    %720 = arith.index_cast %719 : i32 to index
    %721 = memref.load %arg1[%720] : memref<512xi32, #tpu.memory_space<smem>>
    %722 = arith.index_cast %721 : i32 to index
    %c0_189 = arith.constant 0 : index
    %723 = vector.load %arg2[%722, %c0_189] : memref<32x1xf32, #tpu.memory_space<vmem>>, vector<1x1xf32>
    %724 = arith.addf %718, %723 : vector<1x1xf32>
    %c3_i32_190 = arith.constant 3 : i32
    %725 = arith.addi %708, %c3_i32_190 : i32
    %726 = arith.index_cast %725 : i32 to index
    %727 = memref.load %arg1[%726] : memref<512xi32, #tpu.memory_space<smem>>
    %728 = arith.index_cast %727 : i32 to index
    %c0_191 = arith.constant 0 : index
    %729 = vector.load %arg2[%728, %c0_191] : memref<32x1xf32, #tpu.memory_space<vmem>>, vector<1x1xf32>
    %730 = arith.addf %724, %729 : vector<1x1xf32>
    %c25_i32 = arith.constant 25 : i32
    %731 = vector.broadcast %c25_i32 : i32 to vector<1x128xi32>
    %732 = arith.cmpi eq, %1, %731 : vector<1x128xi32>
    %733 = vector.shape_cast %730 : vector<1x1xf32> to vector<1x1xf32>
    %734 = vector.broadcast %733 : vector<1x1xf32> to vector<1x128xf32>
    %735 = arith.select %732, %734, %707 : vector<1x128xi1>, vector<1x128xf32>
    %c104_i32 = arith.constant 104 : i32
    %736 = arith.addi %7, %c104_i32 : i32
    %737 = arith.index_cast %736 : i32 to index
    %738 = memref.load %arg1[%737] : memref<512xi32, #tpu.memory_space<smem>>
    %739 = arith.index_cast %738 : i32 to index
    %c0_192 = arith.constant 0 : index
    %740 = vector.load %arg2[%739, %c0_192] : memref<32x1xf32, #tpu.memory_space<vmem>>, vector<1x1xf32>
    %c1_i32_193 = arith.constant 1 : i32
    %741 = arith.addi %736, %c1_i32_193 : i32
    %742 = arith.index_cast %741 : i32 to index
    %743 = memref.load %arg1[%742] : memref<512xi32, #tpu.memory_space<smem>>
    %744 = arith.index_cast %743 : i32 to index
    %c0_194 = arith.constant 0 : index
    %745 = vector.load %arg2[%744, %c0_194] : memref<32x1xf32, #tpu.memory_space<vmem>>, vector<1x1xf32>
    %746 = arith.addf %740, %745 : vector<1x1xf32>
    %c2_i32_195 = arith.constant 2 : i32
    %747 = arith.addi %736, %c2_i32_195 : i32
    %748 = arith.index_cast %747 : i32 to index
    %749 = memref.load %arg1[%748] : memref<512xi32, #tpu.memory_space<smem>>
    %750 = arith.index_cast %749 : i32 to index
    %c0_196 = arith.constant 0 : index
    %751 = vector.load %arg2[%750, %c0_196] : memref<32x1xf32, #tpu.memory_space<vmem>>, vector<1x1xf32>
    %752 = arith.addf %746, %751 : vector<1x1xf32>
    %c3_i32_197 = arith.constant 3 : i32
    %753 = arith.addi %736, %c3_i32_197 : i32
    %754 = arith.index_cast %753 : i32 to index
    %755 = memref.load %arg1[%754] : memref<512xi32, #tpu.memory_space<smem>>
    %756 = arith.index_cast %755 : i32 to index
    %c0_198 = arith.constant 0 : index
    %757 = vector.load %arg2[%756, %c0_198] : memref<32x1xf32, #tpu.memory_space<vmem>>, vector<1x1xf32>
    %758 = arith.addf %752, %757 : vector<1x1xf32>
    %c26_i32 = arith.constant 26 : i32
    %759 = vector.broadcast %c26_i32 : i32 to vector<1x128xi32>
    %760 = arith.cmpi eq, %1, %759 : vector<1x128xi32>
    %761 = vector.shape_cast %758 : vector<1x1xf32> to vector<1x1xf32>
    %762 = vector.broadcast %761 : vector<1x1xf32> to vector<1x128xf32>
    %763 = arith.select %760, %762, %735 : vector<1x128xi1>, vector<1x128xf32>
    %c108_i32 = arith.constant 108 : i32
    %764 = arith.addi %7, %c108_i32 : i32
    %765 = arith.index_cast %764 : i32 to index
    %766 = memref.load %arg1[%765] : memref<512xi32, #tpu.memory_space<smem>>
    %767 = arith.index_cast %766 : i32 to index
    %c0_199 = arith.constant 0 : index
    %768 = vector.load %arg2[%767, %c0_199] : memref<32x1xf32, #tpu.memory_space<vmem>>, vector<1x1xf32>
    %c1_i32_200 = arith.constant 1 : i32
    %769 = arith.addi %764, %c1_i32_200 : i32
    %770 = arith.index_cast %769 : i32 to index
    %771 = memref.load %arg1[%770] : memref<512xi32, #tpu.memory_space<smem>>
    %772 = arith.index_cast %771 : i32 to index
    %c0_201 = arith.constant 0 : index
    %773 = vector.load %arg2[%772, %c0_201] : memref<32x1xf32, #tpu.memory_space<vmem>>, vector<1x1xf32>
    %774 = arith.addf %768, %773 : vector<1x1xf32>
    %c2_i32_202 = arith.constant 2 : i32
    %775 = arith.addi %764, %c2_i32_202 : i32
    %776 = arith.index_cast %775 : i32 to index
    %777 = memref.load %arg1[%776] : memref<512xi32, #tpu.memory_space<smem>>
    %778 = arith.index_cast %777 : i32 to index
    %c0_203 = arith.constant 0 : index
    %779 = vector.load %arg2[%778, %c0_203] : memref<32x1xf32, #tpu.memory_space<vmem>>, vector<1x1xf32>
    %780 = arith.addf %774, %779 : vector<1x1xf32>
    %c3_i32_204 = arith.constant 3 : i32
    %781 = arith.addi %764, %c3_i32_204 : i32
    %782 = arith.index_cast %781 : i32 to index
    %783 = memref.load %arg1[%782] : memref<512xi32, #tpu.memory_space<smem>>
    %784 = arith.index_cast %783 : i32 to index
    %c0_205 = arith.constant 0 : index
    %785 = vector.load %arg2[%784, %c0_205] : memref<32x1xf32, #tpu.memory_space<vmem>>, vector<1x1xf32>
    %786 = arith.addf %780, %785 : vector<1x1xf32>
    %c27_i32 = arith.constant 27 : i32
    %787 = vector.broadcast %c27_i32 : i32 to vector<1x128xi32>
    %788 = arith.cmpi eq, %1, %787 : vector<1x128xi32>
    %789 = vector.shape_cast %786 : vector<1x1xf32> to vector<1x1xf32>
    %790 = vector.broadcast %789 : vector<1x1xf32> to vector<1x128xf32>
    %791 = arith.select %788, %790, %763 : vector<1x128xi1>, vector<1x128xf32>
    %c112_i32 = arith.constant 112 : i32
    %792 = arith.addi %7, %c112_i32 : i32
    %793 = arith.index_cast %792 : i32 to index
    %794 = memref.load %arg1[%793] : memref<512xi32, #tpu.memory_space<smem>>
    %795 = arith.index_cast %794 : i32 to index
    %c0_206 = arith.constant 0 : index
    %796 = vector.load %arg2[%795, %c0_206] : memref<32x1xf32, #tpu.memory_space<vmem>>, vector<1x1xf32>
    %c1_i32_207 = arith.constant 1 : i32
    %797 = arith.addi %792, %c1_i32_207 : i32
    %798 = arith.index_cast %797 : i32 to index
    %799 = memref.load %arg1[%798] : memref<512xi32, #tpu.memory_space<smem>>
    %800 = arith.index_cast %799 : i32 to index
    %c0_208 = arith.constant 0 : index
    %801 = vector.load %arg2[%800, %c0_208] : memref<32x1xf32, #tpu.memory_space<vmem>>, vector<1x1xf32>
    %802 = arith.addf %796, %801 : vector<1x1xf32>
    %c2_i32_209 = arith.constant 2 : i32
    %803 = arith.addi %792, %c2_i32_209 : i32
    %804 = arith.index_cast %803 : i32 to index
    %805 = memref.load %arg1[%804] : memref<512xi32, #tpu.memory_space<smem>>
    %806 = arith.index_cast %805 : i32 to index
    %c0_210 = arith.constant 0 : index
    %807 = vector.load %arg2[%806, %c0_210] : memref<32x1xf32, #tpu.memory_space<vmem>>, vector<1x1xf32>
    %808 = arith.addf %802, %807 : vector<1x1xf32>
    %c3_i32_211 = arith.constant 3 : i32
    %809 = arith.addi %792, %c3_i32_211 : i32
    %810 = arith.index_cast %809 : i32 to index
    %811 = memref.load %arg1[%810] : memref<512xi32, #tpu.memory_space<smem>>
    %812 = arith.index_cast %811 : i32 to index
    %c0_212 = arith.constant 0 : index
    %813 = vector.load %arg2[%812, %c0_212] : memref<32x1xf32, #tpu.memory_space<vmem>>, vector<1x1xf32>
    %814 = arith.addf %808, %813 : vector<1x1xf32>
    %c28_i32_213 = arith.constant 28 : i32
    %815 = vector.broadcast %c28_i32_213 : i32 to vector<1x128xi32>
    %816 = arith.cmpi eq, %1, %815 : vector<1x128xi32>
    %817 = vector.shape_cast %814 : vector<1x1xf32> to vector<1x1xf32>
    %818 = vector.broadcast %817 : vector<1x1xf32> to vector<1x128xf32>
    %819 = arith.select %816, %818, %791 : vector<1x128xi1>, vector<1x128xf32>
    %c116_i32 = arith.constant 116 : i32
    %820 = arith.addi %7, %c116_i32 : i32
    %821 = arith.index_cast %820 : i32 to index
    %822 = memref.load %arg1[%821] : memref<512xi32, #tpu.memory_space<smem>>
    %823 = arith.index_cast %822 : i32 to index
    %c0_214 = arith.constant 0 : index
    %824 = vector.load %arg2[%823, %c0_214] : memref<32x1xf32, #tpu.memory_space<vmem>>, vector<1x1xf32>
    %c1_i32_215 = arith.constant 1 : i32
    %825 = arith.addi %820, %c1_i32_215 : i32
    %826 = arith.index_cast %825 : i32 to index
    %827 = memref.load %arg1[%826] : memref<512xi32, #tpu.memory_space<smem>>
    %828 = arith.index_cast %827 : i32 to index
    %c0_216 = arith.constant 0 : index
    %829 = vector.load %arg2[%828, %c0_216] : memref<32x1xf32, #tpu.memory_space<vmem>>, vector<1x1xf32>
    %830 = arith.addf %824, %829 : vector<1x1xf32>
    %c2_i32_217 = arith.constant 2 : i32
    %831 = arith.addi %820, %c2_i32_217 : i32
    %832 = arith.index_cast %831 : i32 to index
    %833 = memref.load %arg1[%832] : memref<512xi32, #tpu.memory_space<smem>>
    %834 = arith.index_cast %833 : i32 to index
    %c0_218 = arith.constant 0 : index
    %835 = vector.load %arg2[%834, %c0_218] : memref<32x1xf32, #tpu.memory_space<vmem>>, vector<1x1xf32>
    %836 = arith.addf %830, %835 : vector<1x1xf32>
    %c3_i32_219 = arith.constant 3 : i32
    %837 = arith.addi %820, %c3_i32_219 : i32
    %838 = arith.index_cast %837 : i32 to index
    %839 = memref.load %arg1[%838] : memref<512xi32, #tpu.memory_space<smem>>
    %840 = arith.index_cast %839 : i32 to index
    %c0_220 = arith.constant 0 : index
    %841 = vector.load %arg2[%840, %c0_220] : memref<32x1xf32, #tpu.memory_space<vmem>>, vector<1x1xf32>
    %842 = arith.addf %836, %841 : vector<1x1xf32>
    %c29_i32 = arith.constant 29 : i32
    %843 = vector.broadcast %c29_i32 : i32 to vector<1x128xi32>
    %844 = arith.cmpi eq, %1, %843 : vector<1x128xi32>
    %845 = vector.shape_cast %842 : vector<1x1xf32> to vector<1x1xf32>
    %846 = vector.broadcast %845 : vector<1x1xf32> to vector<1x128xf32>
    %847 = arith.select %844, %846, %819 : vector<1x128xi1>, vector<1x128xf32>
    %c120_i32 = arith.constant 120 : i32
    %848 = arith.addi %7, %c120_i32 : i32
    %849 = arith.index_cast %848 : i32 to index
    %850 = memref.load %arg1[%849] : memref<512xi32, #tpu.memory_space<smem>>
    %851 = arith.index_cast %850 : i32 to index
    %c0_221 = arith.constant 0 : index
    %852 = vector.load %arg2[%851, %c0_221] : memref<32x1xf32, #tpu.memory_space<vmem>>, vector<1x1xf32>
    %c1_i32_222 = arith.constant 1 : i32
    %853 = arith.addi %848, %c1_i32_222 : i32
    %854 = arith.index_cast %853 : i32 to index
    %855 = memref.load %arg1[%854] : memref<512xi32, #tpu.memory_space<smem>>
    %856 = arith.index_cast %855 : i32 to index
    %c0_223 = arith.constant 0 : index
    %857 = vector.load %arg2[%856, %c0_223] : memref<32x1xf32, #tpu.memory_space<vmem>>, vector<1x1xf32>
    %858 = arith.addf %852, %857 : vector<1x1xf32>
    %c2_i32_224 = arith.constant 2 : i32
    %859 = arith.addi %848, %c2_i32_224 : i32
    %860 = arith.index_cast %859 : i32 to index
    %861 = memref.load %arg1[%860] : memref<512xi32, #tpu.memory_space<smem>>
    %862 = arith.index_cast %861 : i32 to index
    %c0_225 = arith.constant 0 : index
    %863 = vector.load %arg2[%862, %c0_225] : memref<32x1xf32, #tpu.memory_space<vmem>>, vector<1x1xf32>
    %864 = arith.addf %858, %863 : vector<1x1xf32>
    %c3_i32_226 = arith.constant 3 : i32
    %865 = arith.addi %848, %c3_i32_226 : i32
    %866 = arith.index_cast %865 : i32 to index
    %867 = memref.load %arg1[%866] : memref<512xi32, #tpu.memory_space<smem>>
    %868 = arith.index_cast %867 : i32 to index
    %c0_227 = arith.constant 0 : index
    %869 = vector.load %arg2[%868, %c0_227] : memref<32x1xf32, #tpu.memory_space<vmem>>, vector<1x1xf32>
    %870 = arith.addf %864, %869 : vector<1x1xf32>
    %c30_i32 = arith.constant 30 : i32
    %871 = vector.broadcast %c30_i32 : i32 to vector<1x128xi32>
    %872 = arith.cmpi eq, %1, %871 : vector<1x128xi32>
    %873 = vector.shape_cast %870 : vector<1x1xf32> to vector<1x1xf32>
    %874 = vector.broadcast %873 : vector<1x1xf32> to vector<1x128xf32>
    %875 = arith.select %872, %874, %847 : vector<1x128xi1>, vector<1x128xf32>
    %c124_i32 = arith.constant 124 : i32
    %876 = arith.addi %7, %c124_i32 : i32
    %877 = arith.index_cast %876 : i32 to index
    %878 = memref.load %arg1[%877] : memref<512xi32, #tpu.memory_space<smem>>
    %879 = arith.index_cast %878 : i32 to index
    %c0_228 = arith.constant 0 : index
    %880 = vector.load %arg2[%879, %c0_228] : memref<32x1xf32, #tpu.memory_space<vmem>>, vector<1x1xf32>
    %c1_i32_229 = arith.constant 1 : i32
    %881 = arith.addi %876, %c1_i32_229 : i32
    %882 = arith.index_cast %881 : i32 to index
    %883 = memref.load %arg1[%882] : memref<512xi32, #tpu.memory_space<smem>>
    %884 = arith.index_cast %883 : i32 to index
    %c0_230 = arith.constant 0 : index
    %885 = vector.load %arg2[%884, %c0_230] : memref<32x1xf32, #tpu.memory_space<vmem>>, vector<1x1xf32>
    %886 = arith.addf %880, %885 : vector<1x1xf32>
    %c2_i32_231 = arith.constant 2 : i32
    %887 = arith.addi %876, %c2_i32_231 : i32
    %888 = arith.index_cast %887 : i32 to index
    %889 = memref.load %arg1[%888] : memref<512xi32, #tpu.memory_space<smem>>
    %890 = arith.index_cast %889 : i32 to index
    %c0_232 = arith.constant 0 : index
    %891 = vector.load %arg2[%890, %c0_232] : memref<32x1xf32, #tpu.memory_space<vmem>>, vector<1x1xf32>
    %892 = arith.addf %886, %891 : vector<1x1xf32>
    %c3_i32_233 = arith.constant 3 : i32
    %893 = arith.addi %876, %c3_i32_233 : i32
    %894 = arith.index_cast %893 : i32 to index
    %895 = memref.load %arg1[%894] : memref<512xi32, #tpu.memory_space<smem>>
    %896 = arith.index_cast %895 : i32 to index
    %c0_234 = arith.constant 0 : index
    %897 = vector.load %arg2[%896, %c0_234] : memref<32x1xf32, #tpu.memory_space<vmem>>, vector<1x1xf32>
    %898 = arith.addf %892, %897 : vector<1x1xf32>
    %c31_i32 = arith.constant 31 : i32
    %899 = vector.broadcast %c31_i32 : i32 to vector<1x128xi32>
    %900 = arith.cmpi eq, %1, %899 : vector<1x128xi32>
    %901 = vector.shape_cast %898 : vector<1x1xf32> to vector<1x1xf32>
    %902 = vector.broadcast %901 : vector<1x1xf32> to vector<1x128xf32>
    %903 = arith.select %900, %902, %875 : vector<1x128xi1>, vector<1x128xf32>
    %c128_i32 = arith.constant 128 : i32
    %904 = arith.addi %7, %c128_i32 : i32
    %905 = arith.index_cast %904 : i32 to index
    %906 = memref.load %arg1[%905] : memref<512xi32, #tpu.memory_space<smem>>
    %907 = arith.index_cast %906 : i32 to index
    %c0_235 = arith.constant 0 : index
    %908 = vector.load %arg2[%907, %c0_235] : memref<32x1xf32, #tpu.memory_space<vmem>>, vector<1x1xf32>
    %c1_i32_236 = arith.constant 1 : i32
    %909 = arith.addi %904, %c1_i32_236 : i32
    %910 = arith.index_cast %909 : i32 to index
    %911 = memref.load %arg1[%910] : memref<512xi32, #tpu.memory_space<smem>>
    %912 = arith.index_cast %911 : i32 to index
    %c0_237 = arith.constant 0 : index
    %913 = vector.load %arg2[%912, %c0_237] : memref<32x1xf32, #tpu.memory_space<vmem>>, vector<1x1xf32>
    %914 = arith.addf %908, %913 : vector<1x1xf32>
    %c2_i32_238 = arith.constant 2 : i32
    %915 = arith.addi %904, %c2_i32_238 : i32
    %916 = arith.index_cast %915 : i32 to index
    %917 = memref.load %arg1[%916] : memref<512xi32, #tpu.memory_space<smem>>
    %918 = arith.index_cast %917 : i32 to index
    %c0_239 = arith.constant 0 : index
    %919 = vector.load %arg2[%918, %c0_239] : memref<32x1xf32, #tpu.memory_space<vmem>>, vector<1x1xf32>
    %920 = arith.addf %914, %919 : vector<1x1xf32>
    %c3_i32_240 = arith.constant 3 : i32
    %921 = arith.addi %904, %c3_i32_240 : i32
    %922 = arith.index_cast %921 : i32 to index
    %923 = memref.load %arg1[%922] : memref<512xi32, #tpu.memory_space<smem>>
    %924 = arith.index_cast %923 : i32 to index
    %c0_241 = arith.constant 0 : index
    %925 = vector.load %arg2[%924, %c0_241] : memref<32x1xf32, #tpu.memory_space<vmem>>, vector<1x1xf32>
    %926 = arith.addf %920, %925 : vector<1x1xf32>
    %c32_i32_242 = arith.constant 32 : i32
    %927 = vector.broadcast %c32_i32_242 : i32 to vector<1x128xi32>
    %928 = arith.cmpi eq, %1, %927 : vector<1x128xi32>
    %929 = vector.shape_cast %926 : vector<1x1xf32> to vector<1x1xf32>
    %930 = vector.broadcast %929 : vector<1x1xf32> to vector<1x128xf32>
    %931 = arith.select %928, %930, %5 : vector<1x128xi1>, vector<1x128xf32>
    %c132_i32 = arith.constant 132 : i32
    %932 = arith.addi %7, %c132_i32 : i32
    %933 = arith.index_cast %932 : i32 to index
    %934 = memref.load %arg1[%933] : memref<512xi32, #tpu.memory_space<smem>>
    %935 = arith.index_cast %934 : i32 to index
    %c0_243 = arith.constant 0 : index
    %936 = vector.load %arg2[%935, %c0_243] : memref<32x1xf32, #tpu.memory_space<vmem>>, vector<1x1xf32>
    %c1_i32_244 = arith.constant 1 : i32
    %937 = arith.addi %932, %c1_i32_244 : i32
    %938 = arith.index_cast %937 : i32 to index
    %939 = memref.load %arg1[%938] : memref<512xi32, #tpu.memory_space<smem>>
    %940 = arith.index_cast %939 : i32 to index
    %c0_245 = arith.constant 0 : index
    %941 = vector.load %arg2[%940, %c0_245] : memref<32x1xf32, #tpu.memory_space<vmem>>, vector<1x1xf32>
    %942 = arith.addf %936, %941 : vector<1x1xf32>
    %c2_i32_246 = arith.constant 2 : i32
    %943 = arith.addi %932, %c2_i32_246 : i32
    %944 = arith.index_cast %943 : i32 to index
    %945 = memref.load %arg1[%944] : memref<512xi32, #tpu.memory_space<smem>>
    %946 = arith.index_cast %945 : i32 to index
    %c0_247 = arith.constant 0 : index
    %947 = vector.load %arg2[%946, %c0_247] : memref<32x1xf32, #tpu.memory_space<vmem>>, vector<1x1xf32>
    %948 = arith.addf %942, %947 : vector<1x1xf32>
    %c3_i32_248 = arith.constant 3 : i32
    %949 = arith.addi %932, %c3_i32_248 : i32
    %950 = arith.index_cast %949 : i32 to index
    %951 = memref.load %arg1[%950] : memref<512xi32, #tpu.memory_space<smem>>
    %952 = arith.index_cast %951 : i32 to index
    %c0_249 = arith.constant 0 : index
    %953 = vector.load %arg2[%952, %c0_249] : memref<32x1xf32, #tpu.memory_space<vmem>>, vector<1x1xf32>
    %954 = arith.addf %948, %953 : vector<1x1xf32>
    %c33_i32 = arith.constant 33 : i32
    %955 = vector.broadcast %c33_i32 : i32 to vector<1x128xi32>
    %956 = arith.cmpi eq, %1, %955 : vector<1x128xi32>
    %957 = vector.shape_cast %954 : vector<1x1xf32> to vector<1x1xf32>
    %958 = vector.broadcast %957 : vector<1x1xf32> to vector<1x128xf32>
    %959 = arith.select %956, %958, %931 : vector<1x128xi1>, vector<1x128xf32>
    %c136_i32 = arith.constant 136 : i32
    %960 = arith.addi %7, %c136_i32 : i32
    %961 = arith.index_cast %960 : i32 to index
    %962 = memref.load %arg1[%961] : memref<512xi32, #tpu.memory_space<smem>>
    %963 = arith.index_cast %962 : i32 to index
    %c0_250 = arith.constant 0 : index
    %964 = vector.load %arg2[%963, %c0_250] : memref<32x1xf32, #tpu.memory_space<vmem>>, vector<1x1xf32>
    %c1_i32_251 = arith.constant 1 : i32
    %965 = arith.addi %960, %c1_i32_251 : i32
    %966 = arith.index_cast %965 : i32 to index
    %967 = memref.load %arg1[%966] : memref<512xi32, #tpu.memory_space<smem>>
    %968 = arith.index_cast %967 : i32 to index
    %c0_252 = arith.constant 0 : index
    %969 = vector.load %arg2[%968, %c0_252] : memref<32x1xf32, #tpu.memory_space<vmem>>, vector<1x1xf32>
    %970 = arith.addf %964, %969 : vector<1x1xf32>
    %c2_i32_253 = arith.constant 2 : i32
    %971 = arith.addi %960, %c2_i32_253 : i32
    %972 = arith.index_cast %971 : i32 to index
    %973 = memref.load %arg1[%972] : memref<512xi32, #tpu.memory_space<smem>>
    %974 = arith.index_cast %973 : i32 to index
    %c0_254 = arith.constant 0 : index
    %975 = vector.load %arg2[%974, %c0_254] : memref<32x1xf32, #tpu.memory_space<vmem>>, vector<1x1xf32>
    %976 = arith.addf %970, %975 : vector<1x1xf32>
    %c3_i32_255 = arith.constant 3 : i32
    %977 = arith.addi %960, %c3_i32_255 : i32
    %978 = arith.index_cast %977 : i32 to index
    %979 = memref.load %arg1[%978] : memref<512xi32, #tpu.memory_space<smem>>
    %980 = arith.index_cast %979 : i32 to index
    %c0_256 = arith.constant 0 : index
    %981 = vector.load %arg2[%980, %c0_256] : memref<32x1xf32, #tpu.memory_space<vmem>>, vector<1x1xf32>
    %982 = arith.addf %976, %981 : vector<1x1xf32>
    %c34_i32 = arith.constant 34 : i32
    %983 = vector.broadcast %c34_i32 : i32 to vector<1x128xi32>
    %984 = arith.cmpi eq, %1, %983 : vector<1x128xi32>
    %985 = vector.shape_cast %982 : vector<1x1xf32> to vector<1x1xf32>
    %986 = vector.broadcast %985 : vector<1x1xf32> to vector<1x128xf32>
    %987 = arith.select %984, %986, %959 : vector<1x128xi1>, vector<1x128xf32>
    %c140_i32 = arith.constant 140 : i32
    %988 = arith.addi %7, %c140_i32 : i32
    %989 = arith.index_cast %988 : i32 to index
    %990 = memref.load %arg1[%989] : memref<512xi32, #tpu.memory_space<smem>>
    %991 = arith.index_cast %990 : i32 to index
    %c0_257 = arith.constant 0 : index
    %992 = vector.load %arg2[%991, %c0_257] : memref<32x1xf32, #tpu.memory_space<vmem>>, vector<1x1xf32>
    %c1_i32_258 = arith.constant 1 : i32
    %993 = arith.addi %988, %c1_i32_258 : i32
    %994 = arith.index_cast %993 : i32 to index
    %995 = memref.load %arg1[%994] : memref<512xi32, #tpu.memory_space<smem>>
    %996 = arith.index_cast %995 : i32 to index
    %c0_259 = arith.constant 0 : index
    %997 = vector.load %arg2[%996, %c0_259] : memref<32x1xf32, #tpu.memory_space<vmem>>, vector<1x1xf32>
    %998 = arith.addf %992, %997 : vector<1x1xf32>
    %c2_i32_260 = arith.constant 2 : i32
    %999 = arith.addi %988, %c2_i32_260 : i32
    %1000 = arith.index_cast %999 : i32 to index
    %1001 = memref.load %arg1[%1000] : memref<512xi32, #tpu.memory_space<smem>>
    %1002 = arith.index_cast %1001 : i32 to index
    %c0_261 = arith.constant 0 : index
    %1003 = vector.load %arg2[%1002, %c0_261] : memref<32x1xf32, #tpu.memory_space<vmem>>, vector<1x1xf32>
    %1004 = arith.addf %998, %1003 : vector<1x1xf32>
    %c3_i32_262 = arith.constant 3 : i32
    %1005 = arith.addi %988, %c3_i32_262 : i32
    %1006 = arith.index_cast %1005 : i32 to index
    %1007 = memref.load %arg1[%1006] : memref<512xi32, #tpu.memory_space<smem>>
    %1008 = arith.index_cast %1007 : i32 to index
    %c0_263 = arith.constant 0 : index
    %1009 = vector.load %arg2[%1008, %c0_263] : memref<32x1xf32, #tpu.memory_space<vmem>>, vector<1x1xf32>
    %1010 = arith.addf %1004, %1009 : vector<1x1xf32>
    %c35_i32 = arith.constant 35 : i32
    %1011 = vector.broadcast %c35_i32 : i32 to vector<1x128xi32>
    %1012 = arith.cmpi eq, %1, %1011 : vector<1x128xi32>
    %1013 = vector.shape_cast %1010 : vector<1x1xf32> to vector<1x1xf32>
    %1014 = vector.broadcast %1013 : vector<1x1xf32> to vector<1x128xf32>
    %1015 = arith.select %1012, %1014, %987 : vector<1x128xi1>, vector<1x128xf32>
    %c144_i32 = arith.constant 144 : i32
    %1016 = arith.addi %7, %c144_i32 : i32
    %1017 = arith.index_cast %1016 : i32 to index
    %1018 = memref.load %arg1[%1017] : memref<512xi32, #tpu.memory_space<smem>>
    %1019 = arith.index_cast %1018 : i32 to index
    %c0_264 = arith.constant 0 : index
    %1020 = vector.load %arg2[%1019, %c0_264] : memref<32x1xf32, #tpu.memory_space<vmem>>, vector<1x1xf32>
    %c1_i32_265 = arith.constant 1 : i32
    %1021 = arith.addi %1016, %c1_i32_265 : i32
    %1022 = arith.index_cast %1021 : i32 to index
    %1023 = memref.load %arg1[%1022] : memref<512xi32, #tpu.memory_space<smem>>
    %1024 = arith.index_cast %1023 : i32 to index
    %c0_266 = arith.constant 0 : index
    %1025 = vector.load %arg2[%1024, %c0_266] : memref<32x1xf32, #tpu.memory_space<vmem>>, vector<1x1xf32>
    %1026 = arith.addf %1020, %1025 : vector<1x1xf32>
    %c2_i32_267 = arith.constant 2 : i32
    %1027 = arith.addi %1016, %c2_i32_267 : i32
    %1028 = arith.index_cast %1027 : i32 to index
    %1029 = memref.load %arg1[%1028] : memref<512xi32, #tpu.memory_space<smem>>
    %1030 = arith.index_cast %1029 : i32 to index
    %c0_268 = arith.constant 0 : index
    %1031 = vector.load %arg2[%1030, %c0_268] : memref<32x1xf32, #tpu.memory_space<vmem>>, vector<1x1xf32>
    %1032 = arith.addf %1026, %1031 : vector<1x1xf32>
    %c3_i32_269 = arith.constant 3 : i32
    %1033 = arith.addi %1016, %c3_i32_269 : i32
    %1034 = arith.index_cast %1033 : i32 to index
    %1035 = memref.load %arg1[%1034] : memref<512xi32, #tpu.memory_space<smem>>
    %1036 = arith.index_cast %1035 : i32 to index
    %c0_270 = arith.constant 0 : index
    %1037 = vector.load %arg2[%1036, %c0_270] : memref<32x1xf32, #tpu.memory_space<vmem>>, vector<1x1xf32>
    %1038 = arith.addf %1032, %1037 : vector<1x1xf32>
    %c36_i32_271 = arith.constant 36 : i32
    %1039 = vector.broadcast %c36_i32_271 : i32 to vector<1x128xi32>
    %1040 = arith.cmpi eq, %1, %1039 : vector<1x128xi32>
    %1041 = vector.shape_cast %1038 : vector<1x1xf32> to vector<1x1xf32>
    %1042 = vector.broadcast %1041 : vector<1x1xf32> to vector<1x128xf32>
    %1043 = arith.select %1040, %1042, %1015 : vector<1x128xi1>, vector<1x128xf32>
    %c148_i32 = arith.constant 148 : i32
    %1044 = arith.addi %7, %c148_i32 : i32
    %1045 = arith.index_cast %1044 : i32 to index
    %1046 = memref.load %arg1[%1045] : memref<512xi32, #tpu.memory_space<smem>>
    %1047 = arith.index_cast %1046 : i32 to index
    %c0_272 = arith.constant 0 : index
    %1048 = vector.load %arg2[%1047, %c0_272] : memref<32x1xf32, #tpu.memory_space<vmem>>, vector<1x1xf32>
    %c1_i32_273 = arith.constant 1 : i32
    %1049 = arith.addi %1044, %c1_i32_273 : i32
    %1050 = arith.index_cast %1049 : i32 to index
    %1051 = memref.load %arg1[%1050] : memref<512xi32, #tpu.memory_space<smem>>
    %1052 = arith.index_cast %1051 : i32 to index
    %c0_274 = arith.constant 0 : index
    %1053 = vector.load %arg2[%1052, %c0_274] : memref<32x1xf32, #tpu.memory_space<vmem>>, vector<1x1xf32>
    %1054 = arith.addf %1048, %1053 : vector<1x1xf32>
    %c2_i32_275 = arith.constant 2 : i32
    %1055 = arith.addi %1044, %c2_i32_275 : i32
    %1056 = arith.index_cast %1055 : i32 to index
    %1057 = memref.load %arg1[%1056] : memref<512xi32, #tpu.memory_space<smem>>
    %1058 = arith.index_cast %1057 : i32 to index
    %c0_276 = arith.constant 0 : index
    %1059 = vector.load %arg2[%1058, %c0_276] : memref<32x1xf32, #tpu.memory_space<vmem>>, vector<1x1xf32>
    %1060 = arith.addf %1054, %1059 : vector<1x1xf32>
    %c3_i32_277 = arith.constant 3 : i32
    %1061 = arith.addi %1044, %c3_i32_277 : i32
    %1062 = arith.index_cast %1061 : i32 to index
    %1063 = memref.load %arg1[%1062] : memref<512xi32, #tpu.memory_space<smem>>
    %1064 = arith.index_cast %1063 : i32 to index
    %c0_278 = arith.constant 0 : index
    %1065 = vector.load %arg2[%1064, %c0_278] : memref<32x1xf32, #tpu.memory_space<vmem>>, vector<1x1xf32>
    %1066 = arith.addf %1060, %1065 : vector<1x1xf32>
    %c37_i32 = arith.constant 37 : i32
    %1067 = vector.broadcast %c37_i32 : i32 to vector<1x128xi32>
    %1068 = arith.cmpi eq, %1, %1067 : vector<1x128xi32>
    %1069 = vector.shape_cast %1066 : vector<1x1xf32> to vector<1x1xf32>
    %1070 = vector.broadcast %1069 : vector<1x1xf32> to vector<1x128xf32>
    %1071 = arith.select %1068, %1070, %1043 : vector<1x128xi1>, vector<1x128xf32>
    %c152_i32 = arith.constant 152 : i32
    %1072 = arith.addi %7, %c152_i32 : i32
    %1073 = arith.index_cast %1072 : i32 to index
    %1074 = memref.load %arg1[%1073] : memref<512xi32, #tpu.memory_space<smem>>
    %1075 = arith.index_cast %1074 : i32 to index
    %c0_279 = arith.constant 0 : index
    %1076 = vector.load %arg2[%1075, %c0_279] : memref<32x1xf32, #tpu.memory_space<vmem>>, vector<1x1xf32>
    %c1_i32_280 = arith.constant 1 : i32
    %1077 = arith.addi %1072, %c1_i32_280 : i32
    %1078 = arith.index_cast %1077 : i32 to index
    %1079 = memref.load %arg1[%1078] : memref<512xi32, #tpu.memory_space<smem>>
    %1080 = arith.index_cast %1079 : i32 to index
    %c0_281 = arith.constant 0 : index
    %1081 = vector.load %arg2[%1080, %c0_281] : memref<32x1xf32, #tpu.memory_space<vmem>>, vector<1x1xf32>
    %1082 = arith.addf %1076, %1081 : vector<1x1xf32>
    %c2_i32_282 = arith.constant 2 : i32
    %1083 = arith.addi %1072, %c2_i32_282 : i32
    %1084 = arith.index_cast %1083 : i32 to index
    %1085 = memref.load %arg1[%1084] : memref<512xi32, #tpu.memory_space<smem>>
    %1086 = arith.index_cast %1085 : i32 to index
    %c0_283 = arith.constant 0 : index
    %1087 = vector.load %arg2[%1086, %c0_283] : memref<32x1xf32, #tpu.memory_space<vmem>>, vector<1x1xf32>
    %1088 = arith.addf %1082, %1087 : vector<1x1xf32>
    %c3_i32_284 = arith.constant 3 : i32
    %1089 = arith.addi %1072, %c3_i32_284 : i32
    %1090 = arith.index_cast %1089 : i32 to index
    %1091 = memref.load %arg1[%1090] : memref<512xi32, #tpu.memory_space<smem>>
    %1092 = arith.index_cast %1091 : i32 to index
    %c0_285 = arith.constant 0 : index
    %1093 = vector.load %arg2[%1092, %c0_285] : memref<32x1xf32, #tpu.memory_space<vmem>>, vector<1x1xf32>
    %1094 = arith.addf %1088, %1093 : vector<1x1xf32>
    %c38_i32 = arith.constant 38 : i32
    %1095 = vector.broadcast %c38_i32 : i32 to vector<1x128xi32>
    %1096 = arith.cmpi eq, %1, %1095 : vector<1x128xi32>
    %1097 = vector.shape_cast %1094 : vector<1x1xf32> to vector<1x1xf32>
    %1098 = vector.broadcast %1097 : vector<1x1xf32> to vector<1x128xf32>
    %1099 = arith.select %1096, %1098, %1071 : vector<1x128xi1>, vector<1x128xf32>
    %c156_i32 = arith.constant 156 : i32
    %1100 = arith.addi %7, %c156_i32 : i32
    %1101 = arith.index_cast %1100 : i32 to index
    %1102 = memref.load %arg1[%1101] : memref<512xi32, #tpu.memory_space<smem>>
    %1103 = arith.index_cast %1102 : i32 to index
    %c0_286 = arith.constant 0 : index
    %1104 = vector.load %arg2[%1103, %c0_286] : memref<32x1xf32, #tpu.memory_space<vmem>>, vector<1x1xf32>
    %c1_i32_287 = arith.constant 1 : i32
    %1105 = arith.addi %1100, %c1_i32_287 : i32
    %1106 = arith.index_cast %1105 : i32 to index
    %1107 = memref.load %arg1[%1106] : memref<512xi32, #tpu.memory_space<smem>>
    %1108 = arith.index_cast %1107 : i32 to index
    %c0_288 = arith.constant 0 : index
    %1109 = vector.load %arg2[%1108, %c0_288] : memref<32x1xf32, #tpu.memory_space<vmem>>, vector<1x1xf32>
    %1110 = arith.addf %1104, %1109 : vector<1x1xf32>
    %c2_i32_289 = arith.constant 2 : i32
    %1111 = arith.addi %1100, %c2_i32_289 : i32
    %1112 = arith.index_cast %1111 : i32 to index
    %1113 = memref.load %arg1[%1112] : memref<512xi32, #tpu.memory_space<smem>>
    %1114 = arith.index_cast %1113 : i32 to index
    %c0_290 = arith.constant 0 : index
    %1115 = vector.load %arg2[%1114, %c0_290] : memref<32x1xf32, #tpu.memory_space<vmem>>, vector<1x1xf32>
    %1116 = arith.addf %1110, %1115 : vector<1x1xf32>
    %c3_i32_291 = arith.constant 3 : i32
    %1117 = arith.addi %1100, %c3_i32_291 : i32
    %1118 = arith.index_cast %1117 : i32 to index
    %1119 = memref.load %arg1[%1118] : memref<512xi32, #tpu.memory_space<smem>>
    %1120 = arith.index_cast %1119 : i32 to index
    %c0_292 = arith.constant 0 : index
    %1121 = vector.load %arg2[%1120, %c0_292] : memref<32x1xf32, #tpu.memory_space<vmem>>, vector<1x1xf32>
    %1122 = arith.addf %1116, %1121 : vector<1x1xf32>
    %c39_i32 = arith.constant 39 : i32
    %1123 = vector.broadcast %c39_i32 : i32 to vector<1x128xi32>
    %1124 = arith.cmpi eq, %1, %1123 : vector<1x128xi32>
    %1125 = vector.shape_cast %1122 : vector<1x1xf32> to vector<1x1xf32>
    %1126 = vector.broadcast %1125 : vector<1x1xf32> to vector<1x128xf32>
    %1127 = arith.select %1124, %1126, %1099 : vector<1x128xi1>, vector<1x128xf32>
    %c160_i32 = arith.constant 160 : i32
    %1128 = arith.addi %7, %c160_i32 : i32
    %1129 = arith.index_cast %1128 : i32 to index
    %1130 = memref.load %arg1[%1129] : memref<512xi32, #tpu.memory_space<smem>>
    %1131 = arith.index_cast %1130 : i32 to index
    %c0_293 = arith.constant 0 : index
    %1132 = vector.load %arg2[%1131, %c0_293] : memref<32x1xf32, #tpu.memory_space<vmem>>, vector<1x1xf32>
    %c1_i32_294 = arith.constant 1 : i32
    %1133 = arith.addi %1128, %c1_i32_294 : i32
    %1134 = arith.index_cast %1133 : i32 to index
    %1135 = memref.load %arg1[%1134] : memref<512xi32, #tpu.memory_space<smem>>
    %1136 = arith.index_cast %1135 : i32 to index
    %c0_295 = arith.constant 0 : index
    %1137 = vector.load %arg2[%1136, %c0_295] : memref<32x1xf32, #tpu.memory_space<vmem>>, vector<1x1xf32>
    %1138 = arith.addf %1132, %1137 : vector<1x1xf32>
    %c2_i32_296 = arith.constant 2 : i32
    %1139 = arith.addi %1128, %c2_i32_296 : i32
    %1140 = arith.index_cast %1139 : i32 to index
    %1141 = memref.load %arg1[%1140] : memref<512xi32, #tpu.memory_space<smem>>
    %1142 = arith.index_cast %1141 : i32 to index
    %c0_297 = arith.constant 0 : index
    %1143 = vector.load %arg2[%1142, %c0_297] : memref<32x1xf32, #tpu.memory_space<vmem>>, vector<1x1xf32>
    %1144 = arith.addf %1138, %1143 : vector<1x1xf32>
    %c3_i32_298 = arith.constant 3 : i32
    %1145 = arith.addi %1128, %c3_i32_298 : i32
    %1146 = arith.index_cast %1145 : i32 to index
    %1147 = memref.load %arg1[%1146] : memref<512xi32, #tpu.memory_space<smem>>
    %1148 = arith.index_cast %1147 : i32 to index
    %c0_299 = arith.constant 0 : index
    %1149 = vector.load %arg2[%1148, %c0_299] : memref<32x1xf32, #tpu.memory_space<vmem>>, vector<1x1xf32>
    %1150 = arith.addf %1144, %1149 : vector<1x1xf32>
    %c40_i32_300 = arith.constant 40 : i32
    %1151 = vector.broadcast %c40_i32_300 : i32 to vector<1x128xi32>
    %1152 = arith.cmpi eq, %1, %1151 : vector<1x128xi32>
    %1153 = vector.shape_cast %1150 : vector<1x1xf32> to vector<1x1xf32>
    %1154 = vector.broadcast %1153 : vector<1x1xf32> to vector<1x128xf32>
    %1155 = arith.select %1152, %1154, %5 : vector<1x128xi1>, vector<1x128xf32>
    %c164_i32 = arith.constant 164 : i32
    %1156 = arith.addi %7, %c164_i32 : i32
    %1157 = arith.index_cast %1156 : i32 to index
    %1158 = memref.load %arg1[%1157] : memref<512xi32, #tpu.memory_space<smem>>
    %1159 = arith.index_cast %1158 : i32 to index
    %c0_301 = arith.constant 0 : index
    %1160 = vector.load %arg2[%1159, %c0_301] : memref<32x1xf32, #tpu.memory_space<vmem>>, vector<1x1xf32>
    %c1_i32_302 = arith.constant 1 : i32
    %1161 = arith.addi %1156, %c1_i32_302 : i32
    %1162 = arith.index_cast %1161 : i32 to index
    %1163 = memref.load %arg1[%1162] : memref<512xi32, #tpu.memory_space<smem>>
    %1164 = arith.index_cast %1163 : i32 to index
    %c0_303 = arith.constant 0 : index
    %1165 = vector.load %arg2[%1164, %c0_303] : memref<32x1xf32, #tpu.memory_space<vmem>>, vector<1x1xf32>
    %1166 = arith.addf %1160, %1165 : vector<1x1xf32>
    %c2_i32_304 = arith.constant 2 : i32
    %1167 = arith.addi %1156, %c2_i32_304 : i32
    %1168 = arith.index_cast %1167 : i32 to index
    %1169 = memref.load %arg1[%1168] : memref<512xi32, #tpu.memory_space<smem>>
    %1170 = arith.index_cast %1169 : i32 to index
    %c0_305 = arith.constant 0 : index
    %1171 = vector.load %arg2[%1170, %c0_305] : memref<32x1xf32, #tpu.memory_space<vmem>>, vector<1x1xf32>
    %1172 = arith.addf %1166, %1171 : vector<1x1xf32>
    %c3_i32_306 = arith.constant 3 : i32
    %1173 = arith.addi %1156, %c3_i32_306 : i32
    %1174 = arith.index_cast %1173 : i32 to index
    %1175 = memref.load %arg1[%1174] : memref<512xi32, #tpu.memory_space<smem>>
    %1176 = arith.index_cast %1175 : i32 to index
    %c0_307 = arith.constant 0 : index
    %1177 = vector.load %arg2[%1176, %c0_307] : memref<32x1xf32, #tpu.memory_space<vmem>>, vector<1x1xf32>
    %1178 = arith.addf %1172, %1177 : vector<1x1xf32>
    %c41_i32 = arith.constant 41 : i32
    %1179 = vector.broadcast %c41_i32 : i32 to vector<1x128xi32>
    %1180 = arith.cmpi eq, %1, %1179 : vector<1x128xi32>
    %1181 = vector.shape_cast %1178 : vector<1x1xf32> to vector<1x1xf32>
    %1182 = vector.broadcast %1181 : vector<1x1xf32> to vector<1x128xf32>
    %1183 = arith.select %1180, %1182, %1155 : vector<1x128xi1>, vector<1x128xf32>
    %c168_i32 = arith.constant 168 : i32
    %1184 = arith.addi %7, %c168_i32 : i32
    %1185 = arith.index_cast %1184 : i32 to index
    %1186 = memref.load %arg1[%1185] : memref<512xi32, #tpu.memory_space<smem>>
    %1187 = arith.index_cast %1186 : i32 to index
    %c0_308 = arith.constant 0 : index
    %1188 = vector.load %arg2[%1187, %c0_308] : memref<32x1xf32, #tpu.memory_space<vmem>>, vector<1x1xf32>
    %c1_i32_309 = arith.constant 1 : i32
    %1189 = arith.addi %1184, %c1_i32_309 : i32
    %1190 = arith.index_cast %1189 : i32 to index
    %1191 = memref.load %arg1[%1190] : memref<512xi32, #tpu.memory_space<smem>>
    %1192 = arith.index_cast %1191 : i32 to index
    %c0_310 = arith.constant 0 : index
    %1193 = vector.load %arg2[%1192, %c0_310] : memref<32x1xf32, #tpu.memory_space<vmem>>, vector<1x1xf32>
    %1194 = arith.addf %1188, %1193 : vector<1x1xf32>
    %c2_i32_311 = arith.constant 2 : i32
    %1195 = arith.addi %1184, %c2_i32_311 : i32
    %1196 = arith.index_cast %1195 : i32 to index
    %1197 = memref.load %arg1[%1196] : memref<512xi32, #tpu.memory_space<smem>>
    %1198 = arith.index_cast %1197 : i32 to index
    %c0_312 = arith.constant 0 : index
    %1199 = vector.load %arg2[%1198, %c0_312] : memref<32x1xf32, #tpu.memory_space<vmem>>, vector<1x1xf32>
    %1200 = arith.addf %1194, %1199 : vector<1x1xf32>
    %c3_i32_313 = arith.constant 3 : i32
    %1201 = arith.addi %1184, %c3_i32_313 : i32
    %1202 = arith.index_cast %1201 : i32 to index
    %1203 = memref.load %arg1[%1202] : memref<512xi32, #tpu.memory_space<smem>>
    %1204 = arith.index_cast %1203 : i32 to index
    %c0_314 = arith.constant 0 : index
    %1205 = vector.load %arg2[%1204, %c0_314] : memref<32x1xf32, #tpu.memory_space<vmem>>, vector<1x1xf32>
    %1206 = arith.addf %1200, %1205 : vector<1x1xf32>
    %c42_i32 = arith.constant 42 : i32
    %1207 = vector.broadcast %c42_i32 : i32 to vector<1x128xi32>
    %1208 = arith.cmpi eq, %1, %1207 : vector<1x128xi32>
    %1209 = vector.shape_cast %1206 : vector<1x1xf32> to vector<1x1xf32>
    %1210 = vector.broadcast %1209 : vector<1x1xf32> to vector<1x128xf32>
    %1211 = arith.select %1208, %1210, %1183 : vector<1x128xi1>, vector<1x128xf32>
    %c172_i32 = arith.constant 172 : i32
    %1212 = arith.addi %7, %c172_i32 : i32
    %1213 = arith.index_cast %1212 : i32 to index
    %1214 = memref.load %arg1[%1213] : memref<512xi32, #tpu.memory_space<smem>>
    %1215 = arith.index_cast %1214 : i32 to index
    %c0_315 = arith.constant 0 : index
    %1216 = vector.load %arg2[%1215, %c0_315] : memref<32x1xf32, #tpu.memory_space<vmem>>, vector<1x1xf32>
    %c1_i32_316 = arith.constant 1 : i32
    %1217 = arith.addi %1212, %c1_i32_316 : i32
    %1218 = arith.index_cast %1217 : i32 to index
    %1219 = memref.load %arg1[%1218] : memref<512xi32, #tpu.memory_space<smem>>
    %1220 = arith.index_cast %1219 : i32 to index
    %c0_317 = arith.constant 0 : index
    %1221 = vector.load %arg2[%1220, %c0_317] : memref<32x1xf32, #tpu.memory_space<vmem>>, vector<1x1xf32>
    %1222 = arith.addf %1216, %1221 : vector<1x1xf32>
    %c2_i32_318 = arith.constant 2 : i32
    %1223 = arith.addi %1212, %c2_i32_318 : i32
    %1224 = arith.index_cast %1223 : i32 to index
    %1225 = memref.load %arg1[%1224] : memref<512xi32, #tpu.memory_space<smem>>
    %1226 = arith.index_cast %1225 : i32 to index
    %c0_319 = arith.constant 0 : index
    %1227 = vector.load %arg2[%1226, %c0_319] : memref<32x1xf32, #tpu.memory_space<vmem>>, vector<1x1xf32>
    %1228 = arith.addf %1222, %1227 : vector<1x1xf32>
    %c3_i32_320 = arith.constant 3 : i32
    %1229 = arith.addi %1212, %c3_i32_320 : i32
    %1230 = arith.index_cast %1229 : i32 to index
    %1231 = memref.load %arg1[%1230] : memref<512xi32, #tpu.memory_space<smem>>
    %1232 = arith.index_cast %1231 : i32 to index
    %c0_321 = arith.constant 0 : index
    %1233 = vector.load %arg2[%1232, %c0_321] : memref<32x1xf32, #tpu.memory_space<vmem>>, vector<1x1xf32>
    %1234 = arith.addf %1228, %1233 : vector<1x1xf32>
    %c43_i32 = arith.constant 43 : i32
    %1235 = vector.broadcast %c43_i32 : i32 to vector<1x128xi32>
    %1236 = arith.cmpi eq, %1, %1235 : vector<1x128xi32>
    %1237 = vector.shape_cast %1234 : vector<1x1xf32> to vector<1x1xf32>
    %1238 = vector.broadcast %1237 : vector<1x1xf32> to vector<1x128xf32>
    %1239 = arith.select %1236, %1238, %1211 : vector<1x128xi1>, vector<1x128xf32>
    %c176_i32 = arith.constant 176 : i32
    %1240 = arith.addi %7, %c176_i32 : i32
    %1241 = arith.index_cast %1240 : i32 to index
    %1242 = memref.load %arg1[%1241] : memref<512xi32, #tpu.memory_space<smem>>
    %1243 = arith.index_cast %1242 : i32 to index
    %c0_322 = arith.constant 0 : index
    %1244 = vector.load %arg2[%1243, %c0_322] : memref<32x1xf32, #tpu.memory_space<vmem>>, vector<1x1xf32>
    %c1_i32_323 = arith.constant 1 : i32
    %1245 = arith.addi %1240, %c1_i32_323 : i32
    %1246 = arith.index_cast %1245 : i32 to index
    %1247 = memref.load %arg1[%1246] : memref<512xi32, #tpu.memory_space<smem>>
    %1248 = arith.index_cast %1247 : i32 to index
    %c0_324 = arith.constant 0 : index
    %1249 = vector.load %arg2[%1248, %c0_324] : memref<32x1xf32, #tpu.memory_space<vmem>>, vector<1x1xf32>
    %1250 = arith.addf %1244, %1249 : vector<1x1xf32>
    %c2_i32_325 = arith.constant 2 : i32
    %1251 = arith.addi %1240, %c2_i32_325 : i32
    %1252 = arith.index_cast %1251 : i32 to index
    %1253 = memref.load %arg1[%1252] : memref<512xi32, #tpu.memory_space<smem>>
    %1254 = arith.index_cast %1253 : i32 to index
    %c0_326 = arith.constant 0 : index
    %1255 = vector.load %arg2[%1254, %c0_326] : memref<32x1xf32, #tpu.memory_space<vmem>>, vector<1x1xf32>
    %1256 = arith.addf %1250, %1255 : vector<1x1xf32>
    %c3_i32_327 = arith.constant 3 : i32
    %1257 = arith.addi %1240, %c3_i32_327 : i32
    %1258 = arith.index_cast %1257 : i32 to index
    %1259 = memref.load %arg1[%1258] : memref<512xi32, #tpu.memory_space<smem>>
    %1260 = arith.index_cast %1259 : i32 to index
    %c0_328 = arith.constant 0 : index
    %1261 = vector.load %arg2[%1260, %c0_328] : memref<32x1xf32, #tpu.memory_space<vmem>>, vector<1x1xf32>
    %1262 = arith.addf %1256, %1261 : vector<1x1xf32>
    %c44_i32_329 = arith.constant 44 : i32
    %1263 = vector.broadcast %c44_i32_329 : i32 to vector<1x128xi32>
    %1264 = arith.cmpi eq, %1, %1263 : vector<1x128xi32>
    %1265 = vector.shape_cast %1262 : vector<1x1xf32> to vector<1x1xf32>
    %1266 = vector.broadcast %1265 : vector<1x1xf32> to vector<1x128xf32>
    %1267 = arith.select %1264, %1266, %1239 : vector<1x128xi1>, vector<1x128xf32>
    %c180_i32 = arith.constant 180 : i32
    %1268 = arith.addi %7, %c180_i32 : i32
    %1269 = arith.index_cast %1268 : i32 to index
    %1270 = memref.load %arg1[%1269] : memref<512xi32, #tpu.memory_space<smem>>
    %1271 = arith.index_cast %1270 : i32 to index
    %c0_330 = arith.constant 0 : index
    %1272 = vector.load %arg2[%1271, %c0_330] : memref<32x1xf32, #tpu.memory_space<vmem>>, vector<1x1xf32>
    %c1_i32_331 = arith.constant 1 : i32
    %1273 = arith.addi %1268, %c1_i32_331 : i32
    %1274 = arith.index_cast %1273 : i32 to index
    %1275 = memref.load %arg1[%1274] : memref<512xi32, #tpu.memory_space<smem>>
    %1276 = arith.index_cast %1275 : i32 to index
    %c0_332 = arith.constant 0 : index
    %1277 = vector.load %arg2[%1276, %c0_332] : memref<32x1xf32, #tpu.memory_space<vmem>>, vector<1x1xf32>
    %1278 = arith.addf %1272, %1277 : vector<1x1xf32>
    %c2_i32_333 = arith.constant 2 : i32
    %1279 = arith.addi %1268, %c2_i32_333 : i32
    %1280 = arith.index_cast %1279 : i32 to index
    %1281 = memref.load %arg1[%1280] : memref<512xi32, #tpu.memory_space<smem>>
    %1282 = arith.index_cast %1281 : i32 to index
    %c0_334 = arith.constant 0 : index
    %1283 = vector.load %arg2[%1282, %c0_334] : memref<32x1xf32, #tpu.memory_space<vmem>>, vector<1x1xf32>
    %1284 = arith.addf %1278, %1283 : vector<1x1xf32>
    %c3_i32_335 = arith.constant 3 : i32
    %1285 = arith.addi %1268, %c3_i32_335 : i32
    %1286 = arith.index_cast %1285 : i32 to index
    %1287 = memref.load %arg1[%1286] : memref<512xi32, #tpu.memory_space<smem>>
    %1288 = arith.index_cast %1287 : i32 to index
    %c0_336 = arith.constant 0 : index
    %1289 = vector.load %arg2[%1288, %c0_336] : memref<32x1xf32, #tpu.memory_space<vmem>>, vector<1x1xf32>
    %1290 = arith.addf %1284, %1289 : vector<1x1xf32>
    %c45_i32 = arith.constant 45 : i32
    %1291 = vector.broadcast %c45_i32 : i32 to vector<1x128xi32>
    %1292 = arith.cmpi eq, %1, %1291 : vector<1x128xi32>
    %1293 = vector.shape_cast %1290 : vector<1x1xf32> to vector<1x1xf32>
    %1294 = vector.broadcast %1293 : vector<1x1xf32> to vector<1x128xf32>
    %1295 = arith.select %1292, %1294, %1267 : vector<1x128xi1>, vector<1x128xf32>
    %c184_i32 = arith.constant 184 : i32
    %1296 = arith.addi %7, %c184_i32 : i32
    %1297 = arith.index_cast %1296 : i32 to index
    %1298 = memref.load %arg1[%1297] : memref<512xi32, #tpu.memory_space<smem>>
    %1299 = arith.index_cast %1298 : i32 to index
    %c0_337 = arith.constant 0 : index
    %1300 = vector.load %arg2[%1299, %c0_337] : memref<32x1xf32, #tpu.memory_space<vmem>>, vector<1x1xf32>
    %c1_i32_338 = arith.constant 1 : i32
    %1301 = arith.addi %1296, %c1_i32_338 : i32
    %1302 = arith.index_cast %1301 : i32 to index
    %1303 = memref.load %arg1[%1302] : memref<512xi32, #tpu.memory_space<smem>>
    %1304 = arith.index_cast %1303 : i32 to index
    %c0_339 = arith.constant 0 : index
    %1305 = vector.load %arg2[%1304, %c0_339] : memref<32x1xf32, #tpu.memory_space<vmem>>, vector<1x1xf32>
    %1306 = arith.addf %1300, %1305 : vector<1x1xf32>
    %c2_i32_340 = arith.constant 2 : i32
    %1307 = arith.addi %1296, %c2_i32_340 : i32
    %1308 = arith.index_cast %1307 : i32 to index
    %1309 = memref.load %arg1[%1308] : memref<512xi32, #tpu.memory_space<smem>>
    %1310 = arith.index_cast %1309 : i32 to index
    %c0_341 = arith.constant 0 : index
    %1311 = vector.load %arg2[%1310, %c0_341] : memref<32x1xf32, #tpu.memory_space<vmem>>, vector<1x1xf32>
    %1312 = arith.addf %1306, %1311 : vector<1x1xf32>
    %c3_i32_342 = arith.constant 3 : i32
    %1313 = arith.addi %1296, %c3_i32_342 : i32
    %1314 = arith.index_cast %1313 : i32 to index
    %1315 = memref.load %arg1[%1314] : memref<512xi32, #tpu.memory_space<smem>>
    %1316 = arith.index_cast %1315 : i32 to index
    %c0_343 = arith.constant 0 : index
    %1317 = vector.load %arg2[%1316, %c0_343] : memref<32x1xf32, #tpu.memory_space<vmem>>, vector<1x1xf32>
    %1318 = arith.addf %1312, %1317 : vector<1x1xf32>
    %c46_i32 = arith.constant 46 : i32
    %1319 = vector.broadcast %c46_i32 : i32 to vector<1x128xi32>
    %1320 = arith.cmpi eq, %1, %1319 : vector<1x128xi32>
    %1321 = vector.shape_cast %1318 : vector<1x1xf32> to vector<1x1xf32>
    %1322 = vector.broadcast %1321 : vector<1x1xf32> to vector<1x128xf32>
    %1323 = arith.select %1320, %1322, %1295 : vector<1x128xi1>, vector<1x128xf32>
    %c188_i32 = arith.constant 188 : i32
    %1324 = arith.addi %7, %c188_i32 : i32
    %1325 = arith.index_cast %1324 : i32 to index
    %1326 = memref.load %arg1[%1325] : memref<512xi32, #tpu.memory_space<smem>>
    %1327 = arith.index_cast %1326 : i32 to index
    %c0_344 = arith.constant 0 : index
    %1328 = vector.load %arg2[%1327, %c0_344] : memref<32x1xf32, #tpu.memory_space<vmem>>, vector<1x1xf32>
    %c1_i32_345 = arith.constant 1 : i32
    %1329 = arith.addi %1324, %c1_i32_345 : i32
    %1330 = arith.index_cast %1329 : i32 to index
    %1331 = memref.load %arg1[%1330] : memref<512xi32, #tpu.memory_space<smem>>
    %1332 = arith.index_cast %1331 : i32 to index
    %c0_346 = arith.constant 0 : index
    %1333 = vector.load %arg2[%1332, %c0_346] : memref<32x1xf32, #tpu.memory_space<vmem>>, vector<1x1xf32>
    %1334 = arith.addf %1328, %1333 : vector<1x1xf32>
    %c2_i32_347 = arith.constant 2 : i32
    %1335 = arith.addi %1324, %c2_i32_347 : i32
    %1336 = arith.index_cast %1335 : i32 to index
    %1337 = memref.load %arg1[%1336] : memref<512xi32, #tpu.memory_space<smem>>
    %1338 = arith.index_cast %1337 : i32 to index
    %c0_348 = arith.constant 0 : index
    %1339 = vector.load %arg2[%1338, %c0_348] : memref<32x1xf32, #tpu.memory_space<vmem>>, vector<1x1xf32>
    %1340 = arith.addf %1334, %1339 : vector<1x1xf32>
    %c3_i32_349 = arith.constant 3 : i32
    %1341 = arith.addi %1324, %c3_i32_349 : i32
    %1342 = arith.index_cast %1341 : i32 to index
    %1343 = memref.load %arg1[%1342] : memref<512xi32, #tpu.memory_space<smem>>
    %1344 = arith.index_cast %1343 : i32 to index
    %c0_350 = arith.constant 0 : index
    %1345 = vector.load %arg2[%1344, %c0_350] : memref<32x1xf32, #tpu.memory_space<vmem>>, vector<1x1xf32>
    %1346 = arith.addf %1340, %1345 : vector<1x1xf32>
    %c47_i32 = arith.constant 47 : i32
    %1347 = vector.broadcast %c47_i32 : i32 to vector<1x128xi32>
    %1348 = arith.cmpi eq, %1, %1347 : vector<1x128xi32>
    %1349 = vector.shape_cast %1346 : vector<1x1xf32> to vector<1x1xf32>
    %1350 = vector.broadcast %1349 : vector<1x1xf32> to vector<1x128xf32>
    %1351 = arith.select %1348, %1350, %1323 : vector<1x128xi1>, vector<1x128xf32>
    %c192_i32 = arith.constant 192 : i32
    %1352 = arith.addi %7, %c192_i32 : i32
    %1353 = arith.index_cast %1352 : i32 to index
    %1354 = memref.load %arg1[%1353] : memref<512xi32, #tpu.memory_space<smem>>
    %1355 = arith.index_cast %1354 : i32 to index
    %c0_351 = arith.constant 0 : index
    %1356 = vector.load %arg2[%1355, %c0_351] : memref<32x1xf32, #tpu.memory_space<vmem>>, vector<1x1xf32>
    %c1_i32_352 = arith.constant 1 : i32
    %1357 = arith.addi %1352, %c1_i32_352 : i32
    %1358 = arith.index_cast %1357 : i32 to index
    %1359 = memref.load %arg1[%1358] : memref<512xi32, #tpu.memory_space<smem>>
    %1360 = arith.index_cast %1359 : i32 to index
    %c0_353 = arith.constant 0 : index
    %1361 = vector.load %arg2[%1360, %c0_353] : memref<32x1xf32, #tpu.memory_space<vmem>>, vector<1x1xf32>
    %1362 = arith.addf %1356, %1361 : vector<1x1xf32>
    %c2_i32_354 = arith.constant 2 : i32
    %1363 = arith.addi %1352, %c2_i32_354 : i32
    %1364 = arith.index_cast %1363 : i32 to index
    %1365 = memref.load %arg1[%1364] : memref<512xi32, #tpu.memory_space<smem>>
    %1366 = arith.index_cast %1365 : i32 to index
    %c0_355 = arith.constant 0 : index
    %1367 = vector.load %arg2[%1366, %c0_355] : memref<32x1xf32, #tpu.memory_space<vmem>>, vector<1x1xf32>
    %1368 = arith.addf %1362, %1367 : vector<1x1xf32>
    %c3_i32_356 = arith.constant 3 : i32
    %1369 = arith.addi %1352, %c3_i32_356 : i32
    %1370 = arith.index_cast %1369 : i32 to index
    %1371 = memref.load %arg1[%1370] : memref<512xi32, #tpu.memory_space<smem>>
    %1372 = arith.index_cast %1371 : i32 to index
    %c0_357 = arith.constant 0 : index
    %1373 = vector.load %arg2[%1372, %c0_357] : memref<32x1xf32, #tpu.memory_space<vmem>>, vector<1x1xf32>
    %1374 = arith.addf %1368, %1373 : vector<1x1xf32>
    %c48_i32_358 = arith.constant 48 : i32
    %1375 = vector.broadcast %c48_i32_358 : i32 to vector<1x128xi32>
    %1376 = arith.cmpi eq, %1, %1375 : vector<1x128xi32>
    %1377 = vector.shape_cast %1374 : vector<1x1xf32> to vector<1x1xf32>
    %1378 = vector.broadcast %1377 : vector<1x1xf32> to vector<1x128xf32>
    %1379 = arith.select %1376, %1378, %5 : vector<1x128xi1>, vector<1x128xf32>
    %c196_i32 = arith.constant 196 : i32
    %1380 = arith.addi %7, %c196_i32 : i32
    %1381 = arith.index_cast %1380 : i32 to index
    %1382 = memref.load %arg1[%1381] : memref<512xi32, #tpu.memory_space<smem>>
    %1383 = arith.index_cast %1382 : i32 to index
    %c0_359 = arith.constant 0 : index
    %1384 = vector.load %arg2[%1383, %c0_359] : memref<32x1xf32, #tpu.memory_space<vmem>>, vector<1x1xf32>
    %c1_i32_360 = arith.constant 1 : i32
    %1385 = arith.addi %1380, %c1_i32_360 : i32
    %1386 = arith.index_cast %1385 : i32 to index
    %1387 = memref.load %arg1[%1386] : memref<512xi32, #tpu.memory_space<smem>>
    %1388 = arith.index_cast %1387 : i32 to index
    %c0_361 = arith.constant 0 : index
    %1389 = vector.load %arg2[%1388, %c0_361] : memref<32x1xf32, #tpu.memory_space<vmem>>, vector<1x1xf32>
    %1390 = arith.addf %1384, %1389 : vector<1x1xf32>
    %c2_i32_362 = arith.constant 2 : i32
    %1391 = arith.addi %1380, %c2_i32_362 : i32
    %1392 = arith.index_cast %1391 : i32 to index
    %1393 = memref.load %arg1[%1392] : memref<512xi32, #tpu.memory_space<smem>>
    %1394 = arith.index_cast %1393 : i32 to index
    %c0_363 = arith.constant 0 : index
    %1395 = vector.load %arg2[%1394, %c0_363] : memref<32x1xf32, #tpu.memory_space<vmem>>, vector<1x1xf32>
    %1396 = arith.addf %1390, %1395 : vector<1x1xf32>
    %c3_i32_364 = arith.constant 3 : i32
    %1397 = arith.addi %1380, %c3_i32_364 : i32
    %1398 = arith.index_cast %1397 : i32 to index
    %1399 = memref.load %arg1[%1398] : memref<512xi32, #tpu.memory_space<smem>>
    %1400 = arith.index_cast %1399 : i32 to index
    %c0_365 = arith.constant 0 : index
    %1401 = vector.load %arg2[%1400, %c0_365] : memref<32x1xf32, #tpu.memory_space<vmem>>, vector<1x1xf32>
    %1402 = arith.addf %1396, %1401 : vector<1x1xf32>
    %c49_i32 = arith.constant 49 : i32
    %1403 = vector.broadcast %c49_i32 : i32 to vector<1x128xi32>
    %1404 = arith.cmpi eq, %1, %1403 : vector<1x128xi32>
    %1405 = vector.shape_cast %1402 : vector<1x1xf32> to vector<1x1xf32>
    %1406 = vector.broadcast %1405 : vector<1x1xf32> to vector<1x128xf32>
    %1407 = arith.select %1404, %1406, %1379 : vector<1x128xi1>, vector<1x128xf32>
    %c200_i32 = arith.constant 200 : i32
    %1408 = arith.addi %7, %c200_i32 : i32
    %1409 = arith.index_cast %1408 : i32 to index
    %1410 = memref.load %arg1[%1409] : memref<512xi32, #tpu.memory_space<smem>>
    %1411 = arith.index_cast %1410 : i32 to index
    %c0_366 = arith.constant 0 : index
    %1412 = vector.load %arg2[%1411, %c0_366] : memref<32x1xf32, #tpu.memory_space<vmem>>, vector<1x1xf32>
    %c1_i32_367 = arith.constant 1 : i32
    %1413 = arith.addi %1408, %c1_i32_367 : i32
    %1414 = arith.index_cast %1413 : i32 to index
    %1415 = memref.load %arg1[%1414] : memref<512xi32, #tpu.memory_space<smem>>
    %1416 = arith.index_cast %1415 : i32 to index
    %c0_368 = arith.constant 0 : index
    %1417 = vector.load %arg2[%1416, %c0_368] : memref<32x1xf32, #tpu.memory_space<vmem>>, vector<1x1xf32>
    %1418 = arith.addf %1412, %1417 : vector<1x1xf32>
    %c2_i32_369 = arith.constant 2 : i32
    %1419 = arith.addi %1408, %c2_i32_369 : i32
    %1420 = arith.index_cast %1419 : i32 to index
    %1421 = memref.load %arg1[%1420] : memref<512xi32, #tpu.memory_space<smem>>
    %1422 = arith.index_cast %1421 : i32 to index
    %c0_370 = arith.constant 0 : index
    %1423 = vector.load %arg2[%1422, %c0_370] : memref<32x1xf32, #tpu.memory_space<vmem>>, vector<1x1xf32>
    %1424 = arith.addf %1418, %1423 : vector<1x1xf32>
    %c3_i32_371 = arith.constant 3 : i32
    %1425 = arith.addi %1408, %c3_i32_371 : i32
    %1426 = arith.index_cast %1425 : i32 to index
    %1427 = memref.load %arg1[%1426] : memref<512xi32, #tpu.memory_space<smem>>
    %1428 = arith.index_cast %1427 : i32 to index
    %c0_372 = arith.constant 0 : index
    %1429 = vector.load %arg2[%1428, %c0_372] : memref<32x1xf32, #tpu.memory_space<vmem>>, vector<1x1xf32>
    %1430 = arith.addf %1424, %1429 : vector<1x1xf32>
    %c50_i32 = arith.constant 50 : i32
    %1431 = vector.broadcast %c50_i32 : i32 to vector<1x128xi32>
    %1432 = arith.cmpi eq, %1, %1431 : vector<1x128xi32>
    %1433 = vector.shape_cast %1430 : vector<1x1xf32> to vector<1x1xf32>
    %1434 = vector.broadcast %1433 : vector<1x1xf32> to vector<1x128xf32>
    %1435 = arith.select %1432, %1434, %1407 : vector<1x128xi1>, vector<1x128xf32>
    %c204_i32 = arith.constant 204 : i32
    %1436 = arith.addi %7, %c204_i32 : i32
    %1437 = arith.index_cast %1436 : i32 to index
    %1438 = memref.load %arg1[%1437] : memref<512xi32, #tpu.memory_space<smem>>
    %1439 = arith.index_cast %1438 : i32 to index
    %c0_373 = arith.constant 0 : index
    %1440 = vector.load %arg2[%1439, %c0_373] : memref<32x1xf32, #tpu.memory_space<vmem>>, vector<1x1xf32>
    %c1_i32_374 = arith.constant 1 : i32
    %1441 = arith.addi %1436, %c1_i32_374 : i32
    %1442 = arith.index_cast %1441 : i32 to index
    %1443 = memref.load %arg1[%1442] : memref<512xi32, #tpu.memory_space<smem>>
    %1444 = arith.index_cast %1443 : i32 to index
    %c0_375 = arith.constant 0 : index
    %1445 = vector.load %arg2[%1444, %c0_375] : memref<32x1xf32, #tpu.memory_space<vmem>>, vector<1x1xf32>
    %1446 = arith.addf %1440, %1445 : vector<1x1xf32>
    %c2_i32_376 = arith.constant 2 : i32
    %1447 = arith.addi %1436, %c2_i32_376 : i32
    %1448 = arith.index_cast %1447 : i32 to index
    %1449 = memref.load %arg1[%1448] : memref<512xi32, #tpu.memory_space<smem>>
    %1450 = arith.index_cast %1449 : i32 to index
    %c0_377 = arith.constant 0 : index
    %1451 = vector.load %arg2[%1450, %c0_377] : memref<32x1xf32, #tpu.memory_space<vmem>>, vector<1x1xf32>
    %1452 = arith.addf %1446, %1451 : vector<1x1xf32>
    %c3_i32_378 = arith.constant 3 : i32
    %1453 = arith.addi %1436, %c3_i32_378 : i32
    %1454 = arith.index_cast %1453 : i32 to index
    %1455 = memref.load %arg1[%1454] : memref<512xi32, #tpu.memory_space<smem>>
    %1456 = arith.index_cast %1455 : i32 to index
    %c0_379 = arith.constant 0 : index
    %1457 = vector.load %arg2[%1456, %c0_379] : memref<32x1xf32, #tpu.memory_space<vmem>>, vector<1x1xf32>
    %1458 = arith.addf %1452, %1457 : vector<1x1xf32>
    %c51_i32 = arith.constant 51 : i32
    %1459 = vector.broadcast %c51_i32 : i32 to vector<1x128xi32>
    %1460 = arith.cmpi eq, %1, %1459 : vector<1x128xi32>
    %1461 = vector.shape_cast %1458 : vector<1x1xf32> to vector<1x1xf32>
    %1462 = vector.broadcast %1461 : vector<1x1xf32> to vector<1x128xf32>
    %1463 = arith.select %1460, %1462, %1435 : vector<1x128xi1>, vector<1x128xf32>
    %c208_i32 = arith.constant 208 : i32
    %1464 = arith.addi %7, %c208_i32 : i32
    %1465 = arith.index_cast %1464 : i32 to index
    %1466 = memref.load %arg1[%1465] : memref<512xi32, #tpu.memory_space<smem>>
    %1467 = arith.index_cast %1466 : i32 to index
    %c0_380 = arith.constant 0 : index
    %1468 = vector.load %arg2[%1467, %c0_380] : memref<32x1xf32, #tpu.memory_space<vmem>>, vector<1x1xf32>
    %c1_i32_381 = arith.constant 1 : i32
    %1469 = arith.addi %1464, %c1_i32_381 : i32
    %1470 = arith.index_cast %1469 : i32 to index
    %1471 = memref.load %arg1[%1470] : memref<512xi32, #tpu.memory_space<smem>>
    %1472 = arith.index_cast %1471 : i32 to index
    %c0_382 = arith.constant 0 : index
    %1473 = vector.load %arg2[%1472, %c0_382] : memref<32x1xf32, #tpu.memory_space<vmem>>, vector<1x1xf32>
    %1474 = arith.addf %1468, %1473 : vector<1x1xf32>
    %c2_i32_383 = arith.constant 2 : i32
    %1475 = arith.addi %1464, %c2_i32_383 : i32
    %1476 = arith.index_cast %1475 : i32 to index
    %1477 = memref.load %arg1[%1476] : memref<512xi32, #tpu.memory_space<smem>>
    %1478 = arith.index_cast %1477 : i32 to index
    %c0_384 = arith.constant 0 : index
    %1479 = vector.load %arg2[%1478, %c0_384] : memref<32x1xf32, #tpu.memory_space<vmem>>, vector<1x1xf32>
    %1480 = arith.addf %1474, %1479 : vector<1x1xf32>
    %c3_i32_385 = arith.constant 3 : i32
    %1481 = arith.addi %1464, %c3_i32_385 : i32
    %1482 = arith.index_cast %1481 : i32 to index
    %1483 = memref.load %arg1[%1482] : memref<512xi32, #tpu.memory_space<smem>>
    %1484 = arith.index_cast %1483 : i32 to index
    %c0_386 = arith.constant 0 : index
    %1485 = vector.load %arg2[%1484, %c0_386] : memref<32x1xf32, #tpu.memory_space<vmem>>, vector<1x1xf32>
    %1486 = arith.addf %1480, %1485 : vector<1x1xf32>
    %c52_i32_387 = arith.constant 52 : i32
    %1487 = vector.broadcast %c52_i32_387 : i32 to vector<1x128xi32>
    %1488 = arith.cmpi eq, %1, %1487 : vector<1x128xi32>
    %1489 = vector.shape_cast %1486 : vector<1x1xf32> to vector<1x1xf32>
    %1490 = vector.broadcast %1489 : vector<1x1xf32> to vector<1x128xf32>
    %1491 = arith.select %1488, %1490, %1463 : vector<1x128xi1>, vector<1x128xf32>
    %c212_i32 = arith.constant 212 : i32
    %1492 = arith.addi %7, %c212_i32 : i32
    %1493 = arith.index_cast %1492 : i32 to index
    %1494 = memref.load %arg1[%1493] : memref<512xi32, #tpu.memory_space<smem>>
    %1495 = arith.index_cast %1494 : i32 to index
    %c0_388 = arith.constant 0 : index
    %1496 = vector.load %arg2[%1495, %c0_388] : memref<32x1xf32, #tpu.memory_space<vmem>>, vector<1x1xf32>
    %c1_i32_389 = arith.constant 1 : i32
    %1497 = arith.addi %1492, %c1_i32_389 : i32
    %1498 = arith.index_cast %1497 : i32 to index
    %1499 = memref.load %arg1[%1498] : memref<512xi32, #tpu.memory_space<smem>>
    %1500 = arith.index_cast %1499 : i32 to index
    %c0_390 = arith.constant 0 : index
    %1501 = vector.load %arg2[%1500, %c0_390] : memref<32x1xf32, #tpu.memory_space<vmem>>, vector<1x1xf32>
    %1502 = arith.addf %1496, %1501 : vector<1x1xf32>
    %c2_i32_391 = arith.constant 2 : i32
    %1503 = arith.addi %1492, %c2_i32_391 : i32
    %1504 = arith.index_cast %1503 : i32 to index
    %1505 = memref.load %arg1[%1504] : memref<512xi32, #tpu.memory_space<smem>>
    %1506 = arith.index_cast %1505 : i32 to index
    %c0_392 = arith.constant 0 : index
    %1507 = vector.load %arg2[%1506, %c0_392] : memref<32x1xf32, #tpu.memory_space<vmem>>, vector<1x1xf32>
    %1508 = arith.addf %1502, %1507 : vector<1x1xf32>
    %c3_i32_393 = arith.constant 3 : i32
    %1509 = arith.addi %1492, %c3_i32_393 : i32
    %1510 = arith.index_cast %1509 : i32 to index
    %1511 = memref.load %arg1[%1510] : memref<512xi32, #tpu.memory_space<smem>>
    %1512 = arith.index_cast %1511 : i32 to index
    %c0_394 = arith.constant 0 : index
    %1513 = vector.load %arg2[%1512, %c0_394] : memref<32x1xf32, #tpu.memory_space<vmem>>, vector<1x1xf32>
    %1514 = arith.addf %1508, %1513 : vector<1x1xf32>
    %c53_i32 = arith.constant 53 : i32
    %1515 = vector.broadcast %c53_i32 : i32 to vector<1x128xi32>
    %1516 = arith.cmpi eq, %1, %1515 : vector<1x128xi32>
    %1517 = vector.shape_cast %1514 : vector<1x1xf32> to vector<1x1xf32>
    %1518 = vector.broadcast %1517 : vector<1x1xf32> to vector<1x128xf32>
    %1519 = arith.select %1516, %1518, %1491 : vector<1x128xi1>, vector<1x128xf32>
    %c216_i32 = arith.constant 216 : i32
    %1520 = arith.addi %7, %c216_i32 : i32
    %1521 = arith.index_cast %1520 : i32 to index
    %1522 = memref.load %arg1[%1521] : memref<512xi32, #tpu.memory_space<smem>>
    %1523 = arith.index_cast %1522 : i32 to index
    %c0_395 = arith.constant 0 : index
    %1524 = vector.load %arg2[%1523, %c0_395] : memref<32x1xf32, #tpu.memory_space<vmem>>, vector<1x1xf32>
    %c1_i32_396 = arith.constant 1 : i32
    %1525 = arith.addi %1520, %c1_i32_396 : i32
    %1526 = arith.index_cast %1525 : i32 to index
    %1527 = memref.load %arg1[%1526] : memref<512xi32, #tpu.memory_space<smem>>
    %1528 = arith.index_cast %1527 : i32 to index
    %c0_397 = arith.constant 0 : index
    %1529 = vector.load %arg2[%1528, %c0_397] : memref<32x1xf32, #tpu.memory_space<vmem>>, vector<1x1xf32>
    %1530 = arith.addf %1524, %1529 : vector<1x1xf32>
    %c2_i32_398 = arith.constant 2 : i32
    %1531 = arith.addi %1520, %c2_i32_398 : i32
    %1532 = arith.index_cast %1531 : i32 to index
    %1533 = memref.load %arg1[%1532] : memref<512xi32, #tpu.memory_space<smem>>
    %1534 = arith.index_cast %1533 : i32 to index
    %c0_399 = arith.constant 0 : index
    %1535 = vector.load %arg2[%1534, %c0_399] : memref<32x1xf32, #tpu.memory_space<vmem>>, vector<1x1xf32>
    %1536 = arith.addf %1530, %1535 : vector<1x1xf32>
    %c3_i32_400 = arith.constant 3 : i32
    %1537 = arith.addi %1520, %c3_i32_400 : i32
    %1538 = arith.index_cast %1537 : i32 to index
    %1539 = memref.load %arg1[%1538] : memref<512xi32, #tpu.memory_space<smem>>
    %1540 = arith.index_cast %1539 : i32 to index
    %c0_401 = arith.constant 0 : index
    %1541 = vector.load %arg2[%1540, %c0_401] : memref<32x1xf32, #tpu.memory_space<vmem>>, vector<1x1xf32>
    %1542 = arith.addf %1536, %1541 : vector<1x1xf32>
    %c54_i32 = arith.constant 54 : i32
    %1543 = vector.broadcast %c54_i32 : i32 to vector<1x128xi32>
    %1544 = arith.cmpi eq, %1, %1543 : vector<1x128xi32>
    %1545 = vector.shape_cast %1542 : vector<1x1xf32> to vector<1x1xf32>
    %1546 = vector.broadcast %1545 : vector<1x1xf32> to vector<1x128xf32>
    %1547 = arith.select %1544, %1546, %1519 : vector<1x128xi1>, vector<1x128xf32>
    %c220_i32 = arith.constant 220 : i32
    %1548 = arith.addi %7, %c220_i32 : i32
    %1549 = arith.index_cast %1548 : i32 to index
    %1550 = memref.load %arg1[%1549] : memref<512xi32, #tpu.memory_space<smem>>
    %1551 = arith.index_cast %1550 : i32 to index
    %c0_402 = arith.constant 0 : index
    %1552 = vector.load %arg2[%1551, %c0_402] : memref<32x1xf32, #tpu.memory_space<vmem>>, vector<1x1xf32>
    %c1_i32_403 = arith.constant 1 : i32
    %1553 = arith.addi %1548, %c1_i32_403 : i32
    %1554 = arith.index_cast %1553 : i32 to index
    %1555 = memref.load %arg1[%1554] : memref<512xi32, #tpu.memory_space<smem>>
    %1556 = arith.index_cast %1555 : i32 to index
    %c0_404 = arith.constant 0 : index
    %1557 = vector.load %arg2[%1556, %c0_404] : memref<32x1xf32, #tpu.memory_space<vmem>>, vector<1x1xf32>
    %1558 = arith.addf %1552, %1557 : vector<1x1xf32>
    %c2_i32_405 = arith.constant 2 : i32
    %1559 = arith.addi %1548, %c2_i32_405 : i32
    %1560 = arith.index_cast %1559 : i32 to index
    %1561 = memref.load %arg1[%1560] : memref<512xi32, #tpu.memory_space<smem>>
    %1562 = arith.index_cast %1561 : i32 to index
    %c0_406 = arith.constant 0 : index
    %1563 = vector.load %arg2[%1562, %c0_406] : memref<32x1xf32, #tpu.memory_space<vmem>>, vector<1x1xf32>
    %1564 = arith.addf %1558, %1563 : vector<1x1xf32>
    %c3_i32_407 = arith.constant 3 : i32
    %1565 = arith.addi %1548, %c3_i32_407 : i32
    %1566 = arith.index_cast %1565 : i32 to index
    %1567 = memref.load %arg1[%1566] : memref<512xi32, #tpu.memory_space<smem>>
    %1568 = arith.index_cast %1567 : i32 to index
    %c0_408 = arith.constant 0 : index
    %1569 = vector.load %arg2[%1568, %c0_408] : memref<32x1xf32, #tpu.memory_space<vmem>>, vector<1x1xf32>
    %1570 = arith.addf %1564, %1569 : vector<1x1xf32>
    %c55_i32 = arith.constant 55 : i32
    %1571 = vector.broadcast %c55_i32 : i32 to vector<1x128xi32>
    %1572 = arith.cmpi eq, %1, %1571 : vector<1x128xi32>
    %1573 = vector.shape_cast %1570 : vector<1x1xf32> to vector<1x1xf32>
    %1574 = vector.broadcast %1573 : vector<1x1xf32> to vector<1x128xf32>
    %1575 = arith.select %1572, %1574, %1547 : vector<1x128xi1>, vector<1x128xf32>
    %c224_i32 = arith.constant 224 : i32
    %1576 = arith.addi %7, %c224_i32 : i32
    %1577 = arith.index_cast %1576 : i32 to index
    %1578 = memref.load %arg1[%1577] : memref<512xi32, #tpu.memory_space<smem>>
    %1579 = arith.index_cast %1578 : i32 to index
    %c0_409 = arith.constant 0 : index
    %1580 = vector.load %arg2[%1579, %c0_409] : memref<32x1xf32, #tpu.memory_space<vmem>>, vector<1x1xf32>
    %c1_i32_410 = arith.constant 1 : i32
    %1581 = arith.addi %1576, %c1_i32_410 : i32
    %1582 = arith.index_cast %1581 : i32 to index
    %1583 = memref.load %arg1[%1582] : memref<512xi32, #tpu.memory_space<smem>>
    %1584 = arith.index_cast %1583 : i32 to index
    %c0_411 = arith.constant 0 : index
    %1585 = vector.load %arg2[%1584, %c0_411] : memref<32x1xf32, #tpu.memory_space<vmem>>, vector<1x1xf32>
    %1586 = arith.addf %1580, %1585 : vector<1x1xf32>
    %c2_i32_412 = arith.constant 2 : i32
    %1587 = arith.addi %1576, %c2_i32_412 : i32
    %1588 = arith.index_cast %1587 : i32 to index
    %1589 = memref.load %arg1[%1588] : memref<512xi32, #tpu.memory_space<smem>>
    %1590 = arith.index_cast %1589 : i32 to index
    %c0_413 = arith.constant 0 : index
    %1591 = vector.load %arg2[%1590, %c0_413] : memref<32x1xf32, #tpu.memory_space<vmem>>, vector<1x1xf32>
    %1592 = arith.addf %1586, %1591 : vector<1x1xf32>
    %c3_i32_414 = arith.constant 3 : i32
    %1593 = arith.addi %1576, %c3_i32_414 : i32
    %1594 = arith.index_cast %1593 : i32 to index
    %1595 = memref.load %arg1[%1594] : memref<512xi32, #tpu.memory_space<smem>>
    %1596 = arith.index_cast %1595 : i32 to index
    %c0_415 = arith.constant 0 : index
    %1597 = vector.load %arg2[%1596, %c0_415] : memref<32x1xf32, #tpu.memory_space<vmem>>, vector<1x1xf32>
    %1598 = arith.addf %1592, %1597 : vector<1x1xf32>
    %c56_i32_416 = arith.constant 56 : i32
    %1599 = vector.broadcast %c56_i32_416 : i32 to vector<1x128xi32>
    %1600 = arith.cmpi eq, %1, %1599 : vector<1x128xi32>
    %1601 = vector.shape_cast %1598 : vector<1x1xf32> to vector<1x1xf32>
    %1602 = vector.broadcast %1601 : vector<1x1xf32> to vector<1x128xf32>
    %1603 = arith.select %1600, %1602, %5 : vector<1x128xi1>, vector<1x128xf32>
    %c228_i32 = arith.constant 228 : i32
    %1604 = arith.addi %7, %c228_i32 : i32
    %1605 = arith.index_cast %1604 : i32 to index
    %1606 = memref.load %arg1[%1605] : memref<512xi32, #tpu.memory_space<smem>>
    %1607 = arith.index_cast %1606 : i32 to index
    %c0_417 = arith.constant 0 : index
    %1608 = vector.load %arg2[%1607, %c0_417] : memref<32x1xf32, #tpu.memory_space<vmem>>, vector<1x1xf32>
    %c1_i32_418 = arith.constant 1 : i32
    %1609 = arith.addi %1604, %c1_i32_418 : i32
    %1610 = arith.index_cast %1609 : i32 to index
    %1611 = memref.load %arg1[%1610] : memref<512xi32, #tpu.memory_space<smem>>
    %1612 = arith.index_cast %1611 : i32 to index
    %c0_419 = arith.constant 0 : index
    %1613 = vector.load %arg2[%1612, %c0_419] : memref<32x1xf32, #tpu.memory_space<vmem>>, vector<1x1xf32>
    %1614 = arith.addf %1608, %1613 : vector<1x1xf32>
    %c2_i32_420 = arith.constant 2 : i32
    %1615 = arith.addi %1604, %c2_i32_420 : i32
    %1616 = arith.index_cast %1615 : i32 to index
    %1617 = memref.load %arg1[%1616] : memref<512xi32, #tpu.memory_space<smem>>
    %1618 = arith.index_cast %1617 : i32 to index
    %c0_421 = arith.constant 0 : index
    %1619 = vector.load %arg2[%1618, %c0_421] : memref<32x1xf32, #tpu.memory_space<vmem>>, vector<1x1xf32>
    %1620 = arith.addf %1614, %1619 : vector<1x1xf32>
    %c3_i32_422 = arith.constant 3 : i32
    %1621 = arith.addi %1604, %c3_i32_422 : i32
    %1622 = arith.index_cast %1621 : i32 to index
    %1623 = memref.load %arg1[%1622] : memref<512xi32, #tpu.memory_space<smem>>
    %1624 = arith.index_cast %1623 : i32 to index
    %c0_423 = arith.constant 0 : index
    %1625 = vector.load %arg2[%1624, %c0_423] : memref<32x1xf32, #tpu.memory_space<vmem>>, vector<1x1xf32>
    %1626 = arith.addf %1620, %1625 : vector<1x1xf32>
    %c57_i32 = arith.constant 57 : i32
    %1627 = vector.broadcast %c57_i32 : i32 to vector<1x128xi32>
    %1628 = arith.cmpi eq, %1, %1627 : vector<1x128xi32>
    %1629 = vector.shape_cast %1626 : vector<1x1xf32> to vector<1x1xf32>
    %1630 = vector.broadcast %1629 : vector<1x1xf32> to vector<1x128xf32>
    %1631 = arith.select %1628, %1630, %1603 : vector<1x128xi1>, vector<1x128xf32>
    %c232_i32 = arith.constant 232 : i32
    %1632 = arith.addi %7, %c232_i32 : i32
    %1633 = arith.index_cast %1632 : i32 to index
    %1634 = memref.load %arg1[%1633] : memref<512xi32, #tpu.memory_space<smem>>
    %1635 = arith.index_cast %1634 : i32 to index
    %c0_424 = arith.constant 0 : index
    %1636 = vector.load %arg2[%1635, %c0_424] : memref<32x1xf32, #tpu.memory_space<vmem>>, vector<1x1xf32>
    %c1_i32_425 = arith.constant 1 : i32
    %1637 = arith.addi %1632, %c1_i32_425 : i32
    %1638 = arith.index_cast %1637 : i32 to index
    %1639 = memref.load %arg1[%1638] : memref<512xi32, #tpu.memory_space<smem>>
    %1640 = arith.index_cast %1639 : i32 to index
    %c0_426 = arith.constant 0 : index
    %1641 = vector.load %arg2[%1640, %c0_426] : memref<32x1xf32, #tpu.memory_space<vmem>>, vector<1x1xf32>
    %1642 = arith.addf %1636, %1641 : vector<1x1xf32>
    %c2_i32_427 = arith.constant 2 : i32
    %1643 = arith.addi %1632, %c2_i32_427 : i32
    %1644 = arith.index_cast %1643 : i32 to index
    %1645 = memref.load %arg1[%1644] : memref<512xi32, #tpu.memory_space<smem>>
    %1646 = arith.index_cast %1645 : i32 to index
    %c0_428 = arith.constant 0 : index
    %1647 = vector.load %arg2[%1646, %c0_428] : memref<32x1xf32, #tpu.memory_space<vmem>>, vector<1x1xf32>
    %1648 = arith.addf %1642, %1647 : vector<1x1xf32>
    %c3_i32_429 = arith.constant 3 : i32
    %1649 = arith.addi %1632, %c3_i32_429 : i32
    %1650 = arith.index_cast %1649 : i32 to index
    %1651 = memref.load %arg1[%1650] : memref<512xi32, #tpu.memory_space<smem>>
    %1652 = arith.index_cast %1651 : i32 to index
    %c0_430 = arith.constant 0 : index
    %1653 = vector.load %arg2[%1652, %c0_430] : memref<32x1xf32, #tpu.memory_space<vmem>>, vector<1x1xf32>
    %1654 = arith.addf %1648, %1653 : vector<1x1xf32>
    %c58_i32 = arith.constant 58 : i32
    %1655 = vector.broadcast %c58_i32 : i32 to vector<1x128xi32>
    %1656 = arith.cmpi eq, %1, %1655 : vector<1x128xi32>
    %1657 = vector.shape_cast %1654 : vector<1x1xf32> to vector<1x1xf32>
    %1658 = vector.broadcast %1657 : vector<1x1xf32> to vector<1x128xf32>
    %1659 = arith.select %1656, %1658, %1631 : vector<1x128xi1>, vector<1x128xf32>
    %c236_i32 = arith.constant 236 : i32
    %1660 = arith.addi %7, %c236_i32 : i32
    %1661 = arith.index_cast %1660 : i32 to index
    %1662 = memref.load %arg1[%1661] : memref<512xi32, #tpu.memory_space<smem>>
    %1663 = arith.index_cast %1662 : i32 to index
    %c0_431 = arith.constant 0 : index
    %1664 = vector.load %arg2[%1663, %c0_431] : memref<32x1xf32, #tpu.memory_space<vmem>>, vector<1x1xf32>
    %c1_i32_432 = arith.constant 1 : i32
    %1665 = arith.addi %1660, %c1_i32_432 : i32
    %1666 = arith.index_cast %1665 : i32 to index
    %1667 = memref.load %arg1[%1666] : memref<512xi32, #tpu.memory_space<smem>>
    %1668 = arith.index_cast %1667 : i32 to index
    %c0_433 = arith.constant 0 : index
    %1669 = vector.load %arg2[%1668, %c0_433] : memref<32x1xf32, #tpu.memory_space<vmem>>, vector<1x1xf32>
    %1670 = arith.addf %1664, %1669 : vector<1x1xf32>
    %c2_i32_434 = arith.constant 2 : i32
    %1671 = arith.addi %1660, %c2_i32_434 : i32
    %1672 = arith.index_cast %1671 : i32 to index
    %1673 = memref.load %arg1[%1672] : memref<512xi32, #tpu.memory_space<smem>>
    %1674 = arith.index_cast %1673 : i32 to index
    %c0_435 = arith.constant 0 : index
    %1675 = vector.load %arg2[%1674, %c0_435] : memref<32x1xf32, #tpu.memory_space<vmem>>, vector<1x1xf32>
    %1676 = arith.addf %1670, %1675 : vector<1x1xf32>
    %c3_i32_436 = arith.constant 3 : i32
    %1677 = arith.addi %1660, %c3_i32_436 : i32
    %1678 = arith.index_cast %1677 : i32 to index
    %1679 = memref.load %arg1[%1678] : memref<512xi32, #tpu.memory_space<smem>>
    %1680 = arith.index_cast %1679 : i32 to index
    %c0_437 = arith.constant 0 : index
    %1681 = vector.load %arg2[%1680, %c0_437] : memref<32x1xf32, #tpu.memory_space<vmem>>, vector<1x1xf32>
    %1682 = arith.addf %1676, %1681 : vector<1x1xf32>
    %c59_i32 = arith.constant 59 : i32
    %1683 = vector.broadcast %c59_i32 : i32 to vector<1x128xi32>
    %1684 = arith.cmpi eq, %1, %1683 : vector<1x128xi32>
    %1685 = vector.shape_cast %1682 : vector<1x1xf32> to vector<1x1xf32>
    %1686 = vector.broadcast %1685 : vector<1x1xf32> to vector<1x128xf32>
    %1687 = arith.select %1684, %1686, %1659 : vector<1x128xi1>, vector<1x128xf32>
    %c240_i32 = arith.constant 240 : i32
    %1688 = arith.addi %7, %c240_i32 : i32
    %1689 = arith.index_cast %1688 : i32 to index
    %1690 = memref.load %arg1[%1689] : memref<512xi32, #tpu.memory_space<smem>>
    %1691 = arith.index_cast %1690 : i32 to index
    %c0_438 = arith.constant 0 : index
    %1692 = vector.load %arg2[%1691, %c0_438] : memref<32x1xf32, #tpu.memory_space<vmem>>, vector<1x1xf32>
    %c1_i32_439 = arith.constant 1 : i32
    %1693 = arith.addi %1688, %c1_i32_439 : i32
    %1694 = arith.index_cast %1693 : i32 to index
    %1695 = memref.load %arg1[%1694] : memref<512xi32, #tpu.memory_space<smem>>
    %1696 = arith.index_cast %1695 : i32 to index
    %c0_440 = arith.constant 0 : index
    %1697 = vector.load %arg2[%1696, %c0_440] : memref<32x1xf32, #tpu.memory_space<vmem>>, vector<1x1xf32>
    %1698 = arith.addf %1692, %1697 : vector<1x1xf32>
    %c2_i32_441 = arith.constant 2 : i32
    %1699 = arith.addi %1688, %c2_i32_441 : i32
    %1700 = arith.index_cast %1699 : i32 to index
    %1701 = memref.load %arg1[%1700] : memref<512xi32, #tpu.memory_space<smem>>
    %1702 = arith.index_cast %1701 : i32 to index
    %c0_442 = arith.constant 0 : index
    %1703 = vector.load %arg2[%1702, %c0_442] : memref<32x1xf32, #tpu.memory_space<vmem>>, vector<1x1xf32>
    %1704 = arith.addf %1698, %1703 : vector<1x1xf32>
    %c3_i32_443 = arith.constant 3 : i32
    %1705 = arith.addi %1688, %c3_i32_443 : i32
    %1706 = arith.index_cast %1705 : i32 to index
    %1707 = memref.load %arg1[%1706] : memref<512xi32, #tpu.memory_space<smem>>
    %1708 = arith.index_cast %1707 : i32 to index
    %c0_444 = arith.constant 0 : index
    %1709 = vector.load %arg2[%1708, %c0_444] : memref<32x1xf32, #tpu.memory_space<vmem>>, vector<1x1xf32>
    %1710 = arith.addf %1704, %1709 : vector<1x1xf32>
    %c60_i32_445 = arith.constant 60 : i32
    %1711 = vector.broadcast %c60_i32_445 : i32 to vector<1x128xi32>
    %1712 = arith.cmpi eq, %1, %1711 : vector<1x128xi32>
    %1713 = vector.shape_cast %1710 : vector<1x1xf32> to vector<1x1xf32>
    %1714 = vector.broadcast %1713 : vector<1x1xf32> to vector<1x128xf32>
    %1715 = arith.select %1712, %1714, %1687 : vector<1x128xi1>, vector<1x128xf32>
    %c244_i32 = arith.constant 244 : i32
    %1716 = arith.addi %7, %c244_i32 : i32
    %1717 = arith.index_cast %1716 : i32 to index
    %1718 = memref.load %arg1[%1717] : memref<512xi32, #tpu.memory_space<smem>>
    %1719 = arith.index_cast %1718 : i32 to index
    %c0_446 = arith.constant 0 : index
    %1720 = vector.load %arg2[%1719, %c0_446] : memref<32x1xf32, #tpu.memory_space<vmem>>, vector<1x1xf32>
    %c1_i32_447 = arith.constant 1 : i32
    %1721 = arith.addi %1716, %c1_i32_447 : i32
    %1722 = arith.index_cast %1721 : i32 to index
    %1723 = memref.load %arg1[%1722] : memref<512xi32, #tpu.memory_space<smem>>
    %1724 = arith.index_cast %1723 : i32 to index
    %c0_448 = arith.constant 0 : index
    %1725 = vector.load %arg2[%1724, %c0_448] : memref<32x1xf32, #tpu.memory_space<vmem>>, vector<1x1xf32>
    %1726 = arith.addf %1720, %1725 : vector<1x1xf32>
    %c2_i32_449 = arith.constant 2 : i32
    %1727 = arith.addi %1716, %c2_i32_449 : i32
    %1728 = arith.index_cast %1727 : i32 to index
    %1729 = memref.load %arg1[%1728] : memref<512xi32, #tpu.memory_space<smem>>
    %1730 = arith.index_cast %1729 : i32 to index
    %c0_450 = arith.constant 0 : index
    %1731 = vector.load %arg2[%1730, %c0_450] : memref<32x1xf32, #tpu.memory_space<vmem>>, vector<1x1xf32>
    %1732 = arith.addf %1726, %1731 : vector<1x1xf32>
    %c3_i32_451 = arith.constant 3 : i32
    %1733 = arith.addi %1716, %c3_i32_451 : i32
    %1734 = arith.index_cast %1733 : i32 to index
    %1735 = memref.load %arg1[%1734] : memref<512xi32, #tpu.memory_space<smem>>
    %1736 = arith.index_cast %1735 : i32 to index
    %c0_452 = arith.constant 0 : index
    %1737 = vector.load %arg2[%1736, %c0_452] : memref<32x1xf32, #tpu.memory_space<vmem>>, vector<1x1xf32>
    %1738 = arith.addf %1732, %1737 : vector<1x1xf32>
    %c61_i32 = arith.constant 61 : i32
    %1739 = vector.broadcast %c61_i32 : i32 to vector<1x128xi32>
    %1740 = arith.cmpi eq, %1, %1739 : vector<1x128xi32>
    %1741 = vector.shape_cast %1738 : vector<1x1xf32> to vector<1x1xf32>
    %1742 = vector.broadcast %1741 : vector<1x1xf32> to vector<1x128xf32>
    %1743 = arith.select %1740, %1742, %1715 : vector<1x128xi1>, vector<1x128xf32>
    %c248_i32 = arith.constant 248 : i32
    %1744 = arith.addi %7, %c248_i32 : i32
    %1745 = arith.index_cast %1744 : i32 to index
    %1746 = memref.load %arg1[%1745] : memref<512xi32, #tpu.memory_space<smem>>
    %1747 = arith.index_cast %1746 : i32 to index
    %c0_453 = arith.constant 0 : index
    %1748 = vector.load %arg2[%1747, %c0_453] : memref<32x1xf32, #tpu.memory_space<vmem>>, vector<1x1xf32>
    %c1_i32_454 = arith.constant 1 : i32
    %1749 = arith.addi %1744, %c1_i32_454 : i32
    %1750 = arith.index_cast %1749 : i32 to index
    %1751 = memref.load %arg1[%1750] : memref<512xi32, #tpu.memory_space<smem>>
    %1752 = arith.index_cast %1751 : i32 to index
    %c0_455 = arith.constant 0 : index
    %1753 = vector.load %arg2[%1752, %c0_455] : memref<32x1xf32, #tpu.memory_space<vmem>>, vector<1x1xf32>
    %1754 = arith.addf %1748, %1753 : vector<1x1xf32>
    %c2_i32_456 = arith.constant 2 : i32
    %1755 = arith.addi %1744, %c2_i32_456 : i32
    %1756 = arith.index_cast %1755 : i32 to index
    %1757 = memref.load %arg1[%1756] : memref<512xi32, #tpu.memory_space<smem>>
    %1758 = arith.index_cast %1757 : i32 to index
    %c0_457 = arith.constant 0 : index
    %1759 = vector.load %arg2[%1758, %c0_457] : memref<32x1xf32, #tpu.memory_space<vmem>>, vector<1x1xf32>
    %1760 = arith.addf %1754, %1759 : vector<1x1xf32>
    %c3_i32_458 = arith.constant 3 : i32
    %1761 = arith.addi %1744, %c3_i32_458 : i32
    %1762 = arith.index_cast %1761 : i32 to index
    %1763 = memref.load %arg1[%1762] : memref<512xi32, #tpu.memory_space<smem>>
    %1764 = arith.index_cast %1763 : i32 to index
    %c0_459 = arith.constant 0 : index
    %1765 = vector.load %arg2[%1764, %c0_459] : memref<32x1xf32, #tpu.memory_space<vmem>>, vector<1x1xf32>
    %1766 = arith.addf %1760, %1765 : vector<1x1xf32>
    %c62_i32 = arith.constant 62 : i32
    %1767 = vector.broadcast %c62_i32 : i32 to vector<1x128xi32>
    %1768 = arith.cmpi eq, %1, %1767 : vector<1x128xi32>
    %1769 = vector.shape_cast %1766 : vector<1x1xf32> to vector<1x1xf32>
    %1770 = vector.broadcast %1769 : vector<1x1xf32> to vector<1x128xf32>
    %1771 = arith.select %1768, %1770, %1743 : vector<1x128xi1>, vector<1x128xf32>
    %c252_i32 = arith.constant 252 : i32
    %1772 = arith.addi %7, %c252_i32 : i32
    %1773 = arith.index_cast %1772 : i32 to index
    %1774 = memref.load %arg1[%1773] : memref<512xi32, #tpu.memory_space<smem>>
    %1775 = arith.index_cast %1774 : i32 to index
    %c0_460 = arith.constant 0 : index
    %1776 = vector.load %arg2[%1775, %c0_460] : memref<32x1xf32, #tpu.memory_space<vmem>>, vector<1x1xf32>
    %c1_i32_461 = arith.constant 1 : i32
    %1777 = arith.addi %1772, %c1_i32_461 : i32
    %1778 = arith.index_cast %1777 : i32 to index
    %1779 = memref.load %arg1[%1778] : memref<512xi32, #tpu.memory_space<smem>>
    %1780 = arith.index_cast %1779 : i32 to index
    %c0_462 = arith.constant 0 : index
    %1781 = vector.load %arg2[%1780, %c0_462] : memref<32x1xf32, #tpu.memory_space<vmem>>, vector<1x1xf32>
    %1782 = arith.addf %1776, %1781 : vector<1x1xf32>
    %c2_i32_463 = arith.constant 2 : i32
    %1783 = arith.addi %1772, %c2_i32_463 : i32
    %1784 = arith.index_cast %1783 : i32 to index
    %1785 = memref.load %arg1[%1784] : memref<512xi32, #tpu.memory_space<smem>>
    %1786 = arith.index_cast %1785 : i32 to index
    %c0_464 = arith.constant 0 : index
    %1787 = vector.load %arg2[%1786, %c0_464] : memref<32x1xf32, #tpu.memory_space<vmem>>, vector<1x1xf32>
    %1788 = arith.addf %1782, %1787 : vector<1x1xf32>
    %c3_i32_465 = arith.constant 3 : i32
    %1789 = arith.addi %1772, %c3_i32_465 : i32
    %1790 = arith.index_cast %1789 : i32 to index
    %1791 = memref.load %arg1[%1790] : memref<512xi32, #tpu.memory_space<smem>>
    %1792 = arith.index_cast %1791 : i32 to index
    %c0_466 = arith.constant 0 : index
    %1793 = vector.load %arg2[%1792, %c0_466] : memref<32x1xf32, #tpu.memory_space<vmem>>, vector<1x1xf32>
    %1794 = arith.addf %1788, %1793 : vector<1x1xf32>
    %c63_i32 = arith.constant 63 : i32
    %1795 = vector.broadcast %c63_i32 : i32 to vector<1x128xi32>
    %1796 = arith.cmpi eq, %1, %1795 : vector<1x128xi32>
    %1797 = vector.shape_cast %1794 : vector<1x1xf32> to vector<1x1xf32>
    %1798 = vector.broadcast %1797 : vector<1x1xf32> to vector<1x128xf32>
    %1799 = arith.select %1796, %1798, %1771 : vector<1x128xi1>, vector<1x128xf32>
    %c256_i32 = arith.constant 256 : i32
    %1800 = arith.addi %7, %c256_i32 : i32
    %1801 = arith.index_cast %1800 : i32 to index
    %1802 = memref.load %arg1[%1801] : memref<512xi32, #tpu.memory_space<smem>>
    %1803 = arith.index_cast %1802 : i32 to index
    %c0_467 = arith.constant 0 : index
    %1804 = vector.load %arg2[%1803, %c0_467] : memref<32x1xf32, #tpu.memory_space<vmem>>, vector<1x1xf32>
    %c1_i32_468 = arith.constant 1 : i32
    %1805 = arith.addi %1800, %c1_i32_468 : i32
    %1806 = arith.index_cast %1805 : i32 to index
    %1807 = memref.load %arg1[%1806] : memref<512xi32, #tpu.memory_space<smem>>
    %1808 = arith.index_cast %1807 : i32 to index
    %c0_469 = arith.constant 0 : index
    %1809 = vector.load %arg2[%1808, %c0_469] : memref<32x1xf32, #tpu.memory_space<vmem>>, vector<1x1xf32>
    %1810 = arith.addf %1804, %1809 : vector<1x1xf32>
    %c2_i32_470 = arith.constant 2 : i32
    %1811 = arith.addi %1800, %c2_i32_470 : i32
    %1812 = arith.index_cast %1811 : i32 to index
    %1813 = memref.load %arg1[%1812] : memref<512xi32, #tpu.memory_space<smem>>
    %1814 = arith.index_cast %1813 : i32 to index
    %c0_471 = arith.constant 0 : index
    %1815 = vector.load %arg2[%1814, %c0_471] : memref<32x1xf32, #tpu.memory_space<vmem>>, vector<1x1xf32>
    %1816 = arith.addf %1810, %1815 : vector<1x1xf32>
    %c3_i32_472 = arith.constant 3 : i32
    %1817 = arith.addi %1800, %c3_i32_472 : i32
    %1818 = arith.index_cast %1817 : i32 to index
    %1819 = memref.load %arg1[%1818] : memref<512xi32, #tpu.memory_space<smem>>
    %1820 = arith.index_cast %1819 : i32 to index
    %c0_473 = arith.constant 0 : index
    %1821 = vector.load %arg2[%1820, %c0_473] : memref<32x1xf32, #tpu.memory_space<vmem>>, vector<1x1xf32>
    %1822 = arith.addf %1816, %1821 : vector<1x1xf32>
    %c64_i32_474 = arith.constant 64 : i32
    %1823 = vector.broadcast %c64_i32_474 : i32 to vector<1x128xi32>
    %1824 = arith.cmpi eq, %1, %1823 : vector<1x128xi32>
    %1825 = vector.shape_cast %1822 : vector<1x1xf32> to vector<1x1xf32>
    %1826 = vector.broadcast %1825 : vector<1x1xf32> to vector<1x128xf32>
    %1827 = arith.select %1824, %1826, %5 : vector<1x128xi1>, vector<1x128xf32>
    %c260_i32 = arith.constant 260 : i32
    %1828 = arith.addi %7, %c260_i32 : i32
    %1829 = arith.index_cast %1828 : i32 to index
    %1830 = memref.load %arg1[%1829] : memref<512xi32, #tpu.memory_space<smem>>
    %1831 = arith.index_cast %1830 : i32 to index
    %c0_475 = arith.constant 0 : index
    %1832 = vector.load %arg2[%1831, %c0_475] : memref<32x1xf32, #tpu.memory_space<vmem>>, vector<1x1xf32>
    %c1_i32_476 = arith.constant 1 : i32
    %1833 = arith.addi %1828, %c1_i32_476 : i32
    %1834 = arith.index_cast %1833 : i32 to index
    %1835 = memref.load %arg1[%1834] : memref<512xi32, #tpu.memory_space<smem>>
    %1836 = arith.index_cast %1835 : i32 to index
    %c0_477 = arith.constant 0 : index
    %1837 = vector.load %arg2[%1836, %c0_477] : memref<32x1xf32, #tpu.memory_space<vmem>>, vector<1x1xf32>
    %1838 = arith.addf %1832, %1837 : vector<1x1xf32>
    %c2_i32_478 = arith.constant 2 : i32
    %1839 = arith.addi %1828, %c2_i32_478 : i32
    %1840 = arith.index_cast %1839 : i32 to index
    %1841 = memref.load %arg1[%1840] : memref<512xi32, #tpu.memory_space<smem>>
    %1842 = arith.index_cast %1841 : i32 to index
    %c0_479 = arith.constant 0 : index
    %1843 = vector.load %arg2[%1842, %c0_479] : memref<32x1xf32, #tpu.memory_space<vmem>>, vector<1x1xf32>
    %1844 = arith.addf %1838, %1843 : vector<1x1xf32>
    %c3_i32_480 = arith.constant 3 : i32
    %1845 = arith.addi %1828, %c3_i32_480 : i32
    %1846 = arith.index_cast %1845 : i32 to index
    %1847 = memref.load %arg1[%1846] : memref<512xi32, #tpu.memory_space<smem>>
    %1848 = arith.index_cast %1847 : i32 to index
    %c0_481 = arith.constant 0 : index
    %1849 = vector.load %arg2[%1848, %c0_481] : memref<32x1xf32, #tpu.memory_space<vmem>>, vector<1x1xf32>
    %1850 = arith.addf %1844, %1849 : vector<1x1xf32>
    %c65_i32 = arith.constant 65 : i32
    %1851 = vector.broadcast %c65_i32 : i32 to vector<1x128xi32>
    %1852 = arith.cmpi eq, %1, %1851 : vector<1x128xi32>
    %1853 = vector.shape_cast %1850 : vector<1x1xf32> to vector<1x1xf32>
    %1854 = vector.broadcast %1853 : vector<1x1xf32> to vector<1x128xf32>
    %1855 = arith.select %1852, %1854, %1827 : vector<1x128xi1>, vector<1x128xf32>
    %c264_i32 = arith.constant 264 : i32
    %1856 = arith.addi %7, %c264_i32 : i32
    %1857 = arith.index_cast %1856 : i32 to index
    %1858 = memref.load %arg1[%1857] : memref<512xi32, #tpu.memory_space<smem>>
    %1859 = arith.index_cast %1858 : i32 to index
    %c0_482 = arith.constant 0 : index
    %1860 = vector.load %arg2[%1859, %c0_482] : memref<32x1xf32, #tpu.memory_space<vmem>>, vector<1x1xf32>
    %c1_i32_483 = arith.constant 1 : i32
    %1861 = arith.addi %1856, %c1_i32_483 : i32
    %1862 = arith.index_cast %1861 : i32 to index
    %1863 = memref.load %arg1[%1862] : memref<512xi32, #tpu.memory_space<smem>>
    %1864 = arith.index_cast %1863 : i32 to index
    %c0_484 = arith.constant 0 : index
    %1865 = vector.load %arg2[%1864, %c0_484] : memref<32x1xf32, #tpu.memory_space<vmem>>, vector<1x1xf32>
    %1866 = arith.addf %1860, %1865 : vector<1x1xf32>
    %c2_i32_485 = arith.constant 2 : i32
    %1867 = arith.addi %1856, %c2_i32_485 : i32
    %1868 = arith.index_cast %1867 : i32 to index
    %1869 = memref.load %arg1[%1868] : memref<512xi32, #tpu.memory_space<smem>>
    %1870 = arith.index_cast %1869 : i32 to index
    %c0_486 = arith.constant 0 : index
    %1871 = vector.load %arg2[%1870, %c0_486] : memref<32x1xf32, #tpu.memory_space<vmem>>, vector<1x1xf32>
    %1872 = arith.addf %1866, %1871 : vector<1x1xf32>
    %c3_i32_487 = arith.constant 3 : i32
    %1873 = arith.addi %1856, %c3_i32_487 : i32
    %1874 = arith.index_cast %1873 : i32 to index
    %1875 = memref.load %arg1[%1874] : memref<512xi32, #tpu.memory_space<smem>>
    %1876 = arith.index_cast %1875 : i32 to index
    %c0_488 = arith.constant 0 : index
    %1877 = vector.load %arg2[%1876, %c0_488] : memref<32x1xf32, #tpu.memory_space<vmem>>, vector<1x1xf32>
    %1878 = arith.addf %1872, %1877 : vector<1x1xf32>
    %c66_i32 = arith.constant 66 : i32
    %1879 = vector.broadcast %c66_i32 : i32 to vector<1x128xi32>
    %1880 = arith.cmpi eq, %1, %1879 : vector<1x128xi32>
    %1881 = vector.shape_cast %1878 : vector<1x1xf32> to vector<1x1xf32>
    %1882 = vector.broadcast %1881 : vector<1x1xf32> to vector<1x128xf32>
    %1883 = arith.select %1880, %1882, %1855 : vector<1x128xi1>, vector<1x128xf32>
    %c268_i32 = arith.constant 268 : i32
    %1884 = arith.addi %7, %c268_i32 : i32
    %1885 = arith.index_cast %1884 : i32 to index
    %1886 = memref.load %arg1[%1885] : memref<512xi32, #tpu.memory_space<smem>>
    %1887 = arith.index_cast %1886 : i32 to index
    %c0_489 = arith.constant 0 : index
    %1888 = vector.load %arg2[%1887, %c0_489] : memref<32x1xf32, #tpu.memory_space<vmem>>, vector<1x1xf32>
    %c1_i32_490 = arith.constant 1 : i32
    %1889 = arith.addi %1884, %c1_i32_490 : i32
    %1890 = arith.index_cast %1889 : i32 to index
    %1891 = memref.load %arg1[%1890] : memref<512xi32, #tpu.memory_space<smem>>
    %1892 = arith.index_cast %1891 : i32 to index
    %c0_491 = arith.constant 0 : index
    %1893 = vector.load %arg2[%1892, %c0_491] : memref<32x1xf32, #tpu.memory_space<vmem>>, vector<1x1xf32>
    %1894 = arith.addf %1888, %1893 : vector<1x1xf32>
    %c2_i32_492 = arith.constant 2 : i32
    %1895 = arith.addi %1884, %c2_i32_492 : i32
    %1896 = arith.index_cast %1895 : i32 to index
    %1897 = memref.load %arg1[%1896] : memref<512xi32, #tpu.memory_space<smem>>
    %1898 = arith.index_cast %1897 : i32 to index
    %c0_493 = arith.constant 0 : index
    %1899 = vector.load %arg2[%1898, %c0_493] : memref<32x1xf32, #tpu.memory_space<vmem>>, vector<1x1xf32>
    %1900 = arith.addf %1894, %1899 : vector<1x1xf32>
    %c3_i32_494 = arith.constant 3 : i32
    %1901 = arith.addi %1884, %c3_i32_494 : i32
    %1902 = arith.index_cast %1901 : i32 to index
    %1903 = memref.load %arg1[%1902] : memref<512xi32, #tpu.memory_space<smem>>
    %1904 = arith.index_cast %1903 : i32 to index
    %c0_495 = arith.constant 0 : index
    %1905 = vector.load %arg2[%1904, %c0_495] : memref<32x1xf32, #tpu.memory_space<vmem>>, vector<1x1xf32>
    %1906 = arith.addf %1900, %1905 : vector<1x1xf32>
    %c67_i32 = arith.constant 67 : i32
    %1907 = vector.broadcast %c67_i32 : i32 to vector<1x128xi32>
    %1908 = arith.cmpi eq, %1, %1907 : vector<1x128xi32>
    %1909 = vector.shape_cast %1906 : vector<1x1xf32> to vector<1x1xf32>
    %1910 = vector.broadcast %1909 : vector<1x1xf32> to vector<1x128xf32>
    %1911 = arith.select %1908, %1910, %1883 : vector<1x128xi1>, vector<1x128xf32>
    %c272_i32 = arith.constant 272 : i32
    %1912 = arith.addi %7, %c272_i32 : i32
    %1913 = arith.index_cast %1912 : i32 to index
    %1914 = memref.load %arg1[%1913] : memref<512xi32, #tpu.memory_space<smem>>
    %1915 = arith.index_cast %1914 : i32 to index
    %c0_496 = arith.constant 0 : index
    %1916 = vector.load %arg2[%1915, %c0_496] : memref<32x1xf32, #tpu.memory_space<vmem>>, vector<1x1xf32>
    %c1_i32_497 = arith.constant 1 : i32
    %1917 = arith.addi %1912, %c1_i32_497 : i32
    %1918 = arith.index_cast %1917 : i32 to index
    %1919 = memref.load %arg1[%1918] : memref<512xi32, #tpu.memory_space<smem>>
    %1920 = arith.index_cast %1919 : i32 to index
    %c0_498 = arith.constant 0 : index
    %1921 = vector.load %arg2[%1920, %c0_498] : memref<32x1xf32, #tpu.memory_space<vmem>>, vector<1x1xf32>
    %1922 = arith.addf %1916, %1921 : vector<1x1xf32>
    %c2_i32_499 = arith.constant 2 : i32
    %1923 = arith.addi %1912, %c2_i32_499 : i32
    %1924 = arith.index_cast %1923 : i32 to index
    %1925 = memref.load %arg1[%1924] : memref<512xi32, #tpu.memory_space<smem>>
    %1926 = arith.index_cast %1925 : i32 to index
    %c0_500 = arith.constant 0 : index
    %1927 = vector.load %arg2[%1926, %c0_500] : memref<32x1xf32, #tpu.memory_space<vmem>>, vector<1x1xf32>
    %1928 = arith.addf %1922, %1927 : vector<1x1xf32>
    %c3_i32_501 = arith.constant 3 : i32
    %1929 = arith.addi %1912, %c3_i32_501 : i32
    %1930 = arith.index_cast %1929 : i32 to index
    %1931 = memref.load %arg1[%1930] : memref<512xi32, #tpu.memory_space<smem>>
    %1932 = arith.index_cast %1931 : i32 to index
    %c0_502 = arith.constant 0 : index
    %1933 = vector.load %arg2[%1932, %c0_502] : memref<32x1xf32, #tpu.memory_space<vmem>>, vector<1x1xf32>
    %1934 = arith.addf %1928, %1933 : vector<1x1xf32>
    %c68_i32_503 = arith.constant 68 : i32
    %1935 = vector.broadcast %c68_i32_503 : i32 to vector<1x128xi32>
    %1936 = arith.cmpi eq, %1, %1935 : vector<1x128xi32>
    %1937 = vector.shape_cast %1934 : vector<1x1xf32> to vector<1x1xf32>
    %1938 = vector.broadcast %1937 : vector<1x1xf32> to vector<1x128xf32>
    %1939 = arith.select %1936, %1938, %1911 : vector<1x128xi1>, vector<1x128xf32>
    %c276_i32 = arith.constant 276 : i32
    %1940 = arith.addi %7, %c276_i32 : i32
    %1941 = arith.index_cast %1940 : i32 to index
    %1942 = memref.load %arg1[%1941] : memref<512xi32, #tpu.memory_space<smem>>
    %1943 = arith.index_cast %1942 : i32 to index
    %c0_504 = arith.constant 0 : index
    %1944 = vector.load %arg2[%1943, %c0_504] : memref<32x1xf32, #tpu.memory_space<vmem>>, vector<1x1xf32>
    %c1_i32_505 = arith.constant 1 : i32
    %1945 = arith.addi %1940, %c1_i32_505 : i32
    %1946 = arith.index_cast %1945 : i32 to index
    %1947 = memref.load %arg1[%1946] : memref<512xi32, #tpu.memory_space<smem>>
    %1948 = arith.index_cast %1947 : i32 to index
    %c0_506 = arith.constant 0 : index
    %1949 = vector.load %arg2[%1948, %c0_506] : memref<32x1xf32, #tpu.memory_space<vmem>>, vector<1x1xf32>
    %1950 = arith.addf %1944, %1949 : vector<1x1xf32>
    %c2_i32_507 = arith.constant 2 : i32
    %1951 = arith.addi %1940, %c2_i32_507 : i32
    %1952 = arith.index_cast %1951 : i32 to index
    %1953 = memref.load %arg1[%1952] : memref<512xi32, #tpu.memory_space<smem>>
    %1954 = arith.index_cast %1953 : i32 to index
    %c0_508 = arith.constant 0 : index
    %1955 = vector.load %arg2[%1954, %c0_508] : memref<32x1xf32, #tpu.memory_space<vmem>>, vector<1x1xf32>
    %1956 = arith.addf %1950, %1955 : vector<1x1xf32>
    %c3_i32_509 = arith.constant 3 : i32
    %1957 = arith.addi %1940, %c3_i32_509 : i32
    %1958 = arith.index_cast %1957 : i32 to index
    %1959 = memref.load %arg1[%1958] : memref<512xi32, #tpu.memory_space<smem>>
    %1960 = arith.index_cast %1959 : i32 to index
    %c0_510 = arith.constant 0 : index
    %1961 = vector.load %arg2[%1960, %c0_510] : memref<32x1xf32, #tpu.memory_space<vmem>>, vector<1x1xf32>
    %1962 = arith.addf %1956, %1961 : vector<1x1xf32>
    %c69_i32 = arith.constant 69 : i32
    %1963 = vector.broadcast %c69_i32 : i32 to vector<1x128xi32>
    %1964 = arith.cmpi eq, %1, %1963 : vector<1x128xi32>
    %1965 = vector.shape_cast %1962 : vector<1x1xf32> to vector<1x1xf32>
    %1966 = vector.broadcast %1965 : vector<1x1xf32> to vector<1x128xf32>
    %1967 = arith.select %1964, %1966, %1939 : vector<1x128xi1>, vector<1x128xf32>
    %c280_i32 = arith.constant 280 : i32
    %1968 = arith.addi %7, %c280_i32 : i32
    %1969 = arith.index_cast %1968 : i32 to index
    %1970 = memref.load %arg1[%1969] : memref<512xi32, #tpu.memory_space<smem>>
    %1971 = arith.index_cast %1970 : i32 to index
    %c0_511 = arith.constant 0 : index
    %1972 = vector.load %arg2[%1971, %c0_511] : memref<32x1xf32, #tpu.memory_space<vmem>>, vector<1x1xf32>
    %c1_i32_512 = arith.constant 1 : i32
    %1973 = arith.addi %1968, %c1_i32_512 : i32
    %1974 = arith.index_cast %1973 : i32 to index
    %1975 = memref.load %arg1[%1974] : memref<512xi32, #tpu.memory_space<smem>>
    %1976 = arith.index_cast %1975 : i32 to index
    %c0_513 = arith.constant 0 : index
    %1977 = vector.load %arg2[%1976, %c0_513] : memref<32x1xf32, #tpu.memory_space<vmem>>, vector<1x1xf32>
    %1978 = arith.addf %1972, %1977 : vector<1x1xf32>
    %c2_i32_514 = arith.constant 2 : i32
    %1979 = arith.addi %1968, %c2_i32_514 : i32
    %1980 = arith.index_cast %1979 : i32 to index
    %1981 = memref.load %arg1[%1980] : memref<512xi32, #tpu.memory_space<smem>>
    %1982 = arith.index_cast %1981 : i32 to index
    %c0_515 = arith.constant 0 : index
    %1983 = vector.load %arg2[%1982, %c0_515] : memref<32x1xf32, #tpu.memory_space<vmem>>, vector<1x1xf32>
    %1984 = arith.addf %1978, %1983 : vector<1x1xf32>
    %c3_i32_516 = arith.constant 3 : i32
    %1985 = arith.addi %1968, %c3_i32_516 : i32
    %1986 = arith.index_cast %1985 : i32 to index
    %1987 = memref.load %arg1[%1986] : memref<512xi32, #tpu.memory_space<smem>>
    %1988 = arith.index_cast %1987 : i32 to index
    %c0_517 = arith.constant 0 : index
    %1989 = vector.load %arg2[%1988, %c0_517] : memref<32x1xf32, #tpu.memory_space<vmem>>, vector<1x1xf32>
    %1990 = arith.addf %1984, %1989 : vector<1x1xf32>
    %c70_i32 = arith.constant 70 : i32
    %1991 = vector.broadcast %c70_i32 : i32 to vector<1x128xi32>
    %1992 = arith.cmpi eq, %1, %1991 : vector<1x128xi32>
    %1993 = vector.shape_cast %1990 : vector<1x1xf32> to vector<1x1xf32>
    %1994 = vector.broadcast %1993 : vector<1x1xf32> to vector<1x128xf32>
    %1995 = arith.select %1992, %1994, %1967 : vector<1x128xi1>, vector<1x128xf32>
    %c284_i32 = arith.constant 284 : i32
    %1996 = arith.addi %7, %c284_i32 : i32
    %1997 = arith.index_cast %1996 : i32 to index
    %1998 = memref.load %arg1[%1997] : memref<512xi32, #tpu.memory_space<smem>>
    %1999 = arith.index_cast %1998 : i32 to index
    %c0_518 = arith.constant 0 : index
    %2000 = vector.load %arg2[%1999, %c0_518] : memref<32x1xf32, #tpu.memory_space<vmem>>, vector<1x1xf32>
    %c1_i32_519 = arith.constant 1 : i32
    %2001 = arith.addi %1996, %c1_i32_519 : i32
    %2002 = arith.index_cast %2001 : i32 to index
    %2003 = memref.load %arg1[%2002] : memref<512xi32, #tpu.memory_space<smem>>
    %2004 = arith.index_cast %2003 : i32 to index
    %c0_520 = arith.constant 0 : index
    %2005 = vector.load %arg2[%2004, %c0_520] : memref<32x1xf32, #tpu.memory_space<vmem>>, vector<1x1xf32>
    %2006 = arith.addf %2000, %2005 : vector<1x1xf32>
    %c2_i32_521 = arith.constant 2 : i32
    %2007 = arith.addi %1996, %c2_i32_521 : i32
    %2008 = arith.index_cast %2007 : i32 to index
    %2009 = memref.load %arg1[%2008] : memref<512xi32, #tpu.memory_space<smem>>
    %2010 = arith.index_cast %2009 : i32 to index
    %c0_522 = arith.constant 0 : index
    %2011 = vector.load %arg2[%2010, %c0_522] : memref<32x1xf32, #tpu.memory_space<vmem>>, vector<1x1xf32>
    %2012 = arith.addf %2006, %2011 : vector<1x1xf32>
    %c3_i32_523 = arith.constant 3 : i32
    %2013 = arith.addi %1996, %c3_i32_523 : i32
    %2014 = arith.index_cast %2013 : i32 to index
    %2015 = memref.load %arg1[%2014] : memref<512xi32, #tpu.memory_space<smem>>
    %2016 = arith.index_cast %2015 : i32 to index
    %c0_524 = arith.constant 0 : index
    %2017 = vector.load %arg2[%2016, %c0_524] : memref<32x1xf32, #tpu.memory_space<vmem>>, vector<1x1xf32>
    %2018 = arith.addf %2012, %2017 : vector<1x1xf32>
    %c71_i32 = arith.constant 71 : i32
    %2019 = vector.broadcast %c71_i32 : i32 to vector<1x128xi32>
    %2020 = arith.cmpi eq, %1, %2019 : vector<1x128xi32>
    %2021 = vector.shape_cast %2018 : vector<1x1xf32> to vector<1x1xf32>
    %2022 = vector.broadcast %2021 : vector<1x1xf32> to vector<1x128xf32>
    %2023 = arith.select %2020, %2022, %1995 : vector<1x128xi1>, vector<1x128xf32>
    %c288_i32 = arith.constant 288 : i32
    %2024 = arith.addi %7, %c288_i32 : i32
    %2025 = arith.index_cast %2024 : i32 to index
    %2026 = memref.load %arg1[%2025] : memref<512xi32, #tpu.memory_space<smem>>
    %2027 = arith.index_cast %2026 : i32 to index
    %c0_525 = arith.constant 0 : index
    %2028 = vector.load %arg2[%2027, %c0_525] : memref<32x1xf32, #tpu.memory_space<vmem>>, vector<1x1xf32>
    %c1_i32_526 = arith.constant 1 : i32
    %2029 = arith.addi %2024, %c1_i32_526 : i32
    %2030 = arith.index_cast %2029 : i32 to index
    %2031 = memref.load %arg1[%2030] : memref<512xi32, #tpu.memory_space<smem>>
    %2032 = arith.index_cast %2031 : i32 to index
    %c0_527 = arith.constant 0 : index
    %2033 = vector.load %arg2[%2032, %c0_527] : memref<32x1xf32, #tpu.memory_space<vmem>>, vector<1x1xf32>
    %2034 = arith.addf %2028, %2033 : vector<1x1xf32>
    %c2_i32_528 = arith.constant 2 : i32
    %2035 = arith.addi %2024, %c2_i32_528 : i32
    %2036 = arith.index_cast %2035 : i32 to index
    %2037 = memref.load %arg1[%2036] : memref<512xi32, #tpu.memory_space<smem>>
    %2038 = arith.index_cast %2037 : i32 to index
    %c0_529 = arith.constant 0 : index
    %2039 = vector.load %arg2[%2038, %c0_529] : memref<32x1xf32, #tpu.memory_space<vmem>>, vector<1x1xf32>
    %2040 = arith.addf %2034, %2039 : vector<1x1xf32>
    %c3_i32_530 = arith.constant 3 : i32
    %2041 = arith.addi %2024, %c3_i32_530 : i32
    %2042 = arith.index_cast %2041 : i32 to index
    %2043 = memref.load %arg1[%2042] : memref<512xi32, #tpu.memory_space<smem>>
    %2044 = arith.index_cast %2043 : i32 to index
    %c0_531 = arith.constant 0 : index
    %2045 = vector.load %arg2[%2044, %c0_531] : memref<32x1xf32, #tpu.memory_space<vmem>>, vector<1x1xf32>
    %2046 = arith.addf %2040, %2045 : vector<1x1xf32>
    %c72_i32_532 = arith.constant 72 : i32
    %2047 = vector.broadcast %c72_i32_532 : i32 to vector<1x128xi32>
    %2048 = arith.cmpi eq, %1, %2047 : vector<1x128xi32>
    %2049 = vector.shape_cast %2046 : vector<1x1xf32> to vector<1x1xf32>
    %2050 = vector.broadcast %2049 : vector<1x1xf32> to vector<1x128xf32>
    %2051 = arith.select %2048, %2050, %5 : vector<1x128xi1>, vector<1x128xf32>
    %c292_i32 = arith.constant 292 : i32
    %2052 = arith.addi %7, %c292_i32 : i32
    %2053 = arith.index_cast %2052 : i32 to index
    %2054 = memref.load %arg1[%2053] : memref<512xi32, #tpu.memory_space<smem>>
    %2055 = arith.index_cast %2054 : i32 to index
    %c0_533 = arith.constant 0 : index
    %2056 = vector.load %arg2[%2055, %c0_533] : memref<32x1xf32, #tpu.memory_space<vmem>>, vector<1x1xf32>
    %c1_i32_534 = arith.constant 1 : i32
    %2057 = arith.addi %2052, %c1_i32_534 : i32
    %2058 = arith.index_cast %2057 : i32 to index
    %2059 = memref.load %arg1[%2058] : memref<512xi32, #tpu.memory_space<smem>>
    %2060 = arith.index_cast %2059 : i32 to index
    %c0_535 = arith.constant 0 : index
    %2061 = vector.load %arg2[%2060, %c0_535] : memref<32x1xf32, #tpu.memory_space<vmem>>, vector<1x1xf32>
    %2062 = arith.addf %2056, %2061 : vector<1x1xf32>
    %c2_i32_536 = arith.constant 2 : i32
    %2063 = arith.addi %2052, %c2_i32_536 : i32
    %2064 = arith.index_cast %2063 : i32 to index
    %2065 = memref.load %arg1[%2064] : memref<512xi32, #tpu.memory_space<smem>>
    %2066 = arith.index_cast %2065 : i32 to index
    %c0_537 = arith.constant 0 : index
    %2067 = vector.load %arg2[%2066, %c0_537] : memref<32x1xf32, #tpu.memory_space<vmem>>, vector<1x1xf32>
    %2068 = arith.addf %2062, %2067 : vector<1x1xf32>
    %c3_i32_538 = arith.constant 3 : i32
    %2069 = arith.addi %2052, %c3_i32_538 : i32
    %2070 = arith.index_cast %2069 : i32 to index
    %2071 = memref.load %arg1[%2070] : memref<512xi32, #tpu.memory_space<smem>>
    %2072 = arith.index_cast %2071 : i32 to index
    %c0_539 = arith.constant 0 : index
    %2073 = vector.load %arg2[%2072, %c0_539] : memref<32x1xf32, #tpu.memory_space<vmem>>, vector<1x1xf32>
    %2074 = arith.addf %2068, %2073 : vector<1x1xf32>
    %c73_i32 = arith.constant 73 : i32
    %2075 = vector.broadcast %c73_i32 : i32 to vector<1x128xi32>
    %2076 = arith.cmpi eq, %1, %2075 : vector<1x128xi32>
    %2077 = vector.shape_cast %2074 : vector<1x1xf32> to vector<1x1xf32>
    %2078 = vector.broadcast %2077 : vector<1x1xf32> to vector<1x128xf32>
    %2079 = arith.select %2076, %2078, %2051 : vector<1x128xi1>, vector<1x128xf32>
    %c296_i32 = arith.constant 296 : i32
    %2080 = arith.addi %7, %c296_i32 : i32
    %2081 = arith.index_cast %2080 : i32 to index
    %2082 = memref.load %arg1[%2081] : memref<512xi32, #tpu.memory_space<smem>>
    %2083 = arith.index_cast %2082 : i32 to index
    %c0_540 = arith.constant 0 : index
    %2084 = vector.load %arg2[%2083, %c0_540] : memref<32x1xf32, #tpu.memory_space<vmem>>, vector<1x1xf32>
    %c1_i32_541 = arith.constant 1 : i32
    %2085 = arith.addi %2080, %c1_i32_541 : i32
    %2086 = arith.index_cast %2085 : i32 to index
    %2087 = memref.load %arg1[%2086] : memref<512xi32, #tpu.memory_space<smem>>
    %2088 = arith.index_cast %2087 : i32 to index
    %c0_542 = arith.constant 0 : index
    %2089 = vector.load %arg2[%2088, %c0_542] : memref<32x1xf32, #tpu.memory_space<vmem>>, vector<1x1xf32>
    %2090 = arith.addf %2084, %2089 : vector<1x1xf32>
    %c2_i32_543 = arith.constant 2 : i32
    %2091 = arith.addi %2080, %c2_i32_543 : i32
    %2092 = arith.index_cast %2091 : i32 to index
    %2093 = memref.load %arg1[%2092] : memref<512xi32, #tpu.memory_space<smem>>
    %2094 = arith.index_cast %2093 : i32 to index
    %c0_544 = arith.constant 0 : index
    %2095 = vector.load %arg2[%2094, %c0_544] : memref<32x1xf32, #tpu.memory_space<vmem>>, vector<1x1xf32>
    %2096 = arith.addf %2090, %2095 : vector<1x1xf32>
    %c3_i32_545 = arith.constant 3 : i32
    %2097 = arith.addi %2080, %c3_i32_545 : i32
    %2098 = arith.index_cast %2097 : i32 to index
    %2099 = memref.load %arg1[%2098] : memref<512xi32, #tpu.memory_space<smem>>
    %2100 = arith.index_cast %2099 : i32 to index
    %c0_546 = arith.constant 0 : index
    %2101 = vector.load %arg2[%2100, %c0_546] : memref<32x1xf32, #tpu.memory_space<vmem>>, vector<1x1xf32>
    %2102 = arith.addf %2096, %2101 : vector<1x1xf32>
    %c74_i32 = arith.constant 74 : i32
    %2103 = vector.broadcast %c74_i32 : i32 to vector<1x128xi32>
    %2104 = arith.cmpi eq, %1, %2103 : vector<1x128xi32>
    %2105 = vector.shape_cast %2102 : vector<1x1xf32> to vector<1x1xf32>
    %2106 = vector.broadcast %2105 : vector<1x1xf32> to vector<1x128xf32>
    %2107 = arith.select %2104, %2106, %2079 : vector<1x128xi1>, vector<1x128xf32>
    %c300_i32 = arith.constant 300 : i32
    %2108 = arith.addi %7, %c300_i32 : i32
    %2109 = arith.index_cast %2108 : i32 to index
    %2110 = memref.load %arg1[%2109] : memref<512xi32, #tpu.memory_space<smem>>
    %2111 = arith.index_cast %2110 : i32 to index
    %c0_547 = arith.constant 0 : index
    %2112 = vector.load %arg2[%2111, %c0_547] : memref<32x1xf32, #tpu.memory_space<vmem>>, vector<1x1xf32>
    %c1_i32_548 = arith.constant 1 : i32
    %2113 = arith.addi %2108, %c1_i32_548 : i32
    %2114 = arith.index_cast %2113 : i32 to index
    %2115 = memref.load %arg1[%2114] : memref<512xi32, #tpu.memory_space<smem>>
    %2116 = arith.index_cast %2115 : i32 to index
    %c0_549 = arith.constant 0 : index
    %2117 = vector.load %arg2[%2116, %c0_549] : memref<32x1xf32, #tpu.memory_space<vmem>>, vector<1x1xf32>
    %2118 = arith.addf %2112, %2117 : vector<1x1xf32>
    %c2_i32_550 = arith.constant 2 : i32
    %2119 = arith.addi %2108, %c2_i32_550 : i32
    %2120 = arith.index_cast %2119 : i32 to index
    %2121 = memref.load %arg1[%2120] : memref<512xi32, #tpu.memory_space<smem>>
    %2122 = arith.index_cast %2121 : i32 to index
    %c0_551 = arith.constant 0 : index
    %2123 = vector.load %arg2[%2122, %c0_551] : memref<32x1xf32, #tpu.memory_space<vmem>>, vector<1x1xf32>
    %2124 = arith.addf %2118, %2123 : vector<1x1xf32>
    %c3_i32_552 = arith.constant 3 : i32
    %2125 = arith.addi %2108, %c3_i32_552 : i32
    %2126 = arith.index_cast %2125 : i32 to index
    %2127 = memref.load %arg1[%2126] : memref<512xi32, #tpu.memory_space<smem>>
    %2128 = arith.index_cast %2127 : i32 to index
    %c0_553 = arith.constant 0 : index
    %2129 = vector.load %arg2[%2128, %c0_553] : memref<32x1xf32, #tpu.memory_space<vmem>>, vector<1x1xf32>
    %2130 = arith.addf %2124, %2129 : vector<1x1xf32>
    %c75_i32 = arith.constant 75 : i32
    %2131 = vector.broadcast %c75_i32 : i32 to vector<1x128xi32>
    %2132 = arith.cmpi eq, %1, %2131 : vector<1x128xi32>
    %2133 = vector.shape_cast %2130 : vector<1x1xf32> to vector<1x1xf32>
    %2134 = vector.broadcast %2133 : vector<1x1xf32> to vector<1x128xf32>
    %2135 = arith.select %2132, %2134, %2107 : vector<1x128xi1>, vector<1x128xf32>
    %c304_i32 = arith.constant 304 : i32
    %2136 = arith.addi %7, %c304_i32 : i32
    %2137 = arith.index_cast %2136 : i32 to index
    %2138 = memref.load %arg1[%2137] : memref<512xi32, #tpu.memory_space<smem>>
    %2139 = arith.index_cast %2138 : i32 to index
    %c0_554 = arith.constant 0 : index
    %2140 = vector.load %arg2[%2139, %c0_554] : memref<32x1xf32, #tpu.memory_space<vmem>>, vector<1x1xf32>
    %c1_i32_555 = arith.constant 1 : i32
    %2141 = arith.addi %2136, %c1_i32_555 : i32
    %2142 = arith.index_cast %2141 : i32 to index
    %2143 = memref.load %arg1[%2142] : memref<512xi32, #tpu.memory_space<smem>>
    %2144 = arith.index_cast %2143 : i32 to index
    %c0_556 = arith.constant 0 : index
    %2145 = vector.load %arg2[%2144, %c0_556] : memref<32x1xf32, #tpu.memory_space<vmem>>, vector<1x1xf32>
    %2146 = arith.addf %2140, %2145 : vector<1x1xf32>
    %c2_i32_557 = arith.constant 2 : i32
    %2147 = arith.addi %2136, %c2_i32_557 : i32
    %2148 = arith.index_cast %2147 : i32 to index
    %2149 = memref.load %arg1[%2148] : memref<512xi32, #tpu.memory_space<smem>>
    %2150 = arith.index_cast %2149 : i32 to index
    %c0_558 = arith.constant 0 : index
    %2151 = vector.load %arg2[%2150, %c0_558] : memref<32x1xf32, #tpu.memory_space<vmem>>, vector<1x1xf32>
    %2152 = arith.addf %2146, %2151 : vector<1x1xf32>
    %c3_i32_559 = arith.constant 3 : i32
    %2153 = arith.addi %2136, %c3_i32_559 : i32
    %2154 = arith.index_cast %2153 : i32 to index
    %2155 = memref.load %arg1[%2154] : memref<512xi32, #tpu.memory_space<smem>>
    %2156 = arith.index_cast %2155 : i32 to index
    %c0_560 = arith.constant 0 : index
    %2157 = vector.load %arg2[%2156, %c0_560] : memref<32x1xf32, #tpu.memory_space<vmem>>, vector<1x1xf32>
    %2158 = arith.addf %2152, %2157 : vector<1x1xf32>
    %c76_i32_561 = arith.constant 76 : i32
    %2159 = vector.broadcast %c76_i32_561 : i32 to vector<1x128xi32>
    %2160 = arith.cmpi eq, %1, %2159 : vector<1x128xi32>
    %2161 = vector.shape_cast %2158 : vector<1x1xf32> to vector<1x1xf32>
    %2162 = vector.broadcast %2161 : vector<1x1xf32> to vector<1x128xf32>
    %2163 = arith.select %2160, %2162, %2135 : vector<1x128xi1>, vector<1x128xf32>
    %c308_i32 = arith.constant 308 : i32
    %2164 = arith.addi %7, %c308_i32 : i32
    %2165 = arith.index_cast %2164 : i32 to index
    %2166 = memref.load %arg1[%2165] : memref<512xi32, #tpu.memory_space<smem>>
    %2167 = arith.index_cast %2166 : i32 to index
    %c0_562 = arith.constant 0 : index
    %2168 = vector.load %arg2[%2167, %c0_562] : memref<32x1xf32, #tpu.memory_space<vmem>>, vector<1x1xf32>
    %c1_i32_563 = arith.constant 1 : i32
    %2169 = arith.addi %2164, %c1_i32_563 : i32
    %2170 = arith.index_cast %2169 : i32 to index
    %2171 = memref.load %arg1[%2170] : memref<512xi32, #tpu.memory_space<smem>>
    %2172 = arith.index_cast %2171 : i32 to index
    %c0_564 = arith.constant 0 : index
    %2173 = vector.load %arg2[%2172, %c0_564] : memref<32x1xf32, #tpu.memory_space<vmem>>, vector<1x1xf32>
    %2174 = arith.addf %2168, %2173 : vector<1x1xf32>
    %c2_i32_565 = arith.constant 2 : i32
    %2175 = arith.addi %2164, %c2_i32_565 : i32
    %2176 = arith.index_cast %2175 : i32 to index
    %2177 = memref.load %arg1[%2176] : memref<512xi32, #tpu.memory_space<smem>>
    %2178 = arith.index_cast %2177 : i32 to index
    %c0_566 = arith.constant 0 : index
    %2179 = vector.load %arg2[%2178, %c0_566] : memref<32x1xf32, #tpu.memory_space<vmem>>, vector<1x1xf32>
    %2180 = arith.addf %2174, %2179 : vector<1x1xf32>
    %c3_i32_567 = arith.constant 3 : i32
    %2181 = arith.addi %2164, %c3_i32_567 : i32
    %2182 = arith.index_cast %2181 : i32 to index
    %2183 = memref.load %arg1[%2182] : memref<512xi32, #tpu.memory_space<smem>>
    %2184 = arith.index_cast %2183 : i32 to index
    %c0_568 = arith.constant 0 : index
    %2185 = vector.load %arg2[%2184, %c0_568] : memref<32x1xf32, #tpu.memory_space<vmem>>, vector<1x1xf32>
    %2186 = arith.addf %2180, %2185 : vector<1x1xf32>
    %c77_i32 = arith.constant 77 : i32
    %2187 = vector.broadcast %c77_i32 : i32 to vector<1x128xi32>
    %2188 = arith.cmpi eq, %1, %2187 : vector<1x128xi32>
    %2189 = vector.shape_cast %2186 : vector<1x1xf32> to vector<1x1xf32>
    %2190 = vector.broadcast %2189 : vector<1x1xf32> to vector<1x128xf32>
    %2191 = arith.select %2188, %2190, %2163 : vector<1x128xi1>, vector<1x128xf32>
    %c312_i32 = arith.constant 312 : i32
    %2192 = arith.addi %7, %c312_i32 : i32
    %2193 = arith.index_cast %2192 : i32 to index
    %2194 = memref.load %arg1[%2193] : memref<512xi32, #tpu.memory_space<smem>>
    %2195 = arith.index_cast %2194 : i32 to index
    %c0_569 = arith.constant 0 : index
    %2196 = vector.load %arg2[%2195, %c0_569] : memref<32x1xf32, #tpu.memory_space<vmem>>, vector<1x1xf32>
    %c1_i32_570 = arith.constant 1 : i32
    %2197 = arith.addi %2192, %c1_i32_570 : i32
    %2198 = arith.index_cast %2197 : i32 to index
    %2199 = memref.load %arg1[%2198] : memref<512xi32, #tpu.memory_space<smem>>
    %2200 = arith.index_cast %2199 : i32 to index
    %c0_571 = arith.constant 0 : index
    %2201 = vector.load %arg2[%2200, %c0_571] : memref<32x1xf32, #tpu.memory_space<vmem>>, vector<1x1xf32>
    %2202 = arith.addf %2196, %2201 : vector<1x1xf32>
    %c2_i32_572 = arith.constant 2 : i32
    %2203 = arith.addi %2192, %c2_i32_572 : i32
    %2204 = arith.index_cast %2203 : i32 to index
    %2205 = memref.load %arg1[%2204] : memref<512xi32, #tpu.memory_space<smem>>
    %2206 = arith.index_cast %2205 : i32 to index
    %c0_573 = arith.constant 0 : index
    %2207 = vector.load %arg2[%2206, %c0_573] : memref<32x1xf32, #tpu.memory_space<vmem>>, vector<1x1xf32>
    %2208 = arith.addf %2202, %2207 : vector<1x1xf32>
    %c3_i32_574 = arith.constant 3 : i32
    %2209 = arith.addi %2192, %c3_i32_574 : i32
    %2210 = arith.index_cast %2209 : i32 to index
    %2211 = memref.load %arg1[%2210] : memref<512xi32, #tpu.memory_space<smem>>
    %2212 = arith.index_cast %2211 : i32 to index
    %c0_575 = arith.constant 0 : index
    %2213 = vector.load %arg2[%2212, %c0_575] : memref<32x1xf32, #tpu.memory_space<vmem>>, vector<1x1xf32>
    %2214 = arith.addf %2208, %2213 : vector<1x1xf32>
    %c78_i32 = arith.constant 78 : i32
    %2215 = vector.broadcast %c78_i32 : i32 to vector<1x128xi32>
    %2216 = arith.cmpi eq, %1, %2215 : vector<1x128xi32>
    %2217 = vector.shape_cast %2214 : vector<1x1xf32> to vector<1x1xf32>
    %2218 = vector.broadcast %2217 : vector<1x1xf32> to vector<1x128xf32>
    %2219 = arith.select %2216, %2218, %2191 : vector<1x128xi1>, vector<1x128xf32>
    %c316_i32 = arith.constant 316 : i32
    %2220 = arith.addi %7, %c316_i32 : i32
    %2221 = arith.index_cast %2220 : i32 to index
    %2222 = memref.load %arg1[%2221] : memref<512xi32, #tpu.memory_space<smem>>
    %2223 = arith.index_cast %2222 : i32 to index
    %c0_576 = arith.constant 0 : index
    %2224 = vector.load %arg2[%2223, %c0_576] : memref<32x1xf32, #tpu.memory_space<vmem>>, vector<1x1xf32>
    %c1_i32_577 = arith.constant 1 : i32
    %2225 = arith.addi %2220, %c1_i32_577 : i32
    %2226 = arith.index_cast %2225 : i32 to index
    %2227 = memref.load %arg1[%2226] : memref<512xi32, #tpu.memory_space<smem>>
    %2228 = arith.index_cast %2227 : i32 to index
    %c0_578 = arith.constant 0 : index
    %2229 = vector.load %arg2[%2228, %c0_578] : memref<32x1xf32, #tpu.memory_space<vmem>>, vector<1x1xf32>
    %2230 = arith.addf %2224, %2229 : vector<1x1xf32>
    %c2_i32_579 = arith.constant 2 : i32
    %2231 = arith.addi %2220, %c2_i32_579 : i32
    %2232 = arith.index_cast %2231 : i32 to index
    %2233 = memref.load %arg1[%2232] : memref<512xi32, #tpu.memory_space<smem>>
    %2234 = arith.index_cast %2233 : i32 to index
    %c0_580 = arith.constant 0 : index
    %2235 = vector.load %arg2[%2234, %c0_580] : memref<32x1xf32, #tpu.memory_space<vmem>>, vector<1x1xf32>
    %2236 = arith.addf %2230, %2235 : vector<1x1xf32>
    %c3_i32_581 = arith.constant 3 : i32
    %2237 = arith.addi %2220, %c3_i32_581 : i32
    %2238 = arith.index_cast %2237 : i32 to index
    %2239 = memref.load %arg1[%2238] : memref<512xi32, #tpu.memory_space<smem>>
    %2240 = arith.index_cast %2239 : i32 to index
    %c0_582 = arith.constant 0 : index
    %2241 = vector.load %arg2[%2240, %c0_582] : memref<32x1xf32, #tpu.memory_space<vmem>>, vector<1x1xf32>
    %2242 = arith.addf %2236, %2241 : vector<1x1xf32>
    %c79_i32 = arith.constant 79 : i32
    %2243 = vector.broadcast %c79_i32 : i32 to vector<1x128xi32>
    %2244 = arith.cmpi eq, %1, %2243 : vector<1x128xi32>
    %2245 = vector.shape_cast %2242 : vector<1x1xf32> to vector<1x1xf32>
    %2246 = vector.broadcast %2245 : vector<1x1xf32> to vector<1x128xf32>
    %2247 = arith.select %2244, %2246, %2219 : vector<1x128xi1>, vector<1x128xf32>
    %c320_i32 = arith.constant 320 : i32
    %2248 = arith.addi %7, %c320_i32 : i32
    %2249 = arith.index_cast %2248 : i32 to index
    %2250 = memref.load %arg1[%2249] : memref<512xi32, #tpu.memory_space<smem>>
    %2251 = arith.index_cast %2250 : i32 to index
    %c0_583 = arith.constant 0 : index
    %2252 = vector.load %arg2[%2251, %c0_583] : memref<32x1xf32, #tpu.memory_space<vmem>>, vector<1x1xf32>
    %c1_i32_584 = arith.constant 1 : i32
    %2253 = arith.addi %2248, %c1_i32_584 : i32
    %2254 = arith.index_cast %2253 : i32 to index
    %2255 = memref.load %arg1[%2254] : memref<512xi32, #tpu.memory_space<smem>>
    %2256 = arith.index_cast %2255 : i32 to index
    %c0_585 = arith.constant 0 : index
    %2257 = vector.load %arg2[%2256, %c0_585] : memref<32x1xf32, #tpu.memory_space<vmem>>, vector<1x1xf32>
    %2258 = arith.addf %2252, %2257 : vector<1x1xf32>
    %c2_i32_586 = arith.constant 2 : i32
    %2259 = arith.addi %2248, %c2_i32_586 : i32
    %2260 = arith.index_cast %2259 : i32 to index
    %2261 = memref.load %arg1[%2260] : memref<512xi32, #tpu.memory_space<smem>>
    %2262 = arith.index_cast %2261 : i32 to index
    %c0_587 = arith.constant 0 : index
    %2263 = vector.load %arg2[%2262, %c0_587] : memref<32x1xf32, #tpu.memory_space<vmem>>, vector<1x1xf32>
    %2264 = arith.addf %2258, %2263 : vector<1x1xf32>
    %c3_i32_588 = arith.constant 3 : i32
    %2265 = arith.addi %2248, %c3_i32_588 : i32
    %2266 = arith.index_cast %2265 : i32 to index
    %2267 = memref.load %arg1[%2266] : memref<512xi32, #tpu.memory_space<smem>>
    %2268 = arith.index_cast %2267 : i32 to index
    %c0_589 = arith.constant 0 : index
    %2269 = vector.load %arg2[%2268, %c0_589] : memref<32x1xf32, #tpu.memory_space<vmem>>, vector<1x1xf32>
    %2270 = arith.addf %2264, %2269 : vector<1x1xf32>
    %c80_i32_590 = arith.constant 80 : i32
    %2271 = vector.broadcast %c80_i32_590 : i32 to vector<1x128xi32>
    %2272 = arith.cmpi eq, %1, %2271 : vector<1x128xi32>
    %2273 = vector.shape_cast %2270 : vector<1x1xf32> to vector<1x1xf32>
    %2274 = vector.broadcast %2273 : vector<1x1xf32> to vector<1x128xf32>
    %2275 = arith.select %2272, %2274, %5 : vector<1x128xi1>, vector<1x128xf32>
    %c324_i32 = arith.constant 324 : i32
    %2276 = arith.addi %7, %c324_i32 : i32
    %2277 = arith.index_cast %2276 : i32 to index
    %2278 = memref.load %arg1[%2277] : memref<512xi32, #tpu.memory_space<smem>>
    %2279 = arith.index_cast %2278 : i32 to index
    %c0_591 = arith.constant 0 : index
    %2280 = vector.load %arg2[%2279, %c0_591] : memref<32x1xf32, #tpu.memory_space<vmem>>, vector<1x1xf32>
    %c1_i32_592 = arith.constant 1 : i32
    %2281 = arith.addi %2276, %c1_i32_592 : i32
    %2282 = arith.index_cast %2281 : i32 to index
    %2283 = memref.load %arg1[%2282] : memref<512xi32, #tpu.memory_space<smem>>
    %2284 = arith.index_cast %2283 : i32 to index
    %c0_593 = arith.constant 0 : index
    %2285 = vector.load %arg2[%2284, %c0_593] : memref<32x1xf32, #tpu.memory_space<vmem>>, vector<1x1xf32>
    %2286 = arith.addf %2280, %2285 : vector<1x1xf32>
    %c2_i32_594 = arith.constant 2 : i32
    %2287 = arith.addi %2276, %c2_i32_594 : i32
    %2288 = arith.index_cast %2287 : i32 to index
    %2289 = memref.load %arg1[%2288] : memref<512xi32, #tpu.memory_space<smem>>
    %2290 = arith.index_cast %2289 : i32 to index
    %c0_595 = arith.constant 0 : index
    %2291 = vector.load %arg2[%2290, %c0_595] : memref<32x1xf32, #tpu.memory_space<vmem>>, vector<1x1xf32>
    %2292 = arith.addf %2286, %2291 : vector<1x1xf32>
    %c3_i32_596 = arith.constant 3 : i32
    %2293 = arith.addi %2276, %c3_i32_596 : i32
    %2294 = arith.index_cast %2293 : i32 to index
    %2295 = memref.load %arg1[%2294] : memref<512xi32, #tpu.memory_space<smem>>
    %2296 = arith.index_cast %2295 : i32 to index
    %c0_597 = arith.constant 0 : index
    %2297 = vector.load %arg2[%2296, %c0_597] : memref<32x1xf32, #tpu.memory_space<vmem>>, vector<1x1xf32>
    %2298 = arith.addf %2292, %2297 : vector<1x1xf32>
    %c81_i32 = arith.constant 81 : i32
    %2299 = vector.broadcast %c81_i32 : i32 to vector<1x128xi32>
    %2300 = arith.cmpi eq, %1, %2299 : vector<1x128xi32>
    %2301 = vector.shape_cast %2298 : vector<1x1xf32> to vector<1x1xf32>
    %2302 = vector.broadcast %2301 : vector<1x1xf32> to vector<1x128xf32>
    %2303 = arith.select %2300, %2302, %2275 : vector<1x128xi1>, vector<1x128xf32>
    %c328_i32 = arith.constant 328 : i32
    %2304 = arith.addi %7, %c328_i32 : i32
    %2305 = arith.index_cast %2304 : i32 to index
    %2306 = memref.load %arg1[%2305] : memref<512xi32, #tpu.memory_space<smem>>
    %2307 = arith.index_cast %2306 : i32 to index
    %c0_598 = arith.constant 0 : index
    %2308 = vector.load %arg2[%2307, %c0_598] : memref<32x1xf32, #tpu.memory_space<vmem>>, vector<1x1xf32>
    %c1_i32_599 = arith.constant 1 : i32
    %2309 = arith.addi %2304, %c1_i32_599 : i32
    %2310 = arith.index_cast %2309 : i32 to index
    %2311 = memref.load %arg1[%2310] : memref<512xi32, #tpu.memory_space<smem>>
    %2312 = arith.index_cast %2311 : i32 to index
    %c0_600 = arith.constant 0 : index
    %2313 = vector.load %arg2[%2312, %c0_600] : memref<32x1xf32, #tpu.memory_space<vmem>>, vector<1x1xf32>
    %2314 = arith.addf %2308, %2313 : vector<1x1xf32>
    %c2_i32_601 = arith.constant 2 : i32
    %2315 = arith.addi %2304, %c2_i32_601 : i32
    %2316 = arith.index_cast %2315 : i32 to index
    %2317 = memref.load %arg1[%2316] : memref<512xi32, #tpu.memory_space<smem>>
    %2318 = arith.index_cast %2317 : i32 to index
    %c0_602 = arith.constant 0 : index
    %2319 = vector.load %arg2[%2318, %c0_602] : memref<32x1xf32, #tpu.memory_space<vmem>>, vector<1x1xf32>
    %2320 = arith.addf %2314, %2319 : vector<1x1xf32>
    %c3_i32_603 = arith.constant 3 : i32
    %2321 = arith.addi %2304, %c3_i32_603 : i32
    %2322 = arith.index_cast %2321 : i32 to index
    %2323 = memref.load %arg1[%2322] : memref<512xi32, #tpu.memory_space<smem>>
    %2324 = arith.index_cast %2323 : i32 to index
    %c0_604 = arith.constant 0 : index
    %2325 = vector.load %arg2[%2324, %c0_604] : memref<32x1xf32, #tpu.memory_space<vmem>>, vector<1x1xf32>
    %2326 = arith.addf %2320, %2325 : vector<1x1xf32>
    %c82_i32 = arith.constant 82 : i32
    %2327 = vector.broadcast %c82_i32 : i32 to vector<1x128xi32>
    %2328 = arith.cmpi eq, %1, %2327 : vector<1x128xi32>
    %2329 = vector.shape_cast %2326 : vector<1x1xf32> to vector<1x1xf32>
    %2330 = vector.broadcast %2329 : vector<1x1xf32> to vector<1x128xf32>
    %2331 = arith.select %2328, %2330, %2303 : vector<1x128xi1>, vector<1x128xf32>
    %c332_i32 = arith.constant 332 : i32
    %2332 = arith.addi %7, %c332_i32 : i32
    %2333 = arith.index_cast %2332 : i32 to index
    %2334 = memref.load %arg1[%2333] : memref<512xi32, #tpu.memory_space<smem>>
    %2335 = arith.index_cast %2334 : i32 to index
    %c0_605 = arith.constant 0 : index
    %2336 = vector.load %arg2[%2335, %c0_605] : memref<32x1xf32, #tpu.memory_space<vmem>>, vector<1x1xf32>
    %c1_i32_606 = arith.constant 1 : i32
    %2337 = arith.addi %2332, %c1_i32_606 : i32
    %2338 = arith.index_cast %2337 : i32 to index
    %2339 = memref.load %arg1[%2338] : memref<512xi32, #tpu.memory_space<smem>>
    %2340 = arith.index_cast %2339 : i32 to index
    %c0_607 = arith.constant 0 : index
    %2341 = vector.load %arg2[%2340, %c0_607] : memref<32x1xf32, #tpu.memory_space<vmem>>, vector<1x1xf32>
    %2342 = arith.addf %2336, %2341 : vector<1x1xf32>
    %c2_i32_608 = arith.constant 2 : i32
    %2343 = arith.addi %2332, %c2_i32_608 : i32
    %2344 = arith.index_cast %2343 : i32 to index
    %2345 = memref.load %arg1[%2344] : memref<512xi32, #tpu.memory_space<smem>>
    %2346 = arith.index_cast %2345 : i32 to index
    %c0_609 = arith.constant 0 : index
    %2347 = vector.load %arg2[%2346, %c0_609] : memref<32x1xf32, #tpu.memory_space<vmem>>, vector<1x1xf32>
    %2348 = arith.addf %2342, %2347 : vector<1x1xf32>
    %c3_i32_610 = arith.constant 3 : i32
    %2349 = arith.addi %2332, %c3_i32_610 : i32
    %2350 = arith.index_cast %2349 : i32 to index
    %2351 = memref.load %arg1[%2350] : memref<512xi32, #tpu.memory_space<smem>>
    %2352 = arith.index_cast %2351 : i32 to index
    %c0_611 = arith.constant 0 : index
    %2353 = vector.load %arg2[%2352, %c0_611] : memref<32x1xf32, #tpu.memory_space<vmem>>, vector<1x1xf32>
    %2354 = arith.addf %2348, %2353 : vector<1x1xf32>
    %c83_i32 = arith.constant 83 : i32
    %2355 = vector.broadcast %c83_i32 : i32 to vector<1x128xi32>
    %2356 = arith.cmpi eq, %1, %2355 : vector<1x128xi32>
    %2357 = vector.shape_cast %2354 : vector<1x1xf32> to vector<1x1xf32>
    %2358 = vector.broadcast %2357 : vector<1x1xf32> to vector<1x128xf32>
    %2359 = arith.select %2356, %2358, %2331 : vector<1x128xi1>, vector<1x128xf32>
    %c336_i32 = arith.constant 336 : i32
    %2360 = arith.addi %7, %c336_i32 : i32
    %2361 = arith.index_cast %2360 : i32 to index
    %2362 = memref.load %arg1[%2361] : memref<512xi32, #tpu.memory_space<smem>>
    %2363 = arith.index_cast %2362 : i32 to index
    %c0_612 = arith.constant 0 : index
    %2364 = vector.load %arg2[%2363, %c0_612] : memref<32x1xf32, #tpu.memory_space<vmem>>, vector<1x1xf32>
    %c1_i32_613 = arith.constant 1 : i32
    %2365 = arith.addi %2360, %c1_i32_613 : i32
    %2366 = arith.index_cast %2365 : i32 to index
    %2367 = memref.load %arg1[%2366] : memref<512xi32, #tpu.memory_space<smem>>
    %2368 = arith.index_cast %2367 : i32 to index
    %c0_614 = arith.constant 0 : index
    %2369 = vector.load %arg2[%2368, %c0_614] : memref<32x1xf32, #tpu.memory_space<vmem>>, vector<1x1xf32>
    %2370 = arith.addf %2364, %2369 : vector<1x1xf32>
    %c2_i32_615 = arith.constant 2 : i32
    %2371 = arith.addi %2360, %c2_i32_615 : i32
    %2372 = arith.index_cast %2371 : i32 to index
    %2373 = memref.load %arg1[%2372] : memref<512xi32, #tpu.memory_space<smem>>
    %2374 = arith.index_cast %2373 : i32 to index
    %c0_616 = arith.constant 0 : index
    %2375 = vector.load %arg2[%2374, %c0_616] : memref<32x1xf32, #tpu.memory_space<vmem>>, vector<1x1xf32>
    %2376 = arith.addf %2370, %2375 : vector<1x1xf32>
    %c3_i32_617 = arith.constant 3 : i32
    %2377 = arith.addi %2360, %c3_i32_617 : i32
    %2378 = arith.index_cast %2377 : i32 to index
    %2379 = memref.load %arg1[%2378] : memref<512xi32, #tpu.memory_space<smem>>
    %2380 = arith.index_cast %2379 : i32 to index
    %c0_618 = arith.constant 0 : index
    %2381 = vector.load %arg2[%2380, %c0_618] : memref<32x1xf32, #tpu.memory_space<vmem>>, vector<1x1xf32>
    %2382 = arith.addf %2376, %2381 : vector<1x1xf32>
    %c84_i32_619 = arith.constant 84 : i32
    %2383 = vector.broadcast %c84_i32_619 : i32 to vector<1x128xi32>
    %2384 = arith.cmpi eq, %1, %2383 : vector<1x128xi32>
    %2385 = vector.shape_cast %2382 : vector<1x1xf32> to vector<1x1xf32>
    %2386 = vector.broadcast %2385 : vector<1x1xf32> to vector<1x128xf32>
    %2387 = arith.select %2384, %2386, %2359 : vector<1x128xi1>, vector<1x128xf32>
    %c340_i32 = arith.constant 340 : i32
    %2388 = arith.addi %7, %c340_i32 : i32
    %2389 = arith.index_cast %2388 : i32 to index
    %2390 = memref.load %arg1[%2389] : memref<512xi32, #tpu.memory_space<smem>>
    %2391 = arith.index_cast %2390 : i32 to index
    %c0_620 = arith.constant 0 : index
    %2392 = vector.load %arg2[%2391, %c0_620] : memref<32x1xf32, #tpu.memory_space<vmem>>, vector<1x1xf32>
    %c1_i32_621 = arith.constant 1 : i32
    %2393 = arith.addi %2388, %c1_i32_621 : i32
    %2394 = arith.index_cast %2393 : i32 to index
    %2395 = memref.load %arg1[%2394] : memref<512xi32, #tpu.memory_space<smem>>
    %2396 = arith.index_cast %2395 : i32 to index
    %c0_622 = arith.constant 0 : index
    %2397 = vector.load %arg2[%2396, %c0_622] : memref<32x1xf32, #tpu.memory_space<vmem>>, vector<1x1xf32>
    %2398 = arith.addf %2392, %2397 : vector<1x1xf32>
    %c2_i32_623 = arith.constant 2 : i32
    %2399 = arith.addi %2388, %c2_i32_623 : i32
    %2400 = arith.index_cast %2399 : i32 to index
    %2401 = memref.load %arg1[%2400] : memref<512xi32, #tpu.memory_space<smem>>
    %2402 = arith.index_cast %2401 : i32 to index
    %c0_624 = arith.constant 0 : index
    %2403 = vector.load %arg2[%2402, %c0_624] : memref<32x1xf32, #tpu.memory_space<vmem>>, vector<1x1xf32>
    %2404 = arith.addf %2398, %2403 : vector<1x1xf32>
    %c3_i32_625 = arith.constant 3 : i32
    %2405 = arith.addi %2388, %c3_i32_625 : i32
    %2406 = arith.index_cast %2405 : i32 to index
    %2407 = memref.load %arg1[%2406] : memref<512xi32, #tpu.memory_space<smem>>
    %2408 = arith.index_cast %2407 : i32 to index
    %c0_626 = arith.constant 0 : index
    %2409 = vector.load %arg2[%2408, %c0_626] : memref<32x1xf32, #tpu.memory_space<vmem>>, vector<1x1xf32>
    %2410 = arith.addf %2404, %2409 : vector<1x1xf32>
    %c85_i32 = arith.constant 85 : i32
    %2411 = vector.broadcast %c85_i32 : i32 to vector<1x128xi32>
    %2412 = arith.cmpi eq, %1, %2411 : vector<1x128xi32>
    %2413 = vector.shape_cast %2410 : vector<1x1xf32> to vector<1x1xf32>
    %2414 = vector.broadcast %2413 : vector<1x1xf32> to vector<1x128xf32>
    %2415 = arith.select %2412, %2414, %2387 : vector<1x128xi1>, vector<1x128xf32>
    %c344_i32 = arith.constant 344 : i32
    %2416 = arith.addi %7, %c344_i32 : i32
    %2417 = arith.index_cast %2416 : i32 to index
    %2418 = memref.load %arg1[%2417] : memref<512xi32, #tpu.memory_space<smem>>
    %2419 = arith.index_cast %2418 : i32 to index
    %c0_627 = arith.constant 0 : index
    %2420 = vector.load %arg2[%2419, %c0_627] : memref<32x1xf32, #tpu.memory_space<vmem>>, vector<1x1xf32>
    %c1_i32_628 = arith.constant 1 : i32
    %2421 = arith.addi %2416, %c1_i32_628 : i32
    %2422 = arith.index_cast %2421 : i32 to index
    %2423 = memref.load %arg1[%2422] : memref<512xi32, #tpu.memory_space<smem>>
    %2424 = arith.index_cast %2423 : i32 to index
    %c0_629 = arith.constant 0 : index
    %2425 = vector.load %arg2[%2424, %c0_629] : memref<32x1xf32, #tpu.memory_space<vmem>>, vector<1x1xf32>
    %2426 = arith.addf %2420, %2425 : vector<1x1xf32>
    %c2_i32_630 = arith.constant 2 : i32
    %2427 = arith.addi %2416, %c2_i32_630 : i32
    %2428 = arith.index_cast %2427 : i32 to index
    %2429 = memref.load %arg1[%2428] : memref<512xi32, #tpu.memory_space<smem>>
    %2430 = arith.index_cast %2429 : i32 to index
    %c0_631 = arith.constant 0 : index
    %2431 = vector.load %arg2[%2430, %c0_631] : memref<32x1xf32, #tpu.memory_space<vmem>>, vector<1x1xf32>
    %2432 = arith.addf %2426, %2431 : vector<1x1xf32>
    %c3_i32_632 = arith.constant 3 : i32
    %2433 = arith.addi %2416, %c3_i32_632 : i32
    %2434 = arith.index_cast %2433 : i32 to index
    %2435 = memref.load %arg1[%2434] : memref<512xi32, #tpu.memory_space<smem>>
    %2436 = arith.index_cast %2435 : i32 to index
    %c0_633 = arith.constant 0 : index
    %2437 = vector.load %arg2[%2436, %c0_633] : memref<32x1xf32, #tpu.memory_space<vmem>>, vector<1x1xf32>
    %2438 = arith.addf %2432, %2437 : vector<1x1xf32>
    %c86_i32 = arith.constant 86 : i32
    %2439 = vector.broadcast %c86_i32 : i32 to vector<1x128xi32>
    %2440 = arith.cmpi eq, %1, %2439 : vector<1x128xi32>
    %2441 = vector.shape_cast %2438 : vector<1x1xf32> to vector<1x1xf32>
    %2442 = vector.broadcast %2441 : vector<1x1xf32> to vector<1x128xf32>
    %2443 = arith.select %2440, %2442, %2415 : vector<1x128xi1>, vector<1x128xf32>
    %c348_i32 = arith.constant 348 : i32
    %2444 = arith.addi %7, %c348_i32 : i32
    %2445 = arith.index_cast %2444 : i32 to index
    %2446 = memref.load %arg1[%2445] : memref<512xi32, #tpu.memory_space<smem>>
    %2447 = arith.index_cast %2446 : i32 to index
    %c0_634 = arith.constant 0 : index
    %2448 = vector.load %arg2[%2447, %c0_634] : memref<32x1xf32, #tpu.memory_space<vmem>>, vector<1x1xf32>
    %c1_i32_635 = arith.constant 1 : i32
    %2449 = arith.addi %2444, %c1_i32_635 : i32
    %2450 = arith.index_cast %2449 : i32 to index
    %2451 = memref.load %arg1[%2450] : memref<512xi32, #tpu.memory_space<smem>>
    %2452 = arith.index_cast %2451 : i32 to index
    %c0_636 = arith.constant 0 : index
    %2453 = vector.load %arg2[%2452, %c0_636] : memref<32x1xf32, #tpu.memory_space<vmem>>, vector<1x1xf32>
    %2454 = arith.addf %2448, %2453 : vector<1x1xf32>
    %c2_i32_637 = arith.constant 2 : i32
    %2455 = arith.addi %2444, %c2_i32_637 : i32
    %2456 = arith.index_cast %2455 : i32 to index
    %2457 = memref.load %arg1[%2456] : memref<512xi32, #tpu.memory_space<smem>>
    %2458 = arith.index_cast %2457 : i32 to index
    %c0_638 = arith.constant 0 : index
    %2459 = vector.load %arg2[%2458, %c0_638] : memref<32x1xf32, #tpu.memory_space<vmem>>, vector<1x1xf32>
    %2460 = arith.addf %2454, %2459 : vector<1x1xf32>
    %c3_i32_639 = arith.constant 3 : i32
    %2461 = arith.addi %2444, %c3_i32_639 : i32
    %2462 = arith.index_cast %2461 : i32 to index
    %2463 = memref.load %arg1[%2462] : memref<512xi32, #tpu.memory_space<smem>>
    %2464 = arith.index_cast %2463 : i32 to index
    %c0_640 = arith.constant 0 : index
    %2465 = vector.load %arg2[%2464, %c0_640] : memref<32x1xf32, #tpu.memory_space<vmem>>, vector<1x1xf32>
    %2466 = arith.addf %2460, %2465 : vector<1x1xf32>
    %c87_i32 = arith.constant 87 : i32
    %2467 = vector.broadcast %c87_i32 : i32 to vector<1x128xi32>
    %2468 = arith.cmpi eq, %1, %2467 : vector<1x128xi32>
    %2469 = vector.shape_cast %2466 : vector<1x1xf32> to vector<1x1xf32>
    %2470 = vector.broadcast %2469 : vector<1x1xf32> to vector<1x128xf32>
    %2471 = arith.select %2468, %2470, %2443 : vector<1x128xi1>, vector<1x128xf32>
    %c352_i32 = arith.constant 352 : i32
    %2472 = arith.addi %7, %c352_i32 : i32
    %2473 = arith.index_cast %2472 : i32 to index
    %2474 = memref.load %arg1[%2473] : memref<512xi32, #tpu.memory_space<smem>>
    %2475 = arith.index_cast %2474 : i32 to index
    %c0_641 = arith.constant 0 : index
    %2476 = vector.load %arg2[%2475, %c0_641] : memref<32x1xf32, #tpu.memory_space<vmem>>, vector<1x1xf32>
    %c1_i32_642 = arith.constant 1 : i32
    %2477 = arith.addi %2472, %c1_i32_642 : i32
    %2478 = arith.index_cast %2477 : i32 to index
    %2479 = memref.load %arg1[%2478] : memref<512xi32, #tpu.memory_space<smem>>
    %2480 = arith.index_cast %2479 : i32 to index
    %c0_643 = arith.constant 0 : index
    %2481 = vector.load %arg2[%2480, %c0_643] : memref<32x1xf32, #tpu.memory_space<vmem>>, vector<1x1xf32>
    %2482 = arith.addf %2476, %2481 : vector<1x1xf32>
    %c2_i32_644 = arith.constant 2 : i32
    %2483 = arith.addi %2472, %c2_i32_644 : i32
    %2484 = arith.index_cast %2483 : i32 to index
    %2485 = memref.load %arg1[%2484] : memref<512xi32, #tpu.memory_space<smem>>
    %2486 = arith.index_cast %2485 : i32 to index
    %c0_645 = arith.constant 0 : index
    %2487 = vector.load %arg2[%2486, %c0_645] : memref<32x1xf32, #tpu.memory_space<vmem>>, vector<1x1xf32>
    %2488 = arith.addf %2482, %2487 : vector<1x1xf32>
    %c3_i32_646 = arith.constant 3 : i32
    %2489 = arith.addi %2472, %c3_i32_646 : i32
    %2490 = arith.index_cast %2489 : i32 to index
    %2491 = memref.load %arg1[%2490] : memref<512xi32, #tpu.memory_space<smem>>
    %2492 = arith.index_cast %2491 : i32 to index
    %c0_647 = arith.constant 0 : index
    %2493 = vector.load %arg2[%2492, %c0_647] : memref<32x1xf32, #tpu.memory_space<vmem>>, vector<1x1xf32>
    %2494 = arith.addf %2488, %2493 : vector<1x1xf32>
    %c88_i32_648 = arith.constant 88 : i32
    %2495 = vector.broadcast %c88_i32_648 : i32 to vector<1x128xi32>
    %2496 = arith.cmpi eq, %1, %2495 : vector<1x128xi32>
    %2497 = vector.shape_cast %2494 : vector<1x1xf32> to vector<1x1xf32>
    %2498 = vector.broadcast %2497 : vector<1x1xf32> to vector<1x128xf32>
    %2499 = arith.select %2496, %2498, %5 : vector<1x128xi1>, vector<1x128xf32>
    %c356_i32 = arith.constant 356 : i32
    %2500 = arith.addi %7, %c356_i32 : i32
    %2501 = arith.index_cast %2500 : i32 to index
    %2502 = memref.load %arg1[%2501] : memref<512xi32, #tpu.memory_space<smem>>
    %2503 = arith.index_cast %2502 : i32 to index
    %c0_649 = arith.constant 0 : index
    %2504 = vector.load %arg2[%2503, %c0_649] : memref<32x1xf32, #tpu.memory_space<vmem>>, vector<1x1xf32>
    %c1_i32_650 = arith.constant 1 : i32
    %2505 = arith.addi %2500, %c1_i32_650 : i32
    %2506 = arith.index_cast %2505 : i32 to index
    %2507 = memref.load %arg1[%2506] : memref<512xi32, #tpu.memory_space<smem>>
    %2508 = arith.index_cast %2507 : i32 to index
    %c0_651 = arith.constant 0 : index
    %2509 = vector.load %arg2[%2508, %c0_651] : memref<32x1xf32, #tpu.memory_space<vmem>>, vector<1x1xf32>
    %2510 = arith.addf %2504, %2509 : vector<1x1xf32>
    %c2_i32_652 = arith.constant 2 : i32
    %2511 = arith.addi %2500, %c2_i32_652 : i32
    %2512 = arith.index_cast %2511 : i32 to index
    %2513 = memref.load %arg1[%2512] : memref<512xi32, #tpu.memory_space<smem>>
    %2514 = arith.index_cast %2513 : i32 to index
    %c0_653 = arith.constant 0 : index
    %2515 = vector.load %arg2[%2514, %c0_653] : memref<32x1xf32, #tpu.memory_space<vmem>>, vector<1x1xf32>
    %2516 = arith.addf %2510, %2515 : vector<1x1xf32>
    %c3_i32_654 = arith.constant 3 : i32
    %2517 = arith.addi %2500, %c3_i32_654 : i32
    %2518 = arith.index_cast %2517 : i32 to index
    %2519 = memref.load %arg1[%2518] : memref<512xi32, #tpu.memory_space<smem>>
    %2520 = arith.index_cast %2519 : i32 to index
    %c0_655 = arith.constant 0 : index
    %2521 = vector.load %arg2[%2520, %c0_655] : memref<32x1xf32, #tpu.memory_space<vmem>>, vector<1x1xf32>
    %2522 = arith.addf %2516, %2521 : vector<1x1xf32>
    %c89_i32 = arith.constant 89 : i32
    %2523 = vector.broadcast %c89_i32 : i32 to vector<1x128xi32>
    %2524 = arith.cmpi eq, %1, %2523 : vector<1x128xi32>
    %2525 = vector.shape_cast %2522 : vector<1x1xf32> to vector<1x1xf32>
    %2526 = vector.broadcast %2525 : vector<1x1xf32> to vector<1x128xf32>
    %2527 = arith.select %2524, %2526, %2499 : vector<1x128xi1>, vector<1x128xf32>
    %c360_i32 = arith.constant 360 : i32
    %2528 = arith.addi %7, %c360_i32 : i32
    %2529 = arith.index_cast %2528 : i32 to index
    %2530 = memref.load %arg1[%2529] : memref<512xi32, #tpu.memory_space<smem>>
    %2531 = arith.index_cast %2530 : i32 to index
    %c0_656 = arith.constant 0 : index
    %2532 = vector.load %arg2[%2531, %c0_656] : memref<32x1xf32, #tpu.memory_space<vmem>>, vector<1x1xf32>
    %c1_i32_657 = arith.constant 1 : i32
    %2533 = arith.addi %2528, %c1_i32_657 : i32
    %2534 = arith.index_cast %2533 : i32 to index
    %2535 = memref.load %arg1[%2534] : memref<512xi32, #tpu.memory_space<smem>>
    %2536 = arith.index_cast %2535 : i32 to index
    %c0_658 = arith.constant 0 : index
    %2537 = vector.load %arg2[%2536, %c0_658] : memref<32x1xf32, #tpu.memory_space<vmem>>, vector<1x1xf32>
    %2538 = arith.addf %2532, %2537 : vector<1x1xf32>
    %c2_i32_659 = arith.constant 2 : i32
    %2539 = arith.addi %2528, %c2_i32_659 : i32
    %2540 = arith.index_cast %2539 : i32 to index
    %2541 = memref.load %arg1[%2540] : memref<512xi32, #tpu.memory_space<smem>>
    %2542 = arith.index_cast %2541 : i32 to index
    %c0_660 = arith.constant 0 : index
    %2543 = vector.load %arg2[%2542, %c0_660] : memref<32x1xf32, #tpu.memory_space<vmem>>, vector<1x1xf32>
    %2544 = arith.addf %2538, %2543 : vector<1x1xf32>
    %c3_i32_661 = arith.constant 3 : i32
    %2545 = arith.addi %2528, %c3_i32_661 : i32
    %2546 = arith.index_cast %2545 : i32 to index
    %2547 = memref.load %arg1[%2546] : memref<512xi32, #tpu.memory_space<smem>>
    %2548 = arith.index_cast %2547 : i32 to index
    %c0_662 = arith.constant 0 : index
    %2549 = vector.load %arg2[%2548, %c0_662] : memref<32x1xf32, #tpu.memory_space<vmem>>, vector<1x1xf32>
    %2550 = arith.addf %2544, %2549 : vector<1x1xf32>
    %c90_i32 = arith.constant 90 : i32
    %2551 = vector.broadcast %c90_i32 : i32 to vector<1x128xi32>
    %2552 = arith.cmpi eq, %1, %2551 : vector<1x128xi32>
    %2553 = vector.shape_cast %2550 : vector<1x1xf32> to vector<1x1xf32>
    %2554 = vector.broadcast %2553 : vector<1x1xf32> to vector<1x128xf32>
    %2555 = arith.select %2552, %2554, %2527 : vector<1x128xi1>, vector<1x128xf32>
    %c364_i32 = arith.constant 364 : i32
    %2556 = arith.addi %7, %c364_i32 : i32
    %2557 = arith.index_cast %2556 : i32 to index
    %2558 = memref.load %arg1[%2557] : memref<512xi32, #tpu.memory_space<smem>>
    %2559 = arith.index_cast %2558 : i32 to index
    %c0_663 = arith.constant 0 : index
    %2560 = vector.load %arg2[%2559, %c0_663] : memref<32x1xf32, #tpu.memory_space<vmem>>, vector<1x1xf32>
    %c1_i32_664 = arith.constant 1 : i32
    %2561 = arith.addi %2556, %c1_i32_664 : i32
    %2562 = arith.index_cast %2561 : i32 to index
    %2563 = memref.load %arg1[%2562] : memref<512xi32, #tpu.memory_space<smem>>
    %2564 = arith.index_cast %2563 : i32 to index
    %c0_665 = arith.constant 0 : index
    %2565 = vector.load %arg2[%2564, %c0_665] : memref<32x1xf32, #tpu.memory_space<vmem>>, vector<1x1xf32>
    %2566 = arith.addf %2560, %2565 : vector<1x1xf32>
    %c2_i32_666 = arith.constant 2 : i32
    %2567 = arith.addi %2556, %c2_i32_666 : i32
    %2568 = arith.index_cast %2567 : i32 to index
    %2569 = memref.load %arg1[%2568] : memref<512xi32, #tpu.memory_space<smem>>
    %2570 = arith.index_cast %2569 : i32 to index
    %c0_667 = arith.constant 0 : index
    %2571 = vector.load %arg2[%2570, %c0_667] : memref<32x1xf32, #tpu.memory_space<vmem>>, vector<1x1xf32>
    %2572 = arith.addf %2566, %2571 : vector<1x1xf32>
    %c3_i32_668 = arith.constant 3 : i32
    %2573 = arith.addi %2556, %c3_i32_668 : i32
    %2574 = arith.index_cast %2573 : i32 to index
    %2575 = memref.load %arg1[%2574] : memref<512xi32, #tpu.memory_space<smem>>
    %2576 = arith.index_cast %2575 : i32 to index
    %c0_669 = arith.constant 0 : index
    %2577 = vector.load %arg2[%2576, %c0_669] : memref<32x1xf32, #tpu.memory_space<vmem>>, vector<1x1xf32>
    %2578 = arith.addf %2572, %2577 : vector<1x1xf32>
    %c91_i32 = arith.constant 91 : i32
    %2579 = vector.broadcast %c91_i32 : i32 to vector<1x128xi32>
    %2580 = arith.cmpi eq, %1, %2579 : vector<1x128xi32>
    %2581 = vector.shape_cast %2578 : vector<1x1xf32> to vector<1x1xf32>
    %2582 = vector.broadcast %2581 : vector<1x1xf32> to vector<1x128xf32>
    %2583 = arith.select %2580, %2582, %2555 : vector<1x128xi1>, vector<1x128xf32>
    %c368_i32 = arith.constant 368 : i32
    %2584 = arith.addi %7, %c368_i32 : i32
    %2585 = arith.index_cast %2584 : i32 to index
    %2586 = memref.load %arg1[%2585] : memref<512xi32, #tpu.memory_space<smem>>
    %2587 = arith.index_cast %2586 : i32 to index
    %c0_670 = arith.constant 0 : index
    %2588 = vector.load %arg2[%2587, %c0_670] : memref<32x1xf32, #tpu.memory_space<vmem>>, vector<1x1xf32>
    %c1_i32_671 = arith.constant 1 : i32
    %2589 = arith.addi %2584, %c1_i32_671 : i32
    %2590 = arith.index_cast %2589 : i32 to index
    %2591 = memref.load %arg1[%2590] : memref<512xi32, #tpu.memory_space<smem>>
    %2592 = arith.index_cast %2591 : i32 to index
    %c0_672 = arith.constant 0 : index
    %2593 = vector.load %arg2[%2592, %c0_672] : memref<32x1xf32, #tpu.memory_space<vmem>>, vector<1x1xf32>
    %2594 = arith.addf %2588, %2593 : vector<1x1xf32>
    %c2_i32_673 = arith.constant 2 : i32
    %2595 = arith.addi %2584, %c2_i32_673 : i32
    %2596 = arith.index_cast %2595 : i32 to index
    %2597 = memref.load %arg1[%2596] : memref<512xi32, #tpu.memory_space<smem>>
    %2598 = arith.index_cast %2597 : i32 to index
    %c0_674 = arith.constant 0 : index
    %2599 = vector.load %arg2[%2598, %c0_674] : memref<32x1xf32, #tpu.memory_space<vmem>>, vector<1x1xf32>
    %2600 = arith.addf %2594, %2599 : vector<1x1xf32>
    %c3_i32_675 = arith.constant 3 : i32
    %2601 = arith.addi %2584, %c3_i32_675 : i32
    %2602 = arith.index_cast %2601 : i32 to index
    %2603 = memref.load %arg1[%2602] : memref<512xi32, #tpu.memory_space<smem>>
    %2604 = arith.index_cast %2603 : i32 to index
    %c0_676 = arith.constant 0 : index
    %2605 = vector.load %arg2[%2604, %c0_676] : memref<32x1xf32, #tpu.memory_space<vmem>>, vector<1x1xf32>
    %2606 = arith.addf %2600, %2605 : vector<1x1xf32>
    %c92_i32_677 = arith.constant 92 : i32
    %2607 = vector.broadcast %c92_i32_677 : i32 to vector<1x128xi32>
    %2608 = arith.cmpi eq, %1, %2607 : vector<1x128xi32>
    %2609 = vector.shape_cast %2606 : vector<1x1xf32> to vector<1x1xf32>
    %2610 = vector.broadcast %2609 : vector<1x1xf32> to vector<1x128xf32>
    %2611 = arith.select %2608, %2610, %2583 : vector<1x128xi1>, vector<1x128xf32>
    %c372_i32 = arith.constant 372 : i32
    %2612 = arith.addi %7, %c372_i32 : i32
    %2613 = arith.index_cast %2612 : i32 to index
    %2614 = memref.load %arg1[%2613] : memref<512xi32, #tpu.memory_space<smem>>
    %2615 = arith.index_cast %2614 : i32 to index
    %c0_678 = arith.constant 0 : index
    %2616 = vector.load %arg2[%2615, %c0_678] : memref<32x1xf32, #tpu.memory_space<vmem>>, vector<1x1xf32>
    %c1_i32_679 = arith.constant 1 : i32
    %2617 = arith.addi %2612, %c1_i32_679 : i32
    %2618 = arith.index_cast %2617 : i32 to index
    %2619 = memref.load %arg1[%2618] : memref<512xi32, #tpu.memory_space<smem>>
    %2620 = arith.index_cast %2619 : i32 to index
    %c0_680 = arith.constant 0 : index
    %2621 = vector.load %arg2[%2620, %c0_680] : memref<32x1xf32, #tpu.memory_space<vmem>>, vector<1x1xf32>
    %2622 = arith.addf %2616, %2621 : vector<1x1xf32>
    %c2_i32_681 = arith.constant 2 : i32
    %2623 = arith.addi %2612, %c2_i32_681 : i32
    %2624 = arith.index_cast %2623 : i32 to index
    %2625 = memref.load %arg1[%2624] : memref<512xi32, #tpu.memory_space<smem>>
    %2626 = arith.index_cast %2625 : i32 to index
    %c0_682 = arith.constant 0 : index
    %2627 = vector.load %arg2[%2626, %c0_682] : memref<32x1xf32, #tpu.memory_space<vmem>>, vector<1x1xf32>
    %2628 = arith.addf %2622, %2627 : vector<1x1xf32>
    %c3_i32_683 = arith.constant 3 : i32
    %2629 = arith.addi %2612, %c3_i32_683 : i32
    %2630 = arith.index_cast %2629 : i32 to index
    %2631 = memref.load %arg1[%2630] : memref<512xi32, #tpu.memory_space<smem>>
    %2632 = arith.index_cast %2631 : i32 to index
    %c0_684 = arith.constant 0 : index
    %2633 = vector.load %arg2[%2632, %c0_684] : memref<32x1xf32, #tpu.memory_space<vmem>>, vector<1x1xf32>
    %2634 = arith.addf %2628, %2633 : vector<1x1xf32>
    %c93_i32 = arith.constant 93 : i32
    %2635 = vector.broadcast %c93_i32 : i32 to vector<1x128xi32>
    %2636 = arith.cmpi eq, %1, %2635 : vector<1x128xi32>
    %2637 = vector.shape_cast %2634 : vector<1x1xf32> to vector<1x1xf32>
    %2638 = vector.broadcast %2637 : vector<1x1xf32> to vector<1x128xf32>
    %2639 = arith.select %2636, %2638, %2611 : vector<1x128xi1>, vector<1x128xf32>
    %c376_i32 = arith.constant 376 : i32
    %2640 = arith.addi %7, %c376_i32 : i32
    %2641 = arith.index_cast %2640 : i32 to index
    %2642 = memref.load %arg1[%2641] : memref<512xi32, #tpu.memory_space<smem>>
    %2643 = arith.index_cast %2642 : i32 to index
    %c0_685 = arith.constant 0 : index
    %2644 = vector.load %arg2[%2643, %c0_685] : memref<32x1xf32, #tpu.memory_space<vmem>>, vector<1x1xf32>
    %c1_i32_686 = arith.constant 1 : i32
    %2645 = arith.addi %2640, %c1_i32_686 : i32
    %2646 = arith.index_cast %2645 : i32 to index
    %2647 = memref.load %arg1[%2646] : memref<512xi32, #tpu.memory_space<smem>>
    %2648 = arith.index_cast %2647 : i32 to index
    %c0_687 = arith.constant 0 : index
    %2649 = vector.load %arg2[%2648, %c0_687] : memref<32x1xf32, #tpu.memory_space<vmem>>, vector<1x1xf32>
    %2650 = arith.addf %2644, %2649 : vector<1x1xf32>
    %c2_i32_688 = arith.constant 2 : i32
    %2651 = arith.addi %2640, %c2_i32_688 : i32
    %2652 = arith.index_cast %2651 : i32 to index
    %2653 = memref.load %arg1[%2652] : memref<512xi32, #tpu.memory_space<smem>>
    %2654 = arith.index_cast %2653 : i32 to index
    %c0_689 = arith.constant 0 : index
    %2655 = vector.load %arg2[%2654, %c0_689] : memref<32x1xf32, #tpu.memory_space<vmem>>, vector<1x1xf32>
    %2656 = arith.addf %2650, %2655 : vector<1x1xf32>
    %c3_i32_690 = arith.constant 3 : i32
    %2657 = arith.addi %2640, %c3_i32_690 : i32
    %2658 = arith.index_cast %2657 : i32 to index
    %2659 = memref.load %arg1[%2658] : memref<512xi32, #tpu.memory_space<smem>>
    %2660 = arith.index_cast %2659 : i32 to index
    %c0_691 = arith.constant 0 : index
    %2661 = vector.load %arg2[%2660, %c0_691] : memref<32x1xf32, #tpu.memory_space<vmem>>, vector<1x1xf32>
    %2662 = arith.addf %2656, %2661 : vector<1x1xf32>
    %c94_i32 = arith.constant 94 : i32
    %2663 = vector.broadcast %c94_i32 : i32 to vector<1x128xi32>
    %2664 = arith.cmpi eq, %1, %2663 : vector<1x128xi32>
    %2665 = vector.shape_cast %2662 : vector<1x1xf32> to vector<1x1xf32>
    %2666 = vector.broadcast %2665 : vector<1x1xf32> to vector<1x128xf32>
    %2667 = arith.select %2664, %2666, %2639 : vector<1x128xi1>, vector<1x128xf32>
    %c380_i32 = arith.constant 380 : i32
    %2668 = arith.addi %7, %c380_i32 : i32
    %2669 = arith.index_cast %2668 : i32 to index
    %2670 = memref.load %arg1[%2669] : memref<512xi32, #tpu.memory_space<smem>>
    %2671 = arith.index_cast %2670 : i32 to index
    %c0_692 = arith.constant 0 : index
    %2672 = vector.load %arg2[%2671, %c0_692] : memref<32x1xf32, #tpu.memory_space<vmem>>, vector<1x1xf32>
    %c1_i32_693 = arith.constant 1 : i32
    %2673 = arith.addi %2668, %c1_i32_693 : i32
    %2674 = arith.index_cast %2673 : i32 to index
    %2675 = memref.load %arg1[%2674] : memref<512xi32, #tpu.memory_space<smem>>
    %2676 = arith.index_cast %2675 : i32 to index
    %c0_694 = arith.constant 0 : index
    %2677 = vector.load %arg2[%2676, %c0_694] : memref<32x1xf32, #tpu.memory_space<vmem>>, vector<1x1xf32>
    %2678 = arith.addf %2672, %2677 : vector<1x1xf32>
    %c2_i32_695 = arith.constant 2 : i32
    %2679 = arith.addi %2668, %c2_i32_695 : i32
    %2680 = arith.index_cast %2679 : i32 to index
    %2681 = memref.load %arg1[%2680] : memref<512xi32, #tpu.memory_space<smem>>
    %2682 = arith.index_cast %2681 : i32 to index
    %c0_696 = arith.constant 0 : index
    %2683 = vector.load %arg2[%2682, %c0_696] : memref<32x1xf32, #tpu.memory_space<vmem>>, vector<1x1xf32>
    %2684 = arith.addf %2678, %2683 : vector<1x1xf32>
    %c3_i32_697 = arith.constant 3 : i32
    %2685 = arith.addi %2668, %c3_i32_697 : i32
    %2686 = arith.index_cast %2685 : i32 to index
    %2687 = memref.load %arg1[%2686] : memref<512xi32, #tpu.memory_space<smem>>
    %2688 = arith.index_cast %2687 : i32 to index
    %c0_698 = arith.constant 0 : index
    %2689 = vector.load %arg2[%2688, %c0_698] : memref<32x1xf32, #tpu.memory_space<vmem>>, vector<1x1xf32>
    %2690 = arith.addf %2684, %2689 : vector<1x1xf32>
    %c95_i32 = arith.constant 95 : i32
    %2691 = vector.broadcast %c95_i32 : i32 to vector<1x128xi32>
    %2692 = arith.cmpi eq, %1, %2691 : vector<1x128xi32>
    %2693 = vector.shape_cast %2690 : vector<1x1xf32> to vector<1x1xf32>
    %2694 = vector.broadcast %2693 : vector<1x1xf32> to vector<1x128xf32>
    %2695 = arith.select %2692, %2694, %2667 : vector<1x128xi1>, vector<1x128xf32>
    %c384_i32 = arith.constant 384 : i32
    %2696 = arith.addi %7, %c384_i32 : i32
    %2697 = arith.index_cast %2696 : i32 to index
    %2698 = memref.load %arg1[%2697] : memref<512xi32, #tpu.memory_space<smem>>
    %2699 = arith.index_cast %2698 : i32 to index
    %c0_699 = arith.constant 0 : index
    %2700 = vector.load %arg2[%2699, %c0_699] : memref<32x1xf32, #tpu.memory_space<vmem>>, vector<1x1xf32>
    %c1_i32_700 = arith.constant 1 : i32
    %2701 = arith.addi %2696, %c1_i32_700 : i32
    %2702 = arith.index_cast %2701 : i32 to index
    %2703 = memref.load %arg1[%2702] : memref<512xi32, #tpu.memory_space<smem>>
    %2704 = arith.index_cast %2703 : i32 to index
    %c0_701 = arith.constant 0 : index
    %2705 = vector.load %arg2[%2704, %c0_701] : memref<32x1xf32, #tpu.memory_space<vmem>>, vector<1x1xf32>
    %2706 = arith.addf %2700, %2705 : vector<1x1xf32>
    %c2_i32_702 = arith.constant 2 : i32
    %2707 = arith.addi %2696, %c2_i32_702 : i32
    %2708 = arith.index_cast %2707 : i32 to index
    %2709 = memref.load %arg1[%2708] : memref<512xi32, #tpu.memory_space<smem>>
    %2710 = arith.index_cast %2709 : i32 to index
    %c0_703 = arith.constant 0 : index
    %2711 = vector.load %arg2[%2710, %c0_703] : memref<32x1xf32, #tpu.memory_space<vmem>>, vector<1x1xf32>
    %2712 = arith.addf %2706, %2711 : vector<1x1xf32>
    %c3_i32_704 = arith.constant 3 : i32
    %2713 = arith.addi %2696, %c3_i32_704 : i32
    %2714 = arith.index_cast %2713 : i32 to index
    %2715 = memref.load %arg1[%2714] : memref<512xi32, #tpu.memory_space<smem>>
    %2716 = arith.index_cast %2715 : i32 to index
    %c0_705 = arith.constant 0 : index
    %2717 = vector.load %arg2[%2716, %c0_705] : memref<32x1xf32, #tpu.memory_space<vmem>>, vector<1x1xf32>
    %2718 = arith.addf %2712, %2717 : vector<1x1xf32>
    %c96_i32_706 = arith.constant 96 : i32
    %2719 = vector.broadcast %c96_i32_706 : i32 to vector<1x128xi32>
    %2720 = arith.cmpi eq, %1, %2719 : vector<1x128xi32>
    %2721 = vector.shape_cast %2718 : vector<1x1xf32> to vector<1x1xf32>
    %2722 = vector.broadcast %2721 : vector<1x1xf32> to vector<1x128xf32>
    %2723 = arith.select %2720, %2722, %5 : vector<1x128xi1>, vector<1x128xf32>
    %c388_i32 = arith.constant 388 : i32
    %2724 = arith.addi %7, %c388_i32 : i32
    %2725 = arith.index_cast %2724 : i32 to index
    %2726 = memref.load %arg1[%2725] : memref<512xi32, #tpu.memory_space<smem>>
    %2727 = arith.index_cast %2726 : i32 to index
    %c0_707 = arith.constant 0 : index
    %2728 = vector.load %arg2[%2727, %c0_707] : memref<32x1xf32, #tpu.memory_space<vmem>>, vector<1x1xf32>
    %c1_i32_708 = arith.constant 1 : i32
    %2729 = arith.addi %2724, %c1_i32_708 : i32
    %2730 = arith.index_cast %2729 : i32 to index
    %2731 = memref.load %arg1[%2730] : memref<512xi32, #tpu.memory_space<smem>>
    %2732 = arith.index_cast %2731 : i32 to index
    %c0_709 = arith.constant 0 : index
    %2733 = vector.load %arg2[%2732, %c0_709] : memref<32x1xf32, #tpu.memory_space<vmem>>, vector<1x1xf32>
    %2734 = arith.addf %2728, %2733 : vector<1x1xf32>
    %c2_i32_710 = arith.constant 2 : i32
    %2735 = arith.addi %2724, %c2_i32_710 : i32
    %2736 = arith.index_cast %2735 : i32 to index
    %2737 = memref.load %arg1[%2736] : memref<512xi32, #tpu.memory_space<smem>>
    %2738 = arith.index_cast %2737 : i32 to index
    %c0_711 = arith.constant 0 : index
    %2739 = vector.load %arg2[%2738, %c0_711] : memref<32x1xf32, #tpu.memory_space<vmem>>, vector<1x1xf32>
    %2740 = arith.addf %2734, %2739 : vector<1x1xf32>
    %c3_i32_712 = arith.constant 3 : i32
    %2741 = arith.addi %2724, %c3_i32_712 : i32
    %2742 = arith.index_cast %2741 : i32 to index
    %2743 = memref.load %arg1[%2742] : memref<512xi32, #tpu.memory_space<smem>>
    %2744 = arith.index_cast %2743 : i32 to index
    %c0_713 = arith.constant 0 : index
    %2745 = vector.load %arg2[%2744, %c0_713] : memref<32x1xf32, #tpu.memory_space<vmem>>, vector<1x1xf32>
    %2746 = arith.addf %2740, %2745 : vector<1x1xf32>
    %c97_i32 = arith.constant 97 : i32
    %2747 = vector.broadcast %c97_i32 : i32 to vector<1x128xi32>
    %2748 = arith.cmpi eq, %1, %2747 : vector<1x128xi32>
    %2749 = vector.shape_cast %2746 : vector<1x1xf32> to vector<1x1xf32>
    %2750 = vector.broadcast %2749 : vector<1x1xf32> to vector<1x128xf32>
    %2751 = arith.select %2748, %2750, %2723 : vector<1x128xi1>, vector<1x128xf32>
    %c392_i32 = arith.constant 392 : i32
    %2752 = arith.addi %7, %c392_i32 : i32
    %2753 = arith.index_cast %2752 : i32 to index
    %2754 = memref.load %arg1[%2753] : memref<512xi32, #tpu.memory_space<smem>>
    %2755 = arith.index_cast %2754 : i32 to index
    %c0_714 = arith.constant 0 : index
    %2756 = vector.load %arg2[%2755, %c0_714] : memref<32x1xf32, #tpu.memory_space<vmem>>, vector<1x1xf32>
    %c1_i32_715 = arith.constant 1 : i32
    %2757 = arith.addi %2752, %c1_i32_715 : i32
    %2758 = arith.index_cast %2757 : i32 to index
    %2759 = memref.load %arg1[%2758] : memref<512xi32, #tpu.memory_space<smem>>
    %2760 = arith.index_cast %2759 : i32 to index
    %c0_716 = arith.constant 0 : index
    %2761 = vector.load %arg2[%2760, %c0_716] : memref<32x1xf32, #tpu.memory_space<vmem>>, vector<1x1xf32>
    %2762 = arith.addf %2756, %2761 : vector<1x1xf32>
    %c2_i32_717 = arith.constant 2 : i32
    %2763 = arith.addi %2752, %c2_i32_717 : i32
    %2764 = arith.index_cast %2763 : i32 to index
    %2765 = memref.load %arg1[%2764] : memref<512xi32, #tpu.memory_space<smem>>
    %2766 = arith.index_cast %2765 : i32 to index
    %c0_718 = arith.constant 0 : index
    %2767 = vector.load %arg2[%2766, %c0_718] : memref<32x1xf32, #tpu.memory_space<vmem>>, vector<1x1xf32>
    %2768 = arith.addf %2762, %2767 : vector<1x1xf32>
    %c3_i32_719 = arith.constant 3 : i32
    %2769 = arith.addi %2752, %c3_i32_719 : i32
    %2770 = arith.index_cast %2769 : i32 to index
    %2771 = memref.load %arg1[%2770] : memref<512xi32, #tpu.memory_space<smem>>
    %2772 = arith.index_cast %2771 : i32 to index
    %c0_720 = arith.constant 0 : index
    %2773 = vector.load %arg2[%2772, %c0_720] : memref<32x1xf32, #tpu.memory_space<vmem>>, vector<1x1xf32>
    %2774 = arith.addf %2768, %2773 : vector<1x1xf32>
    %c98_i32 = arith.constant 98 : i32
    %2775 = vector.broadcast %c98_i32 : i32 to vector<1x128xi32>
    %2776 = arith.cmpi eq, %1, %2775 : vector<1x128xi32>
    %2777 = vector.shape_cast %2774 : vector<1x1xf32> to vector<1x1xf32>
    %2778 = vector.broadcast %2777 : vector<1x1xf32> to vector<1x128xf32>
    %2779 = arith.select %2776, %2778, %2751 : vector<1x128xi1>, vector<1x128xf32>
    %c396_i32 = arith.constant 396 : i32
    %2780 = arith.addi %7, %c396_i32 : i32
    %2781 = arith.index_cast %2780 : i32 to index
    %2782 = memref.load %arg1[%2781] : memref<512xi32, #tpu.memory_space<smem>>
    %2783 = arith.index_cast %2782 : i32 to index
    %c0_721 = arith.constant 0 : index
    %2784 = vector.load %arg2[%2783, %c0_721] : memref<32x1xf32, #tpu.memory_space<vmem>>, vector<1x1xf32>
    %c1_i32_722 = arith.constant 1 : i32
    %2785 = arith.addi %2780, %c1_i32_722 : i32
    %2786 = arith.index_cast %2785 : i32 to index
    %2787 = memref.load %arg1[%2786] : memref<512xi32, #tpu.memory_space<smem>>
    %2788 = arith.index_cast %2787 : i32 to index
    %c0_723 = arith.constant 0 : index
    %2789 = vector.load %arg2[%2788, %c0_723] : memref<32x1xf32, #tpu.memory_space<vmem>>, vector<1x1xf32>
    %2790 = arith.addf %2784, %2789 : vector<1x1xf32>
    %c2_i32_724 = arith.constant 2 : i32
    %2791 = arith.addi %2780, %c2_i32_724 : i32
    %2792 = arith.index_cast %2791 : i32 to index
    %2793 = memref.load %arg1[%2792] : memref<512xi32, #tpu.memory_space<smem>>
    %2794 = arith.index_cast %2793 : i32 to index
    %c0_725 = arith.constant 0 : index
    %2795 = vector.load %arg2[%2794, %c0_725] : memref<32x1xf32, #tpu.memory_space<vmem>>, vector<1x1xf32>
    %2796 = arith.addf %2790, %2795 : vector<1x1xf32>
    %c3_i32_726 = arith.constant 3 : i32
    %2797 = arith.addi %2780, %c3_i32_726 : i32
    %2798 = arith.index_cast %2797 : i32 to index
    %2799 = memref.load %arg1[%2798] : memref<512xi32, #tpu.memory_space<smem>>
    %2800 = arith.index_cast %2799 : i32 to index
    %c0_727 = arith.constant 0 : index
    %2801 = vector.load %arg2[%2800, %c0_727] : memref<32x1xf32, #tpu.memory_space<vmem>>, vector<1x1xf32>
    %2802 = arith.addf %2796, %2801 : vector<1x1xf32>
    %c99_i32 = arith.constant 99 : i32
    %2803 = vector.broadcast %c99_i32 : i32 to vector<1x128xi32>
    %2804 = arith.cmpi eq, %1, %2803 : vector<1x128xi32>
    %2805 = vector.shape_cast %2802 : vector<1x1xf32> to vector<1x1xf32>
    %2806 = vector.broadcast %2805 : vector<1x1xf32> to vector<1x128xf32>
    %2807 = arith.select %2804, %2806, %2779 : vector<1x128xi1>, vector<1x128xf32>
    %c400_i32 = arith.constant 400 : i32
    %2808 = arith.addi %7, %c400_i32 : i32
    %2809 = arith.index_cast %2808 : i32 to index
    %2810 = memref.load %arg1[%2809] : memref<512xi32, #tpu.memory_space<smem>>
    %2811 = arith.index_cast %2810 : i32 to index
    %c0_728 = arith.constant 0 : index
    %2812 = vector.load %arg2[%2811, %c0_728] : memref<32x1xf32, #tpu.memory_space<vmem>>, vector<1x1xf32>
    %c1_i32_729 = arith.constant 1 : i32
    %2813 = arith.addi %2808, %c1_i32_729 : i32
    %2814 = arith.index_cast %2813 : i32 to index
    %2815 = memref.load %arg1[%2814] : memref<512xi32, #tpu.memory_space<smem>>
    %2816 = arith.index_cast %2815 : i32 to index
    %c0_730 = arith.constant 0 : index
    %2817 = vector.load %arg2[%2816, %c0_730] : memref<32x1xf32, #tpu.memory_space<vmem>>, vector<1x1xf32>
    %2818 = arith.addf %2812, %2817 : vector<1x1xf32>
    %c2_i32_731 = arith.constant 2 : i32
    %2819 = arith.addi %2808, %c2_i32_731 : i32
    %2820 = arith.index_cast %2819 : i32 to index
    %2821 = memref.load %arg1[%2820] : memref<512xi32, #tpu.memory_space<smem>>
    %2822 = arith.index_cast %2821 : i32 to index
    %c0_732 = arith.constant 0 : index
    %2823 = vector.load %arg2[%2822, %c0_732] : memref<32x1xf32, #tpu.memory_space<vmem>>, vector<1x1xf32>
    %2824 = arith.addf %2818, %2823 : vector<1x1xf32>
    %c3_i32_733 = arith.constant 3 : i32
    %2825 = arith.addi %2808, %c3_i32_733 : i32
    %2826 = arith.index_cast %2825 : i32 to index
    %2827 = memref.load %arg1[%2826] : memref<512xi32, #tpu.memory_space<smem>>
    %2828 = arith.index_cast %2827 : i32 to index
    %c0_734 = arith.constant 0 : index
    %2829 = vector.load %arg2[%2828, %c0_734] : memref<32x1xf32, #tpu.memory_space<vmem>>, vector<1x1xf32>
    %2830 = arith.addf %2824, %2829 : vector<1x1xf32>
    %c100_i32_735 = arith.constant 100 : i32
    %2831 = vector.broadcast %c100_i32_735 : i32 to vector<1x128xi32>
    %2832 = arith.cmpi eq, %1, %2831 : vector<1x128xi32>
    %2833 = vector.shape_cast %2830 : vector<1x1xf32> to vector<1x1xf32>
    %2834 = vector.broadcast %2833 : vector<1x1xf32> to vector<1x128xf32>
    %2835 = arith.select %2832, %2834, %2807 : vector<1x128xi1>, vector<1x128xf32>
    %c404_i32 = arith.constant 404 : i32
    %2836 = arith.addi %7, %c404_i32 : i32
    %2837 = arith.index_cast %2836 : i32 to index
    %2838 = memref.load %arg1[%2837] : memref<512xi32, #tpu.memory_space<smem>>
    %2839 = arith.index_cast %2838 : i32 to index
    %c0_736 = arith.constant 0 : index
    %2840 = vector.load %arg2[%2839, %c0_736] : memref<32x1xf32, #tpu.memory_space<vmem>>, vector<1x1xf32>
    %c1_i32_737 = arith.constant 1 : i32
    %2841 = arith.addi %2836, %c1_i32_737 : i32
    %2842 = arith.index_cast %2841 : i32 to index
    %2843 = memref.load %arg1[%2842] : memref<512xi32, #tpu.memory_space<smem>>
    %2844 = arith.index_cast %2843 : i32 to index
    %c0_738 = arith.constant 0 : index
    %2845 = vector.load %arg2[%2844, %c0_738] : memref<32x1xf32, #tpu.memory_space<vmem>>, vector<1x1xf32>
    %2846 = arith.addf %2840, %2845 : vector<1x1xf32>
    %c2_i32_739 = arith.constant 2 : i32
    %2847 = arith.addi %2836, %c2_i32_739 : i32
    %2848 = arith.index_cast %2847 : i32 to index
    %2849 = memref.load %arg1[%2848] : memref<512xi32, #tpu.memory_space<smem>>
    %2850 = arith.index_cast %2849 : i32 to index
    %c0_740 = arith.constant 0 : index
    %2851 = vector.load %arg2[%2850, %c0_740] : memref<32x1xf32, #tpu.memory_space<vmem>>, vector<1x1xf32>
    %2852 = arith.addf %2846, %2851 : vector<1x1xf32>
    %c3_i32_741 = arith.constant 3 : i32
    %2853 = arith.addi %2836, %c3_i32_741 : i32
    %2854 = arith.index_cast %2853 : i32 to index
    %2855 = memref.load %arg1[%2854] : memref<512xi32, #tpu.memory_space<smem>>
    %2856 = arith.index_cast %2855 : i32 to index
    %c0_742 = arith.constant 0 : index
    %2857 = vector.load %arg2[%2856, %c0_742] : memref<32x1xf32, #tpu.memory_space<vmem>>, vector<1x1xf32>
    %2858 = arith.addf %2852, %2857 : vector<1x1xf32>
    %c101_i32 = arith.constant 101 : i32
    %2859 = vector.broadcast %c101_i32 : i32 to vector<1x128xi32>
    %2860 = arith.cmpi eq, %1, %2859 : vector<1x128xi32>
    %2861 = vector.shape_cast %2858 : vector<1x1xf32> to vector<1x1xf32>
    %2862 = vector.broadcast %2861 : vector<1x1xf32> to vector<1x128xf32>
    %2863 = arith.select %2860, %2862, %2835 : vector<1x128xi1>, vector<1x128xf32>
    %c408_i32 = arith.constant 408 : i32
    %2864 = arith.addi %7, %c408_i32 : i32
    %2865 = arith.index_cast %2864 : i32 to index
    %2866 = memref.load %arg1[%2865] : memref<512xi32, #tpu.memory_space<smem>>
    %2867 = arith.index_cast %2866 : i32 to index
    %c0_743 = arith.constant 0 : index
    %2868 = vector.load %arg2[%2867, %c0_743] : memref<32x1xf32, #tpu.memory_space<vmem>>, vector<1x1xf32>
    %c1_i32_744 = arith.constant 1 : i32
    %2869 = arith.addi %2864, %c1_i32_744 : i32
    %2870 = arith.index_cast %2869 : i32 to index
    %2871 = memref.load %arg1[%2870] : memref<512xi32, #tpu.memory_space<smem>>
    %2872 = arith.index_cast %2871 : i32 to index
    %c0_745 = arith.constant 0 : index
    %2873 = vector.load %arg2[%2872, %c0_745] : memref<32x1xf32, #tpu.memory_space<vmem>>, vector<1x1xf32>
    %2874 = arith.addf %2868, %2873 : vector<1x1xf32>
    %c2_i32_746 = arith.constant 2 : i32
    %2875 = arith.addi %2864, %c2_i32_746 : i32
    %2876 = arith.index_cast %2875 : i32 to index
    %2877 = memref.load %arg1[%2876] : memref<512xi32, #tpu.memory_space<smem>>
    %2878 = arith.index_cast %2877 : i32 to index
    %c0_747 = arith.constant 0 : index
    %2879 = vector.load %arg2[%2878, %c0_747] : memref<32x1xf32, #tpu.memory_space<vmem>>, vector<1x1xf32>
    %2880 = arith.addf %2874, %2879 : vector<1x1xf32>
    %c3_i32_748 = arith.constant 3 : i32
    %2881 = arith.addi %2864, %c3_i32_748 : i32
    %2882 = arith.index_cast %2881 : i32 to index
    %2883 = memref.load %arg1[%2882] : memref<512xi32, #tpu.memory_space<smem>>
    %2884 = arith.index_cast %2883 : i32 to index
    %c0_749 = arith.constant 0 : index
    %2885 = vector.load %arg2[%2884, %c0_749] : memref<32x1xf32, #tpu.memory_space<vmem>>, vector<1x1xf32>
    %2886 = arith.addf %2880, %2885 : vector<1x1xf32>
    %c102_i32 = arith.constant 102 : i32
    %2887 = vector.broadcast %c102_i32 : i32 to vector<1x128xi32>
    %2888 = arith.cmpi eq, %1, %2887 : vector<1x128xi32>
    %2889 = vector.shape_cast %2886 : vector<1x1xf32> to vector<1x1xf32>
    %2890 = vector.broadcast %2889 : vector<1x1xf32> to vector<1x128xf32>
    %2891 = arith.select %2888, %2890, %2863 : vector<1x128xi1>, vector<1x128xf32>
    %c412_i32 = arith.constant 412 : i32
    %2892 = arith.addi %7, %c412_i32 : i32
    %2893 = arith.index_cast %2892 : i32 to index
    %2894 = memref.load %arg1[%2893] : memref<512xi32, #tpu.memory_space<smem>>
    %2895 = arith.index_cast %2894 : i32 to index
    %c0_750 = arith.constant 0 : index
    %2896 = vector.load %arg2[%2895, %c0_750] : memref<32x1xf32, #tpu.memory_space<vmem>>, vector<1x1xf32>
    %c1_i32_751 = arith.constant 1 : i32
    %2897 = arith.addi %2892, %c1_i32_751 : i32
    %2898 = arith.index_cast %2897 : i32 to index
    %2899 = memref.load %arg1[%2898] : memref<512xi32, #tpu.memory_space<smem>>
    %2900 = arith.index_cast %2899 : i32 to index
    %c0_752 = arith.constant 0 : index
    %2901 = vector.load %arg2[%2900, %c0_752] : memref<32x1xf32, #tpu.memory_space<vmem>>, vector<1x1xf32>
    %2902 = arith.addf %2896, %2901 : vector<1x1xf32>
    %c2_i32_753 = arith.constant 2 : i32
    %2903 = arith.addi %2892, %c2_i32_753 : i32
    %2904 = arith.index_cast %2903 : i32 to index
    %2905 = memref.load %arg1[%2904] : memref<512xi32, #tpu.memory_space<smem>>
    %2906 = arith.index_cast %2905 : i32 to index
    %c0_754 = arith.constant 0 : index
    %2907 = vector.load %arg2[%2906, %c0_754] : memref<32x1xf32, #tpu.memory_space<vmem>>, vector<1x1xf32>
    %2908 = arith.addf %2902, %2907 : vector<1x1xf32>
    %c3_i32_755 = arith.constant 3 : i32
    %2909 = arith.addi %2892, %c3_i32_755 : i32
    %2910 = arith.index_cast %2909 : i32 to index
    %2911 = memref.load %arg1[%2910] : memref<512xi32, #tpu.memory_space<smem>>
    %2912 = arith.index_cast %2911 : i32 to index
    %c0_756 = arith.constant 0 : index
    %2913 = vector.load %arg2[%2912, %c0_756] : memref<32x1xf32, #tpu.memory_space<vmem>>, vector<1x1xf32>
    %2914 = arith.addf %2908, %2913 : vector<1x1xf32>
    %c103_i32 = arith.constant 103 : i32
    %2915 = vector.broadcast %c103_i32 : i32 to vector<1x128xi32>
    %2916 = arith.cmpi eq, %1, %2915 : vector<1x128xi32>
    %2917 = vector.shape_cast %2914 : vector<1x1xf32> to vector<1x1xf32>
    %2918 = vector.broadcast %2917 : vector<1x1xf32> to vector<1x128xf32>
    %2919 = arith.select %2916, %2918, %2891 : vector<1x128xi1>, vector<1x128xf32>
    %c416_i32 = arith.constant 416 : i32
    %2920 = arith.addi %7, %c416_i32 : i32
    %2921 = arith.index_cast %2920 : i32 to index
    %2922 = memref.load %arg1[%2921] : memref<512xi32, #tpu.memory_space<smem>>
    %2923 = arith.index_cast %2922 : i32 to index
    %c0_757 = arith.constant 0 : index
    %2924 = vector.load %arg2[%2923, %c0_757] : memref<32x1xf32, #tpu.memory_space<vmem>>, vector<1x1xf32>
    %c1_i32_758 = arith.constant 1 : i32
    %2925 = arith.addi %2920, %c1_i32_758 : i32
    %2926 = arith.index_cast %2925 : i32 to index
    %2927 = memref.load %arg1[%2926] : memref<512xi32, #tpu.memory_space<smem>>
    %2928 = arith.index_cast %2927 : i32 to index
    %c0_759 = arith.constant 0 : index
    %2929 = vector.load %arg2[%2928, %c0_759] : memref<32x1xf32, #tpu.memory_space<vmem>>, vector<1x1xf32>
    %2930 = arith.addf %2924, %2929 : vector<1x1xf32>
    %c2_i32_760 = arith.constant 2 : i32
    %2931 = arith.addi %2920, %c2_i32_760 : i32
    %2932 = arith.index_cast %2931 : i32 to index
    %2933 = memref.load %arg1[%2932] : memref<512xi32, #tpu.memory_space<smem>>
    %2934 = arith.index_cast %2933 : i32 to index
    %c0_761 = arith.constant 0 : index
    %2935 = vector.load %arg2[%2934, %c0_761] : memref<32x1xf32, #tpu.memory_space<vmem>>, vector<1x1xf32>
    %2936 = arith.addf %2930, %2935 : vector<1x1xf32>
    %c3_i32_762 = arith.constant 3 : i32
    %2937 = arith.addi %2920, %c3_i32_762 : i32
    %2938 = arith.index_cast %2937 : i32 to index
    %2939 = memref.load %arg1[%2938] : memref<512xi32, #tpu.memory_space<smem>>
    %2940 = arith.index_cast %2939 : i32 to index
    %c0_763 = arith.constant 0 : index
    %2941 = vector.load %arg2[%2940, %c0_763] : memref<32x1xf32, #tpu.memory_space<vmem>>, vector<1x1xf32>
    %2942 = arith.addf %2936, %2941 : vector<1x1xf32>
    %c104_i32_764 = arith.constant 104 : i32
    %2943 = vector.broadcast %c104_i32_764 : i32 to vector<1x128xi32>
    %2944 = arith.cmpi eq, %1, %2943 : vector<1x128xi32>
    %2945 = vector.shape_cast %2942 : vector<1x1xf32> to vector<1x1xf32>
    %2946 = vector.broadcast %2945 : vector<1x1xf32> to vector<1x128xf32>
    %2947 = arith.select %2944, %2946, %5 : vector<1x128xi1>, vector<1x128xf32>
    %c420_i32 = arith.constant 420 : i32
    %2948 = arith.addi %7, %c420_i32 : i32
    %2949 = arith.index_cast %2948 : i32 to index
    %2950 = memref.load %arg1[%2949] : memref<512xi32, #tpu.memory_space<smem>>
    %2951 = arith.index_cast %2950 : i32 to index
    %c0_765 = arith.constant 0 : index
    %2952 = vector.load %arg2[%2951, %c0_765] : memref<32x1xf32, #tpu.memory_space<vmem>>, vector<1x1xf32>
    %c1_i32_766 = arith.constant 1 : i32
    %2953 = arith.addi %2948, %c1_i32_766 : i32
    %2954 = arith.index_cast %2953 : i32 to index
    %2955 = memref.load %arg1[%2954] : memref<512xi32, #tpu.memory_space<smem>>
    %2956 = arith.index_cast %2955 : i32 to index
    %c0_767 = arith.constant 0 : index
    %2957 = vector.load %arg2[%2956, %c0_767] : memref<32x1xf32, #tpu.memory_space<vmem>>, vector<1x1xf32>
    %2958 = arith.addf %2952, %2957 : vector<1x1xf32>
    %c2_i32_768 = arith.constant 2 : i32
    %2959 = arith.addi %2948, %c2_i32_768 : i32
    %2960 = arith.index_cast %2959 : i32 to index
    %2961 = memref.load %arg1[%2960] : memref<512xi32, #tpu.memory_space<smem>>
    %2962 = arith.index_cast %2961 : i32 to index
    %c0_769 = arith.constant 0 : index
    %2963 = vector.load %arg2[%2962, %c0_769] : memref<32x1xf32, #tpu.memory_space<vmem>>, vector<1x1xf32>
    %2964 = arith.addf %2958, %2963 : vector<1x1xf32>
    %c3_i32_770 = arith.constant 3 : i32
    %2965 = arith.addi %2948, %c3_i32_770 : i32
    %2966 = arith.index_cast %2965 : i32 to index
    %2967 = memref.load %arg1[%2966] : memref<512xi32, #tpu.memory_space<smem>>
    %2968 = arith.index_cast %2967 : i32 to index
    %c0_771 = arith.constant 0 : index
    %2969 = vector.load %arg2[%2968, %c0_771] : memref<32x1xf32, #tpu.memory_space<vmem>>, vector<1x1xf32>
    %2970 = arith.addf %2964, %2969 : vector<1x1xf32>
    %c105_i32 = arith.constant 105 : i32
    %2971 = vector.broadcast %c105_i32 : i32 to vector<1x128xi32>
    %2972 = arith.cmpi eq, %1, %2971 : vector<1x128xi32>
    %2973 = vector.shape_cast %2970 : vector<1x1xf32> to vector<1x1xf32>
    %2974 = vector.broadcast %2973 : vector<1x1xf32> to vector<1x128xf32>
    %2975 = arith.select %2972, %2974, %2947 : vector<1x128xi1>, vector<1x128xf32>
    %c424_i32 = arith.constant 424 : i32
    %2976 = arith.addi %7, %c424_i32 : i32
    %2977 = arith.index_cast %2976 : i32 to index
    %2978 = memref.load %arg1[%2977] : memref<512xi32, #tpu.memory_space<smem>>
    %2979 = arith.index_cast %2978 : i32 to index
    %c0_772 = arith.constant 0 : index
    %2980 = vector.load %arg2[%2979, %c0_772] : memref<32x1xf32, #tpu.memory_space<vmem>>, vector<1x1xf32>
    %c1_i32_773 = arith.constant 1 : i32
    %2981 = arith.addi %2976, %c1_i32_773 : i32
    %2982 = arith.index_cast %2981 : i32 to index
    %2983 = memref.load %arg1[%2982] : memref<512xi32, #tpu.memory_space<smem>>
    %2984 = arith.index_cast %2983 : i32 to index
    %c0_774 = arith.constant 0 : index
    %2985 = vector.load %arg2[%2984, %c0_774] : memref<32x1xf32, #tpu.memory_space<vmem>>, vector<1x1xf32>
    %2986 = arith.addf %2980, %2985 : vector<1x1xf32>
    %c2_i32_775 = arith.constant 2 : i32
    %2987 = arith.addi %2976, %c2_i32_775 : i32
    %2988 = arith.index_cast %2987 : i32 to index
    %2989 = memref.load %arg1[%2988] : memref<512xi32, #tpu.memory_space<smem>>
    %2990 = arith.index_cast %2989 : i32 to index
    %c0_776 = arith.constant 0 : index
    %2991 = vector.load %arg2[%2990, %c0_776] : memref<32x1xf32, #tpu.memory_space<vmem>>, vector<1x1xf32>
    %2992 = arith.addf %2986, %2991 : vector<1x1xf32>
    %c3_i32_777 = arith.constant 3 : i32
    %2993 = arith.addi %2976, %c3_i32_777 : i32
    %2994 = arith.index_cast %2993 : i32 to index
    %2995 = memref.load %arg1[%2994] : memref<512xi32, #tpu.memory_space<smem>>
    %2996 = arith.index_cast %2995 : i32 to index
    %c0_778 = arith.constant 0 : index
    %2997 = vector.load %arg2[%2996, %c0_778] : memref<32x1xf32, #tpu.memory_space<vmem>>, vector<1x1xf32>
    %2998 = arith.addf %2992, %2997 : vector<1x1xf32>
    %c106_i32 = arith.constant 106 : i32
    %2999 = vector.broadcast %c106_i32 : i32 to vector<1x128xi32>
    %3000 = arith.cmpi eq, %1, %2999 : vector<1x128xi32>
    %3001 = vector.shape_cast %2998 : vector<1x1xf32> to vector<1x1xf32>
    %3002 = vector.broadcast %3001 : vector<1x1xf32> to vector<1x128xf32>
    %3003 = arith.select %3000, %3002, %2975 : vector<1x128xi1>, vector<1x128xf32>
    %c428_i32 = arith.constant 428 : i32
    %3004 = arith.addi %7, %c428_i32 : i32
    %3005 = arith.index_cast %3004 : i32 to index
    %3006 = memref.load %arg1[%3005] : memref<512xi32, #tpu.memory_space<smem>>
    %3007 = arith.index_cast %3006 : i32 to index
    %c0_779 = arith.constant 0 : index
    %3008 = vector.load %arg2[%3007, %c0_779] : memref<32x1xf32, #tpu.memory_space<vmem>>, vector<1x1xf32>
    %c1_i32_780 = arith.constant 1 : i32
    %3009 = arith.addi %3004, %c1_i32_780 : i32
    %3010 = arith.index_cast %3009 : i32 to index
    %3011 = memref.load %arg1[%3010] : memref<512xi32, #tpu.memory_space<smem>>
    %3012 = arith.index_cast %3011 : i32 to index
    %c0_781 = arith.constant 0 : index
    %3013 = vector.load %arg2[%3012, %c0_781] : memref<32x1xf32, #tpu.memory_space<vmem>>, vector<1x1xf32>
    %3014 = arith.addf %3008, %3013 : vector<1x1xf32>
    %c2_i32_782 = arith.constant 2 : i32
    %3015 = arith.addi %3004, %c2_i32_782 : i32
    %3016 = arith.index_cast %3015 : i32 to index
    %3017 = memref.load %arg1[%3016] : memref<512xi32, #tpu.memory_space<smem>>
    %3018 = arith.index_cast %3017 : i32 to index
    %c0_783 = arith.constant 0 : index
    %3019 = vector.load %arg2[%3018, %c0_783] : memref<32x1xf32, #tpu.memory_space<vmem>>, vector<1x1xf32>
    %3020 = arith.addf %3014, %3019 : vector<1x1xf32>
    %c3_i32_784 = arith.constant 3 : i32
    %3021 = arith.addi %3004, %c3_i32_784 : i32
    %3022 = arith.index_cast %3021 : i32 to index
    %3023 = memref.load %arg1[%3022] : memref<512xi32, #tpu.memory_space<smem>>
    %3024 = arith.index_cast %3023 : i32 to index
    %c0_785 = arith.constant 0 : index
    %3025 = vector.load %arg2[%3024, %c0_785] : memref<32x1xf32, #tpu.memory_space<vmem>>, vector<1x1xf32>
    %3026 = arith.addf %3020, %3025 : vector<1x1xf32>
    %c107_i32 = arith.constant 107 : i32
    %3027 = vector.broadcast %c107_i32 : i32 to vector<1x128xi32>
    %3028 = arith.cmpi eq, %1, %3027 : vector<1x128xi32>
    %3029 = vector.shape_cast %3026 : vector<1x1xf32> to vector<1x1xf32>
    %3030 = vector.broadcast %3029 : vector<1x1xf32> to vector<1x128xf32>
    %3031 = arith.select %3028, %3030, %3003 : vector<1x128xi1>, vector<1x128xf32>
    %c432_i32 = arith.constant 432 : i32
    %3032 = arith.addi %7, %c432_i32 : i32
    %3033 = arith.index_cast %3032 : i32 to index
    %3034 = memref.load %arg1[%3033] : memref<512xi32, #tpu.memory_space<smem>>
    %3035 = arith.index_cast %3034 : i32 to index
    %c0_786 = arith.constant 0 : index
    %3036 = vector.load %arg2[%3035, %c0_786] : memref<32x1xf32, #tpu.memory_space<vmem>>, vector<1x1xf32>
    %c1_i32_787 = arith.constant 1 : i32
    %3037 = arith.addi %3032, %c1_i32_787 : i32
    %3038 = arith.index_cast %3037 : i32 to index
    %3039 = memref.load %arg1[%3038] : memref<512xi32, #tpu.memory_space<smem>>
    %3040 = arith.index_cast %3039 : i32 to index
    %c0_788 = arith.constant 0 : index
    %3041 = vector.load %arg2[%3040, %c0_788] : memref<32x1xf32, #tpu.memory_space<vmem>>, vector<1x1xf32>
    %3042 = arith.addf %3036, %3041 : vector<1x1xf32>
    %c2_i32_789 = arith.constant 2 : i32
    %3043 = arith.addi %3032, %c2_i32_789 : i32
    %3044 = arith.index_cast %3043 : i32 to index
    %3045 = memref.load %arg1[%3044] : memref<512xi32, #tpu.memory_space<smem>>
    %3046 = arith.index_cast %3045 : i32 to index
    %c0_790 = arith.constant 0 : index
    %3047 = vector.load %arg2[%3046, %c0_790] : memref<32x1xf32, #tpu.memory_space<vmem>>, vector<1x1xf32>
    %3048 = arith.addf %3042, %3047 : vector<1x1xf32>
    %c3_i32_791 = arith.constant 3 : i32
    %3049 = arith.addi %3032, %c3_i32_791 : i32
    %3050 = arith.index_cast %3049 : i32 to index
    %3051 = memref.load %arg1[%3050] : memref<512xi32, #tpu.memory_space<smem>>
    %3052 = arith.index_cast %3051 : i32 to index
    %c0_792 = arith.constant 0 : index
    %3053 = vector.load %arg2[%3052, %c0_792] : memref<32x1xf32, #tpu.memory_space<vmem>>, vector<1x1xf32>
    %3054 = arith.addf %3048, %3053 : vector<1x1xf32>
    %c108_i32_793 = arith.constant 108 : i32
    %3055 = vector.broadcast %c108_i32_793 : i32 to vector<1x128xi32>
    %3056 = arith.cmpi eq, %1, %3055 : vector<1x128xi32>
    %3057 = vector.shape_cast %3054 : vector<1x1xf32> to vector<1x1xf32>
    %3058 = vector.broadcast %3057 : vector<1x1xf32> to vector<1x128xf32>
    %3059 = arith.select %3056, %3058, %3031 : vector<1x128xi1>, vector<1x128xf32>
    %c436_i32 = arith.constant 436 : i32
    %3060 = arith.addi %7, %c436_i32 : i32
    %3061 = arith.index_cast %3060 : i32 to index
    %3062 = memref.load %arg1[%3061] : memref<512xi32, #tpu.memory_space<smem>>
    %3063 = arith.index_cast %3062 : i32 to index
    %c0_794 = arith.constant 0 : index
    %3064 = vector.load %arg2[%3063, %c0_794] : memref<32x1xf32, #tpu.memory_space<vmem>>, vector<1x1xf32>
    %c1_i32_795 = arith.constant 1 : i32
    %3065 = arith.addi %3060, %c1_i32_795 : i32
    %3066 = arith.index_cast %3065 : i32 to index
    %3067 = memref.load %arg1[%3066] : memref<512xi32, #tpu.memory_space<smem>>
    %3068 = arith.index_cast %3067 : i32 to index
    %c0_796 = arith.constant 0 : index
    %3069 = vector.load %arg2[%3068, %c0_796] : memref<32x1xf32, #tpu.memory_space<vmem>>, vector<1x1xf32>
    %3070 = arith.addf %3064, %3069 : vector<1x1xf32>
    %c2_i32_797 = arith.constant 2 : i32
    %3071 = arith.addi %3060, %c2_i32_797 : i32
    %3072 = arith.index_cast %3071 : i32 to index
    %3073 = memref.load %arg1[%3072] : memref<512xi32, #tpu.memory_space<smem>>
    %3074 = arith.index_cast %3073 : i32 to index
    %c0_798 = arith.constant 0 : index
    %3075 = vector.load %arg2[%3074, %c0_798] : memref<32x1xf32, #tpu.memory_space<vmem>>, vector<1x1xf32>
    %3076 = arith.addf %3070, %3075 : vector<1x1xf32>
    %c3_i32_799 = arith.constant 3 : i32
    %3077 = arith.addi %3060, %c3_i32_799 : i32
    %3078 = arith.index_cast %3077 : i32 to index
    %3079 = memref.load %arg1[%3078] : memref<512xi32, #tpu.memory_space<smem>>
    %3080 = arith.index_cast %3079 : i32 to index
    %c0_800 = arith.constant 0 : index
    %3081 = vector.load %arg2[%3080, %c0_800] : memref<32x1xf32, #tpu.memory_space<vmem>>, vector<1x1xf32>
    %3082 = arith.addf %3076, %3081 : vector<1x1xf32>
    %c109_i32 = arith.constant 109 : i32
    %3083 = vector.broadcast %c109_i32 : i32 to vector<1x128xi32>
    %3084 = arith.cmpi eq, %1, %3083 : vector<1x128xi32>
    %3085 = vector.shape_cast %3082 : vector<1x1xf32> to vector<1x1xf32>
    %3086 = vector.broadcast %3085 : vector<1x1xf32> to vector<1x128xf32>
    %3087 = arith.select %3084, %3086, %3059 : vector<1x128xi1>, vector<1x128xf32>
    %c440_i32 = arith.constant 440 : i32
    %3088 = arith.addi %7, %c440_i32 : i32
    %3089 = arith.index_cast %3088 : i32 to index
    %3090 = memref.load %arg1[%3089] : memref<512xi32, #tpu.memory_space<smem>>
    %3091 = arith.index_cast %3090 : i32 to index
    %c0_801 = arith.constant 0 : index
    %3092 = vector.load %arg2[%3091, %c0_801] : memref<32x1xf32, #tpu.memory_space<vmem>>, vector<1x1xf32>
    %c1_i32_802 = arith.constant 1 : i32
    %3093 = arith.addi %3088, %c1_i32_802 : i32
    %3094 = arith.index_cast %3093 : i32 to index
    %3095 = memref.load %arg1[%3094] : memref<512xi32, #tpu.memory_space<smem>>
    %3096 = arith.index_cast %3095 : i32 to index
    %c0_803 = arith.constant 0 : index
    %3097 = vector.load %arg2[%3096, %c0_803] : memref<32x1xf32, #tpu.memory_space<vmem>>, vector<1x1xf32>
    %3098 = arith.addf %3092, %3097 : vector<1x1xf32>
    %c2_i32_804 = arith.constant 2 : i32
    %3099 = arith.addi %3088, %c2_i32_804 : i32
    %3100 = arith.index_cast %3099 : i32 to index
    %3101 = memref.load %arg1[%3100] : memref<512xi32, #tpu.memory_space<smem>>
    %3102 = arith.index_cast %3101 : i32 to index
    %c0_805 = arith.constant 0 : index
    %3103 = vector.load %arg2[%3102, %c0_805] : memref<32x1xf32, #tpu.memory_space<vmem>>, vector<1x1xf32>
    %3104 = arith.addf %3098, %3103 : vector<1x1xf32>
    %c3_i32_806 = arith.constant 3 : i32
    %3105 = arith.addi %3088, %c3_i32_806 : i32
    %3106 = arith.index_cast %3105 : i32 to index
    %3107 = memref.load %arg1[%3106] : memref<512xi32, #tpu.memory_space<smem>>
    %3108 = arith.index_cast %3107 : i32 to index
    %c0_807 = arith.constant 0 : index
    %3109 = vector.load %arg2[%3108, %c0_807] : memref<32x1xf32, #tpu.memory_space<vmem>>, vector<1x1xf32>
    %3110 = arith.addf %3104, %3109 : vector<1x1xf32>
    %c110_i32 = arith.constant 110 : i32
    %3111 = vector.broadcast %c110_i32 : i32 to vector<1x128xi32>
    %3112 = arith.cmpi eq, %1, %3111 : vector<1x128xi32>
    %3113 = vector.shape_cast %3110 : vector<1x1xf32> to vector<1x1xf32>
    %3114 = vector.broadcast %3113 : vector<1x1xf32> to vector<1x128xf32>
    %3115 = arith.select %3112, %3114, %3087 : vector<1x128xi1>, vector<1x128xf32>
    %c444_i32 = arith.constant 444 : i32
    %3116 = arith.addi %7, %c444_i32 : i32
    %3117 = arith.index_cast %3116 : i32 to index
    %3118 = memref.load %arg1[%3117] : memref<512xi32, #tpu.memory_space<smem>>
    %3119 = arith.index_cast %3118 : i32 to index
    %c0_808 = arith.constant 0 : index
    %3120 = vector.load %arg2[%3119, %c0_808] : memref<32x1xf32, #tpu.memory_space<vmem>>, vector<1x1xf32>
    %c1_i32_809 = arith.constant 1 : i32
    %3121 = arith.addi %3116, %c1_i32_809 : i32
    %3122 = arith.index_cast %3121 : i32 to index
    %3123 = memref.load %arg1[%3122] : memref<512xi32, #tpu.memory_space<smem>>
    %3124 = arith.index_cast %3123 : i32 to index
    %c0_810 = arith.constant 0 : index
    %3125 = vector.load %arg2[%3124, %c0_810] : memref<32x1xf32, #tpu.memory_space<vmem>>, vector<1x1xf32>
    %3126 = arith.addf %3120, %3125 : vector<1x1xf32>
    %c2_i32_811 = arith.constant 2 : i32
    %3127 = arith.addi %3116, %c2_i32_811 : i32
    %3128 = arith.index_cast %3127 : i32 to index
    %3129 = memref.load %arg1[%3128] : memref<512xi32, #tpu.memory_space<smem>>
    %3130 = arith.index_cast %3129 : i32 to index
    %c0_812 = arith.constant 0 : index
    %3131 = vector.load %arg2[%3130, %c0_812] : memref<32x1xf32, #tpu.memory_space<vmem>>, vector<1x1xf32>
    %3132 = arith.addf %3126, %3131 : vector<1x1xf32>
    %c3_i32_813 = arith.constant 3 : i32
    %3133 = arith.addi %3116, %c3_i32_813 : i32
    %3134 = arith.index_cast %3133 : i32 to index
    %3135 = memref.load %arg1[%3134] : memref<512xi32, #tpu.memory_space<smem>>
    %3136 = arith.index_cast %3135 : i32 to index
    %c0_814 = arith.constant 0 : index
    %3137 = vector.load %arg2[%3136, %c0_814] : memref<32x1xf32, #tpu.memory_space<vmem>>, vector<1x1xf32>
    %3138 = arith.addf %3132, %3137 : vector<1x1xf32>
    %c111_i32 = arith.constant 111 : i32
    %3139 = vector.broadcast %c111_i32 : i32 to vector<1x128xi32>
    %3140 = arith.cmpi eq, %1, %3139 : vector<1x128xi32>
    %3141 = vector.shape_cast %3138 : vector<1x1xf32> to vector<1x1xf32>
    %3142 = vector.broadcast %3141 : vector<1x1xf32> to vector<1x128xf32>
    %3143 = arith.select %3140, %3142, %3115 : vector<1x128xi1>, vector<1x128xf32>
    %c448_i32 = arith.constant 448 : i32
    %3144 = arith.addi %7, %c448_i32 : i32
    %3145 = arith.index_cast %3144 : i32 to index
    %3146 = memref.load %arg1[%3145] : memref<512xi32, #tpu.memory_space<smem>>
    %3147 = arith.index_cast %3146 : i32 to index
    %c0_815 = arith.constant 0 : index
    %3148 = vector.load %arg2[%3147, %c0_815] : memref<32x1xf32, #tpu.memory_space<vmem>>, vector<1x1xf32>
    %c1_i32_816 = arith.constant 1 : i32
    %3149 = arith.addi %3144, %c1_i32_816 : i32
    %3150 = arith.index_cast %3149 : i32 to index
    %3151 = memref.load %arg1[%3150] : memref<512xi32, #tpu.memory_space<smem>>
    %3152 = arith.index_cast %3151 : i32 to index
    %c0_817 = arith.constant 0 : index
    %3153 = vector.load %arg2[%3152, %c0_817] : memref<32x1xf32, #tpu.memory_space<vmem>>, vector<1x1xf32>
    %3154 = arith.addf %3148, %3153 : vector<1x1xf32>
    %c2_i32_818 = arith.constant 2 : i32
    %3155 = arith.addi %3144, %c2_i32_818 : i32
    %3156 = arith.index_cast %3155 : i32 to index
    %3157 = memref.load %arg1[%3156] : memref<512xi32, #tpu.memory_space<smem>>
    %3158 = arith.index_cast %3157 : i32 to index
    %c0_819 = arith.constant 0 : index
    %3159 = vector.load %arg2[%3158, %c0_819] : memref<32x1xf32, #tpu.memory_space<vmem>>, vector<1x1xf32>
    %3160 = arith.addf %3154, %3159 : vector<1x1xf32>
    %c3_i32_820 = arith.constant 3 : i32
    %3161 = arith.addi %3144, %c3_i32_820 : i32
    %3162 = arith.index_cast %3161 : i32 to index
    %3163 = memref.load %arg1[%3162] : memref<512xi32, #tpu.memory_space<smem>>
    %3164 = arith.index_cast %3163 : i32 to index
    %c0_821 = arith.constant 0 : index
    %3165 = vector.load %arg2[%3164, %c0_821] : memref<32x1xf32, #tpu.memory_space<vmem>>, vector<1x1xf32>
    %3166 = arith.addf %3160, %3165 : vector<1x1xf32>
    %c112_i32_822 = arith.constant 112 : i32
    %3167 = vector.broadcast %c112_i32_822 : i32 to vector<1x128xi32>
    %3168 = arith.cmpi eq, %1, %3167 : vector<1x128xi32>
    %3169 = vector.shape_cast %3166 : vector<1x1xf32> to vector<1x1xf32>
    %3170 = vector.broadcast %3169 : vector<1x1xf32> to vector<1x128xf32>
    %3171 = arith.select %3168, %3170, %5 : vector<1x128xi1>, vector<1x128xf32>
    %c452_i32 = arith.constant 452 : i32
    %3172 = arith.addi %7, %c452_i32 : i32
    %3173 = arith.index_cast %3172 : i32 to index
    %3174 = memref.load %arg1[%3173] : memref<512xi32, #tpu.memory_space<smem>>
    %3175 = arith.index_cast %3174 : i32 to index
    %c0_823 = arith.constant 0 : index
    %3176 = vector.load %arg2[%3175, %c0_823] : memref<32x1xf32, #tpu.memory_space<vmem>>, vector<1x1xf32>
    %c1_i32_824 = arith.constant 1 : i32
    %3177 = arith.addi %3172, %c1_i32_824 : i32
    %3178 = arith.index_cast %3177 : i32 to index
    %3179 = memref.load %arg1[%3178] : memref<512xi32, #tpu.memory_space<smem>>
    %3180 = arith.index_cast %3179 : i32 to index
    %c0_825 = arith.constant 0 : index
    %3181 = vector.load %arg2[%3180, %c0_825] : memref<32x1xf32, #tpu.memory_space<vmem>>, vector<1x1xf32>
    %3182 = arith.addf %3176, %3181 : vector<1x1xf32>
    %c2_i32_826 = arith.constant 2 : i32
    %3183 = arith.addi %3172, %c2_i32_826 : i32
    %3184 = arith.index_cast %3183 : i32 to index
    %3185 = memref.load %arg1[%3184] : memref<512xi32, #tpu.memory_space<smem>>
    %3186 = arith.index_cast %3185 : i32 to index
    %c0_827 = arith.constant 0 : index
    %3187 = vector.load %arg2[%3186, %c0_827] : memref<32x1xf32, #tpu.memory_space<vmem>>, vector<1x1xf32>
    %3188 = arith.addf %3182, %3187 : vector<1x1xf32>
    %c3_i32_828 = arith.constant 3 : i32
    %3189 = arith.addi %3172, %c3_i32_828 : i32
    %3190 = arith.index_cast %3189 : i32 to index
    %3191 = memref.load %arg1[%3190] : memref<512xi32, #tpu.memory_space<smem>>
    %3192 = arith.index_cast %3191 : i32 to index
    %c0_829 = arith.constant 0 : index
    %3193 = vector.load %arg2[%3192, %c0_829] : memref<32x1xf32, #tpu.memory_space<vmem>>, vector<1x1xf32>
    %3194 = arith.addf %3188, %3193 : vector<1x1xf32>
    %c113_i32 = arith.constant 113 : i32
    %3195 = vector.broadcast %c113_i32 : i32 to vector<1x128xi32>
    %3196 = arith.cmpi eq, %1, %3195 : vector<1x128xi32>
    %3197 = vector.shape_cast %3194 : vector<1x1xf32> to vector<1x1xf32>
    %3198 = vector.broadcast %3197 : vector<1x1xf32> to vector<1x128xf32>
    %3199 = arith.select %3196, %3198, %3171 : vector<1x128xi1>, vector<1x128xf32>
    %c456_i32 = arith.constant 456 : i32
    %3200 = arith.addi %7, %c456_i32 : i32
    %3201 = arith.index_cast %3200 : i32 to index
    %3202 = memref.load %arg1[%3201] : memref<512xi32, #tpu.memory_space<smem>>
    %3203 = arith.index_cast %3202 : i32 to index
    %c0_830 = arith.constant 0 : index
    %3204 = vector.load %arg2[%3203, %c0_830] : memref<32x1xf32, #tpu.memory_space<vmem>>, vector<1x1xf32>
    %c1_i32_831 = arith.constant 1 : i32
    %3205 = arith.addi %3200, %c1_i32_831 : i32
    %3206 = arith.index_cast %3205 : i32 to index
    %3207 = memref.load %arg1[%3206] : memref<512xi32, #tpu.memory_space<smem>>
    %3208 = arith.index_cast %3207 : i32 to index
    %c0_832 = arith.constant 0 : index
    %3209 = vector.load %arg2[%3208, %c0_832] : memref<32x1xf32, #tpu.memory_space<vmem>>, vector<1x1xf32>
    %3210 = arith.addf %3204, %3209 : vector<1x1xf32>
    %c2_i32_833 = arith.constant 2 : i32
    %3211 = arith.addi %3200, %c2_i32_833 : i32
    %3212 = arith.index_cast %3211 : i32 to index
    %3213 = memref.load %arg1[%3212] : memref<512xi32, #tpu.memory_space<smem>>
    %3214 = arith.index_cast %3213 : i32 to index
    %c0_834 = arith.constant 0 : index
    %3215 = vector.load %arg2[%3214, %c0_834] : memref<32x1xf32, #tpu.memory_space<vmem>>, vector<1x1xf32>
    %3216 = arith.addf %3210, %3215 : vector<1x1xf32>
    %c3_i32_835 = arith.constant 3 : i32
    %3217 = arith.addi %3200, %c3_i32_835 : i32
    %3218 = arith.index_cast %3217 : i32 to index
    %3219 = memref.load %arg1[%3218] : memref<512xi32, #tpu.memory_space<smem>>
    %3220 = arith.index_cast %3219 : i32 to index
    %c0_836 = arith.constant 0 : index
    %3221 = vector.load %arg2[%3220, %c0_836] : memref<32x1xf32, #tpu.memory_space<vmem>>, vector<1x1xf32>
    %3222 = arith.addf %3216, %3221 : vector<1x1xf32>
    %c114_i32 = arith.constant 114 : i32
    %3223 = vector.broadcast %c114_i32 : i32 to vector<1x128xi32>
    %3224 = arith.cmpi eq, %1, %3223 : vector<1x128xi32>
    %3225 = vector.shape_cast %3222 : vector<1x1xf32> to vector<1x1xf32>
    %3226 = vector.broadcast %3225 : vector<1x1xf32> to vector<1x128xf32>
    %3227 = arith.select %3224, %3226, %3199 : vector<1x128xi1>, vector<1x128xf32>
    %c460_i32 = arith.constant 460 : i32
    %3228 = arith.addi %7, %c460_i32 : i32
    %3229 = arith.index_cast %3228 : i32 to index
    %3230 = memref.load %arg1[%3229] : memref<512xi32, #tpu.memory_space<smem>>
    %3231 = arith.index_cast %3230 : i32 to index
    %c0_837 = arith.constant 0 : index
    %3232 = vector.load %arg2[%3231, %c0_837] : memref<32x1xf32, #tpu.memory_space<vmem>>, vector<1x1xf32>
    %c1_i32_838 = arith.constant 1 : i32
    %3233 = arith.addi %3228, %c1_i32_838 : i32
    %3234 = arith.index_cast %3233 : i32 to index
    %3235 = memref.load %arg1[%3234] : memref<512xi32, #tpu.memory_space<smem>>
    %3236 = arith.index_cast %3235 : i32 to index
    %c0_839 = arith.constant 0 : index
    %3237 = vector.load %arg2[%3236, %c0_839] : memref<32x1xf32, #tpu.memory_space<vmem>>, vector<1x1xf32>
    %3238 = arith.addf %3232, %3237 : vector<1x1xf32>
    %c2_i32_840 = arith.constant 2 : i32
    %3239 = arith.addi %3228, %c2_i32_840 : i32
    %3240 = arith.index_cast %3239 : i32 to index
    %3241 = memref.load %arg1[%3240] : memref<512xi32, #tpu.memory_space<smem>>
    %3242 = arith.index_cast %3241 : i32 to index
    %c0_841 = arith.constant 0 : index
    %3243 = vector.load %arg2[%3242, %c0_841] : memref<32x1xf32, #tpu.memory_space<vmem>>, vector<1x1xf32>
    %3244 = arith.addf %3238, %3243 : vector<1x1xf32>
    %c3_i32_842 = arith.constant 3 : i32
    %3245 = arith.addi %3228, %c3_i32_842 : i32
    %3246 = arith.index_cast %3245 : i32 to index
    %3247 = memref.load %arg1[%3246] : memref<512xi32, #tpu.memory_space<smem>>
    %3248 = arith.index_cast %3247 : i32 to index
    %c0_843 = arith.constant 0 : index
    %3249 = vector.load %arg2[%3248, %c0_843] : memref<32x1xf32, #tpu.memory_space<vmem>>, vector<1x1xf32>
    %3250 = arith.addf %3244, %3249 : vector<1x1xf32>
    %c115_i32 = arith.constant 115 : i32
    %3251 = vector.broadcast %c115_i32 : i32 to vector<1x128xi32>
    %3252 = arith.cmpi eq, %1, %3251 : vector<1x128xi32>
    %3253 = vector.shape_cast %3250 : vector<1x1xf32> to vector<1x1xf32>
    %3254 = vector.broadcast %3253 : vector<1x1xf32> to vector<1x128xf32>
    %3255 = arith.select %3252, %3254, %3227 : vector<1x128xi1>, vector<1x128xf32>
    %c464_i32 = arith.constant 464 : i32
    %3256 = arith.addi %7, %c464_i32 : i32
    %3257 = arith.index_cast %3256 : i32 to index
    %3258 = memref.load %arg1[%3257] : memref<512xi32, #tpu.memory_space<smem>>
    %3259 = arith.index_cast %3258 : i32 to index
    %c0_844 = arith.constant 0 : index
    %3260 = vector.load %arg2[%3259, %c0_844] : memref<32x1xf32, #tpu.memory_space<vmem>>, vector<1x1xf32>
    %c1_i32_845 = arith.constant 1 : i32
    %3261 = arith.addi %3256, %c1_i32_845 : i32
    %3262 = arith.index_cast %3261 : i32 to index
    %3263 = memref.load %arg1[%3262] : memref<512xi32, #tpu.memory_space<smem>>
    %3264 = arith.index_cast %3263 : i32 to index
    %c0_846 = arith.constant 0 : index
    %3265 = vector.load %arg2[%3264, %c0_846] : memref<32x1xf32, #tpu.memory_space<vmem>>, vector<1x1xf32>
    %3266 = arith.addf %3260, %3265 : vector<1x1xf32>
    %c2_i32_847 = arith.constant 2 : i32
    %3267 = arith.addi %3256, %c2_i32_847 : i32
    %3268 = arith.index_cast %3267 : i32 to index
    %3269 = memref.load %arg1[%3268] : memref<512xi32, #tpu.memory_space<smem>>
    %3270 = arith.index_cast %3269 : i32 to index
    %c0_848 = arith.constant 0 : index
    %3271 = vector.load %arg2[%3270, %c0_848] : memref<32x1xf32, #tpu.memory_space<vmem>>, vector<1x1xf32>
    %3272 = arith.addf %3266, %3271 : vector<1x1xf32>
    %c3_i32_849 = arith.constant 3 : i32
    %3273 = arith.addi %3256, %c3_i32_849 : i32
    %3274 = arith.index_cast %3273 : i32 to index
    %3275 = memref.load %arg1[%3274] : memref<512xi32, #tpu.memory_space<smem>>
    %3276 = arith.index_cast %3275 : i32 to index
    %c0_850 = arith.constant 0 : index
    %3277 = vector.load %arg2[%3276, %c0_850] : memref<32x1xf32, #tpu.memory_space<vmem>>, vector<1x1xf32>
    %3278 = arith.addf %3272, %3277 : vector<1x1xf32>
    %c116_i32_851 = arith.constant 116 : i32
    %3279 = vector.broadcast %c116_i32_851 : i32 to vector<1x128xi32>
    %3280 = arith.cmpi eq, %1, %3279 : vector<1x128xi32>
    %3281 = vector.shape_cast %3278 : vector<1x1xf32> to vector<1x1xf32>
    %3282 = vector.broadcast %3281 : vector<1x1xf32> to vector<1x128xf32>
    %3283 = arith.select %3280, %3282, %3255 : vector<1x128xi1>, vector<1x128xf32>
    %c468_i32 = arith.constant 468 : i32
    %3284 = arith.addi %7, %c468_i32 : i32
    %3285 = arith.index_cast %3284 : i32 to index
    %3286 = memref.load %arg1[%3285] : memref<512xi32, #tpu.memory_space<smem>>
    %3287 = arith.index_cast %3286 : i32 to index
    %c0_852 = arith.constant 0 : index
    %3288 = vector.load %arg2[%3287, %c0_852] : memref<32x1xf32, #tpu.memory_space<vmem>>, vector<1x1xf32>
    %c1_i32_853 = arith.constant 1 : i32
    %3289 = arith.addi %3284, %c1_i32_853 : i32
    %3290 = arith.index_cast %3289 : i32 to index
    %3291 = memref.load %arg1[%3290] : memref<512xi32, #tpu.memory_space<smem>>
    %3292 = arith.index_cast %3291 : i32 to index
    %c0_854 = arith.constant 0 : index
    %3293 = vector.load %arg2[%3292, %c0_854] : memref<32x1xf32, #tpu.memory_space<vmem>>, vector<1x1xf32>
    %3294 = arith.addf %3288, %3293 : vector<1x1xf32>
    %c2_i32_855 = arith.constant 2 : i32
    %3295 = arith.addi %3284, %c2_i32_855 : i32
    %3296 = arith.index_cast %3295 : i32 to index
    %3297 = memref.load %arg1[%3296] : memref<512xi32, #tpu.memory_space<smem>>
    %3298 = arith.index_cast %3297 : i32 to index
    %c0_856 = arith.constant 0 : index
    %3299 = vector.load %arg2[%3298, %c0_856] : memref<32x1xf32, #tpu.memory_space<vmem>>, vector<1x1xf32>
    %3300 = arith.addf %3294, %3299 : vector<1x1xf32>
    %c3_i32_857 = arith.constant 3 : i32
    %3301 = arith.addi %3284, %c3_i32_857 : i32
    %3302 = arith.index_cast %3301 : i32 to index
    %3303 = memref.load %arg1[%3302] : memref<512xi32, #tpu.memory_space<smem>>
    %3304 = arith.index_cast %3303 : i32 to index
    %c0_858 = arith.constant 0 : index
    %3305 = vector.load %arg2[%3304, %c0_858] : memref<32x1xf32, #tpu.memory_space<vmem>>, vector<1x1xf32>
    %3306 = arith.addf %3300, %3305 : vector<1x1xf32>
    %c117_i32 = arith.constant 117 : i32
    %3307 = vector.broadcast %c117_i32 : i32 to vector<1x128xi32>
    %3308 = arith.cmpi eq, %1, %3307 : vector<1x128xi32>
    %3309 = vector.shape_cast %3306 : vector<1x1xf32> to vector<1x1xf32>
    %3310 = vector.broadcast %3309 : vector<1x1xf32> to vector<1x128xf32>
    %3311 = arith.select %3308, %3310, %3283 : vector<1x128xi1>, vector<1x128xf32>
    %c472_i32 = arith.constant 472 : i32
    %3312 = arith.addi %7, %c472_i32 : i32
    %3313 = arith.index_cast %3312 : i32 to index
    %3314 = memref.load %arg1[%3313] : memref<512xi32, #tpu.memory_space<smem>>
    %3315 = arith.index_cast %3314 : i32 to index
    %c0_859 = arith.constant 0 : index
    %3316 = vector.load %arg2[%3315, %c0_859] : memref<32x1xf32, #tpu.memory_space<vmem>>, vector<1x1xf32>
    %c1_i32_860 = arith.constant 1 : i32
    %3317 = arith.addi %3312, %c1_i32_860 : i32
    %3318 = arith.index_cast %3317 : i32 to index
    %3319 = memref.load %arg1[%3318] : memref<512xi32, #tpu.memory_space<smem>>
    %3320 = arith.index_cast %3319 : i32 to index
    %c0_861 = arith.constant 0 : index
    %3321 = vector.load %arg2[%3320, %c0_861] : memref<32x1xf32, #tpu.memory_space<vmem>>, vector<1x1xf32>
    %3322 = arith.addf %3316, %3321 : vector<1x1xf32>
    %c2_i32_862 = arith.constant 2 : i32
    %3323 = arith.addi %3312, %c2_i32_862 : i32
    %3324 = arith.index_cast %3323 : i32 to index
    %3325 = memref.load %arg1[%3324] : memref<512xi32, #tpu.memory_space<smem>>
    %3326 = arith.index_cast %3325 : i32 to index
    %c0_863 = arith.constant 0 : index
    %3327 = vector.load %arg2[%3326, %c0_863] : memref<32x1xf32, #tpu.memory_space<vmem>>, vector<1x1xf32>
    %3328 = arith.addf %3322, %3327 : vector<1x1xf32>
    %c3_i32_864 = arith.constant 3 : i32
    %3329 = arith.addi %3312, %c3_i32_864 : i32
    %3330 = arith.index_cast %3329 : i32 to index
    %3331 = memref.load %arg1[%3330] : memref<512xi32, #tpu.memory_space<smem>>
    %3332 = arith.index_cast %3331 : i32 to index
    %c0_865 = arith.constant 0 : index
    %3333 = vector.load %arg2[%3332, %c0_865] : memref<32x1xf32, #tpu.memory_space<vmem>>, vector<1x1xf32>
    %3334 = arith.addf %3328, %3333 : vector<1x1xf32>
    %c118_i32 = arith.constant 118 : i32
    %3335 = vector.broadcast %c118_i32 : i32 to vector<1x128xi32>
    %3336 = arith.cmpi eq, %1, %3335 : vector<1x128xi32>
    %3337 = vector.shape_cast %3334 : vector<1x1xf32> to vector<1x1xf32>
    %3338 = vector.broadcast %3337 : vector<1x1xf32> to vector<1x128xf32>
    %3339 = arith.select %3336, %3338, %3311 : vector<1x128xi1>, vector<1x128xf32>
    %c476_i32 = arith.constant 476 : i32
    %3340 = arith.addi %7, %c476_i32 : i32
    %3341 = arith.index_cast %3340 : i32 to index
    %3342 = memref.load %arg1[%3341] : memref<512xi32, #tpu.memory_space<smem>>
    %3343 = arith.index_cast %3342 : i32 to index
    %c0_866 = arith.constant 0 : index
    %3344 = vector.load %arg2[%3343, %c0_866] : memref<32x1xf32, #tpu.memory_space<vmem>>, vector<1x1xf32>
    %c1_i32_867 = arith.constant 1 : i32
    %3345 = arith.addi %3340, %c1_i32_867 : i32
    %3346 = arith.index_cast %3345 : i32 to index
    %3347 = memref.load %arg1[%3346] : memref<512xi32, #tpu.memory_space<smem>>
    %3348 = arith.index_cast %3347 : i32 to index
    %c0_868 = arith.constant 0 : index
    %3349 = vector.load %arg2[%3348, %c0_868] : memref<32x1xf32, #tpu.memory_space<vmem>>, vector<1x1xf32>
    %3350 = arith.addf %3344, %3349 : vector<1x1xf32>
    %c2_i32_869 = arith.constant 2 : i32
    %3351 = arith.addi %3340, %c2_i32_869 : i32
    %3352 = arith.index_cast %3351 : i32 to index
    %3353 = memref.load %arg1[%3352] : memref<512xi32, #tpu.memory_space<smem>>
    %3354 = arith.index_cast %3353 : i32 to index
    %c0_870 = arith.constant 0 : index
    %3355 = vector.load %arg2[%3354, %c0_870] : memref<32x1xf32, #tpu.memory_space<vmem>>, vector<1x1xf32>
    %3356 = arith.addf %3350, %3355 : vector<1x1xf32>
    %c3_i32_871 = arith.constant 3 : i32
    %3357 = arith.addi %3340, %c3_i32_871 : i32
    %3358 = arith.index_cast %3357 : i32 to index
    %3359 = memref.load %arg1[%3358] : memref<512xi32, #tpu.memory_space<smem>>
    %3360 = arith.index_cast %3359 : i32 to index
    %c0_872 = arith.constant 0 : index
    %3361 = vector.load %arg2[%3360, %c0_872] : memref<32x1xf32, #tpu.memory_space<vmem>>, vector<1x1xf32>
    %3362 = arith.addf %3356, %3361 : vector<1x1xf32>
    %c119_i32 = arith.constant 119 : i32
    %3363 = vector.broadcast %c119_i32 : i32 to vector<1x128xi32>
    %3364 = arith.cmpi eq, %1, %3363 : vector<1x128xi32>
    %3365 = vector.shape_cast %3362 : vector<1x1xf32> to vector<1x1xf32>
    %3366 = vector.broadcast %3365 : vector<1x1xf32> to vector<1x128xf32>
    %3367 = arith.select %3364, %3366, %3339 : vector<1x128xi1>, vector<1x128xf32>
    %c480_i32 = arith.constant 480 : i32
    %3368 = arith.addi %7, %c480_i32 : i32
    %3369 = arith.index_cast %3368 : i32 to index
    %3370 = memref.load %arg1[%3369] : memref<512xi32, #tpu.memory_space<smem>>
    %3371 = arith.index_cast %3370 : i32 to index
    %c0_873 = arith.constant 0 : index
    %3372 = vector.load %arg2[%3371, %c0_873] : memref<32x1xf32, #tpu.memory_space<vmem>>, vector<1x1xf32>
    %c1_i32_874 = arith.constant 1 : i32
    %3373 = arith.addi %3368, %c1_i32_874 : i32
    %3374 = arith.index_cast %3373 : i32 to index
    %3375 = memref.load %arg1[%3374] : memref<512xi32, #tpu.memory_space<smem>>
    %3376 = arith.index_cast %3375 : i32 to index
    %c0_875 = arith.constant 0 : index
    %3377 = vector.load %arg2[%3376, %c0_875] : memref<32x1xf32, #tpu.memory_space<vmem>>, vector<1x1xf32>
    %3378 = arith.addf %3372, %3377 : vector<1x1xf32>
    %c2_i32_876 = arith.constant 2 : i32
    %3379 = arith.addi %3368, %c2_i32_876 : i32
    %3380 = arith.index_cast %3379 : i32 to index
    %3381 = memref.load %arg1[%3380] : memref<512xi32, #tpu.memory_space<smem>>
    %3382 = arith.index_cast %3381 : i32 to index
    %c0_877 = arith.constant 0 : index
    %3383 = vector.load %arg2[%3382, %c0_877] : memref<32x1xf32, #tpu.memory_space<vmem>>, vector<1x1xf32>
    %3384 = arith.addf %3378, %3383 : vector<1x1xf32>
    %c3_i32_878 = arith.constant 3 : i32
    %3385 = arith.addi %3368, %c3_i32_878 : i32
    %3386 = arith.index_cast %3385 : i32 to index
    %3387 = memref.load %arg1[%3386] : memref<512xi32, #tpu.memory_space<smem>>
    %3388 = arith.index_cast %3387 : i32 to index
    %c0_879 = arith.constant 0 : index
    %3389 = vector.load %arg2[%3388, %c0_879] : memref<32x1xf32, #tpu.memory_space<vmem>>, vector<1x1xf32>
    %3390 = arith.addf %3384, %3389 : vector<1x1xf32>
    %c120_i32_880 = arith.constant 120 : i32
    %3391 = vector.broadcast %c120_i32_880 : i32 to vector<1x128xi32>
    %3392 = arith.cmpi eq, %1, %3391 : vector<1x128xi32>
    %3393 = vector.shape_cast %3390 : vector<1x1xf32> to vector<1x1xf32>
    %3394 = vector.broadcast %3393 : vector<1x1xf32> to vector<1x128xf32>
    %3395 = arith.select %3392, %3394, %5 : vector<1x128xi1>, vector<1x128xf32>
    %c484_i32 = arith.constant 484 : i32
    %3396 = arith.addi %7, %c484_i32 : i32
    %3397 = arith.index_cast %3396 : i32 to index
    %3398 = memref.load %arg1[%3397] : memref<512xi32, #tpu.memory_space<smem>>
    %3399 = arith.index_cast %3398 : i32 to index
    %c0_881 = arith.constant 0 : index
    %3400 = vector.load %arg2[%3399, %c0_881] : memref<32x1xf32, #tpu.memory_space<vmem>>, vector<1x1xf32>
    %c1_i32_882 = arith.constant 1 : i32
    %3401 = arith.addi %3396, %c1_i32_882 : i32
    %3402 = arith.index_cast %3401 : i32 to index
    %3403 = memref.load %arg1[%3402] : memref<512xi32, #tpu.memory_space<smem>>
    %3404 = arith.index_cast %3403 : i32 to index
    %c0_883 = arith.constant 0 : index
    %3405 = vector.load %arg2[%3404, %c0_883] : memref<32x1xf32, #tpu.memory_space<vmem>>, vector<1x1xf32>
    %3406 = arith.addf %3400, %3405 : vector<1x1xf32>
    %c2_i32_884 = arith.constant 2 : i32
    %3407 = arith.addi %3396, %c2_i32_884 : i32
    %3408 = arith.index_cast %3407 : i32 to index
    %3409 = memref.load %arg1[%3408] : memref<512xi32, #tpu.memory_space<smem>>
    %3410 = arith.index_cast %3409 : i32 to index
    %c0_885 = arith.constant 0 : index
    %3411 = vector.load %arg2[%3410, %c0_885] : memref<32x1xf32, #tpu.memory_space<vmem>>, vector<1x1xf32>
    %3412 = arith.addf %3406, %3411 : vector<1x1xf32>
    %c3_i32_886 = arith.constant 3 : i32
    %3413 = arith.addi %3396, %c3_i32_886 : i32
    %3414 = arith.index_cast %3413 : i32 to index
    %3415 = memref.load %arg1[%3414] : memref<512xi32, #tpu.memory_space<smem>>
    %3416 = arith.index_cast %3415 : i32 to index
    %c0_887 = arith.constant 0 : index
    %3417 = vector.load %arg2[%3416, %c0_887] : memref<32x1xf32, #tpu.memory_space<vmem>>, vector<1x1xf32>
    %3418 = arith.addf %3412, %3417 : vector<1x1xf32>
    %c121_i32 = arith.constant 121 : i32
    %3419 = vector.broadcast %c121_i32 : i32 to vector<1x128xi32>
    %3420 = arith.cmpi eq, %1, %3419 : vector<1x128xi32>
    %3421 = vector.shape_cast %3418 : vector<1x1xf32> to vector<1x1xf32>
    %3422 = vector.broadcast %3421 : vector<1x1xf32> to vector<1x128xf32>
    %3423 = arith.select %3420, %3422, %3395 : vector<1x128xi1>, vector<1x128xf32>
    %c488_i32 = arith.constant 488 : i32
    %3424 = arith.addi %7, %c488_i32 : i32
    %3425 = arith.index_cast %3424 : i32 to index
    %3426 = memref.load %arg1[%3425] : memref<512xi32, #tpu.memory_space<smem>>
    %3427 = arith.index_cast %3426 : i32 to index
    %c0_888 = arith.constant 0 : index
    %3428 = vector.load %arg2[%3427, %c0_888] : memref<32x1xf32, #tpu.memory_space<vmem>>, vector<1x1xf32>
    %c1_i32_889 = arith.constant 1 : i32
    %3429 = arith.addi %3424, %c1_i32_889 : i32
    %3430 = arith.index_cast %3429 : i32 to index
    %3431 = memref.load %arg1[%3430] : memref<512xi32, #tpu.memory_space<smem>>
    %3432 = arith.index_cast %3431 : i32 to index
    %c0_890 = arith.constant 0 : index
    %3433 = vector.load %arg2[%3432, %c0_890] : memref<32x1xf32, #tpu.memory_space<vmem>>, vector<1x1xf32>
    %3434 = arith.addf %3428, %3433 : vector<1x1xf32>
    %c2_i32_891 = arith.constant 2 : i32
    %3435 = arith.addi %3424, %c2_i32_891 : i32
    %3436 = arith.index_cast %3435 : i32 to index
    %3437 = memref.load %arg1[%3436] : memref<512xi32, #tpu.memory_space<smem>>
    %3438 = arith.index_cast %3437 : i32 to index
    %c0_892 = arith.constant 0 : index
    %3439 = vector.load %arg2[%3438, %c0_892] : memref<32x1xf32, #tpu.memory_space<vmem>>, vector<1x1xf32>
    %3440 = arith.addf %3434, %3439 : vector<1x1xf32>
    %c3_i32_893 = arith.constant 3 : i32
    %3441 = arith.addi %3424, %c3_i32_893 : i32
    %3442 = arith.index_cast %3441 : i32 to index
    %3443 = memref.load %arg1[%3442] : memref<512xi32, #tpu.memory_space<smem>>
    %3444 = arith.index_cast %3443 : i32 to index
    %c0_894 = arith.constant 0 : index
    %3445 = vector.load %arg2[%3444, %c0_894] : memref<32x1xf32, #tpu.memory_space<vmem>>, vector<1x1xf32>
    %3446 = arith.addf %3440, %3445 : vector<1x1xf32>
    %c122_i32 = arith.constant 122 : i32
    %3447 = vector.broadcast %c122_i32 : i32 to vector<1x128xi32>
    %3448 = arith.cmpi eq, %1, %3447 : vector<1x128xi32>
    %3449 = vector.shape_cast %3446 : vector<1x1xf32> to vector<1x1xf32>
    %3450 = vector.broadcast %3449 : vector<1x1xf32> to vector<1x128xf32>
    %3451 = arith.select %3448, %3450, %3423 : vector<1x128xi1>, vector<1x128xf32>
    %c492_i32 = arith.constant 492 : i32
    %3452 = arith.addi %7, %c492_i32 : i32
    %3453 = arith.index_cast %3452 : i32 to index
    %3454 = memref.load %arg1[%3453] : memref<512xi32, #tpu.memory_space<smem>>
    %3455 = arith.index_cast %3454 : i32 to index
    %c0_895 = arith.constant 0 : index
    %3456 = vector.load %arg2[%3455, %c0_895] : memref<32x1xf32, #tpu.memory_space<vmem>>, vector<1x1xf32>
    %c1_i32_896 = arith.constant 1 : i32
    %3457 = arith.addi %3452, %c1_i32_896 : i32
    %3458 = arith.index_cast %3457 : i32 to index
    %3459 = memref.load %arg1[%3458] : memref<512xi32, #tpu.memory_space<smem>>
    %3460 = arith.index_cast %3459 : i32 to index
    %c0_897 = arith.constant 0 : index
    %3461 = vector.load %arg2[%3460, %c0_897] : memref<32x1xf32, #tpu.memory_space<vmem>>, vector<1x1xf32>
    %3462 = arith.addf %3456, %3461 : vector<1x1xf32>
    %c2_i32_898 = arith.constant 2 : i32
    %3463 = arith.addi %3452, %c2_i32_898 : i32
    %3464 = arith.index_cast %3463 : i32 to index
    %3465 = memref.load %arg1[%3464] : memref<512xi32, #tpu.memory_space<smem>>
    %3466 = arith.index_cast %3465 : i32 to index
    %c0_899 = arith.constant 0 : index
    %3467 = vector.load %arg2[%3466, %c0_899] : memref<32x1xf32, #tpu.memory_space<vmem>>, vector<1x1xf32>
    %3468 = arith.addf %3462, %3467 : vector<1x1xf32>
    %c3_i32_900 = arith.constant 3 : i32
    %3469 = arith.addi %3452, %c3_i32_900 : i32
    %3470 = arith.index_cast %3469 : i32 to index
    %3471 = memref.load %arg1[%3470] : memref<512xi32, #tpu.memory_space<smem>>
    %3472 = arith.index_cast %3471 : i32 to index
    %c0_901 = arith.constant 0 : index
    %3473 = vector.load %arg2[%3472, %c0_901] : memref<32x1xf32, #tpu.memory_space<vmem>>, vector<1x1xf32>
    %3474 = arith.addf %3468, %3473 : vector<1x1xf32>
    %c123_i32 = arith.constant 123 : i32
    %3475 = vector.broadcast %c123_i32 : i32 to vector<1x128xi32>
    %3476 = arith.cmpi eq, %1, %3475 : vector<1x128xi32>
    %3477 = vector.shape_cast %3474 : vector<1x1xf32> to vector<1x1xf32>
    %3478 = vector.broadcast %3477 : vector<1x1xf32> to vector<1x128xf32>
    %3479 = arith.select %3476, %3478, %3451 : vector<1x128xi1>, vector<1x128xf32>
    %c496_i32 = arith.constant 496 : i32
    %3480 = arith.addi %7, %c496_i32 : i32
    %3481 = arith.index_cast %3480 : i32 to index
    %3482 = memref.load %arg1[%3481] : memref<512xi32, #tpu.memory_space<smem>>
    %3483 = arith.index_cast %3482 : i32 to index
    %c0_902 = arith.constant 0 : index
    %3484 = vector.load %arg2[%3483, %c0_902] : memref<32x1xf32, #tpu.memory_space<vmem>>, vector<1x1xf32>
    %c1_i32_903 = arith.constant 1 : i32
    %3485 = arith.addi %3480, %c1_i32_903 : i32
    %3486 = arith.index_cast %3485 : i32 to index
    %3487 = memref.load %arg1[%3486] : memref<512xi32, #tpu.memory_space<smem>>
    %3488 = arith.index_cast %3487 : i32 to index
    %c0_904 = arith.constant 0 : index
    %3489 = vector.load %arg2[%3488, %c0_904] : memref<32x1xf32, #tpu.memory_space<vmem>>, vector<1x1xf32>
    %3490 = arith.addf %3484, %3489 : vector<1x1xf32>
    %c2_i32_905 = arith.constant 2 : i32
    %3491 = arith.addi %3480, %c2_i32_905 : i32
    %3492 = arith.index_cast %3491 : i32 to index
    %3493 = memref.load %arg1[%3492] : memref<512xi32, #tpu.memory_space<smem>>
    %3494 = arith.index_cast %3493 : i32 to index
    %c0_906 = arith.constant 0 : index
    %3495 = vector.load %arg2[%3494, %c0_906] : memref<32x1xf32, #tpu.memory_space<vmem>>, vector<1x1xf32>
    %3496 = arith.addf %3490, %3495 : vector<1x1xf32>
    %c3_i32_907 = arith.constant 3 : i32
    %3497 = arith.addi %3480, %c3_i32_907 : i32
    %3498 = arith.index_cast %3497 : i32 to index
    %3499 = memref.load %arg1[%3498] : memref<512xi32, #tpu.memory_space<smem>>
    %3500 = arith.index_cast %3499 : i32 to index
    %c0_908 = arith.constant 0 : index
    %3501 = vector.load %arg2[%3500, %c0_908] : memref<32x1xf32, #tpu.memory_space<vmem>>, vector<1x1xf32>
    %3502 = arith.addf %3496, %3501 : vector<1x1xf32>
    %c124_i32_909 = arith.constant 124 : i32
    %3503 = vector.broadcast %c124_i32_909 : i32 to vector<1x128xi32>
    %3504 = arith.cmpi eq, %1, %3503 : vector<1x128xi32>
    %3505 = vector.shape_cast %3502 : vector<1x1xf32> to vector<1x1xf32>
    %3506 = vector.broadcast %3505 : vector<1x1xf32> to vector<1x128xf32>
    %3507 = arith.select %3504, %3506, %3479 : vector<1x128xi1>, vector<1x128xf32>
    %c500_i32 = arith.constant 500 : i32
    %3508 = arith.addi %7, %c500_i32 : i32
    %3509 = arith.index_cast %3508 : i32 to index
    %3510 = memref.load %arg1[%3509] : memref<512xi32, #tpu.memory_space<smem>>
    %3511 = arith.index_cast %3510 : i32 to index
    %c0_910 = arith.constant 0 : index
    %3512 = vector.load %arg2[%3511, %c0_910] : memref<32x1xf32, #tpu.memory_space<vmem>>, vector<1x1xf32>
    %c1_i32_911 = arith.constant 1 : i32
    %3513 = arith.addi %3508, %c1_i32_911 : i32
    %3514 = arith.index_cast %3513 : i32 to index
    %3515 = memref.load %arg1[%3514] : memref<512xi32, #tpu.memory_space<smem>>
    %3516 = arith.index_cast %3515 : i32 to index
    %c0_912 = arith.constant 0 : index
    %3517 = vector.load %arg2[%3516, %c0_912] : memref<32x1xf32, #tpu.memory_space<vmem>>, vector<1x1xf32>
    %3518 = arith.addf %3512, %3517 : vector<1x1xf32>
    %c2_i32_913 = arith.constant 2 : i32
    %3519 = arith.addi %3508, %c2_i32_913 : i32
    %3520 = arith.index_cast %3519 : i32 to index
    %3521 = memref.load %arg1[%3520] : memref<512xi32, #tpu.memory_space<smem>>
    %3522 = arith.index_cast %3521 : i32 to index
    %c0_914 = arith.constant 0 : index
    %3523 = vector.load %arg2[%3522, %c0_914] : memref<32x1xf32, #tpu.memory_space<vmem>>, vector<1x1xf32>
    %3524 = arith.addf %3518, %3523 : vector<1x1xf32>
    %c3_i32_915 = arith.constant 3 : i32
    %3525 = arith.addi %3508, %c3_i32_915 : i32
    %3526 = arith.index_cast %3525 : i32 to index
    %3527 = memref.load %arg1[%3526] : memref<512xi32, #tpu.memory_space<smem>>
    %3528 = arith.index_cast %3527 : i32 to index
    %c0_916 = arith.constant 0 : index
    %3529 = vector.load %arg2[%3528, %c0_916] : memref<32x1xf32, #tpu.memory_space<vmem>>, vector<1x1xf32>
    %3530 = arith.addf %3524, %3529 : vector<1x1xf32>
    %c125_i32 = arith.constant 125 : i32
    %3531 = vector.broadcast %c125_i32 : i32 to vector<1x128xi32>
    %3532 = arith.cmpi eq, %1, %3531 : vector<1x128xi32>
    %3533 = vector.shape_cast %3530 : vector<1x1xf32> to vector<1x1xf32>
    %3534 = vector.broadcast %3533 : vector<1x1xf32> to vector<1x128xf32>
    %3535 = arith.select %3532, %3534, %3507 : vector<1x128xi1>, vector<1x128xf32>
    %c504_i32 = arith.constant 504 : i32
    %3536 = arith.addi %7, %c504_i32 : i32
    %3537 = arith.index_cast %3536 : i32 to index
    %3538 = memref.load %arg1[%3537] : memref<512xi32, #tpu.memory_space<smem>>
    %3539 = arith.index_cast %3538 : i32 to index
    %c0_917 = arith.constant 0 : index
    %3540 = vector.load %arg2[%3539, %c0_917] : memref<32x1xf32, #tpu.memory_space<vmem>>, vector<1x1xf32>
    %c1_i32_918 = arith.constant 1 : i32
    %3541 = arith.addi %3536, %c1_i32_918 : i32
    %3542 = arith.index_cast %3541 : i32 to index
    %3543 = memref.load %arg1[%3542] : memref<512xi32, #tpu.memory_space<smem>>
    %3544 = arith.index_cast %3543 : i32 to index
    %c0_919 = arith.constant 0 : index
    %3545 = vector.load %arg2[%3544, %c0_919] : memref<32x1xf32, #tpu.memory_space<vmem>>, vector<1x1xf32>
    %3546 = arith.addf %3540, %3545 : vector<1x1xf32>
    %c2_i32_920 = arith.constant 2 : i32
    %3547 = arith.addi %3536, %c2_i32_920 : i32
    %3548 = arith.index_cast %3547 : i32 to index
    %3549 = memref.load %arg1[%3548] : memref<512xi32, #tpu.memory_space<smem>>
    %3550 = arith.index_cast %3549 : i32 to index
    %c0_921 = arith.constant 0 : index
    %3551 = vector.load %arg2[%3550, %c0_921] : memref<32x1xf32, #tpu.memory_space<vmem>>, vector<1x1xf32>
    %3552 = arith.addf %3546, %3551 : vector<1x1xf32>
    %c3_i32_922 = arith.constant 3 : i32
    %3553 = arith.addi %3536, %c3_i32_922 : i32
    %3554 = arith.index_cast %3553 : i32 to index
    %3555 = memref.load %arg1[%3554] : memref<512xi32, #tpu.memory_space<smem>>
    %3556 = arith.index_cast %3555 : i32 to index
    %c0_923 = arith.constant 0 : index
    %3557 = vector.load %arg2[%3556, %c0_923] : memref<32x1xf32, #tpu.memory_space<vmem>>, vector<1x1xf32>
    %3558 = arith.addf %3552, %3557 : vector<1x1xf32>
    %c126_i32 = arith.constant 126 : i32
    %3559 = vector.broadcast %c126_i32 : i32 to vector<1x128xi32>
    %3560 = arith.cmpi eq, %1, %3559 : vector<1x128xi32>
    %3561 = vector.shape_cast %3558 : vector<1x1xf32> to vector<1x1xf32>
    %3562 = vector.broadcast %3561 : vector<1x1xf32> to vector<1x128xf32>
    %3563 = arith.select %3560, %3562, %3535 : vector<1x128xi1>, vector<1x128xf32>
    %c508_i32 = arith.constant 508 : i32
    %3564 = arith.addi %7, %c508_i32 : i32
    %3565 = arith.index_cast %3564 : i32 to index
    %3566 = memref.load %arg1[%3565] : memref<512xi32, #tpu.memory_space<smem>>
    %3567 = arith.index_cast %3566 : i32 to index
    %c0_924 = arith.constant 0 : index
    %3568 = vector.load %arg2[%3567, %c0_924] : memref<32x1xf32, #tpu.memory_space<vmem>>, vector<1x1xf32>
    %c1_i32_925 = arith.constant 1 : i32
    %3569 = arith.addi %3564, %c1_i32_925 : i32
    %3570 = arith.index_cast %3569 : i32 to index
    %3571 = memref.load %arg1[%3570] : memref<512xi32, #tpu.memory_space<smem>>
    %3572 = arith.index_cast %3571 : i32 to index
    %c0_926 = arith.constant 0 : index
    %3573 = vector.load %arg2[%3572, %c0_926] : memref<32x1xf32, #tpu.memory_space<vmem>>, vector<1x1xf32>
    %3574 = arith.addf %3568, %3573 : vector<1x1xf32>
    %c2_i32_927 = arith.constant 2 : i32
    %3575 = arith.addi %3564, %c2_i32_927 : i32
    %3576 = arith.index_cast %3575 : i32 to index
    %3577 = memref.load %arg1[%3576] : memref<512xi32, #tpu.memory_space<smem>>
    %3578 = arith.index_cast %3577 : i32 to index
    %c0_928 = arith.constant 0 : index
    %3579 = vector.load %arg2[%3578, %c0_928] : memref<32x1xf32, #tpu.memory_space<vmem>>, vector<1x1xf32>
    %3580 = arith.addf %3574, %3579 : vector<1x1xf32>
    %c3_i32_929 = arith.constant 3 : i32
    %3581 = arith.addi %3564, %c3_i32_929 : i32
    %3582 = arith.index_cast %3581 : i32 to index
    %3583 = memref.load %arg1[%3582] : memref<512xi32, #tpu.memory_space<smem>>
    %3584 = arith.index_cast %3583 : i32 to index
    %c0_930 = arith.constant 0 : index
    %3585 = vector.load %arg2[%3584, %c0_930] : memref<32x1xf32, #tpu.memory_space<vmem>>, vector<1x1xf32>
    %3586 = arith.addf %3580, %3585 : vector<1x1xf32>
    %c127_i32 = arith.constant 127 : i32
    %3587 = vector.broadcast %c127_i32 : i32 to vector<1x128xi32>
    %3588 = arith.cmpi eq, %1, %3587 : vector<1x128xi32>
    %3589 = vector.shape_cast %3586 : vector<1x1xf32> to vector<1x1xf32>
    %3590 = vector.broadcast %3589 : vector<1x1xf32> to vector<1x128xf32>
    %3591 = arith.select %3588, %3590, %3563 : vector<1x128xi1>, vector<1x128xf32>
    %3592 = arith.addf %231, %455 : vector<1x128xf32>
    %3593 = arith.addf %3592, %679 : vector<1x128xf32>
    %3594 = arith.addf %3593, %903 : vector<1x128xf32>
    %3595 = arith.addf %3594, %1127 : vector<1x128xf32>
    %3596 = arith.addf %3595, %1351 : vector<1x128xf32>
    %3597 = arith.addf %3596, %1575 : vector<1x128xf32>
    %3598 = arith.addf %3597, %1799 : vector<1x128xf32>
    %3599 = arith.addf %3598, %2023 : vector<1x128xf32>
    %3600 = arith.addf %3599, %2247 : vector<1x128xf32>
    %3601 = arith.addf %3600, %2471 : vector<1x128xf32>
    %3602 = arith.addf %3601, %2695 : vector<1x128xf32>
    %3603 = arith.addf %3602, %2919 : vector<1x128xf32>
    %3604 = arith.addf %3603, %3143 : vector<1x128xf32>
    %3605 = arith.addf %3604, %3367 : vector<1x128xf32>
    %3606 = arith.addf %3605, %3591 : vector<1x128xf32>
    %3607 = arith.addf %3606, %4 : vector<1x128xf32>
    %3608 = arith.index_cast %c0_i32 : i32 to index
    %c0_931 = arith.constant 0 : index
    %3609 = vector.load %arg4[%3608, %c0_931] : memref<1x128xf32, #tpu.memory_space<vmem>>, vector<1x128xf32>
    tpu.vector_store %arg4[%3608, %c0_931], %3607 {strides = array<i32>} : memref<1x128xf32, #tpu.memory_space<vmem>>, vector<1x128xf32>,
    %c1_i32_932 = arith.constant 1 : i32
    return
  }
  func.func @transform_0(%arg0: i32, %arg1: memref<512xi32, #tpu.memory_space<smem>>) -> (i32, i32) {
    %c0_i32 = arith.constant 0 : i32
    %c0_i32_0 = arith.constant 0 : i32
    %c0_i32_1 = arith.constant 0 : i32
    return %c0_i32, %c0_i32_0 : i32, i32
  }
  func.func @transform_1(%arg0: i32, %arg1: memref<512xi32, #tpu.memory_space<smem>>) -> (i32, i32) {
    %c0_i32 = arith.constant 0 : i32
    %c0_i32_0 = arith.constant 0 : i32
    %c0_i32_1 = arith.constant 0 : i32
    return %c0_i32, %c0_i32_0 : i32, i32
  }
  func.func @transform_2(%arg0: i32, %arg1: memref<512xi32, #tpu.memory_space<smem>>) -> (i32, i32) {
    %c0_i32 = arith.constant 0 : i32
    %c0_i32_0 = arith.constant 0 : i32
    return %arg0, %c0_i32 : i32, i32
  }
}

</mosaic_0001>

<llo_original>
// kernel: tpu_custom_call.1
$region0: #{tpu_custom_call.1}
  #allocation0 [shape = 'u32[]', space=smem, size = 0x4, offset = 0x4, fixed_abs, tag = 'smem constant byte address 0x4 - core index']
  #allocation1 [shape = 'u32[72,128]{1,0:T(1,128)}', space=vmem, size = 0x9000, scoped, tag = 'internal scratch']
  #allocation2 [shape = 's32[1]{0}', space=sflag, size = 0x4, scoped, tag = 'scoped memory for tpu_custom_call.1']
  #allocation3 [shape = 'u8[2048]{0}', space=smem, size = 0x800, scoped, tag = 'prefetched SMEM operand 0']
  #allocation4 [shape = 'f32[1,1]{1,0:T(1,128)S(1)}', space=vmem, size = 0x200, scoped, tag = 'scoped memory for tpu_custom_call.1']
  %s0 = inlined_call_operand.vmem [shape: s32[512], index: 0, kind: input, shape index: {}]
  %s1 = inlined_call_operand.vmem [shape: f32[32,1], index: 1, kind: input, shape index: {}]
  %s2 = inlined_call_operand.<no memory space> [shape: f32[1,1], index: 2, kind: input, shape index: {}]
  %s3 = inlined_call_operand.hbm [shape: f32[1,128], index: 3, kind: output, shape index: {}]
  %s4 = sld [smem:[#allocation0]]
  $region18: #{tpu_custom_call.1} parent=0
    _
  %s6 = ssub.s32 1, %s4
  %s7 = scalar_select 0, %s6, %s4
  %s9 = sshll.u32 %s0, 4
  %s10 = int_to_ptr.vmem [resolvable:$true] %s9
  %12 = dma.vmem_to_smem %s10, 64, [#allocation3], [#allocation2]
  %v13 = vstv %s2
  %14 = vst [vmem:[#allocation4] sm:$0x1] %v13
  %16 = dma.done [#allocation2], 64
  %17 = sfence
  $region1: #{tpu_custom_call.1} parent=0
    #allocation5 [shape = 'u8[512]{0}', space=vmem, size = 0x400, scoped, tag = 'output window, operand 0, single buffered']
    #allocation6 [shape = 's32[1]{0}', space=sflag, size = 0x4, scoped, tag = 'scoped memory for tpu_custom_call.1']
    %18 = vsyncpa [#allocation6], 0
    // Predicated region
    $region2: #{tpu_custom_call.1} parent=1 // pred_check
      _
    $region3: #{tpu_custom_call.1} parent=1 // pred_check_branch
      %20 = sbr.rel (0) target = $region5
    $region4: #{tpu_custom_call.1} parent=1 // pred_region
      _
    $region5: #{tpu_custom_call.1} parent=1 // pred_fallthru
      _
    // Predicated region
    $region6: #{tpu_custom_call.1} parent=1 // pred_check
      _
    $region7: #{tpu_custom_call.1} parent=1 // pred_check_branch
      %22 = sbr.rel (0) target = $region9
    $region8: #{tpu_custom_call.1} parent=1 // pred_region
      _
    $region9: #{tpu_custom_call.1} parent=1 // pred_fallthru
      _
    %s23 = smul.u32 0, 512
    %v24 = vlaneseq
    %v25 = vand.u32 %v24, 127
    %v26 = vld [vmem:[#allocation4] sm:$0x1]
    %28 = vset.pattern.permute.xlu0 0
    %29 = vperm.xlu0 %28, %v26
    %v30 = vpop.permute.xlu0 %29
    %v32 = vperm.slane %v30, 0
    %s33 = sld [smem:[#allocation3 + %s23]]
    %s34 = scalar_lea.vmem %s1, %s33
    %v35 = vld [vmem:[%s34] sm:$0x1]
    %s36 = sadd.s32 %s23, 1
    %s37 = sld [smem:[#allocation3 + %s36]]
    %s38 = scalar_lea.vmem %s1, %s37
    %v39 = vld [vmem:[%s38] sm:$0x1]
    %v40 = vadd.f32 %v35, %v39
    %s41 = sadd.s32 %s23, 2
    %s42 = sld [smem:[#allocation3 + %s41]]
    %s43 = scalar_lea.vmem %s1, %s42
    %v44 = vld [vmem:[%s43] sm:$0x1]
    %v45 = vadd.f32 %v40, %v44
    %s46 = sadd.s32 %s23, 3
    %s47 = sld [smem:[#allocation3 + %s46]]
    %s48 = scalar_lea.vmem %s1, %s47
    %v49 = vld [vmem:[%s48] sm:$0x1]
    %v50 = vadd.f32 %v45, %v49
    %vm51 = vcmp.eq.s32.totalorder %v25, 0
    %53 = vset.pattern.permute.xlu0 0
    %54 = vperm.xlu0 %53, %v50
    %v55 = vpop.permute.xlu0 %54
    %v57 = vsel %vm51, %v55, 0.0
    %s58 = sadd.s32 %s23, 4
    %s59 = sld [smem:[#allocation3 + %s58]]
    %s60 = scalar_lea.vmem %s1, %s59
    %v61 = vld [vmem:[%s60] sm:$0x1]
    %s62 = sadd.s32 %s23, 5
    %s63 = sld [smem:[#allocation3 + %s62]]
    %s64 = scalar_lea.vmem %s1, %s63
    %v65 = vld [vmem:[%s64] sm:$0x1]
    %v66 = vadd.f32 %v61, %v65
    %s67 = sadd.s32 %s23, 6
    %s68 = sld [smem:[#allocation3 + %s67]]
    %s69 = scalar_lea.vmem %s1, %s68
    %v70 = vld [vmem:[%s69] sm:$0x1]
    %v71 = vadd.f32 %v66, %v70
    %s72 = sadd.s32 %s23, 7
    %s73 = sld [smem:[#allocation3 + %s72]]
    %s74 = scalar_lea.vmem %s1, %s73
    %v75 = vld [vmem:[%s74] sm:$0x1]
    %v76 = vadd.f32 %v71, %v75
    %vm77 = vcmp.eq.s32.totalorder %v25, 1
    %79 = vset.pattern.permute.xlu0 0
    %80 = vperm.xlu0 %79, %v76
    %v81 = vpop.permute.xlu0 %80
    %v83 = vsel %vm77, %v81, %v57
    %s84 = sadd.s32 %s23, 8
    %s85 = sld [smem:[#allocation3 + %s84]]
    %s86 = scalar_lea.vmem %s1, %s85
    %v87 = vld [vmem:[%s86] sm:$0x1]
    %s88 = sadd.s32 %s23, 9
    %s89 = sld [smem:[#allocation3 + %s88]]
    %s90 = scalar_lea.vmem %s1, %s89
    %v91 = vld [vmem:[%s90] sm:$0x1]
    %v92 = vadd.f32 %v87, %v91
    %s93 = sadd.s32 %s23, 10
    %s94 = sld [smem:[#allocation3 + %s93]]
    %s95 = scalar_lea.vmem %s1, %s94
    %v96 = vld [vmem:[%s95] sm:$0x1]
    %v97 = vadd.f32 %v92, %v96
    %s98 = sadd.s32 %s23, 11
    %s99 = sld [smem:[#allocation3 + %s98]]
    %s100 = scalar_lea.vmem %s1, %s99
    %v101 = vld [vmem:[%s100] sm:$0x1]
    %v102 = vadd.f32 %v97, %v101
    %vm103 = vcmp.eq.s32.totalorder %v25, 2
    %105 = vset.pattern.permute.xlu0 0
    %106 = vperm.xlu0 %105, %v102
    %v107 = vpop.permute.xlu0 %106
    %v109 = vsel %vm103, %v107, %v83
    %s110 = sadd.s32 %s23, 12
    %s111 = sld [smem:[#allocation3 + %s110]]
    %s112 = scalar_lea.vmem %s1, %s111
    %v113 = vld [vmem:[%s112] sm:$0x1]
    %s114 = sadd.s32 %s23, 13
    %s115 = sld [smem:[#allocation3 + %s114]]
    %s116 = scalar_lea.vmem %s1, %s115
    %v117 = vld [vmem:[%s116] sm:$0x1]
    %v118 = vadd.f32 %v113, %v117
    %s119 = sadd.s32 %s23, 14
    %s120 = sld [smem:[#allocation3 + %s119]]
    %s121 = scalar_lea.vmem %s1, %s120
    %v122 = vld [vmem:[%s121] sm:$0x1]
    %v123 = vadd.f32 %v118, %v122
    %s124 = sadd.s32 %s23, 15
    %s125 = sld [smem:[#allocation3 + %s124]]
    %s126 = scalar_lea.vmem %s1, %s125
    %v127 = vld [vmem:[%s126] sm:$0x1]
    %v128 = vadd.f32 %v123, %v127
    %vm129 = vcmp.eq.s32.totalorder %v25, 3
    %131 = vset.pattern.permute.xlu0 0
    %132 = vperm.xlu0 %131, %v128
    %v133 = vpop.permute.xlu0 %132
    %v135 = vsel %vm129, %v133, %v109
    %s136 = sadd.s32 %s23, 16
    %s137 = sld [smem:[#allocation3 + %s136]]
    %s138 = scalar_lea.vmem %s1, %s137
    %v139 = vld [vmem:[%s138] sm:$0x1]
    %s140 = sadd.s32 %s23, 17
    %s141 = sld [smem:[#allocation3 + %s140]]
    %s142 = scalar_lea.vmem %s1, %s141
    %v143 = vld [vmem:[%s142] sm:$0x1]
    %v144 = vadd.f32 %v139, %v143
    %s145 = sadd.s32 %s23, 18
    %s146 = sld [smem:[#allocation3 + %s145]]
    %s147 = scalar_lea.vmem %s1, %s146
    %v148 = vld [vmem:[%s147] sm:$0x1]
    %v149 = vadd.f32 %v144, %v148
    %s150 = sadd.s32 %s23, 19
    %s151 = sld [smem:[#allocation3 + %s150]]
    %s152 = scalar_lea.vmem %s1, %s151
    %v153 = vld [vmem:[%s152] sm:$0x1]
    %v154 = vadd.f32 %v149, %v153
    %vm155 = vcmp.eq.s32.totalorder %v25, 4
    %157 = vset.pattern.permute.xlu0 0
    %158 = vperm.xlu0 %157, %v154
    %v159 = vpop.permute.xlu0 %158
    %v161 = vsel %vm155, %v159, %v135
    %s162 = sadd.s32 %s23, 20
    %s163 = sld [smem:[#allocation3 + %s162]]
    %s164 = scalar_lea.vmem %s1, %s163
    %v165 = vld [vmem:[%s164] sm:$0x1]
    %s166 = sadd.s32 %s23, 21
    %s167 = sld [smem:[#allocation3 + %s166]]
    %s168 = scalar_lea.vmem %s1, %s167
    %v169 = vld [vmem:[%s168] sm:$0x1]
    %v170 = vadd.f32 %v165, %v169
    %s171 = sadd.s32 %s23, 22
    %s172 = sld [smem:[#allocation3 + %s171]]
    %s173 = scalar_lea.vmem %s1, %s172
    %v174 = vld [vmem:[%s173] sm:$0x1]
    %v175 = vadd.f32 %v170, %v174
    %s176 = sadd.s32 %s23, 23
    %s177 = sld [smem:[#allocation3 + %s176]]
    %s178 = scalar_lea.vmem %s1, %s177
    %v179 = vld [vmem:[%s178] sm:$0x1]
    %v180 = vadd.f32 %v175, %v179
    %vm181 = vcmp.eq.s32.totalorder %v25, 5
    %183 = vset.pattern.permute.xlu0 0
    %184 = vperm.xlu0 %183, %v180
    %v185 = vpop.permute.xlu0 %184
    %v187 = vsel %vm181, %v185, %v161
    %s188 = sadd.s32 %s23, 24
    %s189 = sld [smem:[#allocation3 + %s188]]
    %s190 = scalar_lea.vmem %s1, %s189
    %v191 = vld [vmem:[%s190] sm:$0x1]
    %s192 = sadd.s32 %s23, 25
    %s193 = sld [smem:[#allocation3 + %s192]]
    %s194 = scalar_lea.vmem %s1, %s193
    %v195 = vld [vmem:[%s194] sm:$0x1]
    %v196 = vadd.f32 %v191, %v195
    %s197 = sadd.s32 %s23, 26
    %s198 = sld [smem:[#allocation3 + %s197]]
    %s199 = scalar_lea.vmem %s1, %s198
    %v200 = vld [vmem:[%s199] sm:$0x1]
    %v201 = vadd.f32 %v196, %v200
    %s202 = sadd.s32 %s23, 27
    %s203 = sld [smem:[#allocation3 + %s202]]
    %s204 = scalar_lea.vmem %s1, %s203
    %v205 = vld [vmem:[%s204] sm:$0x1]
    %v206 = vadd.f32 %v201, %v205
    %vm207 = vcmp.eq.s32.totalorder %v25, 6
    %209 = vset.pattern.permute.xlu0 0
    %210 = vperm.xlu0 %209, %v206
    %v211 = vpop.permute.xlu0 %210
    %v213 = vsel %vm207, %v211, %v187
    %s214 = sadd.s32 %s23, 28
    %s215 = sld [smem:[#allocation3 + %s214]]
    %s216 = scalar_lea.vmem %s1, %s215
    %v217 = vld [vmem:[%s216] sm:$0x1]
    %s218 = sadd.s32 %s23, 29
    %s219 = sld [smem:[#allocation3 + %s218]]
    %s220 = scalar_lea.vmem %s1, %s219
    %v221 = vld [vmem:[%s220] sm:$0x1]
    %v222 = vadd.f32 %v217, %v221
    %s223 = sadd.s32 %s23, 30
    %s224 = sld [smem:[#allocation3 + %s223]]
    %s225 = scalar_lea.vmem %s1, %s224
    %v226 = vld [vmem:[%s225] sm:$0x1]
    %v227 = vadd.f32 %v222, %v226
    %s228 = sadd.s32 %s23, 31
    %s229 = sld [smem:[#allocation3 + %s228]]
    %s230 = scalar_lea.vmem %s1, %s229
    %v231 = vld [vmem:[%s230] sm:$0x1]
    %v232 = vadd.f32 %v227, %v231
    %vm233 = vcmp.eq.s32.totalorder %v25, 7
    %235 = vset.pattern.permute.xlu0 0
    %236 = vperm.xlu0 %235, %v232
    %v237 = vpop.permute.xlu0 %236
    %v239 = vsel %vm233, %v237, %v213
    %s240 = sadd.s32 %s23, 32
    %s241 = sld [smem:[#allocation3 + %s240]]
    %s242 = scalar_lea.vmem %s1, %s241
    %v243 = vld [vmem:[%s242] sm:$0x1]
    %s244 = sadd.s32 %s23, 33
    %s245 = sld [smem:[#allocation3 + %s244]]
    %s246 = scalar_lea.vmem %s1, %s245
    %v247 = vld [vmem:[%s246] sm:$0x1]
    %v248 = vadd.f32 %v243, %v247
    %s249 = sadd.s32 %s23, 34
    %s250 = sld [smem:[#allocation3 + %s249]]
    %s251 = scalar_lea.vmem %s1, %s250
    %v252 = vld [vmem:[%s251] sm:$0x1]
    %v253 = vadd.f32 %v248, %v252
    %s254 = sadd.s32 %s23, 35
    %s255 = sld [smem:[#allocation3 + %s254]]
    %s256 = scalar_lea.vmem %s1, %s255
    %v257 = vld [vmem:[%s256] sm:$0x1]
    %v258 = vadd.f32 %v253, %v257
    %vm259 = vcmp.eq.s32.totalorder %v25, 8
    %261 = vset.pattern.permute.xlu0 0
    %262 = vperm.xlu0 %261, %v258
    %v263 = vpop.permute.xlu0 %262
    %v265 = vsel %vm259, %v263, 0.0
    %s266 = sadd.s32 %s23, 36
    %s267 = sld [smem:[#allocation3 + %s266]]
    %s268 = scalar_lea.vmem %s1, %s267
    %v269 = vld [vmem:[%s268] sm:$0x1]
    %s270 = sadd.s32 %s23, 37
    %s271 = sld [smem:[#allocation3 + %s270]]
    %s272 = scalar_lea.vmem %s1, %s271
    %v273 = vld [vmem:[%s272] sm:$0x1]
    %v274 = vadd.f32 %v269, %v273
    %s275 = sadd.s32 %s23, 38
    %s276 = sld [smem:[#allocation3 + %s275]]
    %s277 = scalar_lea.vmem %s1, %s276
    %v278 = vld [vmem:[%s277] sm:$0x1]
    %v279 = vadd.f32 %v274, %v278
    %s280 = sadd.s32 %s23, 39
    %s281 = sld [smem:[#allocation3 + %s280]]
    %s282 = scalar_lea.vmem %s1, %s281
    %v283 = vld [vmem:[%s282] sm:$0x1]
    %v284 = vadd.f32 %v279, %v283
    %vm285 = vcmp.eq.s32.totalorder %v25, 9
    %287 = vset.pattern.permute.xlu0 0
    %288 = vperm.xlu0 %287, %v284
    %v289 = vpop.permute.xlu0 %288
    %v291 = vsel %vm285, %v289, %v265
    %s292 = sadd.s32 %s23, 40
    %s293 = sld [smem:[#allocation3 + %s292]]
    %s294 = scalar_lea.vmem %s1, %s293
    %v295 = vld [vmem:[%s294] sm:$0x1]
    %s296 = sadd.s32 %s23, 41
    %s297 = sld [smem:[#allocation3 + %s296]]
    %s298 = scalar_lea.vmem %s1, %s297
    %v299 = vld [vmem:[%s298] sm:$0x1]
    %v300 = vadd.f32 %v295, %v299
    %s301 = sadd.s32 %s23, 42
    %s302 = sld [smem:[#allocation3 + %s301]]
    %s303 = scalar_lea.vmem %s1, %s302
    %v304 = vld [vmem:[%s303] sm:$0x1]
    %v305 = vadd.f32 %v300, %v304
    %s306 = sadd.s32 %s23, 43
    %s307 = sld [smem:[#allocation3 + %s306]]
    %s308 = scalar_lea.vmem %s1, %s307
    %v309 = vld [vmem:[%s308] sm:$0x1]
    %v310 = vadd.f32 %v305, %v309
    %vm311 = vcmp.eq.s32.totalorder %v25, 10
    %313 = vset.pattern.permute.xlu0 0
    %314 = vperm.xlu0 %313, %v310
    %v315 = vpop.permute.xlu0 %314
    %v317 = vsel %vm311, %v315, %v291
    %s318 = sadd.s32 %s23, 44
    %s319 = sld [smem:[#allocation3 + %s318]]
    %s320 = scalar_lea.vmem %s1, %s319
    %v321 = vld [vmem:[%s320] sm:$0x1]
    %s322 = sadd.s32 %s23, 45
    %s323 = sld [smem:[#allocation3 + %s322]]
    %s324 = scalar_lea.vmem %s1, %s323
    %v325 = vld [vmem:[%s324] sm:$0x1]
    %v326 = vadd.f32 %v321, %v325
    %s327 = sadd.s32 %s23, 46
    %s328 = sld [smem:[#allocation3 + %s327]]
    %s329 = scalar_lea.vmem %s1, %s328
    %v330 = vld [vmem:[%s329] sm:$0x1]
    %v331 = vadd.f32 %v326, %v330
    %s332 = sadd.s32 %s23, 47
    %s333 = sld [smem:[#allocation3 + %s332]]
    %s334 = scalar_lea.vmem %s1, %s333
    %v335 = vld [vmem:[%s334] sm:$0x1]
    %v336 = vadd.f32 %v331, %v335
    %vm337 = vcmp.eq.s32.totalorder %v25, 11
    %339 = vset.pattern.permute.xlu0 0
    %340 = vperm.xlu0 %339, %v336
    %v341 = vpop.permute.xlu0 %340
    %v343 = vsel %vm337, %v341, %v317
    %s344 = sadd.s32 %s23, 48
    %s345 = sld [smem:[#allocation3 + %s344]]
    %s346 = scalar_lea.vmem %s1, %s345
    %v347 = vld [vmem:[%s346] sm:$0x1]
    %s348 = sadd.s32 %s23, 49
    %s349 = sld [smem:[#allocation3 + %s348]]
    %s350 = scalar_lea.vmem %s1, %s349
    %v351 = vld [vmem:[%s350] sm:$0x1]
    %v352 = vadd.f32 %v347, %v351
    %s353 = sadd.s32 %s23, 50
    %s354 = sld [smem:[#allocation3 + %s353]]
    %s355 = scalar_lea.vmem %s1, %s354
    %v356 = vld [vmem:[%s355] sm:$0x1]
    %v357 = vadd.f32 %v352, %v356
    %s358 = sadd.s32 %s23, 51
    %s359 = sld [smem:[#allocation3 + %s358]]
    %s360 = scalar_lea.vmem %s1, %s359
    %v361 = vld [vmem:[%s360] sm:$0x1]
    %v362 = vadd.f32 %v357, %v361
    %vm363 = vcmp.eq.s32.totalorder %v25, 12
    %365 = vset.pattern.permute.xlu0 0
    %366 = vperm.xlu0 %365, %v362
    %v367 = vpop.permute.xlu0 %366
    %v369 = vsel %vm363, %v367, %v343
    %s370 = sadd.s32 %s23, 52
    %s371 = sld [smem:[#allocation3 + %s370]]
    %s372 = scalar_lea.vmem %s1, %s371
    %v373 = vld [vmem:[%s372] sm:$0x1]
    %s374 = sadd.s32 %s23, 53
    %s375 = sld [smem:[#allocation3 + %s374]]
    %s376 = scalar_lea.vmem %s1, %s375
    %v377 = vld [vmem:[%s376] sm:$0x1]
    %v378 = vadd.f32 %v373, %v377
    %s379 = sadd.s32 %s23, 54
    %s380 = sld [smem:[#allocation3 + %s379]]
    %s381 = scalar_lea.vmem %s1, %s380
    %v382 = vld [vmem:[%s381] sm:$0x1]
    %v383 = vadd.f32 %v378, %v382
    %s384 = sadd.s32 %s23, 55
    %s385 = sld [smem:[#allocation3 + %s384]]
    %s386 = scalar_lea.vmem %s1, %s385
    %v387 = vld [vmem:[%s386] sm:$0x1]
    %v388 = vadd.f32 %v383, %v387
    %vm389 = vcmp.eq.s32.totalorder %v25, 13
    %391 = vset.pattern.permute.xlu0 0
    %392 = vperm.xlu0 %391, %v388
    %v393 = vpop.permute.xlu0 %392
    %v395 = vsel %vm389, %v393, %v369
    %s396 = sadd.s32 %s23, 56
    %s397 = sld [smem:[#allocation3 + %s396]]
    %s398 = scalar_lea.vmem %s1, %s397
    %v399 = vld [vmem:[%s398] sm:$0x1]
    %s400 = sadd.s32 %s23, 57
    %s401 = sld [smem:[#allocation3 + %s400]]
    %s402 = scalar_lea.vmem %s1, %s401
    %v403 = vld [vmem:[%s402] sm:$0x1]
    %v404 = vadd.f32 %v399, %v403
    %s405 = sadd.s32 %s23, 58
    %s406 = sld [smem:[#allocation3 + %s405]]
    %s407 = scalar_lea.vmem %s1, %s406
    %v408 = vld [vmem:[%s407] sm:$0x1]
    %v409 = vadd.f32 %v404, %v408
    %s410 = sadd.s32 %s23, 59
    %s411 = sld [smem:[#allocation3 + %s410]]
    %s412 = scalar_lea.vmem %s1, %s411
    %v413 = vld [vmem:[%s412] sm:$0x1]
    %v414 = vadd.f32 %v409, %v413
    %vm415 = vcmp.eq.s32.totalorder %v25, 14
    %417 = vset.pattern.permute.xlu0 0
    %418 = vperm.xlu0 %417, %v414
    %v419 = vpop.permute.xlu0 %418
    %v421 = vsel %vm415, %v419, %v395
    %s422 = sadd.s32 %s23, 60
    %s423 = sld [smem:[#allocation3 + %s422]]
    %s424 = scalar_lea.vmem %s1, %s423
    %v425 = vld [vmem:[%s424] sm:$0x1]
    %s426 = sadd.s32 %s23, 61
    %s427 = sld [smem:[#allocation3 + %s426]]
    %s428 = scalar_lea.vmem %s1, %s427
    %v429 = vld [vmem:[%s428] sm:$0x1]
    %v430 = vadd.f32 %v425, %v429
    %s431 = sadd.s32 %s23, 62
    %s432 = sld [smem:[#allocation3 + %s431]]
    %s433 = scalar_lea.vmem %s1, %s432
    %v434 = vld [vmem:[%s433] sm:$0x1]
    %v435 = vadd.f32 %v430, %v434
    %s436 = sadd.s32 %s23, 63
    %s437 = sld [smem:[#allocation3 + %s436]]
    %s438 = scalar_lea.vmem %s1, %s437
    %v439 = vld [vmem:[%s438] sm:$0x1]
    %v440 = vadd.f32 %v435, %v439
    %vm441 = vcmp.eq.s32.totalorder %v25, 15
    %443 = vset.pattern.permute.xlu0 0
    %444 = vperm.xlu0 %443, %v440
    %v445 = vpop.permute.xlu0 %444
    %v447 = vsel %vm441, %v445, %v421
    %s448 = sadd.s32 %s23, 64
    %s449 = sld [smem:[#allocation3 + %s448]]
    %s450 = scalar_lea.vmem %s1, %s449
    %v451 = vld [vmem:[%s450] sm:$0x1]
    %s452 = sadd.s32 %s23, 65
    %s453 = sld [smem:[#allocation3 + %s452]]
    %s454 = scalar_lea.vmem %s1, %s453
    %v455 = vld [vmem:[%s454] sm:$0x1]
    %v456 = vadd.f32 %v451, %v455
    %s457 = sadd.s32 %s23, 66
    %s458 = sld [smem:[#allocation3 + %s457]]
    %s459 = scalar_lea.vmem %s1, %s458
    %v460 = vld [vmem:[%s459] sm:$0x1]
    %v461 = vadd.f32 %v456, %v460
    %s462 = sadd.s32 %s23, 67
    %s463 = sld [smem:[#allocation3 + %s462]]
    %s464 = scalar_lea.vmem %s1, %s463
    %v465 = vld [vmem:[%s464] sm:$0x1]
    %v466 = vadd.f32 %v461, %v465
    %vm467 = vcmp.eq.s32.totalorder %v25, 16
    %469 = vset.pattern.permute.xlu0 0
    %470 = vperm.xlu0 %469, %v466
    %v471 = vpop.permute.xlu0 %470
    %v473 = vsel %vm467, %v471, 0.0
    %s474 = sadd.s32 %s23, 68
    %s475 = sld [smem:[#allocation3 + %s474]]
    %s476 = scalar_lea.vmem %s1, %s475
    %v477 = vld [vmem:[%s476] sm:$0x1]
    %s478 = sadd.s32 %s23, 69
    %s479 = sld [smem:[#allocation3 + %s478]]
    %s480 = scalar_lea.vmem %s1, %s479
    %v481 = vld [vmem:[%s480] sm:$0x1]
    %v482 = vadd.f32 %v477, %v481
    %s483 = sadd.s32 %s23, 70
    %s484 = sld [smem:[#allocation3 + %s483]]
    %s485 = scalar_lea.vmem %s1, %s484
    %v486 = vld [vmem:[%s485] sm:$0x1]
    %v487 = vadd.f32 %v482, %v486
    %s488 = sadd.s32 %s23, 71
    %s489 = sld [smem:[#allocation3 + %s488]]
    %s490 = scalar_lea.vmem %s1, %s489
    %v491 = vld [vmem:[%s490] sm:$0x1]
    %v492 = vadd.f32 %v487, %v491
    %vm493 = vcmp.eq.s32.totalorder %v25, 17
    %495 = vset.pattern.permute.xlu0 0
    %496 = vperm.xlu0 %495, %v492
    %v497 = vpop.permute.xlu0 %496
    %v499 = vsel %vm493, %v497, %v473
    %s500 = sadd.s32 %s23, 72
    %s501 = sld [smem:[#allocation3 + %s500]]
    %s502 = scalar_lea.vmem %s1, %s501
    %v503 = vld [vmem:[%s502] sm:$0x1]
    %s504 = sadd.s32 %s23, 73
    %s505 = sld [smem:[#allocation3 + %s504]]
    %s506 = scalar_lea.vmem %s1, %s505
    %v507 = vld [vmem:[%s506] sm:$0x1]
    %v508 = vadd.f32 %v503, %v507
    %s509 = sadd.s32 %s23, 74
    %s510 = sld [smem:[#allocation3 + %s509]]
    %s511 = scalar_lea.vmem %s1, %s510
    %v512 = vld [vmem:[%s511] sm:$0x1]
    %v513 = vadd.f32 %v508, %v512
    %s514 = sadd.s32 %s23, 75
    %s515 = sld [smem:[#allocation3 + %s514]]
    %s516 = scalar_lea.vmem %s1, %s515
    %v517 = vld [vmem:[%s516] sm:$0x1]
    %v518 = vadd.f32 %v513, %v517
    %vm519 = vcmp.eq.s32.totalorder %v25, 18
    %521 = vset.pattern.permute.xlu0 0
    %522 = vperm.xlu0 %521, %v518
    %v523 = vpop.permute.xlu0 %522
    %v525 = vsel %vm519, %v523, %v499
    %s526 = sadd.s32 %s23, 76
    %s527 = sld [smem:[#allocation3 + %s526]]
    %s528 = scalar_lea.vmem %s1, %s527
    %v529 = vld [vmem:[%s528] sm:$0x1]
    %s530 = sadd.s32 %s23, 77
    %s531 = sld [smem:[#allocation3 + %s530]]
    %s532 = scalar_lea.vmem %s1, %s531
    %v533 = vld [vmem:[%s532] sm:$0x1]
    %v534 = vadd.f32 %v529, %v533
    %s535 = sadd.s32 %s23, 78
    %s536 = sld [smem:[#allocation3 + %s535]]
    %s537 = scalar_lea.vmem %s1, %s536
    %v538 = vld [vmem:[%s537] sm:$0x1]
    %v539 = vadd.f32 %v534, %v538
    %s540 = sadd.s32 %s23, 79
    %s541 = sld [smem:[#allocation3 + %s540]]
    %s542 = scalar_lea.vmem %s1, %s541
    %v543 = vld [vmem:[%s542] sm:$0x1]
    %v544 = vadd.f32 %v539, %v543
    %vm545 = vcmp.eq.s32.totalorder %v25, 19
    %547 = vset.pattern.permute.xlu0 0
    %548 = vperm.xlu0 %547, %v544
    %v549 = vpop.permute.xlu0 %548
    %v551 = vsel %vm545, %v549, %v525
    %s552 = sadd.s32 %s23, 80
    %s553 = sld [smem:[#allocation3 + %s552]]
    %s554 = scalar_lea.vmem %s1, %s553
    %v555 = vld [vmem:[%s554] sm:$0x1]
    %s556 = sadd.s32 %s23, 81
    %s557 = sld [smem:[#allocation3 + %s556]]
    %s558 = scalar_lea.vmem %s1, %s557
    %v559 = vld [vmem:[%s558] sm:$0x1]
    %v560 = vadd.f32 %v555, %v559
    %s561 = sadd.s32 %s23, 82
    %s562 = sld [smem:[#allocation3 + %s561]]
    %s563 = scalar_lea.vmem %s1, %s562
    %v564 = vld [vmem:[%s563] sm:$0x1]
    %v565 = vadd.f32 %v560, %v564
    %s566 = sadd.s32 %s23, 83
    %s567 = sld [smem:[#allocation3 + %s566]]
    %s568 = scalar_lea.vmem %s1, %s567
    %v569 = vld [vmem:[%s568] sm:$0x1]
    %v570 = vadd.f32 %v565, %v569
    %vm571 = vcmp.eq.s32.totalorder %v25, 20
    %573 = vset.pattern.permute.xlu0 0
    %574 = vperm.xlu0 %573, %v570
    %v575 = vpop.permute.xlu0 %574
    %v577 = vsel %vm571, %v575, %v551
    %s578 = sadd.s32 %s23, 84
    %s579 = sld [smem:[#allocation3 + %s578]]
    %s580 = scalar_lea.vmem %s1, %s579
    %v581 = vld [vmem:[%s580] sm:$0x1]
    %s582 = sadd.s32 %s23, 85
    %s583 = sld [smem:[#allocation3 + %s582]]
    %s584 = scalar_lea.vmem %s1, %s583
    %v585 = vld [vmem:[%s584] sm:$0x1]
    %v586 = vadd.f32 %v581, %v585
    %s587 = sadd.s32 %s23, 86
    %s588 = sld [smem:[#allocation3 + %s587]]
    %s589 = scalar_lea.vmem %s1, %s588
    %v590 = vld [vmem:[%s589] sm:$0x1]
    %v591 = vadd.f32 %v586, %v590
    %s592 = sadd.s32 %s23, 87
    %s593 = sld [smem:[#allocation3 + %s592]]
    %s594 = scalar_lea.vmem %s1, %s593
    %v595 = vld [vmem:[%s594] sm:$0x1]
    %v596 = vadd.f32 %v591, %v595
    %vm597 = vcmp.eq.s32.totalorder %v25, 21
    %599 = vset.pattern.permute.xlu0 0
    %600 = vperm.xlu0 %599, %v596
    %v601 = vpop.permute.xlu0 %600
    %v603 = vsel %vm597, %v601, %v577
    %s604 = sadd.s32 %s23, 88
    %s605 = sld [smem:[#allocation3 + %s604]]
    %s606 = scalar_lea.vmem %s1, %s605
    %v607 = vld [vmem:[%s606] sm:$0x1]
    %s608 = sadd.s32 %s23, 89
    %s609 = sld [smem:[#allocation3 + %s608]]
    %s610 = scalar_lea.vmem %s1, %s609
    %v611 = vld [vmem:[%s610] sm:$0x1]
    %v612 = vadd.f32 %v607, %v611
    %s613 = sadd.s32 %s23, 90
    %s614 = sld [smem:[#allocation3 + %s613]]
    %s615 = scalar_lea.vmem %s1, %s614
    %v616 = vld [vmem:[%s615] sm:$0x1]
    %v617 = vadd.f32 %v612, %v616
    %s618 = sadd.s32 %s23, 91
    %s619 = sld [smem:[#allocation3 + %s618]]
    %s620 = scalar_lea.vmem %s1, %s619
    %v621 = vld [vmem:[%s620] sm:$0x1]
    %v622 = vadd.f32 %v617, %v621
    %vm623 = vcmp.eq.s32.totalorder %v25, 22
    %625 = vset.pattern.permute.xlu0 0
    %626 = vperm.xlu0 %625, %v622
    %v627 = vpop.permute.xlu0 %626
    %v629 = vsel %vm623, %v627, %v603
    %s630 = sadd.s32 %s23, 92
    %s631 = sld [smem:[#allocation3 + %s630]]
    %s632 = scalar_lea.vmem %s1, %s631
    %v633 = vld [vmem:[%s632] sm:$0x1]
    %s634 = sadd.s32 %s23, 93
    %s635 = sld [smem:[#allocation3 + %s634]]
    %s636 = scalar_lea.vmem %s1, %s635
    %v637 = vld [vmem:[%s636] sm:$0x1]
    %v638 = vadd.f32 %v633, %v637
    %s639 = sadd.s32 %s23, 94
    %s640 = sld [smem:[#allocation3 + %s639]]
    %s641 = scalar_lea.vmem %s1, %s640
    %v642 = vld [vmem:[%s641] sm:$0x1]
    %v643 = vadd.f32 %v638, %v642
    %s644 = sadd.s32 %s23, 95
    %s645 = sld [smem:[#allocation3 + %s644]]
    %s646 = scalar_lea.vmem %s1, %s645
    %v647 = vld [vmem:[%s646] sm:$0x1]
    %v648 = vadd.f32 %v643, %v647
    %vm649 = vcmp.eq.s32.totalorder %v25, 23
    %651 = vset.pattern.permute.xlu0 0
    %652 = vperm.xlu0 %651, %v648
    %v653 = vpop.permute.xlu0 %652
    %v655 = vsel %vm649, %v653, %v629
    %s656 = sadd.s32 %s23, 96
    %s657 = sld [smem:[#allocation3 + %s656]]
    %s658 = scalar_lea.vmem %s1, %s657
    %v659 = vld [vmem:[%s658] sm:$0x1]
    %s660 = sadd.s32 %s23, 97
    %s661 = sld [smem:[#allocation3 + %s660]]
    %s662 = scalar_lea.vmem %s1, %s661
    %v663 = vld [vmem:[%s662] sm:$0x1]
    %v664 = vadd.f32 %v659, %v663
    %s665 = sadd.s32 %s23, 98
    %s666 = sld [smem:[#allocation3 + %s665]]
    %s667 = scalar_lea.vmem %s1, %s666
    %v668 = vld [vmem:[%s667] sm:$0x1]
    %v669 = vadd.f32 %v664, %v668
    %s670 = sadd.s32 %s23, 99
    %s671 = sld [smem:[#allocation3 + %s670]]
    %s672 = scalar_lea.vmem %s1, %s671
    %v673 = vld [vmem:[%s672] sm:$0x1]
    %v674 = vadd.f32 %v669, %v673
    %vm675 = vcmp.eq.s32.totalorder %v25, 24
    %677 = vset.pattern.permute.xlu0 0
    %678 = vperm.xlu0 %677, %v674
    %v679 = vpop.permute.xlu0 %678
    %v681 = vsel %vm675, %v679, 0.0
    %s682 = sadd.s32 %s23, 100
    %s683 = sld [smem:[#allocation3 + %s682]]
    %s684 = scalar_lea.vmem %s1, %s683
    %v685 = vld [vmem:[%s684] sm:$0x1]
    %s686 = sadd.s32 %s23, 101
    %s687 = sld [smem:[#allocation3 + %s686]]
    %s688 = scalar_lea.vmem %s1, %s687
    %v689 = vld [vmem:[%s688] sm:$0x1]
    %v690 = vadd.f32 %v685, %v689
    %s691 = sadd.s32 %s23, 102
    %s692 = sld [smem:[#allocation3 + %s691]]
    %s693 = scalar_lea.vmem %s1, %s692
    %v694 = vld [vmem:[%s693] sm:$0x1]
    %v695 = vadd.f32 %v690, %v694
    %s696 = sadd.s32 %s23, 103
    %s697 = sld [smem:[#allocation3 + %s696]]
    %s698 = scalar_lea.vmem %s1, %s697
    %v699 = vld [vmem:[%s698] sm:$0x1]
    %v700 = vadd.f32 %v695, %v699
    %vm701 = vcmp.eq.s32.totalorder %v25, 25
    %703 = vset.pattern.permute.xlu0 0
    %704 = vperm.xlu0 %703, %v700
    %v705 = vpop.permute.xlu0 %704
    %v707 = vsel %vm701, %v705, %v681
    %s708 = sadd.s32 %s23, 104
    %s709 = sld [smem:[#allocation3 + %s708]]
    %s710 = scalar_lea.vmem %s1, %s709
    %v711 = vld [vmem:[%s710] sm:$0x1]
    %s712 = sadd.s32 %s23, 105
    %s713 = sld [smem:[#allocation3 + %s712]]
    %s714 = scalar_lea.vmem %s1, %s713
    %v715 = vld [vmem:[%s714] sm:$0x1]
    %v716 = vadd.f32 %v711, %v715
    %s717 = sadd.s32 %s23, 106
    %s718 = sld [smem:[#allocation3 + %s717]]
    %s719 = scalar_lea.vmem %s1, %s718
    %v720 = vld [vmem:[%s719] sm:$0x1]
    %v721 = vadd.f32 %v716, %v720
    %s722 = sadd.s32 %s23, 107
    %s723 = sld [smem:[#allocation3 + %s722]]
    %s724 = scalar_lea.vmem %s1, %s723
    %v725 = vld [vmem:[%s724] sm:$0x1]
    %v726 = vadd.f32 %v721, %v725
    %vm727 = vcmp.eq.s32.totalorder %v25, 26
    %729 = vset.pattern.permute.xlu0 0
    %730 = vperm.xlu0 %729, %v726
    %v731 = vpop.permute.xlu0 %730
    %v733 = vsel %vm727, %v731, %v707
    %s734 = sadd.s32 %s23, 108
    %s735 = sld [smem:[#allocation3 + %s734]]
    %s736 = scalar_lea.vmem %s1, %s735
    %v737 = vld [vmem:[%s736] sm:$0x1]
    %s738 = sadd.s32 %s23, 109
    %s739 = sld [smem:[#allocation3 + %s738]]
    %s740 = scalar_lea.vmem %s1, %s739
    %v741 = vld [vmem:[%s740] sm:$0x1]
    %v742 = vadd.f32 %v737, %v741
    %s743 = sadd.s32 %s23, 110
    %s744 = sld [smem:[#allocation3 + %s743]]
    %s745 = scalar_lea.vmem %s1, %s744
    %v746 = vld [vmem:[%s745] sm:$0x1]
    %v747 = vadd.f32 %v742, %v746
    %s748 = sadd.s32 %s23, 111
    %s749 = sld [smem:[#allocation3 + %s748]]
    %s750 = scalar_lea.vmem %s1, %s749
    %v751 = vld [vmem:[%s750] sm:$0x1]
    %v752 = vadd.f32 %v747, %v751
    %vm753 = vcmp.eq.s32.totalorder %v25, 27
    %755 = vset.pattern.permute.xlu0 0
    %756 = vperm.xlu0 %755, %v752
    %v757 = vpop.permute.xlu0 %756
    %v759 = vsel %vm753, %v757, %v733
    %s760 = sadd.s32 %s23, 112
    %s761 = sld [smem:[#allocation3 + %s760]]
    %s762 = scalar_lea.vmem %s1, %s761
    %v763 = vld [vmem:[%s762] sm:$0x1]
    %s764 = sadd.s32 %s23, 113
    %s765 = sld [smem:[#allocation3 + %s764]]
    %s766 = scalar_lea.vmem %s1, %s765
    %v767 = vld [vmem:[%s766] sm:$0x1]
    %v768 = vadd.f32 %v763, %v767
    %s769 = sadd.s32 %s23, 114
    %s770 = sld [smem:[#allocation3 + %s769]]
    %s771 = scalar_lea.vmem %s1, %s770
    %v772 = vld [vmem:[%s771] sm:$0x1]
    %v773 = vadd.f32 %v768, %v772
    %s774 = sadd.s32 %s23, 115
    %s775 = sld [smem:[#allocation3 + %s774]]
    %s776 = scalar_lea.vmem %s1, %s775
    %v777 = vld [vmem:[%s776] sm:$0x1]
    %v778 = vadd.f32 %v773, %v777
    %vm779 = vcmp.eq.s32.totalorder %v25, 28
    %781 = vset.pattern.permute.xlu0 0
    %782 = vperm.xlu0 %781, %v778
    %v783 = vpop.permute.xlu0 %782
    %v785 = vsel %vm779, %v783, %v759
    %s786 = sadd.s32 %s23, 116
    %s787 = sld [smem:[#allocation3 + %s786]]
    %s788 = scalar_lea.vmem %s1, %s787
    %v789 = vld [vmem:[%s788] sm:$0x1]
    %s790 = sadd.s32 %s23, 117
    %s791 = sld [smem:[#allocation3 + %s790]]
    %s792 = scalar_lea.vmem %s1, %s791
    %v793 = vld [vmem:[%s792] sm:$0x1]
    %v794 = vadd.f32 %v789, %v793
    %s795 = sadd.s32 %s23, 118
    %s796 = sld [smem:[#allocation3 + %s795]]
    %s797 = scalar_lea.vmem %s1, %s796
    %v798 = vld [vmem:[%s797] sm:$0x1]
    %v799 = vadd.f32 %v794, %v798
    %s800 = sadd.s32 %s23, 119
    %s801 = sld [smem:[#allocation3 + %s800]]
    %s802 = scalar_lea.vmem %s1, %s801
    %v803 = vld [vmem:[%s802] sm:$0x1]
    %v804 = vadd.f32 %v799, %v803
    %vm805 = vcmp.eq.s32.totalorder %v25, 29
    %807 = vset.pattern.permute.xlu0 0
    %808 = vperm.xlu0 %807, %v804
    %v809 = vpop.permute.xlu0 %808
    %v811 = vsel %vm805, %v809, %v785
    %s812 = sadd.s32 %s23, 120
    %s813 = sld [smem:[#allocation3 + %s812]]
    %s814 = scalar_lea.vmem %s1, %s813
    %v815 = vld [vmem:[%s814] sm:$0x1]
    %s816 = sadd.s32 %s23, 121
    %s817 = sld [smem:[#allocation3 + %s816]]
    %s818 = scalar_lea.vmem %s1, %s817
    %v819 = vld [vmem:[%s818] sm:$0x1]
    %v820 = vadd.f32 %v815, %v819
    %s821 = sadd.s32 %s23, 122
    %s822 = sld [smem:[#allocation3 + %s821]]
    %s823 = scalar_lea.vmem %s1, %s822
    %v824 = vld [vmem:[%s823] sm:$0x1]
    %v825 = vadd.f32 %v820, %v824
    %s826 = sadd.s32 %s23, 123
    %s827 = sld [smem:[#allocation3 + %s826]]
    %s828 = scalar_lea.vmem %s1, %s827
    %v829 = vld [vmem:[%s828] sm:$0x1]
    %v830 = vadd.f32 %v825, %v829
    %vm831 = vcmp.eq.s32.totalorder %v25, 30
    %833 = vset.pattern.permute.xlu0 0
    %834 = vperm.xlu0 %833, %v830
    %v835 = vpop.permute.xlu0 %834
    %v837 = vsel %vm831, %v835, %v811
    %s838 = sadd.s32 %s23, 124
    %s839 = sld [smem:[#allocation3 + %s838]]
    %s840 = scalar_lea.vmem %s1, %s839
    %v841 = vld [vmem:[%s840] sm:$0x1]
    %s842 = sadd.s32 %s23, 125
    %s843 = sld [smem:[#allocation3 + %s842]]
    %s844 = scalar_lea.vmem %s1, %s843
    %v845 = vld [vmem:[%s844] sm:$0x1]
    %v846 = vadd.f32 %v841, %v845
    %s847 = sadd.s32 %s23, 126
    %s848 = sld [smem:[#allocation3 + %s847]]
    %s849 = scalar_lea.vmem %s1, %s848
    %v850 = vld [vmem:[%s849] sm:$0x1]
    %v851 = vadd.f32 %v846, %v850
    %s852 = sadd.s32 %s23, 127
    %s853 = sld [smem:[#allocation3 + %s852]]
    %s854 = scalar_lea.vmem %s1, %s853
    %v855 = vld [vmem:[%s854] sm:$0x1]
    %v856 = vadd.f32 %v851, %v855
    %vm857 = vcmp.eq.s32.totalorder %v25, 31
    %859 = vset.pattern.permute.xlu0 0
    %860 = vperm.xlu0 %859, %v856
    %v861 = vpop.permute.xlu0 %860
    %v863 = vsel %vm857, %v861, %v837
    %s864 = sadd.s32 %s23, 128
    %s865 = sld [smem:[#allocation3 + %s864]]
    %s866 = scalar_lea.vmem %s1, %s865
    %v867 = vld [vmem:[%s866] sm:$0x1]
    %s868 = sadd.s32 %s23, 129
    %s869 = sld [smem:[#allocation3 + %s868]]
    %s870 = scalar_lea.vmem %s1, %s869
    %v871 = vld [vmem:[%s870] sm:$0x1]
    %v872 = vadd.f32 %v867, %v871
    %s873 = sadd.s32 %s23, 130
    %s874 = sld [smem:[#allocation3 + %s873]]
    %s875 = scalar_lea.vmem %s1, %s874
    %v876 = vld [vmem:[%s875] sm:$0x1]
    %v877 = vadd.f32 %v872, %v876
    %s878 = sadd.s32 %s23, 131
    %s879 = sld [smem:[#allocation3 + %s878]]
    %s880 = scalar_lea.vmem %s1, %s879
    %v881 = vld [vmem:[%s880] sm:$0x1]
    %v882 = vadd.f32 %v877, %v881
    %vm883 = vcmp.eq.s32.totalorder %v25, 32
    %885 = vset.pattern.permute.xlu0 0
    %886 = vperm.xlu0 %885, %v882
    %v887 = vpop.permute.xlu0 %886
    %v889 = vsel %vm883, %v887, 0.0
    %s890 = sadd.s32 %s23, 132
    %s891 = sld [smem:[#allocation3 + %s890]]
    %s892 = scalar_lea.vmem %s1, %s891
    %v893 = vld [vmem:[%s892] sm:$0x1]
    %s894 = sadd.s32 %s23, 133
    %s895 = sld [smem:[#allocation3 + %s894]]
    %s896 = scalar_lea.vmem %s1, %s895
    %v897 = vld [vmem:[%s896] sm:$0x1]
    %v898 = vadd.f32 %v893, %v897
    %s899 = sadd.s32 %s23, 134
    %s900 = sld [smem:[#allocation3 + %s899]]
    %s901 = scalar_lea.vmem %s1, %s900
    %v902 = vld [vmem:[%s901] sm:$0x1]
    %v903 = vadd.f32 %v898, %v902
    %s904 = sadd.s32 %s23, 135
    %s905 = sld [smem:[#allocation3 + %s904]]
    %s906 = scalar_lea.vmem %s1, %s905
    %v907 = vld [vmem:[%s906] sm:$0x1]
    %v908 = vadd.f32 %v903, %v907
    %vm909 = vcmp.eq.s32.totalorder %v25, 33
    %911 = vset.pattern.permute.xlu0 0
    %912 = vperm.xlu0 %911, %v908
    %v913 = vpop.permute.xlu0 %912
    %v915 = vsel %vm909, %v913, %v889
    %s916 = sadd.s32 %s23, 136
    %s917 = sld [smem:[#allocation3 + %s916]]
    %s918 = scalar_lea.vmem %s1, %s917
    %v919 = vld [vmem:[%s918] sm:$0x1]
    %s920 = sadd.s32 %s23, 137
    %s921 = sld [smem:[#allocation3 + %s920]]
    %s922 = scalar_lea.vmem %s1, %s921
    %v923 = vld [vmem:[%s922] sm:$0x1]
    %v924 = vadd.f32 %v919, %v923
    %s925 = sadd.s32 %s23, 138
    %s926 = sld [smem:[#allocation3 + %s925]]
    %s927 = scalar_lea.vmem %s1, %s926
    %v928 = vld [vmem:[%s927] sm:$0x1]
    %v929 = vadd.f32 %v924, %v928
    %s930 = sadd.s32 %s23, 139
    %s931 = sld [smem:[#allocation3 + %s930]]
    %s932 = scalar_lea.vmem %s1, %s931
    %v933 = vld [vmem:[%s932] sm:$0x1]
    %v934 = vadd.f32 %v929, %v933
    %vm935 = vcmp.eq.s32.totalorder %v25, 34
    %937 = vset.pattern.permute.xlu0 0
    %938 = vperm.xlu0 %937, %v934
    %v939 = vpop.permute.xlu0 %938
    %v941 = vsel %vm935, %v939, %v915
    %s942 = sadd.s32 %s23, 140
    %s943 = sld [smem:[#allocation3 + %s942]]
    %s944 = scalar_lea.vmem %s1, %s943
    %v945 = vld [vmem:[%s944] sm:$0x1]
    %s946 = sadd.s32 %s23, 141
    %s947 = sld [smem:[#allocation3 + %s946]]
    %s948 = scalar_lea.vmem %s1, %s947
    %v949 = vld [vmem:[%s948] sm:$0x1]
    %v950 = vadd.f32 %v945, %v949
    %s951 = sadd.s32 %s23, 142
    %s952 = sld [smem:[#allocation3 + %s951]]
    %s953 = scalar_lea.vmem %s1, %s952
    %v954 = vld [vmem:[%s953] sm:$0x1]
    %v955 = vadd.f32 %v950, %v954
    %s956 = sadd.s32 %s23, 143
    %s957 = sld [smem:[#allocation3 + %s956]]
    %s958 = scalar_lea.vmem %s1, %s957
    %v959 = vld [vmem:[%s958] sm:$0x1]
    %v960 = vadd.f32 %v955, %v959
    %vm961 = vcmp.eq.s32.totalorder %v25, 35
    %963 = vset.pattern.permute.xlu0 0
    %964 = vperm.xlu0 %963, %v960
    %v965 = vpop.permute.xlu0 %964
    %v967 = vsel %vm961, %v965, %v941
    %s968 = sadd.s32 %s23, 144
    %s969 = sld [smem:[#allocation3 + %s968]]
    %s970 = scalar_lea.vmem %s1, %s969
    %v971 = vld [vmem:[%s970] sm:$0x1]
    %s972 = sadd.s32 %s23, 145
    %s973 = sld [smem:[#allocation3 + %s972]]
    %s974 = scalar_lea.vmem %s1, %s973
    %v975 = vld [vmem:[%s974] sm:$0x1]
    %v976 = vadd.f32 %v971, %v975
    %s977 = sadd.s32 %s23, 146
    %s978 = sld [smem:[#allocation3 + %s977]]
    %s979 = scalar_lea.vmem %s1, %s978
    %v980 = vld [vmem:[%s979] sm:$0x1]
    %v981 = vadd.f32 %v976, %v980
    %s982 = sadd.s32 %s23, 147
    %s983 = sld [smem:[#allocation3 + %s982]]
    %s984 = scalar_lea.vmem %s1, %s983
    %v985 = vld [vmem:[%s984] sm:$0x1]
    %v986 = vadd.f32 %v981, %v985
    %vm987 = vcmp.eq.s32.totalorder %v25, 36
    %989 = vset.pattern.permute.xlu0 0
    %990 = vperm.xlu0 %989, %v986
    %v991 = vpop.permute.xlu0 %990
    %v993 = vsel %vm987, %v991, %v967
    %s994 = sadd.s32 %s23, 148
    %s995 = sld [smem:[#allocation3 + %s994]]
    %s996 = scalar_lea.vmem %s1, %s995
    %v997 = vld [vmem:[%s996] sm:$0x1]
    %s998 = sadd.s32 %s23, 149
    %s999 = sld [smem:[#allocation3 + %s998]]
    %s1000 = scalar_lea.vmem %s1, %s999
    %v1001 = vld [vmem:[%s1000] sm:$0x1]
    %v1002 = vadd.f32 %v997, %v1001
    %s1003 = sadd.s32 %s23, 150
    %s1004 = sld [smem:[#allocation3 + %s1003]]
    %s1005 = scalar_lea.vmem %s1, %s1004
    %v1006 = vld [vmem:[%s1005] sm:$0x1]
    %v1007 = vadd.f32 %v1002, %v1006
    %s1008 = sadd.s32 %s23, 151
    %s1009 = sld [smem:[#allocation3 + %s1008]]
    %s1010 = scalar_lea.vmem %s1, %s1009
    %v1011 = vld [vmem:[%s1010] sm:$0x1]
    %v1012 = vadd.f32 %v1007, %v1011
    %vm1013 = vcmp.eq.s32.totalorder %v25, 37
    %1015 = vset.pattern.permute.xlu0 0
    %1016 = vperm.xlu0 %1015, %v1012
    %v1017 = vpop.permute.xlu0 %1016
    %v1019 = vsel %vm1013, %v1017, %v993
    %s1020 = sadd.s32 %s23, 152
    %s1021 = sld [smem:[#allocation3 + %s1020]]
    %s1022 = scalar_lea.vmem %s1, %s1021
    %v1023 = vld [vmem:[%s1022] sm:$0x1]
    %s1024 = sadd.s32 %s23, 153
    %s1025 = sld [smem:[#allocation3 + %s1024]]
    %s1026 = scalar_lea.vmem %s1, %s1025
    %v1027 = vld [vmem:[%s1026] sm:$0x1]
    %v1028 = vadd.f32 %v1023, %v1027
    %s1029 = sadd.s32 %s23, 154
    %s1030 = sld [smem:[#allocation3 + %s1029]]
    %s1031 = scalar_lea.vmem %s1, %s1030
    %v1032 = vld [vmem:[%s1031] sm:$0x1]
    %v1033 = vadd.f32 %v1028, %v1032
    %s1034 = sadd.s32 %s23, 155
    %s1035 = sld [smem:[#allocation3 + %s1034]]
    %s1036 = scalar_lea.vmem %s1, %s1035
    %v1037 = vld [vmem:[%s1036] sm:$0x1]
    %v1038 = vadd.f32 %v1033, %v1037
    %vm1039 = vcmp.eq.s32.totalorder %v25, 38
    %1041 = vset.pattern.permute.xlu0 0
    %1042 = vperm.xlu0 %1041, %v1038
    %v1043 = vpop.permute.xlu0 %1042
    %v1045 = vsel %vm1039, %v1043, %v1019
    %s1046 = sadd.s32 %s23, 156
    %s1047 = sld [smem:[#allocation3 + %s1046]]
    %s1048 = scalar_lea.vmem %s1, %s1047
    %v1049 = vld [vmem:[%s1048] sm:$0x1]
    %s1050 = sadd.s32 %s23, 157
    %s1051 = sld [smem:[#allocation3 + %s1050]]
    %s1052 = scalar_lea.vmem %s1, %s1051
    %v1053 = vld [vmem:[%s1052] sm:$0x1]
    %v1054 = vadd.f32 %v1049, %v1053
    %s1055 = sadd.s32 %s23, 158
    %s1056 = sld [smem:[#allocation3 + %s1055]]
    %s1057 = scalar_lea.vmem %s1, %s1056
    %v1058 = vld [vmem:[%s1057] sm:$0x1]
    %v1059 = vadd.f32 %v1054, %v1058
    %s1060 = sadd.s32 %s23, 159
    %s1061 = sld [smem:[#allocation3 + %s1060]]
    %s1062 = scalar_lea.vmem %s1, %s1061
    %v1063 = vld [vmem:[%s1062] sm:$0x1]
    %v1064 = vadd.f32 %v1059, %v1063
    %vm1065 = vcmp.eq.s32.totalorder %v25, 39
    %1067 = vset.pattern.permute.xlu0 0
    %1068 = vperm.xlu0 %1067, %v1064
    %v1069 = vpop.permute.xlu0 %1068
    %v1071 = vsel %vm1065, %v1069, %v1045
    %s1072 = sadd.s32 %s23, 160
    %s1073 = sld [smem:[#allocation3 + %s1072]]
    %s1074 = scalar_lea.vmem %s1, %s1073
    %v1075 = vld [vmem:[%s1074] sm:$0x1]
    %s1076 = sadd.s32 %s23, 161
    %s1077 = sld [smem:[#allocation3 + %s1076]]
    %s1078 = scalar_lea.vmem %s1, %s1077
    %v1079 = vld [vmem:[%s1078] sm:$0x1]
    %v1080 = vadd.f32 %v1075, %v1079
    %s1081 = sadd.s32 %s23, 162
    %s1082 = sld [smem:[#allocation3 + %s1081]]
    %s1083 = scalar_lea.vmem %s1, %s1082
    %v1084 = vld [vmem:[%s1083] sm:$0x1]
    %v1085 = vadd.f32 %v1080, %v1084
    %s1086 = sadd.s32 %s23, 163
    %s1087 = sld [smem:[#allocation3 + %s1086]]
    %s1088 = scalar_lea.vmem %s1, %s1087
    %v1089 = vld [vmem:[%s1088] sm:$0x1]
    %v1090 = vadd.f32 %v1085, %v1089
    %vm1091 = vcmp.eq.s32.totalorder %v25, 40
    %1093 = vset.pattern.permute.xlu0 0
    %1094 = vperm.xlu0 %1093, %v1090
    %v1095 = vpop.permute.xlu0 %1094
    %v1097 = vsel %vm1091, %v1095, 0.0
    %s1098 = sadd.s32 %s23, 164
    %s1099 = sld [smem:[#allocation3 + %s1098]]
    %s1100 = scalar_lea.vmem %s1, %s1099
    %v1101 = vld [vmem:[%s1100] sm:$0x1]
    %s1102 = sadd.s32 %s23, 165
    %s1103 = sld [smem:[#allocation3 + %s1102]]
    %s1104 = scalar_lea.vmem %s1, %s1103
    %v1105 = vld [vmem:[%s1104] sm:$0x1]
    %v1106 = vadd.f32 %v1101, %v1105
    %s1107 = sadd.s32 %s23, 166
    %s1108 = sld [smem:[#allocation3 + %s1107]]
    %s1109 = scalar_lea.vmem %s1, %s1108
    %v1110 = vld [vmem:[%s1109] sm:$0x1]
    %v1111 = vadd.f32 %v1106, %v1110
    %s1112 = sadd.s32 %s23, 167
    %s1113 = sld [smem:[#allocation3 + %s1112]]
    %s1114 = scalar_lea.vmem %s1, %s1113
    %v1115 = vld [vmem:[%s1114] sm:$0x1]
    %v1116 = vadd.f32 %v1111, %v1115
    %vm1117 = vcmp.eq.s32.totalorder %v25, 41
    %1119 = vset.pattern.permute.xlu0 0
    %1120 = vperm.xlu0 %1119, %v1116
    %v1121 = vpop.permute.xlu0 %1120
    %v1123 = vsel %vm1117, %v1121, %v1097
    %s1124 = sadd.s32 %s23, 168
    %s1125 = sld [smem:[#allocation3 + %s1124]]
    %s1126 = scalar_lea.vmem %s1, %s1125
    %v1127 = vld [vmem:[%s1126] sm:$0x1]
    %s1128 = sadd.s32 %s23, 169
    %s1129 = sld [smem:[#allocation3 + %s1128]]
    %s1130 = scalar_lea.vmem %s1, %s1129
    %v1131 = vld [vmem:[%s1130] sm:$0x1]
    %v1132 = vadd.f32 %v1127, %v1131
    %s1133 = sadd.s32 %s23, 170
    %s1134 = sld [smem:[#allocation3 + %s1133]]
    %s1135 = scalar_lea.vmem %s1, %s1134
    %v1136 = vld [vmem:[%s1135] sm:$0x1]
    %v1137 = vadd.f32 %v1132, %v1136
    %s1138 = sadd.s32 %s23, 171
    %s1139 = sld [smem:[#allocation3 + %s1138]]
    %s1140 = scalar_lea.vmem %s1, %s1139
    %v1141 = vld [vmem:[%s1140] sm:$0x1]
    %v1142 = vadd.f32 %v1137, %v1141
    %vm1143 = vcmp.eq.s32.totalorder %v25, 42
    %1145 = vset.pattern.permute.xlu0 0
    %1146 = vperm.xlu0 %1145, %v1142
    %v1147 = vpop.permute.xlu0 %1146
    %v1149 = vsel %vm1143, %v1147, %v1123
    %s1150 = sadd.s32 %s23, 172
    %s1151 = sld [smem:[#allocation3 + %s1150]]
    %s1152 = scalar_lea.vmem %s1, %s1151
    %v1153 = vld [vmem:[%s1152] sm:$0x1]
    %s1154 = sadd.s32 %s23, 173
    %s1155 = sld [smem:[#allocation3 + %s1154]]
    %s1156 = scalar_lea.vmem %s1, %s1155
    %v1157 = vld [vmem:[%s1156] sm:$0x1]
    %v1158 = vadd.f32 %v1153, %v1157
    %s1159 = sadd.s32 %s23, 174
    %s1160 = sld [smem:[#allocation3 + %s1159]]
    %s1161 = scalar_lea.vmem %s1, %s1160
    %v1162 = vld [vmem:[%s1161] sm:$0x1]
    %v1163 = vadd.f32 %v1158, %v1162
    %s1164 = sadd.s32 %s23, 175
    %s1165 = sld [smem:[#allocation3 + %s1164]]
    %s1166 = scalar_lea.vmem %s1, %s1165
    %v1167 = vld [vmem:[%s1166] sm:$0x1]
    %v1168 = vadd.f32 %v1163, %v1167
    %vm1169 = vcmp.eq.s32.totalorder %v25, 43
    %1171 = vset.pattern.permute.xlu0 0
    %1172 = vperm.xlu0 %1171, %v1168
    %v1173 = vpop.permute.xlu0 %1172
    %v1175 = vsel %vm1169, %v1173, %v1149
    %s1176 = sadd.s32 %s23, 176
    %s1177 = sld [smem:[#allocation3 + %s1176]]
    %s1178 = scalar_lea.vmem %s1, %s1177
    %v1179 = vld [vmem:[%s1178] sm:$0x1]
    %s1180 = sadd.s32 %s23, 177
    %s1181 = sld [smem:[#allocation3 + %s1180]]
    %s1182 = scalar_lea.vmem %s1, %s1181
    %v1183 = vld [vmem:[%s1182] sm:$0x1]
    %v1184 = vadd.f32 %v1179, %v1183
    %s1185 = sadd.s32 %s23, 178
    %s1186 = sld [smem:[#allocation3 + %s1185]]
    %s1187 = scalar_lea.vmem %s1, %s1186
    %v1188 = vld [vmem:[%s1187] sm:$0x1]
    %v1189 = vadd.f32 %v1184, %v1188
    %s1190 = sadd.s32 %s23, 179
    %s1191 = sld [smem:[#allocation3 + %s1190]]
    %s1192 = scalar_lea.vmem %s1, %s1191
    %v1193 = vld [vmem:[%s1192] sm:$0x1]
    %v1194 = vadd.f32 %v1189, %v1193
    %vm1195 = vcmp.eq.s32.totalorder %v25, 44
    %1197 = vset.pattern.permute.xlu0 0
    %1198 = vperm.xlu0 %1197, %v1194
    %v1199 = vpop.permute.xlu0 %1198
    %v1201 = vsel %vm1195, %v1199, %v1175
    %s1202 = sadd.s32 %s23, 180
    %s1203 = sld [smem:[#allocation3 + %s1202]]
    %s1204 = scalar_lea.vmem %s1, %s1203
    %v1205 = vld [vmem:[%s1204] sm:$0x1]
    %s1206 = sadd.s32 %s23, 181
    %s1207 = sld [smem:[#allocation3 + %s1206]]
    %s1208 = scalar_lea.vmem %s1, %s1207
    %v1209 = vld [vmem:[%s1208] sm:$0x1]
    %v1210 = vadd.f32 %v1205, %v1209
    %s1211 = sadd.s32 %s23, 182
    %s1212 = sld [smem:[#allocation3 + %s1211]]
    %s1213 = scalar_lea.vmem %s1, %s1212
    %v1214 = vld [vmem:[%s1213] sm:$0x1]
    %v1215 = vadd.f32 %v1210, %v1214
    %s1216 = sadd.s32 %s23, 183
    %s1217 = sld [smem:[#allocation3 + %s1216]]
    %s1218 = scalar_lea.vmem %s1, %s1217
    %v1219 = vld [vmem:[%s1218] sm:$0x1]
    %v1220 = vadd.f32 %v1215, %v1219
    %vm1221 = vcmp.eq.s32.totalorder %v25, 45
    %1223 = vset.pattern.permute.xlu0 0
    %1224 = vperm.xlu0 %1223, %v1220
    %v1225 = vpop.permute.xlu0 %1224
    %v1227 = vsel %vm1221, %v1225, %v1201
    %s1228 = sadd.s32 %s23, 184
    %s1229 = sld [smem:[#allocation3 + %s1228]]
    %s1230 = scalar_lea.vmem %s1, %s1229
    %v1231 = vld [vmem:[%s1230] sm:$0x1]
    %s1232 = sadd.s32 %s23, 185
    %s1233 = sld [smem:[#allocation3 + %s1232]]
    %s1234 = scalar_lea.vmem %s1, %s1233
    %v1235 = vld [vmem:[%s1234] sm:$0x1]
    %v1236 = vadd.f32 %v1231, %v1235
    %s1237 = sadd.s32 %s23, 186
    %s1238 = sld [smem:[#allocation3 + %s1237]]
    %s1239 = scalar_lea.vmem %s1, %s1238
    %v1240 = vld [vmem:[%s1239] sm:$0x1]
    %v1241 = vadd.f32 %v1236, %v1240
    %s1242 = sadd.s32 %s23, 187
    %s1243 = sld [smem:[#allocation3 + %s1242]]
    %s1244 = scalar_lea.vmem %s1, %s1243
    %v1245 = vld [vmem:[%s1244] sm:$0x1]
    %v1246 = vadd.f32 %v1241, %v1245
    %vm1247 = vcmp.eq.s32.totalorder %v25, 46
    %1249 = vset.pattern.permute.xlu0 0
    %1250 = vperm.xlu0 %1249, %v1246
    %v1251 = vpop.permute.xlu0 %1250
    %v1253 = vsel %vm1247, %v1251, %v1227
    %s1254 = sadd.s32 %s23, 188
    %s1255 = sld [smem:[#allocation3 + %s1254]]
    %s1256 = scalar_lea.vmem %s1, %s1255
    %v1257 = vld [vmem:[%s1256] sm:$0x1]
    %s1258 = sadd.s32 %s23, 189
    %s1259 = sld [smem:[#allocation3 + %s1258]]
    %s1260 = scalar_lea.vmem %s1, %s1259
    %v1261 = vld [vmem:[%s1260] sm:$0x1]
    %v1262 = vadd.f32 %v1257, %v1261
    %s1263 = sadd.s32 %s23, 190
    %s1264 = sld [smem:[#allocation3 + %s1263]]
    %s1265 = scalar_lea.vmem %s1, %s1264
    %v1266 = vld [vmem:[%s1265] sm:$0x1]
    %v1267 = vadd.f32 %v1262, %v1266
    %s1268 = sadd.s32 %s23, 191
    %s1269 = sld [smem:[#allocation3 + %s1268]]
    %s1270 = scalar_lea.vmem %s1, %s1269
    %v1271 = vld [vmem:[%s1270] sm:$0x1]
    %v1272 = vadd.f32 %v1267, %v1271
    %vm1273 = vcmp.eq.s32.totalorder %v25, 47
    %1275 = vset.pattern.permute.xlu0 0
    %1276 = vperm.xlu0 %1275, %v1272
    %v1277 = vpop.permute.xlu0 %1276
    %v1279 = vsel %vm1273, %v1277, %v1253
    %s1280 = sadd.s32 %s23, 192
    %s1281 = sld [smem:[#allocation3 + %s1280]]
    %s1282 = scalar_lea.vmem %s1, %s1281
    %v1283 = vld [vmem:[%s1282] sm:$0x1]
    %s1284 = sadd.s32 %s23, 193
    %s1285 = sld [smem:[#allocation3 + %s1284]]
    %s1286 = scalar_lea.vmem %s1, %s1285
    %v1287 = vld [vmem:[%s1286] sm:$0x1]
    %v1288 = vadd.f32 %v1283, %v1287
    %s1289 = sadd.s32 %s23, 194
    %s1290 = sld [smem:[#allocation3 + %s1289]]
    %s1291 = scalar_lea.vmem %s1, %s1290
    %v1292 = vld [vmem:[%s1291] sm:$0x1]
    %v1293 = vadd.f32 %v1288, %v1292
    %s1294 = sadd.s32 %s23, 195
    %s1295 = sld [smem:[#allocation3 + %s1294]]
    %s1296 = scalar_lea.vmem %s1, %s1295
    %v1297 = vld [vmem:[%s1296] sm:$0x1]
    %v1298 = vadd.f32 %v1293, %v1297
    %vm1299 = vcmp.eq.s32.totalorder %v25, 48
    %1301 = vset.pattern.permute.xlu0 0
    %1302 = vperm.xlu0 %1301, %v1298
    %v1303 = vpop.permute.xlu0 %1302
    %v1305 = vsel %vm1299, %v1303, 0.0
    %s1306 = sadd.s32 %s23, 196
    %s1307 = sld [smem:[#allocation3 + %s1306]]
    %s1308 = scalar_lea.vmem %s1, %s1307
    %v1309 = vld [vmem:[%s1308] sm:$0x1]
    %s1310 = sadd.s32 %s23, 197
    %s1311 = sld [smem:[#allocation3 + %s1310]]
    %s1312 = scalar_lea.vmem %s1, %s1311
    %v1313 = vld [vmem:[%s1312] sm:$0x1]
    %v1314 = vadd.f32 %v1309, %v1313
    %s1315 = sadd.s32 %s23, 198
    %s1316 = sld [smem:[#allocation3 + %s1315]]
    %s1317 = scalar_lea.vmem %s1, %s1316
    %v1318 = vld [vmem:[%s1317] sm:$0x1]
    %v1319 = vadd.f32 %v1314, %v1318
    %s1320 = sadd.s32 %s23, 199
    %s1321 = sld [smem:[#allocation3 + %s1320]]
    %s1322 = scalar_lea.vmem %s1, %s1321
    %v1323 = vld [vmem:[%s1322] sm:$0x1]
    %v1324 = vadd.f32 %v1319, %v1323
    %vm1325 = vcmp.eq.s32.totalorder %v25, 49
    %1327 = vset.pattern.permute.xlu0 0
    %1328 = vperm.xlu0 %1327, %v1324
    %v1329 = vpop.permute.xlu0 %1328
    %v1331 = vsel %vm1325, %v1329, %v1305
    %s1332 = sadd.s32 %s23, 200
    %s1333 = sld [smem:[#allocation3 + %s1332]]
    %s1334 = scalar_lea.vmem %s1, %s1333
    %v1335 = vld [vmem:[%s1334] sm:$0x1]
    %s1336 = sadd.s32 %s23, 201
    %s1337 = sld [smem:[#allocation3 + %s1336]]
    %s1338 = scalar_lea.vmem %s1, %s1337
    %v1339 = vld [vmem:[%s1338] sm:$0x1]
    %v1340 = vadd.f32 %v1335, %v1339
    %s1341 = sadd.s32 %s23, 202
    %s1342 = sld [smem:[#allocation3 + %s1341]]
    %s1343 = scalar_lea.vmem %s1, %s1342
    %v1344 = vld [vmem:[%s1343] sm:$0x1]
    %v1345 = vadd.f32 %v1340, %v1344
    %s1346 = sadd.s32 %s23, 203
    %s1347 = sld [smem:[#allocation3 + %s1346]]
    %s1348 = scalar_lea.vmem %s1, %s1347
    %v1349 = vld [vmem:[%s1348] sm:$0x1]
    %v1350 = vadd.f32 %v1345, %v1349
    %vm1351 = vcmp.eq.s32.totalorder %v25, 50
    %1353 = vset.pattern.permute.xlu0 0
    %1354 = vperm.xlu0 %1353, %v1350
    %v1355 = vpop.permute.xlu0 %1354
    %v1357 = vsel %vm1351, %v1355, %v1331
    %s1358 = sadd.s32 %s23, 204
    %s1359 = sld [smem:[#allocation3 + %s1358]]
    %s1360 = scalar_lea.vmem %s1, %s1359
    %v1361 = vld [vmem:[%s1360] sm:$0x1]
    %s1362 = sadd.s32 %s23, 205
    %s1363 = sld [smem:[#allocation3 + %s1362]]
    %s1364 = scalar_lea.vmem %s1, %s1363
    %v1365 = vld [vmem:[%s1364] sm:$0x1]
    %v1366 = vadd.f32 %v1361, %v1365
    %s1367 = sadd.s32 %s23, 206
    %s1368 = sld [smem:[#allocation3 + %s1367]]
    %s1369 = scalar_lea.vmem %s1, %s1368
    %v1370 = vld [vmem:[%s1369] sm:$0x1]
    %v1371 = vadd.f32 %v1366, %v1370
    %s1372 = sadd.s32 %s23, 207
    %s1373 = sld [smem:[#allocation3 + %s1372]]
    %s1374 = scalar_lea.vmem %s1, %s1373
    %v1375 = vld [vmem:[%s1374] sm:$0x1]
    %v1376 = vadd.f32 %v1371, %v1375
    %vm1377 = vcmp.eq.s32.totalorder %v25, 51
    %1379 = vset.pattern.permute.xlu0 0
    %1380 = vperm.xlu0 %1379, %v1376
    %v1381 = vpop.permute.xlu0 %1380
    %v1383 = vsel %vm1377, %v1381, %v1357
    %s1384 = sadd.s32 %s23, 208
    %s1385 = sld [smem:[#allocation3 + %s1384]]
    %s1386 = scalar_lea.vmem %s1, %s1385
    %v1387 = vld [vmem:[%s1386] sm:$0x1]
    %s1388 = sadd.s32 %s23, 209
    %s1389 = sld [smem:[#allocation3 + %s1388]]
    %s1390 = scalar_lea.vmem %s1, %s1389
    %v1391 = vld [vmem:[%s1390] sm:$0x1]
    %v1392 = vadd.f32 %v1387, %v1391
    %s1393 = sadd.s32 %s23, 210
    %s1394 = sld [smem:[#allocation3 + %s1393]]
    %s1395 = scalar_lea.vmem %s1, %s1394
    %v1396 = vld [vmem:[%s1395] sm:$0x1]
    %v1397 = vadd.f32 %v1392, %v1396
    %s1398 = sadd.s32 %s23, 211
    %s1399 = sld [smem:[#allocation3 + %s1398]]
    %s1400 = scalar_lea.vmem %s1, %s1399
    %v1401 = vld [vmem:[%s1400] sm:$0x1]
    %v1402 = vadd.f32 %v1397, %v1401
    %vm1403 = vcmp.eq.s32.totalorder %v25, 52
    %1405 = vset.pattern.permute.xlu0 0
    %1406 = vperm.xlu0 %1405, %v1402
    %v1407 = vpop.permute.xlu0 %1406
    %v1409 = vsel %vm1403, %v1407, %v1383
    %s1410 = sadd.s32 %s23, 212
    %s1411 = sld [smem:[#allocation3 + %s1410]]
    %s1412 = scalar_lea.vmem %s1, %s1411
    %v1413 = vld [vmem:[%s1412] sm:$0x1]
    %s1414 = sadd.s32 %s23, 213
    %s1415 = sld [smem:[#allocation3 + %s1414]]
    %s1416 = scalar_lea.vmem %s1, %s1415
    %v1417 = vld [vmem:[%s1416] sm:$0x1]
    %v1418 = vadd.f32 %v1413, %v1417
    %s1419 = sadd.s32 %s23, 214
    %s1420 = sld [smem:[#allocation3 + %s1419]]
    %s1421 = scalar_lea.vmem %s1, %s1420
    %v1422 = vld [vmem:[%s1421] sm:$0x1]
    %v1423 = vadd.f32 %v1418, %v1422
    %s1424 = sadd.s32 %s23, 215
    %s1425 = sld [smem:[#allocation3 + %s1424]]
    %s1426 = scalar_lea.vmem %s1, %s1425
    %v1427 = vld [vmem:[%s1426] sm:$0x1]
    %v1428 = vadd.f32 %v1423, %v1427
    %vm1429 = vcmp.eq.s32.totalorder %v25, 53
    %1431 = vset.pattern.permute.xlu0 0
    %1432 = vperm.xlu0 %1431, %v1428
    %v1433 = vpop.permute.xlu0 %1432
    %v1435 = vsel %vm1429, %v1433, %v1409
    %s1436 = sadd.s32 %s23, 216
    %s1437 = sld [smem:[#allocation3 + %s1436]]
    %s1438 = scalar_lea.vmem %s1, %s1437
    %v1439 = vld [vmem:[%s1438] sm:$0x1]
    %s1440 = sadd.s32 %s23, 217
    %s1441 = sld [smem:[#allocation3 + %s1440]]
    %s1442 = scalar_lea.vmem %s1, %s1441
    %v1443 = vld [vmem:[%s1442] sm:$0x1]
    %v1444 = vadd.f32 %v1439, %v1443
    %s1445 = sadd.s32 %s23, 218
    %s1446 = sld [smem:[#allocation3 + %s1445]]
    %s1447 = scalar_lea.vmem %s1, %s1446
    %v1448 = vld [vmem:[%s1447] sm:$0x1]
    %v1449 = vadd.f32 %v1444, %v1448
    %s1450 = sadd.s32 %s23, 219
    %s1451 = sld [smem:[#allocation3 + %s1450]]
    %s1452 = scalar_lea.vmem %s1, %s1451
    %v1453 = vld [vmem:[%s1452] sm:$0x1]
    %v1454 = vadd.f32 %v1449, %v1453
    %vm1455 = vcmp.eq.s32.totalorder %v25, 54
    %1457 = vset.pattern.permute.xlu0 0
    %1458 = vperm.xlu0 %1457, %v1454
    %v1459 = vpop.permute.xlu0 %1458
    %v1461 = vsel %vm1455, %v1459, %v1435
    %s1462 = sadd.s32 %s23, 220
    %s1463 = sld [smem:[#allocation3 + %s1462]]
    %s1464 = scalar_lea.vmem %s1, %s1463
    %v1465 = vld [vmem:[%s1464] sm:$0x1]
    %s1466 = sadd.s32 %s23, 221
    %s1467 = sld [smem:[#allocation3 + %s1466]]
    %s1468 = scalar_lea.vmem %s1, %s1467
    %v1469 = vld [vmem:[%s1468] sm:$0x1]
    %v1470 = vadd.f32 %v1465, %v1469
    %s1471 = sadd.s32 %s23, 222
    %s1472 = sld [smem:[#allocation3 + %s1471]]
    %s1473 = scalar_lea.vmem %s1, %s1472
    %v1474 = vld [vmem:[%s1473] sm:$0x1]
    %v1475 = vadd.f32 %v1470, %v1474
    %s1476 = sadd.s32 %s23, 223
    %s1477 = sld [smem:[#allocation3 + %s1476]]
    %s1478 = scalar_lea.vmem %s1, %s1477
    %v1479 = vld [vmem:[%s1478] sm:$0x1]
    %v1480 = vadd.f32 %v1475, %v1479
    %vm1481 = vcmp.eq.s32.totalorder %v25, 55
    %1483 = vset.pattern.permute.xlu0 0
    %1484 = vperm.xlu0 %1483, %v1480
    %v1485 = vpop.permute.xlu0 %1484
    %v1487 = vsel %vm1481, %v1485, %v1461
    %s1488 = sadd.s32 %s23, 224
    %s1489 = sld [smem:[#allocation3 + %s1488]]
    %s1490 = scalar_lea.vmem %s1, %s1489
    %v1491 = vld [vmem:[%s1490] sm:$0x1]
    %s1492 = sadd.s32 %s23, 225
    %s1493 = sld [smem:[#allocation3 + %s1492]]
    %s1494 = scalar_lea.vmem %s1, %s1493
    %v1495 = vld [vmem:[%s1494] sm:$0x1]
    %v1496 = vadd.f32 %v1491, %v1495
    %s1497 = sadd.s32 %s23, 226
    %s1498 = sld [smem:[#allocation3 + %s1497]]
    %s1499 = scalar_lea.vmem %s1, %s1498
    %v1500 = vld [vmem:[%s1499] sm:$0x1]
    %v1501 = vadd.f32 %v1496, %v1500
    %s1502 = sadd.s32 %s23, 227
    %s1503 = sld [smem:[#allocation3 + %s1502]]
    %s1504 = scalar_lea.vmem %s1, %s1503
    %v1505 = vld [vmem:[%s1504] sm:$0x1]
    %v1506 = vadd.f32 %v1501, %v1505
    %vm1507 = vcmp.eq.s32.totalorder %v25, 56
    %1509 = vset.pattern.permute.xlu0 0
    %1510 = vperm.xlu0 %1509, %v1506
    %v1511 = vpop.permute.xlu0 %1510
    %v1513 = vsel %vm1507, %v1511, 0.0
    %s1514 = sadd.s32 %s23, 228
    %s1515 = sld [smem:[#allocation3 + %s1514]]
    %s1516 = scalar_lea.vmem %s1, %s1515
    %v1517 = vld [vmem:[%s1516] sm:$0x1]
    %s1518 = sadd.s32 %s23, 229
    %s1519 = sld [smem:[#allocation3 + %s1518]]
    %s1520 = scalar_lea.vmem %s1, %s1519
    %v1521 = vld [vmem:[%s1520] sm:$0x1]
    %v1522 = vadd.f32 %v1517, %v1521
    %s1523 = sadd.s32 %s23, 230
    %s1524 = sld [smem:[#allocation3 + %s1523]]
    %s1525 = scalar_lea.vmem %s1, %s1524
    %v1526 = vld [vmem:[%s1525] sm:$0x1]
    %v1527 = vadd.f32 %v1522, %v1526
    %s1528 = sadd.s32 %s23, 231
    %s1529 = sld [smem:[#allocation3 + %s1528]]
    %s1530 = scalar_lea.vmem %s1, %s1529
    %v1531 = vld [vmem:[%s1530] sm:$0x1]
    %v1532 = vadd.f32 %v1527, %v1531
    %vm1533 = vcmp.eq.s32.totalorder %v25, 57
    %1535 = vset.pattern.permute.xlu0 0
    %1536 = vperm.xlu0 %1535, %v1532
    %v1537 = vpop.permute.xlu0 %1536
    %v1539 = vsel %vm1533, %v1537, %v1513
    %s1540 = sadd.s32 %s23, 232
    %s1541 = sld [smem:[#allocation3 + %s1540]]
    %s1542 = scalar_lea.vmem %s1, %s1541
    %v1543 = vld [vmem:[%s1542] sm:$0x1]
    %s1544 = sadd.s32 %s23, 233
    %s1545 = sld [smem:[#allocation3 + %s1544]]
    %s1546 = scalar_lea.vmem %s1, %s1545
    %v1547 = vld [vmem:[%s1546] sm:$0x1]
    %v1548 = vadd.f32 %v1543, %v1547
    %s1549 = sadd.s32 %s23, 234
    %s1550 = sld [smem:[#allocation3 + %s1549]]
    %s1551 = scalar_lea.vmem %s1, %s1550
    %v1552 = vld [vmem:[%s1551] sm:$0x1]
    %v1553 = vadd.f32 %v1548, %v1552
    %s1554 = sadd.s32 %s23, 235
    %s1555 = sld [smem:[#allocation3 + %s1554]]
    %s1556 = scalar_lea.vmem %s1, %s1555
    %v1557 = vld [vmem:[%s1556] sm:$0x1]
    %v1558 = vadd.f32 %v1553, %v1557
    %vm1559 = vcmp.eq.s32.totalorder %v25, 58
    %1561 = vset.pattern.permute.xlu0 0
    %1562 = vperm.xlu0 %1561, %v1558
    %v1563 = vpop.permute.xlu0 %1562
    %v1565 = vsel %vm1559, %v1563, %v1539
    %s1566 = sadd.s32 %s23, 236
    %s1567 = sld [smem:[#allocation3 + %s1566]]
    %s1568 = scalar_lea.vmem %s1, %s1567
    %v1569 = vld [vmem:[%s1568] sm:$0x1]
    %s1570 = sadd.s32 %s23, 237
    %s1571 = sld [smem:[#allocation3 + %s1570]]
    %s1572 = scalar_lea.vmem %s1, %s1571
    %v1573 = vld [vmem:[%s1572] sm:$0x1]
    %v1574 = vadd.f32 %v1569, %v1573
    %s1575 = sadd.s32 %s23, 238
    %s1576 = sld [smem:[#allocation3 + %s1575]]
    %s1577 = scalar_lea.vmem %s1, %s1576
    %v1578 = vld [vmem:[%s1577] sm:$0x1]
    %v1579 = vadd.f32 %v1574, %v1578
    %s1580 = sadd.s32 %s23, 239
    %s1581 = sld [smem:[#allocation3 + %s1580]]
    %s1582 = scalar_lea.vmem %s1, %s1581
    %v1583 = vld [vmem:[%s1582] sm:$0x1]
    %v1584 = vadd.f32 %v1579, %v1583
    %vm1585 = vcmp.eq.s32.totalorder %v25, 59
    %1587 = vset.pattern.permute.xlu0 0
    %1588 = vperm.xlu0 %1587, %v1584
    %v1589 = vpop.permute.xlu0 %1588
    %v1591 = vsel %vm1585, %v1589, %v1565
    %s1592 = sadd.s32 %s23, 240
    %s1593 = sld [smem:[#allocation3 + %s1592]]
    %s1594 = scalar_lea.vmem %s1, %s1593
    %v1595 = vld [vmem:[%s1594] sm:$0x1]
    %s1596 = sadd.s32 %s23, 241
    %s1597 = sld [smem:[#allocation3 + %s1596]]
    %s1598 = scalar_lea.vmem %s1, %s1597
    %v1599 = vld [vmem:[%s1598] sm:$0x1]
    %v1600 = vadd.f32 %v1595, %v1599
    %s1601 = sadd.s32 %s23, 242
    %s1602 = sld [smem:[#allocation3 + %s1601]]
    %s1603 = scalar_lea.vmem %s1, %s1602
    %v1604 = vld [vmem:[%s1603] sm:$0x1]
    %v1605 = vadd.f32 %v1600, %v1604
    %s1606 = sadd.s32 %s23, 243
    %s1607 = sld [smem:[#allocation3 + %s1606]]
    %s1608 = scalar_lea.vmem %s1, %s1607
    %v1609 = vld [vmem:[%s1608] sm:$0x1]
    %v1610 = vadd.f32 %v1605, %v1609
    %vm1611 = vcmp.eq.s32.totalorder %v25, 60
    %1613 = vset.pattern.permute.xlu0 0
    %1614 = vperm.xlu0 %1613, %v1610
    %v1615 = vpop.permute.xlu0 %1614
    %v1617 = vsel %vm1611, %v1615, %v1591
    %s1618 = sadd.s32 %s23, 244
    %s1619 = sld [smem:[#allocation3 + %s1618]]
    %s1620 = scalar_lea.vmem %s1, %s1619
    %v1621 = vld [vmem:[%s1620] sm:$0x1]
    %s1622 = sadd.s32 %s23, 245
    %s1623 = sld [smem:[#allocation3 + %s1622]]
    %s1624 = scalar_lea.vmem %s1, %s1623
    %v1625 = vld [vmem:[%s1624] sm:$0x1]
    %v1626 = vadd.f32 %v1621, %v1625
    %s1627 = sadd.s32 %s23, 246
    %s1628 = sld [smem:[#allocation3 + %s1627]]
    %s1629 = scalar_lea.vmem %s1, %s1628
    %v1630 = vld [vmem:[%s1629] sm:$0x1]
    %v1631 = vadd.f32 %v1626, %v1630
    %s1632 = sadd.s32 %s23, 247
    %s1633 = sld [smem:[#allocation3 + %s1632]]
    %s1634 = scalar_lea.vmem %s1, %s1633
    %v1635 = vld [vmem:[%s1634] sm:$0x1]
    %v1636 = vadd.f32 %v1631, %v1635
    %vm1637 = vcmp.eq.s32.totalorder %v25, 61
    %1639 = vset.pattern.permute.xlu0 0
    %1640 = vperm.xlu0 %1639, %v1636
    %v1641 = vpop.permute.xlu0 %1640
    %v1643 = vsel %vm1637, %v1641, %v1617
    %s1644 = sadd.s32 %s23, 248
    %s1645 = sld [smem:[#allocation3 + %s1644]]
    %s1646 = scalar_lea.vmem %s1, %s1645
    %v1647 = vld [vmem:[%s1646] sm:$0x1]
    %s1648 = sadd.s32 %s23, 249
    %s1649 = sld [smem:[#allocation3 + %s1648]]
    %s1650 = scalar_lea.vmem %s1, %s1649
    %v1651 = vld [vmem:[%s1650] sm:$0x1]
    %v1652 = vadd.f32 %v1647, %v1651
    %s1653 = sadd.s32 %s23, 250
    %s1654 = sld [smem:[#allocation3 + %s1653]]
    %s1655 = scalar_lea.vmem %s1, %s1654
    %v1656 = vld [vmem:[%s1655] sm:$0x1]
    %v1657 = vadd.f32 %v1652, %v1656
    %s1658 = sadd.s32 %s23, 251
    %s1659 = sld [smem:[#allocation3 + %s1658]]
    %s1660 = scalar_lea.vmem %s1, %s1659
    %v1661 = vld [vmem:[%s1660] sm:$0x1]
    %v1662 = vadd.f32 %v1657, %v1661
    %vm1663 = vcmp.eq.s32.totalorder %v25, 62
    %1665 = vset.pattern.permute.xlu0 0
    %1666 = vperm.xlu0 %1665, %v1662
    %v1667 = vpop.permute.xlu0 %1666
    %v1669 = vsel %vm1663, %v1667, %v1643
    %s1670 = sadd.s32 %s23, 252
    %s1671 = sld [smem:[#allocation3 + %s1670]]
    %s1672 = scalar_lea.vmem %s1, %s1671
    %v1673 = vld [vmem:[%s1672] sm:$0x1]
    %s1674 = sadd.s32 %s23, 253
    %s1675 = sld [smem:[#allocation3 + %s1674]]
    %s1676 = scalar_lea.vmem %s1, %s1675
    %v1677 = vld [vmem:[%s1676] sm:$0x1]
    %v1678 = vadd.f32 %v1673, %v1677
    %s1679 = sadd.s32 %s23, 254
    %s1680 = sld [smem:[#allocation3 + %s1679]]
    %s1681 = scalar_lea.vmem %s1, %s1680
    %v1682 = vld [vmem:[%s1681] sm:$0x1]
    %v1683 = vadd.f32 %v1678, %v1682
    %s1684 = sadd.s32 %s23, 255
    %s1685 = sld [smem:[#allocation3 + %s1684]]
    %s1686 = scalar_lea.vmem %s1, %s1685
    %v1687 = vld [vmem:[%s1686] sm:$0x1]
    %v1688 = vadd.f32 %v1683, %v1687
    %vm1689 = vcmp.eq.s32.totalorder %v25, 63
    %1691 = vset.pattern.permute.xlu0 0
    %1692 = vperm.xlu0 %1691, %v1688
    %v1693 = vpop.permute.xlu0 %1692
    %v1695 = vsel %vm1689, %v1693, %v1669
    %s1696 = sadd.s32 %s23, 256
    %s1697 = sld [smem:[#allocation3 + %s1696]]
    %s1698 = scalar_lea.vmem %s1, %s1697
    %v1699 = vld [vmem:[%s1698] sm:$0x1]
    %s1700 = sadd.s32 %s23, 257
    %s1701 = sld [smem:[#allocation3 + %s1700]]
    %s1702 = scalar_lea.vmem %s1, %s1701
    %v1703 = vld [vmem:[%s1702] sm:$0x1]
    %v1704 = vadd.f32 %v1699, %v1703
    %s1705 = sadd.s32 %s23, 258
    %s1706 = sld [smem:[#allocation3 + %s1705]]
    %s1707 = scalar_lea.vmem %s1, %s1706
    %v1708 = vld [vmem:[%s1707] sm:$0x1]
    %v1709 = vadd.f32 %v1704, %v1708
    %s1710 = sadd.s32 %s23, 259
    %s1711 = sld [smem:[#allocation3 + %s1710]]
    %s1712 = scalar_lea.vmem %s1, %s1711
    %v1713 = vld [vmem:[%s1712] sm:$0x1]
    %v1714 = vadd.f32 %v1709, %v1713
    %vm1715 = vcmp.eq.s32.totalorder %v25, 64
    %1717 = vset.pattern.permute.xlu0 0
    %1718 = vperm.xlu0 %1717, %v1714
    %v1719 = vpop.permute.xlu0 %1718
    %v1721 = vsel %vm1715, %v1719, 0.0
    %s1722 = sadd.s32 %s23, 260
    %s1723 = sld [smem:[#allocation3 + %s1722]]
    %s1724 = scalar_lea.vmem %s1, %s1723
    %v1725 = vld [vmem:[%s1724] sm:$0x1]
    %s1726 = sadd.s32 %s23, 261
    %s1727 = sld [smem:[#allocation3 + %s1726]]
    %s1728 = scalar_lea.vmem %s1, %s1727
    %v1729 = vld [vmem:[%s1728] sm:$0x1]
    %v1730 = vadd.f32 %v1725, %v1729
    %s1731 = sadd.s32 %s23, 262
    %s1732 = sld [smem:[#allocation3 + %s1731]]
    %s1733 = scalar_lea.vmem %s1, %s1732
    %v1734 = vld [vmem:[%s1733] sm:$0x1]
    %v1735 = vadd.f32 %v1730, %v1734
    %s1736 = sadd.s32 %s23, 263
    %s1737 = sld [smem:[#allocation3 + %s1736]]
    %s1738 = scalar_lea.vmem %s1, %s1737
    %v1739 = vld [vmem:[%s1738] sm:$0x1]
    %v1740 = vadd.f32 %v1735, %v1739
    %vm1741 = vcmp.eq.s32.totalorder %v25, 65
    %1743 = vset.pattern.permute.xlu0 0
    %1744 = vperm.xlu0 %1743, %v1740
    %v1745 = vpop.permute.xlu0 %1744
    %v1747 = vsel %vm1741, %v1745, %v1721
    %s1748 = sadd.s32 %s23, 264
    %s1749 = sld [smem:[#allocation3 + %s1748]]
    %s1750 = scalar_lea.vmem %s1, %s1749
    %v1751 = vld [vmem:[%s1750] sm:$0x1]
    %s1752 = sadd.s32 %s23, 265
    %s1753 = sld [smem:[#allocation3 + %s1752]]
    %s1754 = scalar_lea.vmem %s1, %s1753
    %v1755 = vld [vmem:[%s1754] sm:$0x1]
    %v1756 = vadd.f32 %v1751, %v1755
    %s1757 = sadd.s32 %s23, 266
    %s1758 = sld [smem:[#allocation3 + %s1757]]
    %s1759 = scalar_lea.vmem %s1, %s1758
    %v1760 = vld [vmem:[%s1759] sm:$0x1]
    %v1761 = vadd.f32 %v1756, %v1760
    %s1762 = sadd.s32 %s23, 267
    %s1763 = sld [smem:[#allocation3 + %s1762]]
    %s1764 = scalar_lea.vmem %s1, %s1763
    %v1765 = vld [vmem:[%s1764] sm:$0x1]
    %v1766 = vadd.f32 %v1761, %v1765
    %vm1767 = vcmp.eq.s32.totalorder %v25, 66
    %1769 = vset.pattern.permute.xlu0 0
    %1770 = vperm.xlu0 %1769, %v1766
    %v1771 = vpop.permute.xlu0 %1770
    %v1773 = vsel %vm1767, %v1771, %v1747
    %s1774 = sadd.s32 %s23, 268
    %s1775 = sld [smem:[#allocation3 + %s1774]]
    %s1776 = scalar_lea.vmem %s1, %s1775
    %v1777 = vld [vmem:[%s1776] sm:$0x1]
    %s1778 = sadd.s32 %s23, 269
    %s1779 = sld [smem:[#allocation3 + %s1778]]
    %s1780 = scalar_lea.vmem %s1, %s1779
    %v1781 = vld [vmem:[%s1780] sm:$0x1]
    %v1782 = vadd.f32 %v1777, %v1781
    %s1783 = sadd.s32 %s23, 270
    %s1784 = sld [smem:[#allocation3 + %s1783]]
    %s1785 = scalar_lea.vmem %s1, %s1784
    %v1786 = vld [vmem:[%s1785] sm:$0x1]
    %v1787 = vadd.f32 %v1782, %v1786
    %s1788 = sadd.s32 %s23, 271
    %s1789 = sld [smem:[#allocation3 + %s1788]]
    %s1790 = scalar_lea.vmem %s1, %s1789
    %v1791 = vld [vmem:[%s1790] sm:$0x1]
    %v1792 = vadd.f32 %v1787, %v1791
    %vm1793 = vcmp.eq.s32.totalorder %v25, 67
    %1795 = vset.pattern.permute.xlu0 0
    %1796 = vperm.xlu0 %1795, %v1792
    %v1797 = vpop.permute.xlu0 %1796
    %v1799 = vsel %vm1793, %v1797, %v1773
    %s1800 = sadd.s32 %s23, 272
    %s1801 = sld [smem:[#allocation3 + %s1800]]
    %s1802 = scalar_lea.vmem %s1, %s1801
    %v1803 = vld [vmem:[%s1802] sm:$0x1]
    %s1804 = sadd.s32 %s23, 273
    %s1805 = sld [smem:[#allocation3 + %s1804]]
    %s1806 = scalar_lea.vmem %s1, %s1805
    %v1807 = vld [vmem:[%s1806] sm:$0x1]
    %v1808 = vadd.f32 %v1803, %v1807
    %s1809 = sadd.s32 %s23, 274
    %s1810 = sld [smem:[#allocation3 + %s1809]]
    %s1811 = scalar_lea.vmem %s1, %s1810
    %v1812 = vld [vmem:[%s1811] sm:$0x1]
    %v1813 = vadd.f32 %v1808, %v1812
    %s1814 = sadd.s32 %s23, 275
    %s1815 = sld [smem:[#allocation3 + %s1814]]
    %s1816 = scalar_lea.vmem %s1, %s1815
    %v1817 = vld [vmem:[%s1816] sm:$0x1]
    %v1818 = vadd.f32 %v1813, %v1817
    %vm1819 = vcmp.eq.s32.totalorder %v25, 68
    %1821 = vset.pattern.permute.xlu0 0
    %1822 = vperm.xlu0 %1821, %v1818
    %v1823 = vpop.permute.xlu0 %1822
    %v1825 = vsel %vm1819, %v1823, %v1799
    %s1826 = sadd.s32 %s23, 276
    %s1827 = sld [smem:[#allocation3 + %s1826]]
    %s1828 = scalar_lea.vmem %s1, %s1827
    %v1829 = vld [vmem:[%s1828] sm:$0x1]
    %s1830 = sadd.s32 %s23, 277
    %s1831 = sld [smem:[#allocation3 + %s1830]]
    %s1832 = scalar_lea.vmem %s1, %s1831
    %v1833 = vld [vmem:[%s1832] sm:$0x1]
    %v1834 = vadd.f32 %v1829, %v1833
    %s1835 = sadd.s32 %s23, 278
    %s1836 = sld [smem:[#allocation3 + %s1835]]
    %s1837 = scalar_lea.vmem %s1, %s1836
    %v1838 = vld [vmem:[%s1837] sm:$0x1]
    %v1839 = vadd.f32 %v1834, %v1838
    %s1840 = sadd.s32 %s23, 279
    %s1841 = sld [smem:[#allocation3 + %s1840]]
    %s1842 = scalar_lea.vmem %s1, %s1841
    %v1843 = vld [vmem:[%s1842] sm:$0x1]
    %v1844 = vadd.f32 %v1839, %v1843
    %vm1845 = vcmp.eq.s32.totalorder %v25, 69
    %1847 = vset.pattern.permute.xlu0 0
    %1848 = vperm.xlu0 %1847, %v1844
    %v1849 = vpop.permute.xlu0 %1848
    %v1851 = vsel %vm1845, %v1849, %v1825
    %s1852 = sadd.s32 %s23, 280
    %s1853 = sld [smem:[#allocation3 + %s1852]]
    %s1854 = scalar_lea.vmem %s1, %s1853
    %v1855 = vld [vmem:[%s1854] sm:$0x1]
    %s1856 = sadd.s32 %s23, 281
    %s1857 = sld [smem:[#allocation3 + %s1856]]
    %s1858 = scalar_lea.vmem %s1, %s1857
    %v1859 = vld [vmem:[%s1858] sm:$0x1]
    %v1860 = vadd.f32 %v1855, %v1859
    %s1861 = sadd.s32 %s23, 282
    %s1862 = sld [smem:[#allocation3 + %s1861]]
    %s1863 = scalar_lea.vmem %s1, %s1862
    %v1864 = vld [vmem:[%s1863] sm:$0x1]
    %v1865 = vadd.f32 %v1860, %v1864
    %s1866 = sadd.s32 %s23, 283
    %s1867 = sld [smem:[#allocation3 + %s1866]]
    %s1868 = scalar_lea.vmem %s1, %s1867
    %v1869 = vld [vmem:[%s1868] sm:$0x1]
    %v1870 = vadd.f32 %v1865, %v1869
    %vm1871 = vcmp.eq.s32.totalorder %v25, 70
    %1873 = vset.pattern.permute.xlu0 0
    %1874 = vperm.xlu0 %1873, %v1870
    %v1875 = vpop.permute.xlu0 %1874
    %v1877 = vsel %vm1871, %v1875, %v1851
    %s1878 = sadd.s32 %s23, 284
    %s1879 = sld [smem:[#allocation3 + %s1878]]
    %s1880 = scalar_lea.vmem %s1, %s1879
    %v1881 = vld [vmem:[%s1880] sm:$0x1]
    %s1882 = sadd.s32 %s23, 285
    %s1883 = sld [smem:[#allocation3 + %s1882]]
    %s1884 = scalar_lea.vmem %s1, %s1883
    %v1885 = vld [vmem:[%s1884] sm:$0x1]
    %v1886 = vadd.f32 %v1881, %v1885
    %s1887 = sadd.s32 %s23, 286
    %s1888 = sld [smem:[#allocation3 + %s1887]]
    %s1889 = scalar_lea.vmem %s1, %s1888
    %v1890 = vld [vmem:[%s1889] sm:$0x1]
    %v1891 = vadd.f32 %v1886, %v1890
    %s1892 = sadd.s32 %s23, 287
    %s1893 = sld [smem:[#allocation3 + %s1892]]
    %s1894 = scalar_lea.vmem %s1, %s1893
    %v1895 = vld [vmem:[%s1894] sm:$0x1]
    %v1896 = vadd.f32 %v1891, %v1895
    %vm1897 = vcmp.eq.s32.totalorder %v25, 71
    %1899 = vset.pattern.permute.xlu0 0
    %1900 = vperm.xlu0 %1899, %v1896
    %v1901 = vpop.permute.xlu0 %1900
    %v1903 = vsel %vm1897, %v1901, %v1877
    %s1904 = sadd.s32 %s23, 288
    %s1905 = sld [smem:[#allocation3 + %s1904]]
    %s1906 = scalar_lea.vmem %s1, %s1905
    %v1907 = vld [vmem:[%s1906] sm:$0x1]
    %s1908 = sadd.s32 %s23, 289
    %s1909 = sld [smem:[#allocation3 + %s1908]]
    %s1910 = scalar_lea.vmem %s1, %s1909
    %v1911 = vld [vmem:[%s1910] sm:$0x1]
    %v1912 = vadd.f32 %v1907, %v1911
    %s1913 = sadd.s32 %s23, 290
    %s1914 = sld [smem:[#allocation3 + %s1913]]
    %s1915 = scalar_lea.vmem %s1, %s1914
    %v1916 = vld [vmem:[%s1915] sm:$0x1]
    %v1917 = vadd.f32 %v1912, %v1916
    %s1918 = sadd.s32 %s23, 291
    %s1919 = sld [smem:[#allocation3 + %s1918]]
    %s1920 = scalar_lea.vmem %s1, %s1919
    %v1921 = vld [vmem:[%s1920] sm:$0x1]
    %v1922 = vadd.f32 %v1917, %v1921
    %vm1923 = vcmp.eq.s32.totalorder %v25, 72
    %1925 = vset.pattern.permute.xlu0 0
    %1926 = vperm.xlu0 %1925, %v1922
    %v1927 = vpop.permute.xlu0 %1926
    %v1929 = vsel %vm1923, %v1927, 0.0
    %s1930 = sadd.s32 %s23, 292
    %s1931 = sld [smem:[#allocation3 + %s1930]]
    %s1932 = scalar_lea.vmem %s1, %s1931
    %v1933 = vld [vmem:[%s1932] sm:$0x1]
    %s1934 = sadd.s32 %s23, 293
    %s1935 = sld [smem:[#allocation3 + %s1934]]
    %s1936 = scalar_lea.vmem %s1, %s1935
    %v1937 = vld [vmem:[%s1936] sm:$0x1]
    %v1938 = vadd.f32 %v1933, %v1937
    %s1939 = sadd.s32 %s23, 294
    %s1940 = sld [smem:[#allocation3 + %s1939]]
    %s1941 = scalar_lea.vmem %s1, %s1940
    %v1942 = vld [vmem:[%s1941] sm:$0x1]
    %v1943 = vadd.f32 %v1938, %v1942
    %s1944 = sadd.s32 %s23, 295
    %s1945 = sld [smem:[#allocation3 + %s1944]]
    %s1946 = scalar_lea.vmem %s1, %s1945
    %v1947 = vld [vmem:[%s1946] sm:$0x1]
    %v1948 = vadd.f32 %v1943, %v1947
    %vm1949 = vcmp.eq.s32.totalorder %v25, 73
    %1951 = vset.pattern.permute.xlu0 0
    %1952 = vperm.xlu0 %1951, %v1948
    %v1953 = vpop.permute.xlu0 %1952
    %v1955 = vsel %vm1949, %v1953, %v1929
    %s1956 = sadd.s32 %s23, 296
    %s1957 = sld [smem:[#allocation3 + %s1956]]
    %s1958 = scalar_lea.vmem %s1, %s1957
    %v1959 = vld [vmem:[%s1958] sm:$0x1]
    %s1960 = sadd.s32 %s23, 297
    %s1961 = sld [smem:[#allocation3 + %s1960]]
    %s1962 = scalar_lea.vmem %s1, %s1961
    %v1963 = vld [vmem:[%s1962] sm:$0x1]
    %v1964 = vadd.f32 %v1959, %v1963
    %s1965 = sadd.s32 %s23, 298
    %s1966 = sld [smem:[#allocation3 + %s1965]]
    %s1967 = scalar_lea.vmem %s1, %s1966
    %v1968 = vld [vmem:[%s1967] sm:$0x1]
    %v1969 = vadd.f32 %v1964, %v1968
    %s1970 = sadd.s32 %s23, 299
    %s1971 = sld [smem:[#allocation3 + %s1970]]
    %s1972 = scalar_lea.vmem %s1, %s1971
    %v1973 = vld [vmem:[%s1972] sm:$0x1]
    %v1974 = vadd.f32 %v1969, %v1973
    %vm1975 = vcmp.eq.s32.totalorder %v25, 74
    %1977 = vset.pattern.permute.xlu0 0
    %1978 = vperm.xlu0 %1977, %v1974
    %v1979 = vpop.permute.xlu0 %1978
    %v1981 = vsel %vm1975, %v1979, %v1955
    %s1982 = sadd.s32 %s23, 300
    %s1983 = sld [smem:[#allocation3 + %s1982]]
    %s1984 = scalar_lea.vmem %s1, %s1983
    %v1985 = vld [vmem:[%s1984] sm:$0x1]
    %s1986 = sadd.s32 %s23, 301
    %s1987 = sld [smem:[#allocation3 + %s1986]]
    %s1988 = scalar_lea.vmem %s1, %s1987
    %v1989 = vld [vmem:[%s1988] sm:$0x1]
    %v1990 = vadd.f32 %v1985, %v1989
    %s1991 = sadd.s32 %s23, 302
    %s1992 = sld [smem:[#allocation3 + %s1991]]
    %s1993 = scalar_lea.vmem %s1, %s1992
    %v1994 = vld [vmem:[%s1993] sm:$0x1]
    %v1995 = vadd.f32 %v1990, %v1994
    %s1996 = sadd.s32 %s23, 303
    %s1997 = sld [smem:[#allocation3 + %s1996]]
    %s1998 = scalar_lea.vmem %s1, %s1997
    %v1999 = vld [vmem:[%s1998] sm:$0x1]
    %v2000 = vadd.f32 %v1995, %v1999
    %vm2001 = vcmp.eq.s32.totalorder %v25, 75
    %2003 = vset.pattern.permute.xlu0 0
    %2004 = vperm.xlu0 %2003, %v2000
    %v2005 = vpop.permute.xlu0 %2004
    %v2007 = vsel %vm2001, %v2005, %v1981
    %s2008 = sadd.s32 %s23, 304
    %s2009 = sld [smem:[#allocation3 + %s2008]]
    %s2010 = scalar_lea.vmem %s1, %s2009
    %v2011 = vld [vmem:[%s2010] sm:$0x1]
    %s2012 = sadd.s32 %s23, 305
    %s2013 = sld [smem:[#allocation3 + %s2012]]
    %s2014 = scalar_lea.vmem %s1, %s2013
    %v2015 = vld [vmem:[%s2014] sm:$0x1]
    %v2016 = vadd.f32 %v2011, %v2015
    %s2017 = sadd.s32 %s23, 306
    %s2018 = sld [smem:[#allocation3 + %s2017]]
    %s2019 = scalar_lea.vmem %s1, %s2018
    %v2020 = vld [vmem:[%s2019] sm:$0x1]
    %v2021 = vadd.f32 %v2016, %v2020
    %s2022 = sadd.s32 %s23, 307
    %s2023 = sld [smem:[#allocation3 + %s2022]]
    %s2024 = scalar_lea.vmem %s1, %s2023
    %v2025 = vld [vmem:[%s2024] sm:$0x1]
    %v2026 = vadd.f32 %v2021, %v2025
    %vm2027 = vcmp.eq.s32.totalorder %v25, 76
    %2029 = vset.pattern.permute.xlu0 0
    %2030 = vperm.xlu0 %2029, %v2026
    %v2031 = vpop.permute.xlu0 %2030
    %v2033 = vsel %vm2027, %v2031, %v2007
    %s2034 = sadd.s32 %s23, 308
    %s2035 = sld [smem:[#allocation3 + %s2034]]
    %s2036 = scalar_lea.vmem %s1, %s2035
    %v2037 = vld [vmem:[%s2036] sm:$0x1]
    %s2038 = sadd.s32 %s23, 309
    %s2039 = sld [smem:[#allocation3 + %s2038]]
    %s2040 = scalar_lea.vmem %s1, %s2039
    %v2041 = vld [vmem:[%s2040] sm:$0x1]
    %v2042 = vadd.f32 %v2037, %v2041
    %s2043 = sadd.s32 %s23, 310
    %s2044 = sld [smem:[#allocation3 + %s2043]]
    %s2045 = scalar_lea.vmem %s1, %s2044
    %v2046 = vld [vmem:[%s2045] sm:$0x1]
    %v2047 = vadd.f32 %v2042, %v2046
    %s2048 = sadd.s32 %s23, 311
    %s2049 = sld [smem:[#allocation3 + %s2048]]
    %s2050 = scalar_lea.vmem %s1, %s2049
    %v2051 = vld [vmem:[%s2050] sm:$0x1]
    %v2052 = vadd.f32 %v2047, %v2051
    %vm2053 = vcmp.eq.s32.totalorder %v25, 77
    %2055 = vset.pattern.permute.xlu0 0
    %2056 = vperm.xlu0 %2055, %v2052
    %v2057 = vpop.permute.xlu0 %2056
    %v2059 = vsel %vm2053, %v2057, %v2033
    %s2060 = sadd.s32 %s23, 312
    %s2061 = sld [smem:[#allocation3 + %s2060]]
    %s2062 = scalar_lea.vmem %s1, %s2061
    %v2063 = vld [vmem:[%s2062] sm:$0x1]
    %s2064 = sadd.s32 %s23, 313
    %s2065 = sld [smem:[#allocation3 + %s2064]]
    %s2066 = scalar_lea.vmem %s1, %s2065
    %v2067 = vld [vmem:[%s2066] sm:$0x1]
    %v2068 = vadd.f32 %v2063, %v2067
    %s2069 = sadd.s32 %s23, 314
    %s2070 = sld [smem:[#allocation3 + %s2069]]
    %s2071 = scalar_lea.vmem %s1, %s2070
    %v2072 = vld [vmem:[%s2071] sm:$0x1]
    %v2073 = vadd.f32 %v2068, %v2072
    %s2074 = sadd.s32 %s23, 315
    %s2075 = sld [smem:[#allocation3 + %s2074]]
    %s2076 = scalar_lea.vmem %s1, %s2075
    %v2077 = vld [vmem:[%s2076] sm:$0x1]
    %v2078 = vadd.f32 %v2073, %v2077
    %vm2079 = vcmp.eq.s32.totalorder %v25, 78
    %2081 = vset.pattern.permute.xlu0 0
    %2082 = vperm.xlu0 %2081, %v2078
    %v2083 = vpop.permute.xlu0 %2082
    %v2085 = vsel %vm2079, %v2083, %v2059
    %s2086 = sadd.s32 %s23, 316
    %s2087 = sld [smem:[#allocation3 + %s2086]]
    %s2088 = scalar_lea.vmem %s1, %s2087
    %v2089 = vld [vmem:[%s2088] sm:$0x1]
    %s2090 = sadd.s32 %s23, 317
    %s2091 = sld [smem:[#allocation3 + %s2090]]
    %s2092 = scalar_lea.vmem %s1, %s2091
    %v2093 = vld [vmem:[%s2092] sm:$0x1]
    %v2094 = vadd.f32 %v2089, %v2093
    %s2095 = sadd.s32 %s23, 318
    %s2096 = sld [smem:[#allocation3 + %s2095]]
    %s2097 = scalar_lea.vmem %s1, %s2096
    %v2098 = vld [vmem:[%s2097] sm:$0x1]
    %v2099 = vadd.f32 %v2094, %v2098
    %s2100 = sadd.s32 %s23, 319
    %s2101 = sld [smem:[#allocation3 + %s2100]]
    %s2102 = scalar_lea.vmem %s1, %s2101
    %v2103 = vld [vmem:[%s2102] sm:$0x1]
    %v2104 = vadd.f32 %v2099, %v2103
    %vm2105 = vcmp.eq.s32.totalorder %v25, 79
    %2107 = vset.pattern.permute.xlu0 0
    %2108 = vperm.xlu0 %2107, %v2104
    %v2109 = vpop.permute.xlu0 %2108
    %v2111 = vsel %vm2105, %v2109, %v2085
    %s2112 = sadd.s32 %s23, 320
    %s2113 = sld [smem:[#allocation3 + %s2112]]
    %s2114 = scalar_lea.vmem %s1, %s2113
    %v2115 = vld [vmem:[%s2114] sm:$0x1]
    %s2116 = sadd.s32 %s23, 321
    %s2117 = sld [smem:[#allocation3 + %s2116]]
    %s2118 = scalar_lea.vmem %s1, %s2117
    %v2119 = vld [vmem:[%s2118] sm:$0x1]
    %v2120 = vadd.f32 %v2115, %v2119
    %s2121 = sadd.s32 %s23, 322
    %s2122 = sld [smem:[#allocation3 + %s2121]]
    %s2123 = scalar_lea.vmem %s1, %s2122
    %v2124 = vld [vmem:[%s2123] sm:$0x1]
    %v2125 = vadd.f32 %v2120, %v2124
    %s2126 = sadd.s32 %s23, 323
    %s2127 = sld [smem:[#allocation3 + %s2126]]
    %s2128 = scalar_lea.vmem %s1, %s2127
    %v2129 = vld [vmem:[%s2128] sm:$0x1]
    %v2130 = vadd.f32 %v2125, %v2129
    %vm2131 = vcmp.eq.s32.totalorder %v25, 80
    %2133 = vset.pattern.permute.xlu0 0
    %2134 = vperm.xlu0 %2133, %v2130
    %v2135 = vpop.permute.xlu0 %2134
    %v2137 = vsel %vm2131, %v2135, 0.0
    %s2138 = sadd.s32 %s23, 324
    %s2139 = sld [smem:[#allocation3 + %s2138]]
    %s2140 = scalar_lea.vmem %s1, %s2139
    %v2141 = vld [vmem:[%s2140] sm:$0x1]
    %s2142 = sadd.s32 %s23, 325
    %s2143 = sld [smem:[#allocation3 + %s2142]]
    %s2144 = scalar_lea.vmem %s1, %s2143
    %v2145 = vld [vmem:[%s2144] sm:$0x1]
    %v2146 = vadd.f32 %v2141, %v2145
    %s2147 = sadd.s32 %s23, 326
    %s2148 = sld [smem:[#allocation3 + %s2147]]
    %s2149 = scalar_lea.vmem %s1, %s2148
    %v2150 = vld [vmem:[%s2149] sm:$0x1]
    %v2151 = vadd.f32 %v2146, %v2150
    %s2152 = sadd.s32 %s23, 327
    %s2153 = sld [smem:[#allocation3 + %s2152]]
    %s2154 = scalar_lea.vmem %s1, %s2153
    %v2155 = vld [vmem:[%s2154] sm:$0x1]
    %v2156 = vadd.f32 %v2151, %v2155
    %vm2157 = vcmp.eq.s32.totalorder %v25, 81
    %2159 = vset.pattern.permute.xlu0 0
    %2160 = vperm.xlu0 %2159, %v2156
    %v2161 = vpop.permute.xlu0 %2160
    %v2163 = vsel %vm2157, %v2161, %v2137
    %s2164 = sadd.s32 %s23, 328
    %s2165 = sld [smem:[#allocation3 + %s2164]]
    %s2166 = scalar_lea.vmem %s1, %s2165
    %v2167 = vld [vmem:[%s2166] sm:$0x1]
    %s2168 = sadd.s32 %s23, 329
    %s2169 = sld [smem:[#allocation3 + %s2168]]
    %s2170 = scalar_lea.vmem %s1, %s2169
    %v2171 = vld [vmem:[%s2170] sm:$0x1]
    %v2172 = vadd.f32 %v2167, %v2171
    %s2173 = sadd.s32 %s23, 330
    %s2174 = sld [smem:[#allocation3 + %s2173]]
    %s2175 = scalar_lea.vmem %s1, %s2174
    %v2176 = vld [vmem:[%s2175] sm:$0x1]
    %v2177 = vadd.f32 %v2172, %v2176
    %s2178 = sadd.s32 %s23, 331
    %s2179 = sld [smem:[#allocation3 + %s2178]]
    %s2180 = scalar_lea.vmem %s1, %s2179
    %v2181 = vld [vmem:[%s2180] sm:$0x1]
    %v2182 = vadd.f32 %v2177, %v2181
    %vm2183 = vcmp.eq.s32.totalorder %v25, 82
    %2185 = vset.pattern.permute.xlu0 0
    %2186 = vperm.xlu0 %2185, %v2182
    %v2187 = vpop.permute.xlu0 %2186
    %v2189 = vsel %vm2183, %v2187, %v2163
    %s2190 = sadd.s32 %s23, 332
    %s2191 = sld [smem:[#allocation3 + %s2190]]
    %s2192 = scalar_lea.vmem %s1, %s2191
    %v2193 = vld [vmem:[%s2192] sm:$0x1]
    %s2194 = sadd.s32 %s23, 333
    %s2195 = sld [smem:[#allocation3 + %s2194]]
    %s2196 = scalar_lea.vmem %s1, %s2195
    %v2197 = vld [vmem:[%s2196] sm:$0x1]
    %v2198 = vadd.f32 %v2193, %v2197
    %s2199 = sadd.s32 %s23, 334
    %s2200 = sld [smem:[#allocation3 + %s2199]]
    %s2201 = scalar_lea.vmem %s1, %s2200
    %v2202 = vld [vmem:[%s2201] sm:$0x1]
    %v2203 = vadd.f32 %v2198, %v2202
    %s2204 = sadd.s32 %s23, 335
    %s2205 = sld [smem:[#allocation3 + %s2204]]
    %s2206 = scalar_lea.vmem %s1, %s2205
    %v2207 = vld [vmem:[%s2206] sm:$0x1]
    %v2208 = vadd.f32 %v2203, %v2207
    %vm2209 = vcmp.eq.s32.totalorder %v25, 83
    %2211 = vset.pattern.permute.xlu0 0
    %2212 = vperm.xlu0 %2211, %v2208
    %v2213 = vpop.permute.xlu0 %2212
    %v2215 = vsel %vm2209, %v2213, %v2189
    %s2216 = sadd.s32 %s23, 336
    %s2217 = sld [smem:[#allocation3 + %s2216]]
    %s2218 = scalar_lea.vmem %s1, %s2217
    %v2219 = vld [vmem:[%s2218] sm:$0x1]
    %s2220 = sadd.s32 %s23, 337
    %s2221 = sld [smem:[#allocation3 + %s2220]]
    %s2222 = scalar_lea.vmem %s1, %s2221
    %v2223 = vld [vmem:[%s2222] sm:$0x1]
    %v2224 = vadd.f32 %v2219, %v2223
    %s2225 = sadd.s32 %s23, 338
    %s2226 = sld [smem:[#allocation3 + %s2225]]
    %s2227 = scalar_lea.vmem %s1, %s2226
    %v2228 = vld [vmem:[%s2227] sm:$0x1]
    %v2229 = vadd.f32 %v2224, %v2228
    %s2230 = sadd.s32 %s23, 339
    %s2231 = sld [smem:[#allocation3 + %s2230]]
    %s2232 = scalar_lea.vmem %s1, %s2231
    %v2233 = vld [vmem:[%s2232] sm:$0x1]
    %v2234 = vadd.f32 %v2229, %v2233
    %vm2235 = vcmp.eq.s32.totalorder %v25, 84
    %2237 = vset.pattern.permute.xlu0 0
    %2238 = vperm.xlu0 %2237, %v2234
    %v2239 = vpop.permute.xlu0 %2238
    %v2241 = vsel %vm2235, %v2239, %v2215
    %s2242 = sadd.s32 %s23, 340
    %s2243 = sld [smem:[#allocation3 + %s2242]]
    %s2244 = scalar_lea.vmem %s1, %s2243
    %v2245 = vld [vmem:[%s2244] sm:$0x1]
    %s2246 = sadd.s32 %s23, 341
    %s2247 = sld [smem:[#allocation3 + %s2246]]
    %s2248 = scalar_lea.vmem %s1, %s2247
    %v2249 = vld [vmem:[%s2248] sm:$0x1]
    %v2250 = vadd.f32 %v2245, %v2249
    %s2251 = sadd.s32 %s23, 342
    %s2252 = sld [smem:[#allocation3 + %s2251]]
    %s2253 = scalar_lea.vmem %s1, %s2252
    %v2254 = vld [vmem:[%s2253] sm:$0x1]
    %v2255 = vadd.f32 %v2250, %v2254
    %s2256 = sadd.s32 %s23, 343
    %s2257 = sld [smem:[#allocation3 + %s2256]]
    %s2258 = scalar_lea.vmem %s1, %s2257
    %v2259 = vld [vmem:[%s2258] sm:$0x1]
    %v2260 = vadd.f32 %v2255, %v2259
    %vm2261 = vcmp.eq.s32.totalorder %v25, 85
    %2263 = vset.pattern.permute.xlu0 0
    %2264 = vperm.xlu0 %2263, %v2260
    %v2265 = vpop.permute.xlu0 %2264
    %v2267 = vsel %vm2261, %v2265, %v2241
    %s2268 = sadd.s32 %s23, 344
    %s2269 = sld [smem:[#allocation3 + %s2268]]
    %s2270 = scalar_lea.vmem %s1, %s2269
    %v2271 = vld [vmem:[%s2270] sm:$0x1]
    %s2272 = sadd.s32 %s23, 345
    %s2273 = sld [smem:[#allocation3 + %s2272]]
    %s2274 = scalar_lea.vmem %s1, %s2273
    %v2275 = vld [vmem:[%s2274] sm:$0x1]
    %v2276 = vadd.f32 %v2271, %v2275
    %s2277 = sadd.s32 %s23, 346
    %s2278 = sld [smem:[#allocation3 + %s2277]]
    %s2279 = scalar_lea.vmem %s1, %s2278
    %v2280 = vld [vmem:[%s2279] sm:$0x1]
    %v2281 = vadd.f32 %v2276, %v2280
    %s2282 = sadd.s32 %s23, 347
    %s2283 = sld [smem:[#allocation3 + %s2282]]
    %s2284 = scalar_lea.vmem %s1, %s2283
    %v2285 = vld [vmem:[%s2284] sm:$0x1]
    %v2286 = vadd.f32 %v2281, %v2285
    %vm2287 = vcmp.eq.s32.totalorder %v25, 86
    %2289 = vset.pattern.permute.xlu0 0
    %2290 = vperm.xlu0 %2289, %v2286
    %v2291 = vpop.permute.xlu0 %2290
    %v2293 = vsel %vm2287, %v2291, %v2267
    %s2294 = sadd.s32 %s23, 348
    %s2295 = sld [smem:[#allocation3 + %s2294]]
    %s2296 = scalar_lea.vmem %s1, %s2295
    %v2297 = vld [vmem:[%s2296] sm:$0x1]
    %s2298 = sadd.s32 %s23, 349
    %s2299 = sld [smem:[#allocation3 + %s2298]]
    %s2300 = scalar_lea.vmem %s1, %s2299
    %v2301 = vld [vmem:[%s2300] sm:$0x1]
    %v2302 = vadd.f32 %v2297, %v2301
    %s2303 = sadd.s32 %s23, 350
    %s2304 = sld [smem:[#allocation3 + %s2303]]
    %s2305 = scalar_lea.vmem %s1, %s2304
    %v2306 = vld [vmem:[%s2305] sm:$0x1]
    %v2307 = vadd.f32 %v2302, %v2306
    %s2308 = sadd.s32 %s23, 351
    %s2309 = sld [smem:[#allocation3 + %s2308]]
    %s2310 = scalar_lea.vmem %s1, %s2309
    %v2311 = vld [vmem:[%s2310] sm:$0x1]
    %v2312 = vadd.f32 %v2307, %v2311
    %vm2313 = vcmp.eq.s32.totalorder %v25, 87
    %2315 = vset.pattern.permute.xlu0 0
    %2316 = vperm.xlu0 %2315, %v2312
    %v2317 = vpop.permute.xlu0 %2316
    %v2319 = vsel %vm2313, %v2317, %v2293
    %s2320 = sadd.s32 %s23, 352
    %s2321 = sld [smem:[#allocation3 + %s2320]]
    %s2322 = scalar_lea.vmem %s1, %s2321
    %v2323 = vld [vmem:[%s2322] sm:$0x1]
    %s2324 = sadd.s32 %s23, 353
    %s2325 = sld [smem:[#allocation3 + %s2324]]
    %s2326 = scalar_lea.vmem %s1, %s2325
    %v2327 = vld [vmem:[%s2326] sm:$0x1]
    %v2328 = vadd.f32 %v2323, %v2327
    %s2329 = sadd.s32 %s23, 354
    %s2330 = sld [smem:[#allocation3 + %s2329]]
    %s2331 = scalar_lea.vmem %s1, %s2330
    %v2332 = vld [vmem:[%s2331] sm:$0x1]
    %v2333 = vadd.f32 %v2328, %v2332
    %s2334 = sadd.s32 %s23, 355
    %s2335 = sld [smem:[#allocation3 + %s2334]]
    %s2336 = scalar_lea.vmem %s1, %s2335
    %v2337 = vld [vmem:[%s2336] sm:$0x1]
    %v2338 = vadd.f32 %v2333, %v2337
    %vm2339 = vcmp.eq.s32.totalorder %v25, 88
    %2341 = vset.pattern.permute.xlu0 0
    %2342 = vperm.xlu0 %2341, %v2338
    %v2343 = vpop.permute.xlu0 %2342
    %v2345 = vsel %vm2339, %v2343, 0.0
    %s2346 = sadd.s32 %s23, 356
    %s2347 = sld [smem:[#allocation3 + %s2346]]
    %s2348 = scalar_lea.vmem %s1, %s2347
    %v2349 = vld [vmem:[%s2348] sm:$0x1]
    %s2350 = sadd.s32 %s23, 357
    %s2351 = sld [smem:[#allocation3 + %s2350]]
    %s2352 = scalar_lea.vmem %s1, %s2351
    %v2353 = vld [vmem:[%s2352] sm:$0x1]
    %v2354 = vadd.f32 %v2349, %v2353
    %s2355 = sadd.s32 %s23, 358
    %s2356 = sld [smem:[#allocation3 + %s2355]]
    %s2357 = scalar_lea.vmem %s1, %s2356
    %v2358 = vld [vmem:[%s2357] sm:$0x1]
    %v2359 = vadd.f32 %v2354, %v2358
    %s2360 = sadd.s32 %s23, 359
    %s2361 = sld [smem:[#allocation3 + %s2360]]
    %s2362 = scalar_lea.vmem %s1, %s2361
    %v2363 = vld [vmem:[%s2362] sm:$0x1]
    %v2364 = vadd.f32 %v2359, %v2363
    %vm2365 = vcmp.eq.s32.totalorder %v25, 89
    %2367 = vset.pattern.permute.xlu0 0
    %2368 = vperm.xlu0 %2367, %v2364
    %v2369 = vpop.permute.xlu0 %2368
    %v2371 = vsel %vm2365, %v2369, %v2345
    %s2372 = sadd.s32 %s23, 360
    %s2373 = sld [smem:[#allocation3 + %s2372]]
    %s2374 = scalar_lea.vmem %s1, %s2373
    %v2375 = vld [vmem:[%s2374] sm:$0x1]
    %s2376 = sadd.s32 %s23, 361
    %s2377 = sld [smem:[#allocation3 + %s2376]]
    %s2378 = scalar_lea.vmem %s1, %s2377
    %v2379 = vld [vmem:[%s2378] sm:$0x1]
    %v2380 = vadd.f32 %v2375, %v2379
    %s2381 = sadd.s32 %s23, 362
    %s2382 = sld [smem:[#allocation3 + %s2381]]
    %s2383 = scalar_lea.vmem %s1, %s2382
    %v2384 = vld [vmem:[%s2383] sm:$0x1]
    %v2385 = vadd.f32 %v2380, %v2384
    %s2386 = sadd.s32 %s23, 363
    %s2387 = sld [smem:[#allocation3 + %s2386]]
    %s2388 = scalar_lea.vmem %s1, %s2387
    %v2389 = vld [vmem:[%s2388] sm:$0x1]
    %v2390 = vadd.f32 %v2385, %v2389
    %vm2391 = vcmp.eq.s32.totalorder %v25, 90
    %2393 = vset.pattern.permute.xlu0 0
    %2394 = vperm.xlu0 %2393, %v2390
    %v2395 = vpop.permute.xlu0 %2394
    %v2397 = vsel %vm2391, %v2395, %v2371
    %s2398 = sadd.s32 %s23, 364
    %s2399 = sld [smem:[#allocation3 + %s2398]]
    %s2400 = scalar_lea.vmem %s1, %s2399
    %v2401 = vld [vmem:[%s2400] sm:$0x1]
    %s2402 = sadd.s32 %s23, 365
    %s2403 = sld [smem:[#allocation3 + %s2402]]
    %s2404 = scalar_lea.vmem %s1, %s2403
    %v2405 = vld [vmem:[%s2404] sm:$0x1]
    %v2406 = vadd.f32 %v2401, %v2405
    %s2407 = sadd.s32 %s23, 366
    %s2408 = sld [smem:[#allocation3 + %s2407]]
    %s2409 = scalar_lea.vmem %s1, %s2408
    %v2410 = vld [vmem:[%s2409] sm:$0x1]
    %v2411 = vadd.f32 %v2406, %v2410
    %s2412 = sadd.s32 %s23, 367
    %s2413 = sld [smem:[#allocation3 + %s2412]]
    %s2414 = scalar_lea.vmem %s1, %s2413
    %v2415 = vld [vmem:[%s2414] sm:$0x1]
    %v2416 = vadd.f32 %v2411, %v2415
    %vm2417 = vcmp.eq.s32.totalorder %v25, 91
    %2419 = vset.pattern.permute.xlu0 0
    %2420 = vperm.xlu0 %2419, %v2416
    %v2421 = vpop.permute.xlu0 %2420
    %v2423 = vsel %vm2417, %v2421, %v2397
    %s2424 = sadd.s32 %s23, 368
    %s2425 = sld [smem:[#allocation3 + %s2424]]
    %s2426 = scalar_lea.vmem %s1, %s2425
    %v2427 = vld [vmem:[%s2426] sm:$0x1]
    %s2428 = sadd.s32 %s23, 369
    %s2429 = sld [smem:[#allocation3 + %s2428]]
    %s2430 = scalar_lea.vmem %s1, %s2429
    %v2431 = vld [vmem:[%s2430] sm:$0x1]
    %v2432 = vadd.f32 %v2427, %v2431
    %s2433 = sadd.s32 %s23, 370
    %s2434 = sld [smem:[#allocation3 + %s2433]]
    %s2435 = scalar_lea.vmem %s1, %s2434
    %v2436 = vld [vmem:[%s2435] sm:$0x1]
    %v2437 = vadd.f32 %v2432, %v2436
    %s2438 = sadd.s32 %s23, 371
    %s2439 = sld [smem:[#allocation3 + %s2438]]
    %s2440 = scalar_lea.vmem %s1, %s2439
    %v2441 = vld [vmem:[%s2440] sm:$0x1]
    %v2442 = vadd.f32 %v2437, %v2441
    %vm2443 = vcmp.eq.s32.totalorder %v25, 92
    %2445 = vset.pattern.permute.xlu0 0
    %2446 = vperm.xlu0 %2445, %v2442
    %v2447 = vpop.permute.xlu0 %2446
    %v2449 = vsel %vm2443, %v2447, %v2423
    %s2450 = sadd.s32 %s23, 372
    %s2451 = sld [smem:[#allocation3 + %s2450]]
    %s2452 = scalar_lea.vmem %s1, %s2451
    %v2453 = vld [vmem:[%s2452] sm:$0x1]
    %s2454 = sadd.s32 %s23, 373
    %s2455 = sld [smem:[#allocation3 + %s2454]]
    %s2456 = scalar_lea.vmem %s1, %s2455
    %v2457 = vld [vmem:[%s2456] sm:$0x1]
    %v2458 = vadd.f32 %v2453, %v2457
    %s2459 = sadd.s32 %s23, 374
    %s2460 = sld [smem:[#allocation3 + %s2459]]
    %s2461 = scalar_lea.vmem %s1, %s2460
    %v2462 = vld [vmem:[%s2461] sm:$0x1]
    %v2463 = vadd.f32 %v2458, %v2462
    %s2464 = sadd.s32 %s23, 375
    %s2465 = sld [smem:[#allocation3 + %s2464]]
    %s2466 = scalar_lea.vmem %s1, %s2465
    %v2467 = vld [vmem:[%s2466] sm:$0x1]
    %v2468 = vadd.f32 %v2463, %v2467
    %vm2469 = vcmp.eq.s32.totalorder %v25, 93
    %2471 = vset.pattern.permute.xlu0 0
    %2472 = vperm.xlu0 %2471, %v2468
    %v2473 = vpop.permute.xlu0 %2472
    %v2475 = vsel %vm2469, %v2473, %v2449
    %s2476 = sadd.s32 %s23, 376
    %s2477 = sld [smem:[#allocation3 + %s2476]]
    %s2478 = scalar_lea.vmem %s1, %s2477
    %v2479 = vld [vmem:[%s2478] sm:$0x1]
    %s2480 = sadd.s32 %s23, 377
    %s2481 = sld [smem:[#allocation3 + %s2480]]
    %s2482 = scalar_lea.vmem %s1, %s2481
    %v2483 = vld [vmem:[%s2482] sm:$0x1]
    %v2484 = vadd.f32 %v2479, %v2483
    %s2485 = sadd.s32 %s23, 378
    %s2486 = sld [smem:[#allocation3 + %s2485]]
    %s2487 = scalar_lea.vmem %s1, %s2486
    %v2488 = vld [vmem:[%s2487] sm:$0x1]
    %v2489 = vadd.f32 %v2484, %v2488
    %s2490 = sadd.s32 %s23, 379
    %s2491 = sld [smem:[#allocation3 + %s2490]]
    %s2492 = scalar_lea.vmem %s1, %s2491
    %v2493 = vld [vmem:[%s2492] sm:$0x1]
    %v2494 = vadd.f32 %v2489, %v2493
    %vm2495 = vcmp.eq.s32.totalorder %v25, 94
    %2497 = vset.pattern.permute.xlu0 0
    %2498 = vperm.xlu0 %2497, %v2494
    %v2499 = vpop.permute.xlu0 %2498
    %v2501 = vsel %vm2495, %v2499, %v2475
    %s2502 = sadd.s32 %s23, 380
    %s2503 = sld [smem:[#allocation3 + %s2502]]
    %s2504 = scalar_lea.vmem %s1, %s2503
    %v2505 = vld [vmem:[%s2504] sm:$0x1]
    %s2506 = sadd.s32 %s23, 381
    %s2507 = sld [smem:[#allocation3 + %s2506]]
    %s2508 = scalar_lea.vmem %s1, %s2507
    %v2509 = vld [vmem:[%s2508] sm:$0x1]
    %v2510 = vadd.f32 %v2505, %v2509
    %s2511 = sadd.s32 %s23, 382
    %s2512 = sld [smem:[#allocation3 + %s2511]]
    %s2513 = scalar_lea.vmem %s1, %s2512
    %v2514 = vld [vmem:[%s2513] sm:$0x1]
    %v2515 = vadd.f32 %v2510, %v2514
    %s2516 = sadd.s32 %s23, 383
    %s2517 = sld [smem:[#allocation3 + %s2516]]
    %s2518 = scalar_lea.vmem %s1, %s2517
    %v2519 = vld [vmem:[%s2518] sm:$0x1]
    %v2520 = vadd.f32 %v2515, %v2519
    %vm2521 = vcmp.eq.s32.totalorder %v25, 95
    %2523 = vset.pattern.permute.xlu0 0
    %2524 = vperm.xlu0 %2523, %v2520
    %v2525 = vpop.permute.xlu0 %2524
    %v2527 = vsel %vm2521, %v2525, %v2501
    %s2528 = sadd.s32 %s23, 384
    %s2529 = sld [smem:[#allocation3 + %s2528]]
    %s2530 = scalar_lea.vmem %s1, %s2529
    %v2531 = vld [vmem:[%s2530] sm:$0x1]
    %s2532 = sadd.s32 %s23, 385
    %s2533 = sld [smem:[#allocation3 + %s2532]]
    %s2534 = scalar_lea.vmem %s1, %s2533
    %v2535 = vld [vmem:[%s2534] sm:$0x1]
    %v2536 = vadd.f32 %v2531, %v2535
    %s2537 = sadd.s32 %s23, 386
    %s2538 = sld [smem:[#allocation3 + %s2537]]
    %s2539 = scalar_lea.vmem %s1, %s2538
    %v2540 = vld [vmem:[%s2539] sm:$0x1]
    %v2541 = vadd.f32 %v2536, %v2540
    %s2542 = sadd.s32 %s23, 387
    %s2543 = sld [smem:[#allocation3 + %s2542]]
    %s2544 = scalar_lea.vmem %s1, %s2543
    %v2545 = vld [vmem:[%s2544] sm:$0x1]
    %v2546 = vadd.f32 %v2541, %v2545
    %vm2547 = vcmp.eq.s32.totalorder %v25, 96
    %2549 = vset.pattern.permute.xlu0 0
    %2550 = vperm.xlu0 %2549, %v2546
    %v2551 = vpop.permute.xlu0 %2550
    %v2553 = vsel %vm2547, %v2551, 0.0
    %s2554 = sadd.s32 %s23, 388
    %s2555 = sld [smem:[#allocation3 + %s2554]]
    %s2556 = scalar_lea.vmem %s1, %s2555
    %v2557 = vld [vmem:[%s2556] sm:$0x1]
    %s2558 = sadd.s32 %s23, 389
    %s2559 = sld [smem:[#allocation3 + %s2558]]
    %s2560 = scalar_lea.vmem %s1, %s2559
    %v2561 = vld [vmem:[%s2560] sm:$0x1]
    %v2562 = vadd.f32 %v2557, %v2561
    %s2563 = sadd.s32 %s23, 390
    %s2564 = sld [smem:[#allocation3 + %s2563]]
    %s2565 = scalar_lea.vmem %s1, %s2564
    %v2566 = vld [vmem:[%s2565] sm:$0x1]
    %v2567 = vadd.f32 %v2562, %v2566
    %s2568 = sadd.s32 %s23, 391
    %s2569 = sld [smem:[#allocation3 + %s2568]]
    %s2570 = scalar_lea.vmem %s1, %s2569
    %v2571 = vld [vmem:[%s2570] sm:$0x1]
    %v2572 = vadd.f32 %v2567, %v2571
    %vm2573 = vcmp.eq.s32.totalorder %v25, 97
    %2575 = vset.pattern.permute.xlu0 0
    %2576 = vperm.xlu0 %2575, %v2572
    %v2577 = vpop.permute.xlu0 %2576
    %v2579 = vsel %vm2573, %v2577, %v2553
    %s2580 = sadd.s32 %s23, 392
    %s2581 = sld [smem:[#allocation3 + %s2580]]
    %s2582 = scalar_lea.vmem %s1, %s2581
    %v2583 = vld [vmem:[%s2582] sm:$0x1]
    %s2584 = sadd.s32 %s23, 393
    %s2585 = sld [smem:[#allocation3 + %s2584]]
    %s2586 = scalar_lea.vmem %s1, %s2585
    %v2587 = vld [vmem:[%s2586] sm:$0x1]
    %v2588 = vadd.f32 %v2583, %v2587
    %s2589 = sadd.s32 %s23, 394
    %s2590 = sld [smem:[#allocation3 + %s2589]]
    %s2591 = scalar_lea.vmem %s1, %s2590
    %v2592 = vld [vmem:[%s2591] sm:$0x1]
    %v2593 = vadd.f32 %v2588, %v2592
    %s2594 = sadd.s32 %s23, 395
    %s2595 = sld [smem:[#allocation3 + %s2594]]
    %s2596 = scalar_lea.vmem %s1, %s2595
    %v2597 = vld [vmem:[%s2596] sm:$0x1]
    %v2598 = vadd.f32 %v2593, %v2597
    %vm2599 = vcmp.eq.s32.totalorder %v25, 98
    %2601 = vset.pattern.permute.xlu0 0
    %2602 = vperm.xlu0 %2601, %v2598
    %v2603 = vpop.permute.xlu0 %2602
    %v2605 = vsel %vm2599, %v2603, %v2579
    %s2606 = sadd.s32 %s23, 396
    %s2607 = sld [smem:[#allocation3 + %s2606]]
    %s2608 = scalar_lea.vmem %s1, %s2607
    %v2609 = vld [vmem:[%s2608] sm:$0x1]
    %s2610 = sadd.s32 %s23, 397
    %s2611 = sld [smem:[#allocation3 + %s2610]]
    %s2612 = scalar_lea.vmem %s1, %s2611
    %v2613 = vld [vmem:[%s2612] sm:$0x1]
    %v2614 = vadd.f32 %v2609, %v2613
    %s2615 = sadd.s32 %s23, 398
    %s2616 = sld [smem:[#allocation3 + %s2615]]
    %s2617 = scalar_lea.vmem %s1, %s2616
    %v2618 = vld [vmem:[%s2617] sm:$0x1]
    %v2619 = vadd.f32 %v2614, %v2618
    %s2620 = sadd.s32 %s23, 399
    %s2621 = sld [smem:[#allocation3 + %s2620]]
    %s2622 = scalar_lea.vmem %s1, %s2621
    %v2623 = vld [vmem:[%s2622] sm:$0x1]
    %v2624 = vadd.f32 %v2619, %v2623
    %vm2625 = vcmp.eq.s32.totalorder %v25, 99
    %2627 = vset.pattern.permute.xlu0 0
    %2628 = vperm.xlu0 %2627, %v2624
    %v2629 = vpop.permute.xlu0 %2628
    %v2631 = vsel %vm2625, %v2629, %v2605
    %s2632 = sadd.s32 %s23, 400
    %s2633 = sld [smem:[#allocation3 + %s2632]]
    %s2634 = scalar_lea.vmem %s1, %s2633
    %v2635 = vld [vmem:[%s2634] sm:$0x1]
    %s2636 = sadd.s32 %s23, 401
    %s2637 = sld [smem:[#allocation3 + %s2636]]
    %s2638 = scalar_lea.vmem %s1, %s2637
    %v2639 = vld [vmem:[%s2638] sm:$0x1]
    %v2640 = vadd.f32 %v2635, %v2639
    %s2641 = sadd.s32 %s23, 402
    %s2642 = sld [smem:[#allocation3 + %s2641]]
    %s2643 = scalar_lea.vmem %s1, %s2642
    %v2644 = vld [vmem:[%s2643] sm:$0x1]
    %v2645 = vadd.f32 %v2640, %v2644
    %s2646 = sadd.s32 %s23, 403
    %s2647 = sld [smem:[#allocation3 + %s2646]]
    %s2648 = scalar_lea.vmem %s1, %s2647
    %v2649 = vld [vmem:[%s2648] sm:$0x1]
    %v2650 = vadd.f32 %v2645, %v2649
    %vm2651 = vcmp.eq.s32.totalorder %v25, 100
    %2653 = vset.pattern.permute.xlu0 0
    %2654 = vperm.xlu0 %2653, %v2650
    %v2655 = vpop.permute.xlu0 %2654
    %v2657 = vsel %vm2651, %v2655, %v2631
    %s2658 = sadd.s32 %s23, 404
    %s2659 = sld [smem:[#allocation3 + %s2658]]
    %s2660 = scalar_lea.vmem %s1, %s2659
    %v2661 = vld [vmem:[%s2660] sm:$0x1]
    %s2662 = sadd.s32 %s23, 405
    %s2663 = sld [smem:[#allocation3 + %s2662]]
    %s2664 = scalar_lea.vmem %s1, %s2663
    %v2665 = vld [vmem:[%s2664] sm:$0x1]
    %v2666 = vadd.f32 %v2661, %v2665
    %s2667 = sadd.s32 %s23, 406
    %s2668 = sld [smem:[#allocation3 + %s2667]]
    %s2669 = scalar_lea.vmem %s1, %s2668
    %v2670 = vld [vmem:[%s2669] sm:$0x1]
    %v2671 = vadd.f32 %v2666, %v2670
    %s2672 = sadd.s32 %s23, 407
    %s2673 = sld [smem:[#allocation3 + %s2672]]
    %s2674 = scalar_lea.vmem %s1, %s2673
    %v2675 = vld [vmem:[%s2674] sm:$0x1]
    %v2676 = vadd.f32 %v2671, %v2675
    %vm2677 = vcmp.eq.s32.totalorder %v25, 101
    %2679 = vset.pattern.permute.xlu0 0
    %2680 = vperm.xlu0 %2679, %v2676
    %v2681 = vpop.permute.xlu0 %2680
    %v2683 = vsel %vm2677, %v2681, %v2657
    %s2684 = sadd.s32 %s23, 408
    %s2685 = sld [smem:[#allocation3 + %s2684]]
    %s2686 = scalar_lea.vmem %s1, %s2685
    %v2687 = vld [vmem:[%s2686] sm:$0x1]
    %s2688 = sadd.s32 %s23, 409
    %s2689 = sld [smem:[#allocation3 + %s2688]]
    %s2690 = scalar_lea.vmem %s1, %s2689
    %v2691 = vld [vmem:[%s2690] sm:$0x1]
    %v2692 = vadd.f32 %v2687, %v2691
    %s2693 = sadd.s32 %s23, 410
    %s2694 = sld [smem:[#allocation3 + %s2693]]
    %s2695 = scalar_lea.vmem %s1, %s2694
    %v2696 = vld [vmem:[%s2695] sm:$0x1]
    %v2697 = vadd.f32 %v2692, %v2696
    %s2698 = sadd.s32 %s23, 411
    %s2699 = sld [smem:[#allocation3 + %s2698]]
    %s2700 = scalar_lea.vmem %s1, %s2699
    %v2701 = vld [vmem:[%s2700] sm:$0x1]
    %v2702 = vadd.f32 %v2697, %v2701
    %vm2703 = vcmp.eq.s32.totalorder %v25, 102
    %2705 = vset.pattern.permute.xlu0 0
    %2706 = vperm.xlu0 %2705, %v2702
    %v2707 = vpop.permute.xlu0 %2706
    %v2709 = vsel %vm2703, %v2707, %v2683
    %s2710 = sadd.s32 %s23, 412
    %s2711 = sld [smem:[#allocation3 + %s2710]]
    %s2712 = scalar_lea.vmem %s1, %s2711
    %v2713 = vld [vmem:[%s2712] sm:$0x1]
    %s2714 = sadd.s32 %s23, 413
    %s2715 = sld [smem:[#allocation3 + %s2714]]
    %s2716 = scalar_lea.vmem %s1, %s2715
    %v2717 = vld [vmem:[%s2716] sm:$0x1]
    %v2718 = vadd.f32 %v2713, %v2717
    %s2719 = sadd.s32 %s23, 414
    %s2720 = sld [smem:[#allocation3 + %s2719]]
    %s2721 = scalar_lea.vmem %s1, %s2720
    %v2722 = vld [vmem:[%s2721] sm:$0x1]
    %v2723 = vadd.f32 %v2718, %v2722
    %s2724 = sadd.s32 %s23, 415
    %s2725 = sld [smem:[#allocation3 + %s2724]]
    %s2726 = scalar_lea.vmem %s1, %s2725
    %v2727 = vld [vmem:[%s2726] sm:$0x1]
    %v2728 = vadd.f32 %v2723, %v2727
    %vm2729 = vcmp.eq.s32.totalorder %v25, 103
    %2731 = vset.pattern.permute.xlu0 0
    %2732 = vperm.xlu0 %2731, %v2728
    %v2733 = vpop.permute.xlu0 %2732
    %v2735 = vsel %vm2729, %v2733, %v2709
    %s2736 = sadd.s32 %s23, 416
    %s2737 = sld [smem:[#allocation3 + %s2736]]
    %s2738 = scalar_lea.vmem %s1, %s2737
    %v2739 = vld [vmem:[%s2738] sm:$0x1]
    %s2740 = sadd.s32 %s23, 417
    %s2741 = sld [smem:[#allocation3 + %s2740]]
    %s2742 = scalar_lea.vmem %s1, %s2741
    %v2743 = vld [vmem:[%s2742] sm:$0x1]
    %v2744 = vadd.f32 %v2739, %v2743
    %s2745 = sadd.s32 %s23, 418
    %s2746 = sld [smem:[#allocation3 + %s2745]]
    %s2747 = scalar_lea.vmem %s1, %s2746
    %v2748 = vld [vmem:[%s2747] sm:$0x1]
    %v2749 = vadd.f32 %v2744, %v2748
    %s2750 = sadd.s32 %s23, 419
    %s2751 = sld [smem:[#allocation3 + %s2750]]
    %s2752 = scalar_lea.vmem %s1, %s2751
    %v2753 = vld [vmem:[%s2752] sm:$0x1]
    %v2754 = vadd.f32 %v2749, %v2753
    %vm2755 = vcmp.eq.s32.totalorder %v25, 104
    %2757 = vset.pattern.permute.xlu0 0
    %2758 = vperm.xlu0 %2757, %v2754
    %v2759 = vpop.permute.xlu0 %2758
    %v2761 = vsel %vm2755, %v2759, 0.0
    %s2762 = sadd.s32 %s23, 420
    %s2763 = sld [smem:[#allocation3 + %s2762]]
    %s2764 = scalar_lea.vmem %s1, %s2763
    %v2765 = vld [vmem:[%s2764] sm:$0x1]
    %s2766 = sadd.s32 %s23, 421
    %s2767 = sld [smem:[#allocation3 + %s2766]]
    %s2768 = scalar_lea.vmem %s1, %s2767
    %v2769 = vld [vmem:[%s2768] sm:$0x1]
    %v2770 = vadd.f32 %v2765, %v2769
    %s2771 = sadd.s32 %s23, 422
    %s2772 = sld [smem:[#allocation3 + %s2771]]
    %s2773 = scalar_lea.vmem %s1, %s2772
    %v2774 = vld [vmem:[%s2773] sm:$0x1]
    %v2775 = vadd.f32 %v2770, %v2774
    %s2776 = sadd.s32 %s23, 423
    %s2777 = sld [smem:[#allocation3 + %s2776]]
    %s2778 = scalar_lea.vmem %s1, %s2777
    %v2779 = vld [vmem:[%s2778] sm:$0x1]
    %v2780 = vadd.f32 %v2775, %v2779
    %vm2781 = vcmp.eq.s32.totalorder %v25, 105
    %2783 = vset.pattern.permute.xlu0 0
    %2784 = vperm.xlu0 %2783, %v2780
    %v2785 = vpop.permute.xlu0 %2784
    %v2787 = vsel %vm2781, %v2785, %v2761
    %s2788 = sadd.s32 %s23, 424
    %s2789 = sld [smem:[#allocation3 + %s2788]]
    %s2790 = scalar_lea.vmem %s1, %s2789
    %v2791 = vld [vmem:[%s2790] sm:$0x1]
    %s2792 = sadd.s32 %s23, 425
    %s2793 = sld [smem:[#allocation3 + %s2792]]
    %s2794 = scalar_lea.vmem %s1, %s2793
    %v2795 = vld [vmem:[%s2794] sm:$0x1]
    %v2796 = vadd.f32 %v2791, %v2795
    %s2797 = sadd.s32 %s23, 426
    %s2798 = sld [smem:[#allocation3 + %s2797]]
    %s2799 = scalar_lea.vmem %s1, %s2798
    %v2800 = vld [vmem:[%s2799] sm:$0x1]
    %v2801 = vadd.f32 %v2796, %v2800
    %s2802 = sadd.s32 %s23, 427
    %s2803 = sld [smem:[#allocation3 + %s2802]]
    %s2804 = scalar_lea.vmem %s1, %s2803
    %v2805 = vld [vmem:[%s2804] sm:$0x1]
    %v2806 = vadd.f32 %v2801, %v2805
    %vm2807 = vcmp.eq.s32.totalorder %v25, 106
    %2809 = vset.pattern.permute.xlu0 0
    %2810 = vperm.xlu0 %2809, %v2806
    %v2811 = vpop.permute.xlu0 %2810
    %v2813 = vsel %vm2807, %v2811, %v2787
    %s2814 = sadd.s32 %s23, 428
    %s2815 = sld [smem:[#allocation3 + %s2814]]
    %s2816 = scalar_lea.vmem %s1, %s2815
    %v2817 = vld [vmem:[%s2816] sm:$0x1]
    %s2818 = sadd.s32 %s23, 429
    %s2819 = sld [smem:[#allocation3 + %s2818]]
    %s2820 = scalar_lea.vmem %s1, %s2819
    %v2821 = vld [vmem:[%s2820] sm:$0x1]
    %v2822 = vadd.f32 %v2817, %v2821
    %s2823 = sadd.s32 %s23, 430
    %s2824 = sld [smem:[#allocation3 + %s2823]]
    %s2825 = scalar_lea.vmem %s1, %s2824
    %v2826 = vld [vmem:[%s2825] sm:$0x1]
    %v2827 = vadd.f32 %v2822, %v2826
    %s2828 = sadd.s32 %s23, 431
    %s2829 = sld [smem:[#allocation3 + %s2828]]
    %s2830 = scalar_lea.vmem %s1, %s2829
    %v2831 = vld [vmem:[%s2830] sm:$0x1]
    %v2832 = vadd.f32 %v2827, %v2831
    %vm2833 = vcmp.eq.s32.totalorder %v25, 107
    %2835 = vset.pattern.permute.xlu0 0
    %2836 = vperm.xlu0 %2835, %v2832
    %v2837 = vpop.permute.xlu0 %2836
    %v2839 = vsel %vm2833, %v2837, %v2813
    %s2840 = sadd.s32 %s23, 432
    %s2841 = sld [smem:[#allocation3 + %s2840]]
    %s2842 = scalar_lea.vmem %s1, %s2841
    %v2843 = vld [vmem:[%s2842] sm:$0x1]
    %s2844 = sadd.s32 %s23, 433
    %s2845 = sld [smem:[#allocation3 + %s2844]]
    %s2846 = scalar_lea.vmem %s1, %s2845
    %v2847 = vld [vmem:[%s2846] sm:$0x1]
    %v2848 = vadd.f32 %v2843, %v2847
    %s2849 = sadd.s32 %s23, 434
    %s2850 = sld [smem:[#allocation3 + %s2849]]
    %s2851 = scalar_lea.vmem %s1, %s2850
    %v2852 = vld [vmem:[%s2851] sm:$0x1]
    %v2853 = vadd.f32 %v2848, %v2852
    %s2854 = sadd.s32 %s23, 435
    %s2855 = sld [smem:[#allocation3 + %s2854]]
    %s2856 = scalar_lea.vmem %s1, %s2855
    %v2857 = vld [vmem:[%s2856] sm:$0x1]
    %v2858 = vadd.f32 %v2853, %v2857
    %vm2859 = vcmp.eq.s32.totalorder %v25, 108
    %2861 = vset.pattern.permute.xlu0 0
    %2862 = vperm.xlu0 %2861, %v2858
    %v2863 = vpop.permute.xlu0 %2862
    %v2865 = vsel %vm2859, %v2863, %v2839
    %s2866 = sadd.s32 %s23, 436
    %s2867 = sld [smem:[#allocation3 + %s2866]]
    %s2868 = scalar_lea.vmem %s1, %s2867
    %v2869 = vld [vmem:[%s2868] sm:$0x1]
    %s2870 = sadd.s32 %s23, 437
    %s2871 = sld [smem:[#allocation3 + %s2870]]
    %s2872 = scalar_lea.vmem %s1, %s2871
    %v2873 = vld [vmem:[%s2872] sm:$0x1]
    %v2874 = vadd.f32 %v2869, %v2873
    %s2875 = sadd.s32 %s23, 438
    %s2876 = sld [smem:[#allocation3 + %s2875]]
    %s2877 = scalar_lea.vmem %s1, %s2876
    %v2878 = vld [vmem:[%s2877] sm:$0x1]
    %v2879 = vadd.f32 %v2874, %v2878
    %s2880 = sadd.s32 %s23, 439
    %s2881 = sld [smem:[#allocation3 + %s2880]]
    %s2882 = scalar_lea.vmem %s1, %s2881
    %v2883 = vld [vmem:[%s2882] sm:$0x1]
    %v2884 = vadd.f32 %v2879, %v2883
    %vm2885 = vcmp.eq.s32.totalorder %v25, 109
    %2887 = vset.pattern.permute.xlu0 0
    %2888 = vperm.xlu0 %2887, %v2884
    %v2889 = vpop.permute.xlu0 %2888
    %v2891 = vsel %vm2885, %v2889, %v2865
    %s2892 = sadd.s32 %s23, 440
    %s2893 = sld [smem:[#allocation3 + %s2892]]
    %s2894 = scalar_lea.vmem %s1, %s2893
    %v2895 = vld [vmem:[%s2894] sm:$0x1]
    %s2896 = sadd.s32 %s23, 441
    %s2897 = sld [smem:[#allocation3 + %s2896]]
    %s2898 = scalar_lea.vmem %s1, %s2897
    %v2899 = vld [vmem:[%s2898] sm:$0x1]
    %v2900 = vadd.f32 %v2895, %v2899
    %s2901 = sadd.s32 %s23, 442
    %s2902 = sld [smem:[#allocation3 + %s2901]]
    %s2903 = scalar_lea.vmem %s1, %s2902
    %v2904 = vld [vmem:[%s2903] sm:$0x1]
    %v2905 = vadd.f32 %v2900, %v2904
    %s2906 = sadd.s32 %s23, 443
    %s2907 = sld [smem:[#allocation3 + %s2906]]
    %s2908 = scalar_lea.vmem %s1, %s2907
    %v2909 = vld [vmem:[%s2908] sm:$0x1]
    %v2910 = vadd.f32 %v2905, %v2909
    %vm2911 = vcmp.eq.s32.totalorder %v25, 110
    %2913 = vset.pattern.permute.xlu0 0
    %2914 = vperm.xlu0 %2913, %v2910
    %v2915 = vpop.permute.xlu0 %2914
    %v2917 = vsel %vm2911, %v2915, %v2891
    %s2918 = sadd.s32 %s23, 444
    %s2919 = sld [smem:[#allocation3 + %s2918]]
    %s2920 = scalar_lea.vmem %s1, %s2919
    %v2921 = vld [vmem:[%s2920] sm:$0x1]
    %s2922 = sadd.s32 %s23, 445
    %s2923 = sld [smem:[#allocation3 + %s2922]]
    %s2924 = scalar_lea.vmem %s1, %s2923
    %v2925 = vld [vmem:[%s2924] sm:$0x1]
    %v2926 = vadd.f32 %v2921, %v2925
    %s2927 = sadd.s32 %s23, 446
    %s2928 = sld [smem:[#allocation3 + %s2927]]
    %s2929 = scalar_lea.vmem %s1, %s2928
    %v2930 = vld [vmem:[%s2929] sm:$0x1]
    %v2931 = vadd.f32 %v2926, %v2930
    %s2932 = sadd.s32 %s23, 447
    %s2933 = sld [smem:[#allocation3 + %s2932]]
    %s2934 = scalar_lea.vmem %s1, %s2933
    %v2935 = vld [vmem:[%s2934] sm:$0x1]
    %v2936 = vadd.f32 %v2931, %v2935
    %vm2937 = vcmp.eq.s32.totalorder %v25, 111
    %2939 = vset.pattern.permute.xlu0 0
    %2940 = vperm.xlu0 %2939, %v2936
    %v2941 = vpop.permute.xlu0 %2940
    %v2943 = vsel %vm2937, %v2941, %v2917
    %s2944 = sadd.s32 %s23, 448
    %s2945 = sld [smem:[#allocation3 + %s2944]]
    %s2946 = scalar_lea.vmem %s1, %s2945
    %v2947 = vld [vmem:[%s2946] sm:$0x1]
    %s2948 = sadd.s32 %s23, 449
    %s2949 = sld [smem:[#allocation3 + %s2948]]
    %s2950 = scalar_lea.vmem %s1, %s2949
    %v2951 = vld [vmem:[%s2950] sm:$0x1]
    %v2952 = vadd.f32 %v2947, %v2951
    %s2953 = sadd.s32 %s23, 450
    %s2954 = sld [smem:[#allocation3 + %s2953]]
    %s2955 = scalar_lea.vmem %s1, %s2954
    %v2956 = vld [vmem:[%s2955] sm:$0x1]
    %v2957 = vadd.f32 %v2952, %v2956
    %s2958 = sadd.s32 %s23, 451
    %s2959 = sld [smem:[#allocation3 + %s2958]]
    %s2960 = scalar_lea.vmem %s1, %s2959
    %v2961 = vld [vmem:[%s2960] sm:$0x1]
    %v2962 = vadd.f32 %v2957, %v2961
    %vm2963 = vcmp.eq.s32.totalorder %v25, 112
    %2965 = vset.pattern.permute.xlu0 0
    %2966 = vperm.xlu0 %2965, %v2962
    %v2967 = vpop.permute.xlu0 %2966
    %v2969 = vsel %vm2963, %v2967, 0.0
    %s2970 = sadd.s32 %s23, 452
    %s2971 = sld [smem:[#allocation3 + %s2970]]
    %s2972 = scalar_lea.vmem %s1, %s2971
    %v2973 = vld [vmem:[%s2972] sm:$0x1]
    %s2974 = sadd.s32 %s23, 453
    %s2975 = sld [smem:[#allocation3 + %s2974]]
    %s2976 = scalar_lea.vmem %s1, %s2975
    %v2977 = vld [vmem:[%s2976] sm:$0x1]
    %v2978 = vadd.f32 %v2973, %v2977
    %s2979 = sadd.s32 %s23, 454
    %s2980 = sld [smem:[#allocation3 + %s2979]]
    %s2981 = scalar_lea.vmem %s1, %s2980
    %v2982 = vld [vmem:[%s2981] sm:$0x1]
    %v2983 = vadd.f32 %v2978, %v2982
    %s2984 = sadd.s32 %s23, 455
    %s2985 = sld [smem:[#allocation3 + %s2984]]
    %s2986 = scalar_lea.vmem %s1, %s2985
    %v2987 = vld [vmem:[%s2986] sm:$0x1]
    %v2988 = vadd.f32 %v2983, %v2987
    %vm2989 = vcmp.eq.s32.totalorder %v25, 113
    %2991 = vset.pattern.permute.xlu0 0
    %2992 = vperm.xlu0 %2991, %v2988
    %v2993 = vpop.permute.xlu0 %2992
    %v2995 = vsel %vm2989, %v2993, %v2969
    %s2996 = sadd.s32 %s23, 456
    %s2997 = sld [smem:[#allocation3 + %s2996]]
    %s2998 = scalar_lea.vmem %s1, %s2997
    %v2999 = vld [vmem:[%s2998] sm:$0x1]
    %s3000 = sadd.s32 %s23, 457
    %s3001 = sld [smem:[#allocation3 + %s3000]]
    %s3002 = scalar_lea.vmem %s1, %s3001
    %v3003 = vld [vmem:[%s3002] sm:$0x1]
    %v3004 = vadd.f32 %v2999, %v3003
    %s3005 = sadd.s32 %s23, 458
    %s3006 = sld [smem:[#allocation3 + %s3005]]
    %s3007 = scalar_lea.vmem %s1, %s3006
    %v3008 = vld [vmem:[%s3007] sm:$0x1]
    %v3009 = vadd.f32 %v3004, %v3008
    %s3010 = sadd.s32 %s23, 459
    %s3011 = sld [smem:[#allocation3 + %s3010]]
    %s3012 = scalar_lea.vmem %s1, %s3011
    %v3013 = vld [vmem:[%s3012] sm:$0x1]
    %v3014 = vadd.f32 %v3009, %v3013
    %vm3015 = vcmp.eq.s32.totalorder %v25, 114
    %3017 = vset.pattern.permute.xlu0 0
    %3018 = vperm.xlu0 %3017, %v3014
    %v3019 = vpop.permute.xlu0 %3018
    %v3021 = vsel %vm3015, %v3019, %v2995
    %s3022 = sadd.s32 %s23, 460
    %s3023 = sld [smem:[#allocation3 + %s3022]]
    %s3024 = scalar_lea.vmem %s1, %s3023
    %v3025 = vld [vmem:[%s3024] sm:$0x1]
    %s3026 = sadd.s32 %s23, 461
    %s3027 = sld [smem:[#allocation3 + %s3026]]
    %s3028 = scalar_lea.vmem %s1, %s3027
    %v3029 = vld [vmem:[%s3028] sm:$0x1]
    %v3030 = vadd.f32 %v3025, %v3029
    %s3031 = sadd.s32 %s23, 462
    %s3032 = sld [smem:[#allocation3 + %s3031]]
    %s3033 = scalar_lea.vmem %s1, %s3032
    %v3034 = vld [vmem:[%s3033] sm:$0x1]
    %v3035 = vadd.f32 %v3030, %v3034
    %s3036 = sadd.s32 %s23, 463
    %s3037 = sld [smem:[#allocation3 + %s3036]]
    %s3038 = scalar_lea.vmem %s1, %s3037
    %v3039 = vld [vmem:[%s3038] sm:$0x1]
    %v3040 = vadd.f32 %v3035, %v3039
    %vm3041 = vcmp.eq.s32.totalorder %v25, 115
    %3043 = vset.pattern.permute.xlu0 0
    %3044 = vperm.xlu0 %3043, %v3040
    %v3045 = vpop.permute.xlu0 %3044
    %v3047 = vsel %vm3041, %v3045, %v3021
    %s3048 = sadd.s32 %s23, 464
    %s3049 = sld [smem:[#allocation3 + %s3048]]
    %s3050 = scalar_lea.vmem %s1, %s3049
    %v3051 = vld [vmem:[%s3050] sm:$0x1]
    %s3052 = sadd.s32 %s23, 465
    %s3053 = sld [smem:[#allocation3 + %s3052]]
    %s3054 = scalar_lea.vmem %s1, %s3053
    %v3055 = vld [vmem:[%s3054] sm:$0x1]
    %v3056 = vadd.f32 %v3051, %v3055
    %s3057 = sadd.s32 %s23, 466
    %s3058 = sld [smem:[#allocation3 + %s3057]]
    %s3059 = scalar_lea.vmem %s1, %s3058
    %v3060 = vld [vmem:[%s3059] sm:$0x1]
    %v3061 = vadd.f32 %v3056, %v3060
    %s3062 = sadd.s32 %s23, 467
    %s3063 = sld [smem:[#allocation3 + %s3062]]
    %s3064 = scalar_lea.vmem %s1, %s3063
    %v3065 = vld [vmem:[%s3064] sm:$0x1]
    %v3066 = vadd.f32 %v3061, %v3065
    %vm3067 = vcmp.eq.s32.totalorder %v25, 116
    %3069 = vset.pattern.permute.xlu0 0
    %3070 = vperm.xlu0 %3069, %v3066
    %v3071 = vpop.permute.xlu0 %3070
    %v3073 = vsel %vm3067, %v3071, %v3047
    %s3074 = sadd.s32 %s23, 468
    %s3075 = sld [smem:[#allocation3 + %s3074]]
    %s3076 = scalar_lea.vmem %s1, %s3075
    %v3077 = vld [vmem:[%s3076] sm:$0x1]
    %s3078 = sadd.s32 %s23, 469
    %s3079 = sld [smem:[#allocation3 + %s3078]]
    %s3080 = scalar_lea.vmem %s1, %s3079
    %v3081 = vld [vmem:[%s3080] sm:$0x1]
    %v3082 = vadd.f32 %v3077, %v3081
    %s3083 = sadd.s32 %s23, 470
    %s3084 = sld [smem:[#allocation3 + %s3083]]
    %s3085 = scalar_lea.vmem %s1, %s3084
    %v3086 = vld [vmem:[%s3085] sm:$0x1]
    %v3087 = vadd.f32 %v3082, %v3086
    %s3088 = sadd.s32 %s23, 471
    %s3089 = sld [smem:[#allocation3 + %s3088]]
    %s3090 = scalar_lea.vmem %s1, %s3089
    %v3091 = vld [vmem:[%s3090] sm:$0x1]
    %v3092 = vadd.f32 %v3087, %v3091
    %vm3093 = vcmp.eq.s32.totalorder %v25, 117
    %3095 = vset.pattern.permute.xlu0 0
    %3096 = vperm.xlu0 %3095, %v3092
    %v3097 = vpop.permute.xlu0 %3096
    %v3099 = vsel %vm3093, %v3097, %v3073
    %s3100 = sadd.s32 %s23, 472
    %s3101 = sld [smem:[#allocation3 + %s3100]]
    %s3102 = scalar_lea.vmem %s1, %s3101
    %v3103 = vld [vmem:[%s3102] sm:$0x1]
    %s3104 = sadd.s32 %s23, 473
    %s3105 = sld [smem:[#allocation3 + %s3104]]
    %s3106 = scalar_lea.vmem %s1, %s3105
    %v3107 = vld [vmem:[%s3106] sm:$0x1]
    %v3108 = vadd.f32 %v3103, %v3107
    %s3109 = sadd.s32 %s23, 474
    %s3110 = sld [smem:[#allocation3 + %s3109]]
    %s3111 = scalar_lea.vmem %s1, %s3110
    %v3112 = vld [vmem:[%s3111] sm:$0x1]
    %v3113 = vadd.f32 %v3108, %v3112
    %s3114 = sadd.s32 %s23, 475
    %s3115 = sld [smem:[#allocation3 + %s3114]]
    %s3116 = scalar_lea.vmem %s1, %s3115
    %v3117 = vld [vmem:[%s3116] sm:$0x1]
    %v3118 = vadd.f32 %v3113, %v3117
    %vm3119 = vcmp.eq.s32.totalorder %v25, 118
    %3121 = vset.pattern.permute.xlu0 0
    %3122 = vperm.xlu0 %3121, %v3118
    %v3123 = vpop.permute.xlu0 %3122
    %v3125 = vsel %vm3119, %v3123, %v3099
    %s3126 = sadd.s32 %s23, 476
    %s3127 = sld [smem:[#allocation3 + %s3126]]
    %s3128 = scalar_lea.vmem %s1, %s3127
    %v3129 = vld [vmem:[%s3128] sm:$0x1]
    %s3130 = sadd.s32 %s23, 477
    %s3131 = sld [smem:[#allocation3 + %s3130]]
    %s3132 = scalar_lea.vmem %s1, %s3131
    %v3133 = vld [vmem:[%s3132] sm:$0x1]
    %v3134 = vadd.f32 %v3129, %v3133
    %s3135 = sadd.s32 %s23, 478
    %s3136 = sld [smem:[#allocation3 + %s3135]]
    %s3137 = scalar_lea.vmem %s1, %s3136
    %v3138 = vld [vmem:[%s3137] sm:$0x1]
    %v3139 = vadd.f32 %v3134, %v3138
    %s3140 = sadd.s32 %s23, 479
    %s3141 = sld [smem:[#allocation3 + %s3140]]
    %s3142 = scalar_lea.vmem %s1, %s3141
    %v3143 = vld [vmem:[%s3142] sm:$0x1]
    %v3144 = vadd.f32 %v3139, %v3143
    %vm3145 = vcmp.eq.s32.totalorder %v25, 119
    %3147 = vset.pattern.permute.xlu0 0
    %3148 = vperm.xlu0 %3147, %v3144
    %v3149 = vpop.permute.xlu0 %3148
    %v3151 = vsel %vm3145, %v3149, %v3125
    %s3152 = sadd.s32 %s23, 480
    %s3153 = sld [smem:[#allocation3 + %s3152]]
    %s3154 = scalar_lea.vmem %s1, %s3153
    %v3155 = vld [vmem:[%s3154] sm:$0x1]
    %s3156 = sadd.s32 %s23, 481
    %s3157 = sld [smem:[#allocation3 + %s3156]]
    %s3158 = scalar_lea.vmem %s1, %s3157
    %v3159 = vld [vmem:[%s3158] sm:$0x1]
    %v3160 = vadd.f32 %v3155, %v3159
    %s3161 = sadd.s32 %s23, 482
    %s3162 = sld [smem:[#allocation3 + %s3161]]
    %s3163 = scalar_lea.vmem %s1, %s3162
    %v3164 = vld [vmem:[%s3163] sm:$0x1]
    %v3165 = vadd.f32 %v3160, %v3164
    %s3166 = sadd.s32 %s23, 483
    %s3167 = sld [smem:[#allocation3 + %s3166]]
    %s3168 = scalar_lea.vmem %s1, %s3167
    %v3169 = vld [vmem:[%s3168] sm:$0x1]
    %v3170 = vadd.f32 %v3165, %v3169
    %vm3171 = vcmp.eq.s32.totalorder %v25, 120
    %3173 = vset.pattern.permute.xlu0 0
    %3174 = vperm.xlu0 %3173, %v3170
    %v3175 = vpop.permute.xlu0 %3174
    %v3177 = vsel %vm3171, %v3175, 0.0
    %s3178 = sadd.s32 %s23, 484
    %s3179 = sld [smem:[#allocation3 + %s3178]]
    %s3180 = scalar_lea.vmem %s1, %s3179
    %v3181 = vld [vmem:[%s3180] sm:$0x1]
    %s3182 = sadd.s32 %s23, 485
    %s3183 = sld [smem:[#allocation3 + %s3182]]
    %s3184 = scalar_lea.vmem %s1, %s3183
    %v3185 = vld [vmem:[%s3184] sm:$0x1]
    %v3186 = vadd.f32 %v3181, %v3185
    %s3187 = sadd.s32 %s23, 486
    %s3188 = sld [smem:[#allocation3 + %s3187]]
    %s3189 = scalar_lea.vmem %s1, %s3188
    %v3190 = vld [vmem:[%s3189] sm:$0x1]
    %v3191 = vadd.f32 %v3186, %v3190
    %s3192 = sadd.s32 %s23, 487
    %s3193 = sld [smem:[#allocation3 + %s3192]]
    %s3194 = scalar_lea.vmem %s1, %s3193
    %v3195 = vld [vmem:[%s3194] sm:$0x1]
    %v3196 = vadd.f32 %v3191, %v3195
    %vm3197 = vcmp.eq.s32.totalorder %v25, 121
    %3199 = vset.pattern.permute.xlu0 0
    %3200 = vperm.xlu0 %3199, %v3196
    %v3201 = vpop.permute.xlu0 %3200
    %v3203 = vsel %vm3197, %v3201, %v3177
    %s3204 = sadd.s32 %s23, 488
    %s3205 = sld [smem:[#allocation3 + %s3204]]
    %s3206 = scalar_lea.vmem %s1, %s3205
    %v3207 = vld [vmem:[%s3206] sm:$0x1]
    %s3208 = sadd.s32 %s23, 489
    %s3209 = sld [smem:[#allocation3 + %s3208]]
    %s3210 = scalar_lea.vmem %s1, %s3209
    %v3211 = vld [vmem:[%s3210] sm:$0x1]
    %v3212 = vadd.f32 %v3207, %v3211
    %s3213 = sadd.s32 %s23, 490
    %s3214 = sld [smem:[#allocation3 + %s3213]]
    %s3215 = scalar_lea.vmem %s1, %s3214
    %v3216 = vld [vmem:[%s3215] sm:$0x1]
    %v3217 = vadd.f32 %v3212, %v3216
    %s3218 = sadd.s32 %s23, 491
    %s3219 = sld [smem:[#allocation3 + %s3218]]
    %s3220 = scalar_lea.vmem %s1, %s3219
    %v3221 = vld [vmem:[%s3220] sm:$0x1]
    %v3222 = vadd.f32 %v3217, %v3221
    %vm3223 = vcmp.eq.s32.totalorder %v25, 122
    %3225 = vset.pattern.permute.xlu0 0
    %3226 = vperm.xlu0 %3225, %v3222
    %v3227 = vpop.permute.xlu0 %3226
    %v3229 = vsel %vm3223, %v3227, %v3203
    %s3230 = sadd.s32 %s23, 492
    %s3231 = sld [smem:[#allocation3 + %s3230]]
    %s3232 = scalar_lea.vmem %s1, %s3231
    %v3233 = vld [vmem:[%s3232] sm:$0x1]
    %s3234 = sadd.s32 %s23, 493
    %s3235 = sld [smem:[#allocation3 + %s3234]]
    %s3236 = scalar_lea.vmem %s1, %s3235
    %v3237 = vld [vmem:[%s3236] sm:$0x1]
    %v3238 = vadd.f32 %v3233, %v3237
    %s3239 = sadd.s32 %s23, 494
    %s3240 = sld [smem:[#allocation3 + %s3239]]
    %s3241 = scalar_lea.vmem %s1, %s3240
    %v3242 = vld [vmem:[%s3241] sm:$0x1]
    %v3243 = vadd.f32 %v3238, %v3242
    %s3244 = sadd.s32 %s23, 495
    %s3245 = sld [smem:[#allocation3 + %s3244]]
    %s3246 = scalar_lea.vmem %s1, %s3245
    %v3247 = vld [vmem:[%s3246] sm:$0x1]
    %v3248 = vadd.f32 %v3243, %v3247
    %vm3249 = vcmp.eq.s32.totalorder %v25, 123
    %3251 = vset.pattern.permute.xlu0 0
    %3252 = vperm.xlu0 %3251, %v3248
    %v3253 = vpop.permute.xlu0 %3252
    %v3255 = vsel %vm3249, %v3253, %v3229
    %s3256 = sadd.s32 %s23, 496
    %s3257 = sld [smem:[#allocation3 + %s3256]]
    %s3258 = scalar_lea.vmem %s1, %s3257
    %v3259 = vld [vmem:[%s3258] sm:$0x1]
    %s3260 = sadd.s32 %s23, 497
    %s3261 = sld [smem:[#allocation3 + %s3260]]
    %s3262 = scalar_lea.vmem %s1, %s3261
    %v3263 = vld [vmem:[%s3262] sm:$0x1]
    %v3264 = vadd.f32 %v3259, %v3263
    %s3265 = sadd.s32 %s23, 498
    %s3266 = sld [smem:[#allocation3 + %s3265]]
    %s3267 = scalar_lea.vmem %s1, %s3266
    %v3268 = vld [vmem:[%s3267] sm:$0x1]
    %v3269 = vadd.f32 %v3264, %v3268
    %s3270 = sadd.s32 %s23, 499
    %s3271 = sld [smem:[#allocation3 + %s3270]]
    %s3272 = scalar_lea.vmem %s1, %s3271
    %v3273 = vld [vmem:[%s3272] sm:$0x1]
    %v3274 = vadd.f32 %v3269, %v3273
    %vm3275 = vcmp.eq.s32.totalorder %v25, 124
    %3277 = vset.pattern.permute.xlu0 0
    %3278 = vperm.xlu0 %3277, %v3274
    %v3279 = vpop.permute.xlu0 %3278
    %v3281 = vsel %vm3275, %v3279, %v3255
    %s3282 = sadd.s32 %s23, 500
    %s3283 = sld [smem:[#allocation3 + %s3282]]
    %s3284 = scalar_lea.vmem %s1, %s3283
    %v3285 = vld [vmem:[%s3284] sm:$0x1]
    %s3286 = sadd.s32 %s23, 501
    %s3287 = sld [smem:[#allocation3 + %s3286]]
    %s3288 = scalar_lea.vmem %s1, %s3287
    %v3289 = vld [vmem:[%s3288] sm:$0x1]
    %v3290 = vadd.f32 %v3285, %v3289
    %s3291 = sadd.s32 %s23, 502
    %s3292 = sld [smem:[#allocation3 + %s3291]]
    %s3293 = scalar_lea.vmem %s1, %s3292
    %v3294 = vld [vmem:[%s3293] sm:$0x1]
    %v3295 = vadd.f32 %v3290, %v3294
    %s3296 = sadd.s32 %s23, 503
    %s3297 = sld [smem:[#allocation3 + %s3296]]
    %s3298 = scalar_lea.vmem %s1, %s3297
    %v3299 = vld [vmem:[%s3298] sm:$0x1]
    %v3300 = vadd.f32 %v3295, %v3299
    %vm3301 = vcmp.eq.s32.totalorder %v25, 125
    %3303 = vset.pattern.permute.xlu0 0
    %3304 = vperm.xlu0 %3303, %v3300
    %v3305 = vpop.permute.xlu0 %3304
    %v3307 = vsel %vm3301, %v3305, %v3281
    %s3308 = sadd.s32 %s23, 504
    %s3309 = sld [smem:[#allocation3 + %s3308]]
    %s3310 = scalar_lea.vmem %s1, %s3309
    %v3311 = vld [vmem:[%s3310] sm:$0x1]
    %s3312 = sadd.s32 %s23, 505
    %s3313 = sld [smem:[#allocation3 + %s3312]]
    %s3314 = scalar_lea.vmem %s1, %s3313
    %v3315 = vld [vmem:[%s3314] sm:$0x1]
    %v3316 = vadd.f32 %v3311, %v3315
    %s3317 = sadd.s32 %s23, 506
    %s3318 = sld [smem:[#allocation3 + %s3317]]
    %s3319 = scalar_lea.vmem %s1, %s3318
    %v3320 = vld [vmem:[%s3319] sm:$0x1]
    %v3321 = vadd.f32 %v3316, %v3320
    %s3322 = sadd.s32 %s23, 507
    %s3323 = sld [smem:[#allocation3 + %s3322]]
    %s3324 = scalar_lea.vmem %s1, %s3323
    %v3325 = vld [vmem:[%s3324] sm:$0x1]
    %v3326 = vadd.f32 %v3321, %v3325
    %vm3327 = vcmp.eq.s32.totalorder %v25, 126
    %3329 = vset.pattern.permute.xlu0 0
    %3330 = vperm.xlu0 %3329, %v3326
    %v3331 = vpop.permute.xlu0 %3330
    %v3333 = vsel %vm3327, %v3331, %v3307
    %s3334 = sadd.s32 %s23, 508
    %s3335 = sld [smem:[#allocation3 + %s3334]]
    %s3336 = scalar_lea.vmem %s1, %s3335
    %v3337 = vld [vmem:[%s3336] sm:$0x1]
    %s3338 = sadd.s32 %s23, 509
    %s3339 = sld [smem:[#allocation3 + %s3338]]
    %s3340 = scalar_lea.vmem %s1, %s3339
    %v3341 = vld [vmem:[%s3340] sm:$0x1]
    %v3342 = vadd.f32 %v3337, %v3341
    %s3343 = sadd.s32 %s23, 510
    %s3344 = sld [smem:[#allocation3 + %s3343]]
    %s3345 = scalar_lea.vmem %s1, %s3344
    %v3346 = vld [vmem:[%s3345] sm:$0x1]
    %v3347 = vadd.f32 %v3342, %v3346
    %s3348 = sadd.s32 %s23, 511
    %s3349 = sld [smem:[#allocation3 + %s3348]]
    %s3350 = scalar_lea.vmem %s1, %s3349
    %v3351 = vld [vmem:[%s3350] sm:$0x1]
    %v3352 = vadd.f32 %v3347, %v3351
    %vm3353 = vcmp.eq.s32.totalorder %v25, 127
    %3355 = vset.pattern.permute.xlu0 0
    %3356 = vperm.xlu0 %3355, %v3352
    %v3357 = vpop.permute.xlu0 %3356
    %v3359 = vsel %vm3353, %v3357, %v3333
    %v3360 = vadd.f32 %v239, %v447
    %v3361 = vadd.f32 %v3360, %v655
    %v3362 = vadd.f32 %v3361, %v863
    %v3363 = vadd.f32 %v3362, %v1071
    %v3364 = vadd.f32 %v3363, %v1279
    %v3365 = vadd.f32 %v3364, %v1487
    %v3366 = vadd.f32 %v3365, %v1695
    %v3367 = vadd.f32 %v3366, %v1903
    %v3368 = vadd.f32 %v3367, %v2111
    %v3369 = vadd.f32 %v3368, %v2319
    %v3370 = vadd.f32 %v3369, %v2527
    %v3371 = vadd.f32 %v3370, %v2735
    %v3372 = vadd.f32 %v3371, %v2943
    %v3373 = vadd.f32 %v3372, %v3151
    %v3374 = vadd.f32 %v3373, %v3359
    %v3375 = vadd.f32 %v3374, %v32
    %3376 = vst [vmem:[#allocation5] sm:$0x1] %v3375
    // Predicated region
    $region10: #{tpu_custom_call.1} parent=1 // pred_check
      _
    $region11: #{tpu_custom_call.1} parent=1 // pred_check_branch
      %3378 = sbr.rel (0) target = $region13
    $region12: #{tpu_custom_call.1} parent=1 // pred_region
      %3380 = vsyncadd [#allocation6], 0
      %s3382 = sshll.u32 [#allocation5], 4
      %s3383 = int_to_ptr.vmem [resolvable:$true] %s3382
      %s3384 = sshll.u32 %s3, 4
      %s3385 = int_to_ptr.hbm [resolvable:$true] %s3384
      %3387 = dma.vmem_to_hbm [thread:$0]  %s3383, 16, %s3385, [#allocation6]
    $region13: #{tpu_custom_call.1} parent=1 // pred_fallthru
      _
    // Predicated region
    $region14: #{tpu_custom_call.1} parent=1 // pred_check
      _
    $region15: #{tpu_custom_call.1} parent=1 // pred_check_branch
      %3389 = sbr.rel (0) target = $region17
    $region16: #{tpu_custom_call.1} parent=1 // pred_region
      %3391 = dma.done [#allocation6], 16
    $region17: #{tpu_custom_call.1} parent=1 // pred_fallthru
      _
    %3392 = vsyncpa [#allocation6], 1

</llo_original>
